<compile_context>
chip_gen: v5e
topology: v5e:2x2
jax: 0.10.0
libtpu: 0.0.40
codegen_flags: <defaults>
</compile_context>

<pallas_src>
import functools

import jax
import jax.numpy as jnp
from jax.experimental import pallas as pl
from jax.experimental.pallas import tpu as pltpu


# Set to jnp.bfloat16 on v6e/v7x for ~2x MXU throughput and ~half the operand HBM
# traffic (accumulation stays f32). Default f32 to match the PyTorch f32 reference.
MATMUL_DTYPE = jnp.float32

_LANE = 128      # lane width (last dim)
_SUBLANE = 8     # sublane width (second-to-last dim)


def _round_up(x, m):
    return ((x + m - 1) // m) * m


def _pick_tile(dim, pref, align):
    """Pick (tile, padded_dim) with tile % align == 0 and tile | padded_dim."""
    if dim >= pref:
        return pref, _round_up(dim, pref)
    t = _round_up(dim, align)
    return t, t


# ----------------------------------------------------------------------------
# Pallas kernels
# ----------------------------------------------------------------------------
def _matmul_bias_kernel(x_ref, w_ref, b_ref, o_ref, acc_ref):
    """Grouped tiled matmul with K-axis accumulation and a bias epilogue.

    Grid: (G, M_tiles, N_tiles, K_tiles); K is the innermost reduction axis.
    Blocks: x (1, tm, tk), w (1, tk, tn), b (1, 1, tn), o (1, tm, tn).
    """
    k = pl.program_id(3)

    @pl.when(k == 0)
    def _init():
        acc_ref[...] = jnp.zeros_like(acc_ref)

    acc_ref[...] += jnp.dot(x_ref[0], w_ref[0],
                            preferred_element_type=jnp.float32)

    @pl.when(k == pl.num_programs(3) - 1)
    def _finalize():
        o_ref[0] = acc_ref[...] + b_ref[0]


def matmul_bias(x, w, b, *, tm_pref=256, tn_pref=256, tk_pref=512):
    """y[g] = x[g] @ w[g] + b[g]; x:(G,M,K), w:(G,K,N), b:(G,N) -> (G,M,N) float32.

    Pads M to a multiple of 8 and N / K to multiples of 128 (lane-dense stores /
    loads), tiles all three dims, and accumulates over K in a VMEM f32 scratch so
    the BlockSpec pipeline can double-buffer the streaming tiles.
    """
    G, M, K = x.shape
    N = w.shape[2]

    tm, Mp = _pick_tile(M, tm_pref, _SUBLANE)
    tn, Np = _pick_tile(N, tn_pref, _LANE)
    tk, Kp = _pick_tile(K, tk_pref, _LANE)

    xp = jnp.pad(x, ((0, 0), (0, Mp - M), (0, Kp - K))).astype(MATMUL_DTYPE)
    wp = jnp.pad(w, ((0, 0), (0, Kp - K), (0, Np - N))).astype(MATMUL_DTYPE)
    bp = jnp.pad(b.reshape(G, 1, N), ((0, 0), (0, 0), (0, Np - N))).astype(jnp.float32)

    grid = (G, Mp // tm, Np // tn, Kp // tk)
    itm = jnp.dtype(MATMUL_DTYPE).itemsize
    cost = pl.CostEstimate(
        flops=2 * G * Mp * Np * Kp,
        transcendentals=0,
        bytes_accessed=itm * G * (Mp * Kp + Kp * Np) + 4 * G * Mp * Np,
    )

    out = pl.pallas_call(
        _matmul_bias_kernel,
        out_shape=jax.ShapeDtypeStruct((G, Mp, Np), jnp.float32),
        grid=grid,
        in_specs=[
            pl.BlockSpec((1, tm, tk), lambda g, i, j, k: (g, i, k)),
            pl.BlockSpec((1, tk, tn), lambda g, i, j, k: (g, k, j)),
            pl.BlockSpec((1, 1, tn), lambda g, i, j, k: (g, 0, j)),
        ],
        out_specs=pl.BlockSpec((1, tm, tn), lambda g, i, j, k: (g, i, j)),
        scratch_shapes=[pltpu.VMEM((tm, tn), jnp.float32)],
        compiler_params=pltpu.CompilerParams(
            dimension_semantics=("parallel", "parallel", "parallel", "arbitrary"),
            vmem_limit_bytes=48 * 1024 * 1024,   # explicit: safe under v7x's 64 MiB
        ),
        cost_estimate=cost,
    )(xp, wp, bp)
    return out[:, :M, :N]


def _instance_norm_kernel(eps, x_ref, o_ref):
    x = x_ref[0]                                         # (H*W, C) f32
    inv_n = 1.0 / x.shape[0]
    mean = jnp.sum(x, axis=0, keepdims=True) * inv_n
    ex2 = jnp.sum(x * x, axis=0, keepdims=True) * inv_n
    var = jnp.maximum(ex2 - mean * mean, 0.0)            # biased var (PyTorch)
    o_ref[0] = (x - mean) * jax.lax.rsqrt(var + eps)


def instance_norm(x, eps=1e-5):
    """InstanceNorm2d(affine=False), single-pass stats. x: (N, H, W, C) NHWC."""
    N, H, W, C = x.shape
    HW = H * W
    xr = x.reshape(N, HW, C)
    out = pl.pallas_call(
        functools.partial(_instance_norm_kernel, eps),
        out_shape=jax.ShapeDtypeStruct((N, HW, C), jnp.float32),
        grid=(N,),
        in_specs=[pl.BlockSpec((1, HW, C), lambda n: (n, 0, 0))],
        out_specs=pl.BlockSpec((1, HW, C), lambda n: (n, 0, 0)),
        compiler_params=pltpu.CompilerParams(
            dimension_semantics=("parallel",)),
    )(xr)
    return out.reshape(N, H, W, C)


# ----------------------------------------------------------------------------
# Conv glue (patch extraction in XLA; the MAC hot path is the Pallas matmul)
# ----------------------------------------------------------------------------
def _apply_act(x, act):
    """Activation applied once per element, BEFORE patch formation."""
    if act == "lrelu":
        return jnp.where(x >= 0.0, x, 0.2 * x)
    if act == "relu":
        return jnp.maximum(x, 0.0)
    return x


def _extract_patches(xp, k, stride, Ho, Wo):
    """xp: padded (N, Hp, Wp, C) -> (N*Ho*Wo, k*k*C), column order (kh, kw, c)."""
    # TODO(synk): fold patch formation into the matmul kernel (halo-tiled VMEM-resident
    # input with in-kernel shifted-slice accumulation) to remove the im2col HBM pass.
    N = xp.shape[0]
    C = xp.shape[3]
    cols = []
    for kh in range(k):
        for kw in range(k):
            cols.append(
                xp[:, kh:kh + stride * (Ho - 1) + 1:stride,
                      kw:kw + stride * (Wo - 1) + 1:stride, :])
    p = jnp.stack(cols, axis=3)                          # (N, Ho, Wo, k*k, C)
    return p.reshape(N * Ho * Wo, k * k * C)


def conv4x4_s2(x, weight, bias, act):
    """nn.Conv2d(Cin, Cout, 4, stride=2, padding=1). x:(N,H,W,Cin) NHWC,
    weight:(Cout,Cin,4,4) PyTorch layout, bias:(Cout,)."""
    N, H, W, Cin = x.shape
    Cout = weight.shape[0]
    Ho, Wo = H // 2, W // 2
    xa = _apply_act(x, act)
    xp = jnp.pad(xa, ((0, 0), (1, 1), (1, 1), (0, 0)))
    patches = _extract_patches(xp, 4, 2, Ho, Wo)                 # (N*Ho*Wo, 16*Cin)
    w_mat = jnp.transpose(weight, (2, 3, 1, 0)).reshape(16 * Cin, Cout)
    y = matmul_bias(patches[None], w_mat[None], bias[None])      # (1, M, Cout)
    return y[0].reshape(N, Ho, Wo, Cout)


def convT4x4_s2(x, weight, bias, act):
    """nn.ConvTranspose2d(Cin, Cout, 4, stride=2, padding=1), phase-decomposed
    into 4 parity sub-convolutions (2x2 kernels, no zero-dilation).
    x:(N,H,W,Cin) NHWC, weight:(Cin,Cout,4,4) PyTorch layout, bias:(Cout,)."""
    N, H, W, Cin = x.shape
    Cout = weight.shape[1]
    xa = _apply_act(x, act)

    lhs_phases, rhs_phases = [], []
    for ry in (0, 1):
        for rx in (0, 1):
            # output pixel (2i+ry, 2j+rx) reads input rows {i-1,i} (ry=0) or
            # {i,i+1} (ry=1) and analogously for columns.
            pad_h = (1, 0) if ry == 0 else (0, 1)
            pad_w = (1, 0) if rx == 0 else (0, 1)
            xpp = jnp.pad(xa, ((0, 0), pad_h, pad_w, (0, 0)))     # (N, H+1, W+1, Cin)
            lhs_phases.append(_extract_patches(xpp, 2, 1, H, W))  # (N*H*W, 4*Cin)
            kh_idx = jnp.array([3, 1] if ry == 0 else [2, 0])
            kw_idx = jnp.array([3, 1] if rx == 0 else [2, 0])
            w_sub = weight[:, :, kh_idx, :][:, :, :, kw_idx]      # (Cin, Cout, 2, 2)
            rhs_phases.append(
                jnp.transpose(w_sub, (2, 3, 0, 1)).reshape(4 * Cin, Cout))

    lhs = jnp.stack(lhs_phases, axis=0)                  # (4, N*H*W, 4*Cin)
    rhs = jnp.stack(rhs_phases, axis=0)                  # (4, 4*Cin, Cout)
    b4 = jnp.broadcast_to(bias[None, :], (4, Cout))
    y = matmul_bias(lhs, rhs, b4)                        # (4, N*H*W, Cout) - one call

    y = y.reshape(2, 2, N, H, W, Cout)                   # (ry, rx, n, i, j, c)
    y = jnp.transpose(y, (2, 3, 0, 4, 1, 5))             # (n, i, ry, j, rx, c)
    return y.reshape(N, 2 * H, 2 * W, Cout)


# ----------------------------------------------------------------------------
# Deterministic parameter init (synthetic weights, PyTorch shapes)
# ----------------------------------------------------------------------------
def _init_conv(key, cin, cout):
    k1, k2 = jax.random.split(key)
    w = jax.random.normal(k1, (cout, cin, 4, 4), jnp.float32) * 0.05
    b = jax.random.normal(k2, (cout,), jnp.float32) * 0.05
    return w, b


def _init_convT(key, cin, cout):
    k1, k2 = jax.random.split(key)
    w = jax.random.normal(k1, (cin, cout, 4, 4), jnp.float32) * 0.05
    b = jax.random.normal(k2, (cout,), jnp.float32) * 0.05
    return w, b


# ----------------------------------------------------------------------------
# UnetBlock / UnetGenerator (forward semantics of the PyTorch module)
# ----------------------------------------------------------------------------
def make_unet_block(key, outer_nc, inner_nc, input_nc=None, submodule=None,
                    outermost=False, innermost=False):
    if input_nc is None:
        input_nc = outer_nc
    k_down, k_up = jax.random.split(key)
    dw, db = _init_conv(k_down, input_nc, inner_nc)
    up_in = inner_nc if innermost else inner_nc * 2
    uw, ub = _init_convT(k_up, up_in, outer_nc)

    def forward(x):
        # ---- down path ----
        if outermost:
            d = conv4x4_s2(x, dw, db, act="none")                 # downconv only
        else:
            d = conv4x4_s2(x, dw, db, act="lrelu")                # downrelu + downconv
            if not innermost:
                d = instance_norm(d)                              # downnorm
        # ---- submodule ----
        mid = submodule(d) if submodule is not None else d
        # ---- up path ----
        u = convT4x4_s2(mid, uw, ub, act="relu")                  # uprelu + upconv
        if outermost:
            return u                                              # with_tanh=False
        u = instance_norm(u)                                      # upnorm
        return jnp.concatenate([x, u], axis=-1)                   # cat([x, model(x)])

    return forward


def make_unet_generator(key, input_nc, output_nc, num_downs, ngf=64):
    keys = jax.random.split(key, num_downs + 1)
    ki = iter(list(keys))
    blk = make_unet_block(next(ki), ngf * 8, ngf * 8, innermost=True)
    for _ in range(num_downs - 5):
        blk = make_unet_block(next(ki), ngf * 8, ngf * 8, submodule=blk)
    blk = make_unet_block(next(ki), ngf * 4, ngf * 8, submodule=blk)
    blk = make_unet_block(next(ki), ngf * 2, ngf * 4, submodule=blk)
    blk = make_unet_block(next(ki), ngf, ngf * 2, submodule=blk)
    blk = make_unet_block(next(ki), output_nc, ngf, input_nc=input_nc,
                          submodule=blk, outermost=True)
    return blk


# ----------------------------------------------------------------------------
if __name__ == "__main__":
    key = jax.random.PRNGKey(0)
    k_params, k_x = jax.random.split(key)

    # small instantiation: num_downs=5 requires spatial = 2^5 = 32
    N, IN_C, OUT_C, HW, NGF, NUM_DOWNS = 2, 3, 3, 32, 8, 5
    x_nchw = jax.random.normal(k_x, (N, IN_C, HW, HW), jnp.float32)

    unet = make_unet_generator(k_params, input_nc=IN_C, output_nc=OUT_C,
                               num_downs=NUM_DOWNS, ngf=NGF)

    def run(x):
        xh = jnp.transpose(x, (0, 2, 3, 1))        # NCHW -> NHWC
        yh = unet(xh)
        return jnp.transpose(yh, (0, 3, 1, 2))     # NHWC -> NCHW

    y = jax.jit(run)(x_nchw)
    jax.block_until_ready(y)
    assert y.shape == (N, OUT_C, HW, HW), y.shape
    assert y.dtype == jnp.float32
    print("KERNEL_OK")
</pallas_src>

<mosaic_0001>
module attributes {stable_mosaic.version = 11 : i64} {
  func.func @_matmul_bias_kernel(%arg0: i32, %arg1: i32, %arg2: i32, %arg3: i32, %arg4: memref<1x256x128xf32, #tpu.memory_space<vmem>>, %arg5: memref<1x128x128xf32, #tpu.memory_space<vmem>>, %arg6: memref<1x1x128xf32, #tpu.memory_space<vmem>>, %arg7: memref<1x256x128xf32, #tpu.memory_space<vmem>>, %arg8: memref<256x128xf32, #tpu.memory_space<vmem>>) attributes {dimension_semantics = [#tpu.dimension_semantics<parallel>, #tpu.dimension_semantics<parallel>, #tpu.dimension_semantics<parallel>, #tpu.dimension_semantics<arbitrary>], iteration_bounds = array<i64: 1, 2, 1, 1>, scalar_prefetch = 0 : i64, scratch_operands = 1 : i64, tpu.core_type = #tpu.core_type<tc>, window_params = [{transform_indices = @transform_0, window_bounds = array<i64: 1, 256, 128>}, {transform_indices = @transform_1, window_bounds = array<i64: 1, 128, 128>}, {transform_indices = @transform_2, window_bounds = array<i64: 1, 1, 128>}, {transform_indices = @transform_3, window_bounds = array<i64: 1, 256, 128>}]} {
    %c0_i32 = arith.constant 0 : i32
    %0 = arith.cmpi eq, %arg3, %c0_i32 : i32
    %1 = arith.extui %0 : i1 to i32
    %c0_i32_0 = arith.constant 0 : i32
    %2 = arith.cmpi ne, %1, %c0_i32_0 : i32
    scf.if %2 {
      %cst_12 = arith.constant 0.000000e+00 : f32
      %14 = vector.broadcast %cst_12 : f32 to vector<256x128xf32>
      %c0_13 = arith.constant 0 : index
      %c0_14 = arith.constant 0 : index
      %15 = vector.load %arg8[%c0_13, %c0_14] : memref<256x128xf32, #tpu.memory_space<vmem>>, vector<256x128xf32>
      tpu.vector_store %arg8[%c0_13, %c0_14], %14 {strides = array<i32>} : memref<256x128xf32, #tpu.memory_space<vmem>>, vector<256x128xf32>,
    } else {
    }
    %c0 = arith.constant 0 : index
    %c0_1 = arith.constant 0 : index
    %3 = vector.load %arg8[%c0, %c0_1] : memref<256x128xf32, #tpu.memory_space<vmem>>, vector<256x128xf32>
    %c0_2 = arith.constant 0 : index
    %c0_3 = arith.constant 0 : index
    %c0_4 = arith.constant 0 : index
    %4 = vector.load %arg4[%c0_2, %c0_3, %c0_4] : memref<1x256x128xf32, #tpu.memory_space<vmem>>, vector<1x256x128xf32>
    %5 = vector.shape_cast %4 : vector<1x256x128xf32> to vector<256x128xf32>
    %c0_5 = arith.constant 0 : index
    %c0_6 = arith.constant 0 : index
    %c0_7 = arith.constant 0 : index
    %6 = vector.load %arg5[%c0_5, %c0_6, %c0_7] : memref<1x128x128xf32, #tpu.memory_space<vmem>>, vector<1x128x128xf32>
    %7 = vector.shape_cast %6 : vector<1x128x128xf32> to vector<128x128xf32>
    %cst = arith.constant dense<0.000000e+00> : vector<256x128xf32>
    %8 = tpu.matmul %5, %7, %cst {dimension_numbers = #tpu.dot_dimension_numbers<[1], [0], [0], [1], [0, 0, 1, 1], [], []>} : vector<256x128xf32>, vector<128x128xf32>, vector<256x128xf32> -> vector<256x128xf32>
    %9 = arith.addf %3, %8 : vector<256x128xf32>
    %c0_8 = arith.constant 0 : index
    %c0_9 = arith.constant 0 : index
    %10 = vector.load %arg8[%c0_8, %c0_9] : memref<256x128xf32, #tpu.memory_space<vmem>>, vector<256x128xf32>
    tpu.vector_store %arg8[%c0_8, %c0_9], %9 {strides = array<i32>} : memref<256x128xf32, #tpu.memory_space<vmem>>, vector<256x128xf32>,
    %c0_i32_10 = arith.constant 0 : i32
    %11 = arith.cmpi eq, %arg3, %c0_i32_10 : i32
    %12 = arith.extui %11 : i1 to i32
    %c0_i32_11 = arith.constant 0 : i32
    %13 = arith.cmpi ne, %12, %c0_i32_11 : i32
    scf.if %13 {
      %c0_12 = arith.constant 0 : index
      %c0_13 = arith.constant 0 : index
      %14 = vector.load %arg8[%c0_12, %c0_13] : memref<256x128xf32, #tpu.memory_space<vmem>>, vector<256x128xf32>
      %c0_14 = arith.constant 0 : index
      %c0_15 = arith.constant 0 : index
      %c0_16 = arith.constant 0 : index
      %15 = vector.load %arg6[%c0_14, %c0_15, %c0_16] : memref<1x1x128xf32, #tpu.memory_space<vmem>>, vector<1x1x128xf32>
      %16 = vector.shape_cast %15 : vector<1x1x128xf32> to vector<1x128xf32>
      %17 = vector.broadcast %16 : vector<1x128xf32> to vector<256x128xf32>
      %18 = arith.addf %14, %17 : vector<256x128xf32>
      %c0_17 = arith.constant 0 : index
      %c0_18 = arith.constant 0 : index
      %c0_19 = arith.constant 0 : index
      %19 = vector.load %arg7[%c0_17, %c0_18, %c0_19] : memref<1x256x128xf32, #tpu.memory_space<vmem>>, vector<1x256x128xf32>
      %20 = vector.shape_cast %19 : vector<1x256x128xf32> to vector<256x128xf32>
      %21 = vector.shape_cast %18 : vector<256x128xf32> to vector<1x256x128xf32>
      tpu.vector_store %arg7[%c0_17, %c0_18, %c0_19], %21 {strides = array<i32>} : memref<1x256x128xf32, #tpu.memory_space<vmem>>, vector<1x256x128xf32>,
    } else {
    }
    return
  }
  func.func @transform_0(%arg0: i32, %arg1: i32, %arg2: i32, %arg3: i32) -> (i32, i32, i32) {
    %c0_i32 = arith.constant 0 : i32
    return %arg0, %arg1, %arg3 : i32, i32, i32
  }
  func.func @transform_1(%arg0: i32, %arg1: i32, %arg2: i32, %arg3: i32) -> (i32, i32, i32) {
    %c0_i32 = arith.constant 0 : i32
    return %arg0, %arg3, %arg2 : i32, i32, i32
  }
  func.func @transform_2(%arg0: i32, %arg1: i32, %arg2: i32, %arg3: i32) -> (i32, i32, i32) {
    %c0_i32 = arith.constant 0 : i32
    %c0_i32_0 = arith.constant 0 : i32
    return %arg0, %c0_i32, %arg2 : i32, i32, i32
  }
  func.func @transform_3(%arg0: i32, %arg1: i32, %arg2: i32, %arg3: i32) -> (i32, i32, i32) {
    %c0_i32 = arith.constant 0 : i32
    return %arg0, %arg1, %arg2 : i32, i32, i32
  }
}

module attributes {stable_mosaic.version = 11 : i64} {
  func.func @_matmul_bias_kernel(%arg0: i32, %arg1: i32, %arg2: i32, %arg3: i32, %arg4: memref<1x128x128xf32, #tpu.memory_space<vmem>>, %arg5: memref<1x128x128xf32, #tpu.memory_space<vmem>>, %arg6: memref<1x1x128xf32, #tpu.memory_space<vmem>>, %arg7: memref<1x128x128xf32, #tpu.memory_space<vmem>>, %arg8: memref<128x128xf32, #tpu.memory_space<vmem>>) attributes {dimension_semantics = [#tpu.dimension_semantics<parallel>, #tpu.dimension_semantics<parallel>, #tpu.dimension_semantics<parallel>, #tpu.dimension_semantics<arbitrary>], iteration_bounds = array<i64: 1, 1, 1, 1>, scalar_prefetch = 0 : i64, scratch_operands = 1 : i64, tpu.core_type = #tpu.core_type<tc>, window_params = [{transform_indices = @transform_0, window_bounds = array<i64: 1, 128, 128>}, {transform_indices = @transform_1, window_bounds = array<i64: 1, 128, 128>}, {transform_indices = @transform_2, window_bounds = array<i64: 1, 1, 128>}, {transform_indices = @transform_3, window_bounds = array<i64: 1, 128, 128>}]} {
    %c0_i32 = arith.constant 0 : i32
    %0 = arith.cmpi eq, %arg3, %c0_i32 : i32
    %1 = arith.extui %0 : i1 to i32
    %c0_i32_0 = arith.constant 0 : i32
    %2 = arith.cmpi ne, %1, %c0_i32_0 : i32
    scf.if %2 {
      %cst_12 = arith.constant 0.000000e+00 : f32
      %14 = vector.broadcast %cst_12 : f32 to vector<128x128xf32>
      %c0_13 = arith.constant 0 : index
      %c0_14 = arith.constant 0 : index
      %15 = vector.load %arg8[%c0_13, %c0_14] : memref<128x128xf32, #tpu.memory_space<vmem>>, vector<128x128xf32>
      tpu.vector_store %arg8[%c0_13, %c0_14], %14 {strides = array<i32>} : memref<128x128xf32, #tpu.memory_space<vmem>>, vector<128x128xf32>,
    } else {
    }
    %c0 = arith.constant 0 : index
    %c0_1 = arith.constant 0 : index
    %3 = vector.load %arg8[%c0, %c0_1] : memref<128x128xf32, #tpu.memory_space<vmem>>, vector<128x128xf32>
    %c0_2 = arith.constant 0 : index
    %c0_3 = arith.constant 0 : index
    %c0_4 = arith.constant 0 : index
    %4 = vector.load %arg4[%c0_2, %c0_3, %c0_4] : memref<1x128x128xf32, #tpu.memory_space<vmem>>, vector<1x128x128xf32>
    %5 = vector.shape_cast %4 : vector<1x128x128xf32> to vector<128x128xf32>
    %c0_5 = arith.constant 0 : index
    %c0_6 = arith.constant 0 : index
    %c0_7 = arith.constant 0 : index
    %6 = vector.load %arg5[%c0_5, %c0_6, %c0_7] : memref<1x128x128xf32, #tpu.memory_space<vmem>>, vector<1x128x128xf32>
    %7 = vector.shape_cast %6 : vector<1x128x128xf32> to vector<128x128xf32>
    %cst = arith.constant dense<0.000000e+00> : vector<128x128xf32>
    %8 = tpu.matmul %5, %7, %cst {dimension_numbers = #tpu.dot_dimension_numbers<[1], [0], [0], [1], [0, 0, 1, 1], [], []>} : vector<128x128xf32>, vector<128x128xf32>, vector<128x128xf32> -> vector<128x128xf32>
    %9 = arith.addf %3, %8 : vector<128x128xf32>
    %c0_8 = arith.constant 0 : index
    %c0_9 = arith.constant 0 : index
    %10 = vector.load %arg8[%c0_8, %c0_9] : memref<128x128xf32, #tpu.memory_space<vmem>>, vector<128x128xf32>
    tpu.vector_store %arg8[%c0_8, %c0_9], %9 {strides = array<i32>} : memref<128x128xf32, #tpu.memory_space<vmem>>, vector<128x128xf32>,
    %c0_i32_10 = arith.constant 0 : i32
    %11 = arith.cmpi eq, %arg3, %c0_i32_10 : i32
    %12 = arith.extui %11 : i1 to i32
    %c0_i32_11 = arith.constant 0 : i32
    %13 = arith.cmpi ne, %12, %c0_i32_11 : i32
    scf.if %13 {
      %c0_12 = arith.constant 0 : index
      %c0_13 = arith.constant 0 : index
      %14 = vector.load %arg8[%c0_12, %c0_13] : memref<128x128xf32, #tpu.memory_space<vmem>>, vector<128x128xf32>
      %c0_14 = arith.constant 0 : index
      %c0_15 = arith.constant 0 : index
      %c0_16 = arith.constant 0 : index
      %15 = vector.load %arg6[%c0_14, %c0_15, %c0_16] : memref<1x1x128xf32, #tpu.memory_space<vmem>>, vector<1x1x128xf32>
      %16 = vector.shape_cast %15 : vector<1x1x128xf32> to vector<1x128xf32>
      %17 = vector.broadcast %16 : vector<1x128xf32> to vector<128x128xf32>
      %18 = arith.addf %14, %17 : vector<128x128xf32>
      %c0_17 = arith.constant 0 : index
      %c0_18 = arith.constant 0 : index
      %c0_19 = arith.constant 0 : index
      %19 = vector.load %arg7[%c0_17, %c0_18, %c0_19] : memref<1x128x128xf32, #tpu.memory_space<vmem>>, vector<1x128x128xf32>
      %20 = vector.shape_cast %19 : vector<1x128x128xf32> to vector<128x128xf32>
      %21 = vector.shape_cast %18 : vector<128x128xf32> to vector<1x128x128xf32>
      tpu.vector_store %arg7[%c0_17, %c0_18, %c0_19], %21 {strides = array<i32>} : memref<1x128x128xf32, #tpu.memory_space<vmem>>, vector<1x128x128xf32>,
    } else {
    }
    return
  }
  func.func @transform_0(%arg0: i32, %arg1: i32, %arg2: i32, %arg3: i32) -> (i32, i32, i32) {
    %c0_i32 = arith.constant 0 : i32
    return %arg0, %arg1, %arg3 : i32, i32, i32
  }
  func.func @transform_1(%arg0: i32, %arg1: i32, %arg2: i32, %arg3: i32) -> (i32, i32, i32) {
    %c0_i32 = arith.constant 0 : i32
    return %arg0, %arg3, %arg2 : i32, i32, i32
  }
  func.func @transform_2(%arg0: i32, %arg1: i32, %arg2: i32, %arg3: i32) -> (i32, i32, i32) {
    %c0_i32 = arith.constant 0 : i32
    %c0_i32_0 = arith.constant 0 : i32
    return %arg0, %c0_i32, %arg2 : i32, i32, i32
  }
  func.func @transform_3(%arg0: i32, %arg1: i32, %arg2: i32, %arg3: i32) -> (i32, i32, i32) {
    %c0_i32 = arith.constant 0 : i32
    return %arg0, %arg1, %arg2 : i32, i32, i32
  }
}

module attributes {stable_mosaic.version = 11 : i64} {
  func.func @_instance_norm_kernel(%arg0: i32, %arg1: memref<1x64x16xf32, #tpu.memory_space<vmem>>, %arg2: memref<1x64x16xf32, #tpu.memory_space<vmem>>) attributes {dimension_semantics = [#tpu.dimension_semantics<parallel>], iteration_bounds = array<i64: 2>, scalar_prefetch = 0 : i64, scratch_operands = 0 : i64, tpu.core_type = #tpu.core_type<tc>, window_params = [{transform_indices = @transform_0, window_bounds = array<i64: 1, 64, 16>}, {transform_indices = @transform_1, window_bounds = array<i64: 1, 64, 16>}]} {
    %c0 = arith.constant 0 : index
    %c0_0 = arith.constant 0 : index
    %c0_1 = arith.constant 0 : index
    %0 = vector.load %arg1[%c0, %c0_0, %c0_1] : memref<1x64x16xf32, #tpu.memory_space<vmem>>, vector<1x64x16xf32>
    %1 = vector.shape_cast %0 : vector<1x64x16xf32> to vector<64x16xf32>
    %cst = arith.constant dense<0.000000e+00> : vector<16xf32>
    %2 = vector.multi_reduction <add>, %1, %cst [0] : vector<64x16xf32> to vector<16xf32>
    %3 = vector.shape_cast %2 : vector<16xf32> to vector<1x16xf32>
    %cst_2 = arith.constant 1.562500e-02 : f32
    %4 = vector.broadcast %cst_2 : f32 to vector<1x16xf32>
    %5 = arith.mulf %3, %4 : vector<1x16xf32>
    %6 = arith.mulf %1, %1 : vector<64x16xf32>
    %cst_3 = arith.constant dense<0.000000e+00> : vector<16xf32>
    %7 = vector.multi_reduction <add>, %6, %cst_3 [0] : vector<64x16xf32> to vector<16xf32>
    %8 = vector.shape_cast %7 : vector<16xf32> to vector<1x16xf32>
    %cst_4 = arith.constant 1.562500e-02 : f32
    %9 = vector.broadcast %cst_4 : f32 to vector<1x16xf32>
    %10 = arith.mulf %8, %9 : vector<1x16xf32>
    %11 = arith.mulf %5, %5 : vector<1x16xf32>
    %12 = arith.subf %10, %11 : vector<1x16xf32>
    %cst_5 = arith.constant 0.000000e+00 : f32
    %13 = vector.broadcast %cst_5 : f32 to vector<1x16xf32>
    %14 = arith.maximumf %12, %13 : vector<1x16xf32>
    %15 = vector.broadcast %5 : vector<1x16xf32> to vector<64x16xf32>
    %16 = arith.subf %1, %15 : vector<64x16xf32>
    %cst_6 = arith.constant 9.99999974E-6 : f32
    %17 = vector.broadcast %cst_6 : f32 to vector<1x16xf32>
    %18 = arith.addf %14, %17 : vector<1x16xf32>
    %19 = math.rsqrt %18 : vector<1x16xf32>
    %20 = vector.broadcast %19 : vector<1x16xf32> to vector<64x16xf32>
    %21 = arith.mulf %16, %20 : vector<64x16xf32>
    %c0_7 = arith.constant 0 : index
    %c0_8 = arith.constant 0 : index
    %c0_9 = arith.constant 0 : index
    %22 = vector.load %arg2[%c0_7, %c0_8, %c0_9] : memref<1x64x16xf32, #tpu.memory_space<vmem>>, vector<1x64x16xf32>
    %23 = vector.shape_cast %22 : vector<1x64x16xf32> to vector<64x16xf32>
    %24 = vector.shape_cast %21 : vector<64x16xf32> to vector<1x64x16xf32>
    tpu.vector_store %arg2[%c0_7, %c0_8, %c0_9], %24 {strides = array<i32>} : memref<1x64x16xf32, #tpu.memory_space<vmem>>, vector<1x64x16xf32>,
    return
  }
  func.func @transform_0(%arg0: i32) -> (i32, i32, i32) {
    %c0_i32 = arith.constant 0 : i32
    %c0_i32_0 = arith.constant 0 : i32
    %c0_i32_1 = arith.constant 0 : i32
    return %arg0, %c0_i32, %c0_i32_0 : i32, i32, i32
  }
  func.func @transform_1(%arg0: i32) -> (i32, i32, i32) {
    %c0_i32 = arith.constant 0 : i32
    %c0_i32_0 = arith.constant 0 : i32
    %c0_i32_1 = arith.constant 0 : i32
    return %arg0, %c0_i32, %c0_i32_0 : i32, i32, i32
  }
}

module attributes {stable_mosaic.version = 11 : i64} {
  func.func @_matmul_bias_kernel(%arg0: i32, %arg1: i32, %arg2: i32, %arg3: i32, %arg4: memref<1x32x256xf32, #tpu.memory_space<vmem>>, %arg5: memref<1x256x128xf32, #tpu.memory_space<vmem>>, %arg6: memref<1x1x128xf32, #tpu.memory_space<vmem>>, %arg7: memref<1x32x128xf32, #tpu.memory_space<vmem>>, %arg8: memref<32x128xf32, #tpu.memory_space<vmem>>) attributes {dimension_semantics = [#tpu.dimension_semantics<parallel>, #tpu.dimension_semantics<parallel>, #tpu.dimension_semantics<parallel>, #tpu.dimension_semantics<arbitrary>], iteration_bounds = array<i64: 1, 1, 1, 1>, scalar_prefetch = 0 : i64, scratch_operands = 1 : i64, tpu.core_type = #tpu.core_type<tc>, window_params = [{transform_indices = @transform_0, window_bounds = array<i64: 1, 32, 256>}, {transform_indices = @transform_1, window_bounds = array<i64: 1, 256, 128>}, {transform_indices = @transform_2, window_bounds = array<i64: 1, 1, 128>}, {transform_indices = @transform_3, window_bounds = array<i64: 1, 32, 128>}]} {
    %c0_i32 = arith.constant 0 : i32
    %0 = arith.cmpi eq, %arg3, %c0_i32 : i32
    %1 = arith.extui %0 : i1 to i32
    %c0_i32_0 = arith.constant 0 : i32
    %2 = arith.cmpi ne, %1, %c0_i32_0 : i32
    scf.if %2 {
      %cst_12 = arith.constant 0.000000e+00 : f32
      %14 = vector.broadcast %cst_12 : f32 to vector<32x128xf32>
      %c0_13 = arith.constant 0 : index
      %c0_14 = arith.constant 0 : index
      %15 = vector.load %arg8[%c0_13, %c0_14] : memref<32x128xf32, #tpu.memory_space<vmem>>, vector<32x128xf32>
      tpu.vector_store %arg8[%c0_13, %c0_14], %14 {strides = array<i32>} : memref<32x128xf32, #tpu.memory_space<vmem>>, vector<32x128xf32>,
    } else {
    }
    %c0 = arith.constant 0 : index
    %c0_1 = arith.constant 0 : index
    %3 = vector.load %arg8[%c0, %c0_1] : memref<32x128xf32, #tpu.memory_space<vmem>>, vector<32x128xf32>
    %c0_2 = arith.constant 0 : index
    %c0_3 = arith.constant 0 : index
    %c0_4 = arith.constant 0 : index
    %4 = vector.load %arg4[%c0_2, %c0_3, %c0_4] : memref<1x32x256xf32, #tpu.memory_space<vmem>>, vector<1x32x256xf32>
    %5 = vector.shape_cast %4 : vector<1x32x256xf32> to vector<32x256xf32>
    %c0_5 = arith.constant 0 : index
    %c0_6 = arith.constant 0 : index
    %c0_7 = arith.constant 0 : index
    %6 = vector.load %arg5[%c0_5, %c0_6, %c0_7] : memref<1x256x128xf32, #tpu.memory_space<vmem>>, vector<1x256x128xf32>
    %7 = vector.shape_cast %6 : vector<1x256x128xf32> to vector<256x128xf32>
    %cst = arith.constant dense<0.000000e+00> : vector<32x128xf32>
    %8 = tpu.matmul %5, %7, %cst {dimension_numbers = #tpu.dot_dimension_numbers<[1], [0], [0], [1], [0, 0, 1, 1], [], []>} : vector<32x256xf32>, vector<256x128xf32>, vector<32x128xf32> -> vector<32x128xf32>
    %9 = arith.addf %3, %8 : vector<32x128xf32>
    %c0_8 = arith.constant 0 : index
    %c0_9 = arith.constant 0 : index
    %10 = vector.load %arg8[%c0_8, %c0_9] : memref<32x128xf32, #tpu.memory_space<vmem>>, vector<32x128xf32>
    tpu.vector_store %arg8[%c0_8, %c0_9], %9 {strides = array<i32>} : memref<32x128xf32, #tpu.memory_space<vmem>>, vector<32x128xf32>,
    %c0_i32_10 = arith.constant 0 : i32
    %11 = arith.cmpi eq, %arg3, %c0_i32_10 : i32
    %12 = arith.extui %11 : i1 to i32
    %c0_i32_11 = arith.constant 0 : i32
    %13 = arith.cmpi ne, %12, %c0_i32_11 : i32
    scf.if %13 {
      %c0_12 = arith.constant 0 : index
      %c0_13 = arith.constant 0 : index
      %14 = vector.load %arg8[%c0_12, %c0_13] : memref<32x128xf32, #tpu.memory_space<vmem>>, vector<32x128xf32>
      %c0_14 = arith.constant 0 : index
      %c0_15 = arith.constant 0 : index
      %c0_16 = arith.constant 0 : index
      %15 = vector.load %arg6[%c0_14, %c0_15, %c0_16] : memref<1x1x128xf32, #tpu.memory_space<vmem>>, vector<1x1x128xf32>
      %16 = vector.shape_cast %15 : vector<1x1x128xf32> to vector<1x128xf32>
      %17 = vector.broadcast %16 : vector<1x128xf32> to vector<32x128xf32>
      %18 = arith.addf %14, %17 : vector<32x128xf32>
      %c0_17 = arith.constant 0 : index
      %c0_18 = arith.constant 0 : index
      %c0_19 = arith.constant 0 : index
      %19 = vector.load %arg7[%c0_17, %c0_18, %c0_19] : memref<1x32x128xf32, #tpu.memory_space<vmem>>, vector<1x32x128xf32>
      %20 = vector.shape_cast %19 : vector<1x32x128xf32> to vector<32x128xf32>
      %21 = vector.shape_cast %18 : vector<32x128xf32> to vector<1x32x128xf32>
      tpu.vector_store %arg7[%c0_17, %c0_18, %c0_19], %21 {strides = array<i32>} : memref<1x32x128xf32, #tpu.memory_space<vmem>>, vector<1x32x128xf32>,
    } else {
    }
    return
  }
  func.func @transform_0(%arg0: i32, %arg1: i32, %arg2: i32, %arg3: i32) -> (i32, i32, i32) {
    %c0_i32 = arith.constant 0 : i32
    return %arg0, %arg1, %arg3 : i32, i32, i32
  }
  func.func @transform_1(%arg0: i32, %arg1: i32, %arg2: i32, %arg3: i32) -> (i32, i32, i32) {
    %c0_i32 = arith.constant 0 : i32
    return %arg0, %arg3, %arg2 : i32, i32, i32
  }
  func.func @transform_2(%arg0: i32, %arg1: i32, %arg2: i32, %arg3: i32) -> (i32, i32, i32) {
    %c0_i32 = arith.constant 0 : i32
    %c0_i32_0 = arith.constant 0 : i32
    return %arg0, %c0_i32, %arg2 : i32, i32, i32
  }
  func.func @transform_3(%arg0: i32, %arg1: i32, %arg2: i32, %arg3: i32) -> (i32, i32, i32) {
    %c0_i32 = arith.constant 0 : i32
    return %arg0, %arg1, %arg2 : i32, i32, i32
  }
}

module attributes {stable_mosaic.version = 11 : i64} {
  func.func @_instance_norm_kernel(%arg0: i32, %arg1: memref<1x16x32xf32, #tpu.memory_space<vmem>>, %arg2: memref<1x16x32xf32, #tpu.memory_space<vmem>>) attributes {dimension_semantics = [#tpu.dimension_semantics<parallel>], iteration_bounds = array<i64: 2>, scalar_prefetch = 0 : i64, scratch_operands = 0 : i64, tpu.core_type = #tpu.core_type<tc>, window_params = [{transform_indices = @transform_0, window_bounds = array<i64: 1, 16, 32>}, {transform_indices = @transform_1, window_bounds = array<i64: 1, 16, 32>}]} {
    %c0 = arith.constant 0 : index
    %c0_0 = arith.constant 0 : index
    %c0_1 = arith.constant 0 : index
    %0 = vector.load %arg1[%c0, %c0_0, %c0_1] : memref<1x16x32xf32, #tpu.memory_space<vmem>>, vector<1x16x32xf32>
    %1 = vector.shape_cast %0 : vector<1x16x32xf32> to vector<16x32xf32>
    %cst = arith.constant dense<0.000000e+00> : vector<32xf32>
    %2 = vector.multi_reduction <add>, %1, %cst [0] : vector<16x32xf32> to vector<32xf32>
    %3 = vector.shape_cast %2 : vector<32xf32> to vector<1x32xf32>
    %cst_2 = arith.constant 6.250000e-02 : f32
    %4 = vector.broadcast %cst_2 : f32 to vector<1x32xf32>
    %5 = arith.mulf %3, %4 : vector<1x32xf32>
    %6 = arith.mulf %1, %1 : vector<16x32xf32>
    %cst_3 = arith.constant dense<0.000000e+00> : vector<32xf32>
    %7 = vector.multi_reduction <add>, %6, %cst_3 [0] : vector<16x32xf32> to vector<32xf32>
    %8 = vector.shape_cast %7 : vector<32xf32> to vector<1x32xf32>
    %cst_4 = arith.constant 6.250000e-02 : f32
    %9 = vector.broadcast %cst_4 : f32 to vector<1x32xf32>
    %10 = arith.mulf %8, %9 : vector<1x32xf32>
    %11 = arith.mulf %5, %5 : vector<1x32xf32>
    %12 = arith.subf %10, %11 : vector<1x32xf32>
    %cst_5 = arith.constant 0.000000e+00 : f32
    %13 = vector.broadcast %cst_5 : f32 to vector<1x32xf32>
    %14 = arith.maximumf %12, %13 : vector<1x32xf32>
    %15 = vector.broadcast %5 : vector<1x32xf32> to vector<16x32xf32>
    %16 = arith.subf %1, %15 : vector<16x32xf32>
    %cst_6 = arith.constant 9.99999974E-6 : f32
    %17 = vector.broadcast %cst_6 : f32 to vector<1x32xf32>
    %18 = arith.addf %14, %17 : vector<1x32xf32>
    %19 = math.rsqrt %18 : vector<1x32xf32>
    %20 = vector.broadcast %19 : vector<1x32xf32> to vector<16x32xf32>
    %21 = arith.mulf %16, %20 : vector<16x32xf32>
    %c0_7 = arith.constant 0 : index
    %c0_8 = arith.constant 0 : index
    %c0_9 = arith.constant 0 : index
    %22 = vector.load %arg2[%c0_7, %c0_8, %c0_9] : memref<1x16x32xf32, #tpu.memory_space<vmem>>, vector<1x16x32xf32>
    %23 = vector.shape_cast %22 : vector<1x16x32xf32> to vector<16x32xf32>
    %24 = vector.shape_cast %21 : vector<16x32xf32> to vector<1x16x32xf32>
    tpu.vector_store %arg2[%c0_7, %c0_8, %c0_9], %24 {strides = array<i32>} : memref<1x16x32xf32, #tpu.memory_space<vmem>>, vector<1x16x32xf32>,
    return
  }
  func.func @transform_0(%arg0: i32) -> (i32, i32, i32) {
    %c0_i32 = arith.constant 0 : i32
    %c0_i32_0 = arith.constant 0 : i32
    %c0_i32_1 = arith.constant 0 : i32
    return %arg0, %c0_i32, %c0_i32_0 : i32, i32, i32
  }
  func.func @transform_1(%arg0: i32) -> (i32, i32, i32) {
    %c0_i32 = arith.constant 0 : i32
    %c0_i32_0 = arith.constant 0 : i32
    %c0_i32_1 = arith.constant 0 : i32
    return %arg0, %c0_i32, %c0_i32_0 : i32, i32, i32
  }
}

module attributes {stable_mosaic.version = 11 : i64} {
  func.func @_instance_norm_kernel(%arg0: i32, %arg1: memref<1x4x64xf32, #tpu.memory_space<vmem>>, %arg2: memref<1x4x64xf32, #tpu.memory_space<vmem>>) attributes {dimension_semantics = [#tpu.dimension_semantics<parallel>], iteration_bounds = array<i64: 2>, scalar_prefetch = 0 : i64, scratch_operands = 0 : i64, tpu.core_type = #tpu.core_type<tc>, window_params = [{transform_indices = @transform_0, window_bounds = array<i64: 1, 4, 64>}, {transform_indices = @transform_1, window_bounds = array<i64: 1, 4, 64>}]} {
    %c0 = arith.constant 0 : index
    %c0_0 = arith.constant 0 : index
    %c0_1 = arith.constant 0 : index
    %0 = vector.load %arg1[%c0, %c0_0, %c0_1] : memref<1x4x64xf32, #tpu.memory_space<vmem>>, vector<1x4x64xf32>
    %1 = vector.shape_cast %0 : vector<1x4x64xf32> to vector<4x64xf32>
    %cst = arith.constant dense<0.000000e+00> : vector<64xf32>
    %2 = vector.multi_reduction <add>, %1, %cst [0] : vector<4x64xf32> to vector<64xf32>
    %3 = vector.shape_cast %2 : vector<64xf32> to vector<1x64xf32>
    %cst_2 = arith.constant 2.500000e-01 : f32
    %4 = vector.broadcast %cst_2 : f32 to vector<1x64xf32>
    %5 = arith.mulf %3, %4 : vector<1x64xf32>
    %6 = arith.mulf %1, %1 : vector<4x64xf32>
    %cst_3 = arith.constant dense<0.000000e+00> : vector<64xf32>
    %7 = vector.multi_reduction <add>, %6, %cst_3 [0] : vector<4x64xf32> to vector<64xf32>
    %8 = vector.shape_cast %7 : vector<64xf32> to vector<1x64xf32>
    %cst_4 = arith.constant 2.500000e-01 : f32
    %9 = vector.broadcast %cst_4 : f32 to vector<1x64xf32>
    %10 = arith.mulf %8, %9 : vector<1x64xf32>
    %11 = arith.mulf %5, %5 : vector<1x64xf32>
    %12 = arith.subf %10, %11 : vector<1x64xf32>
    %cst_5 = arith.constant 0.000000e+00 : f32
    %13 = vector.broadcast %cst_5 : f32 to vector<1x64xf32>
    %14 = arith.maximumf %12, %13 : vector<1x64xf32>
    %15 = vector.broadcast %5 : vector<1x64xf32> to vector<4x64xf32>
    %16 = arith.subf %1, %15 : vector<4x64xf32>
    %cst_6 = arith.constant 9.99999974E-6 : f32
    %17 = vector.broadcast %cst_6 : f32 to vector<1x64xf32>
    %18 = arith.addf %14, %17 : vector<1x64xf32>
    %19 = math.rsqrt %18 : vector<1x64xf32>
    %20 = vector.broadcast %19 : vector<1x64xf32> to vector<4x64xf32>
    %21 = arith.mulf %16, %20 : vector<4x64xf32>
    %c0_7 = arith.constant 0 : index
    %c0_8 = arith.constant 0 : index
    %c0_9 = arith.constant 0 : index
    %22 = vector.load %arg2[%c0_7, %c0_8, %c0_9] : memref<1x4x64xf32, #tpu.memory_space<vmem>>, vector<1x4x64xf32>
    %23 = vector.shape_cast %22 : vector<1x4x64xf32> to vector<4x64xf32>
    %24 = vector.shape_cast %21 : vector<4x64xf32> to vector<1x4x64xf32>
    tpu.vector_store %arg2[%c0_7, %c0_8, %c0_9], %24 {strides = array<i32>} : memref<1x4x64xf32, #tpu.memory_space<vmem>>, vector<1x4x64xf32>,
    return
  }
  func.func @transform_0(%arg0: i32) -> (i32, i32, i32) {
    %c0_i32 = arith.constant 0 : i32
    %c0_i32_0 = arith.constant 0 : i32
    %c0_i32_1 = arith.constant 0 : i32
    return %arg0, %c0_i32, %c0_i32_0 : i32, i32, i32
  }
  func.func @transform_1(%arg0: i32) -> (i32, i32, i32) {
    %c0_i32 = arith.constant 0 : i32
    %c0_i32_0 = arith.constant 0 : i32
    %c0_i32_1 = arith.constant 0 : i32
    return %arg0, %c0_i32, %c0_i32_0 : i32, i32, i32
  }
}

module attributes {stable_mosaic.version = 11 : i64} {
  func.func @_matmul_bias_kernel(%arg0: i32, %arg1: i32, %arg2: i32, %arg3: i32, %arg4: memref<1x8x512xf32, #tpu.memory_space<vmem>>, %arg5: memref<1x512x128xf32, #tpu.memory_space<vmem>>, %arg6: memref<1x1x128xf32, #tpu.memory_space<vmem>>, %arg7: memref<1x8x128xf32, #tpu.memory_space<vmem>>, %arg8: memref<8x128xf32, #tpu.memory_space<vmem>>) attributes {dimension_semantics = [#tpu.dimension_semantics<parallel>, #tpu.dimension_semantics<parallel>, #tpu.dimension_semantics<parallel>, #tpu.dimension_semantics<arbitrary>], iteration_bounds = array<i64: 1, 1, 1, 1>, scalar_prefetch = 0 : i64, scratch_operands = 1 : i64, tpu.core_type = #tpu.core_type<tc>, window_params = [{transform_indices = @transform_0, window_bounds = array<i64: 1, 8, 512>}, {transform_indices = @transform_1, window_bounds = array<i64: 1, 512, 128>}, {transform_indices = @transform_2, window_bounds = array<i64: 1, 1, 128>}, {transform_indices = @transform_3, window_bounds = array<i64: 1, 8, 128>}]} {
    %c0_i32 = arith.constant 0 : i32
    %0 = arith.cmpi eq, %arg3, %c0_i32 : i32
    %1 = arith.extui %0 : i1 to i32
    %c0_i32_0 = arith.constant 0 : i32
    %2 = arith.cmpi ne, %1, %c0_i32_0 : i32
    scf.if %2 {
      %cst_12 = arith.constant 0.000000e+00 : f32
      %14 = vector.broadcast %cst_12 : f32 to vector<8x128xf32>
      %c0_13 = arith.constant 0 : index
      %c0_14 = arith.constant 0 : index
      %15 = vector.load %arg8[%c0_13, %c0_14] : memref<8x128xf32, #tpu.memory_space<vmem>>, vector<8x128xf32>
      tpu.vector_store %arg8[%c0_13, %c0_14], %14 {strides = array<i32>} : memref<8x128xf32, #tpu.memory_space<vmem>>, vector<8x128xf32>,
    } else {
    }
    %c0 = arith.constant 0 : index
    %c0_1 = arith.constant 0 : index
    %3 = vector.load %arg8[%c0, %c0_1] : memref<8x128xf32, #tpu.memory_space<vmem>>, vector<8x128xf32>
    %c0_2 = arith.constant 0 : index
    %c0_3 = arith.constant 0 : index
    %c0_4 = arith.constant 0 : index
    %4 = vector.load %arg4[%c0_2, %c0_3, %c0_4] : memref<1x8x512xf32, #tpu.memory_space<vmem>>, vector<1x8x512xf32>
    %5 = vector.shape_cast %4 : vector<1x8x512xf32> to vector<8x512xf32>
    %c0_5 = arith.constant 0 : index
    %c0_6 = arith.constant 0 : index
    %c0_7 = arith.constant 0 : index
    %6 = vector.load %arg5[%c0_5, %c0_6, %c0_7] : memref<1x512x128xf32, #tpu.memory_space<vmem>>, vector<1x512x128xf32>
    %7 = vector.shape_cast %6 : vector<1x512x128xf32> to vector<512x128xf32>
    %cst = arith.constant dense<0.000000e+00> : vector<8x128xf32>
    %8 = tpu.matmul %5, %7, %cst {dimension_numbers = #tpu.dot_dimension_numbers<[1], [0], [0], [1], [0, 0, 1, 1], [], []>} : vector<8x512xf32>, vector<512x128xf32>, vector<8x128xf32> -> vector<8x128xf32>
    %9 = arith.addf %3, %8 : vector<8x128xf32>
    %c0_8 = arith.constant 0 : index
    %c0_9 = arith.constant 0 : index
    %10 = vector.load %arg8[%c0_8, %c0_9] : memref<8x128xf32, #tpu.memory_space<vmem>>, vector<8x128xf32>
    tpu.vector_store %arg8[%c0_8, %c0_9], %9 {strides = array<i32>} : memref<8x128xf32, #tpu.memory_space<vmem>>, vector<8x128xf32>,
    %c0_i32_10 = arith.constant 0 : i32
    %11 = arith.cmpi eq, %arg3, %c0_i32_10 : i32
    %12 = arith.extui %11 : i1 to i32
    %c0_i32_11 = arith.constant 0 : i32
    %13 = arith.cmpi ne, %12, %c0_i32_11 : i32
    scf.if %13 {
      %c0_12 = arith.constant 0 : index
      %c0_13 = arith.constant 0 : index
      %14 = vector.load %arg8[%c0_12, %c0_13] : memref<8x128xf32, #tpu.memory_space<vmem>>, vector<8x128xf32>
      %c0_14 = arith.constant 0 : index
      %c0_15 = arith.constant 0 : index
      %c0_16 = arith.constant 0 : index
      %15 = vector.load %arg6[%c0_14, %c0_15, %c0_16] : memref<1x1x128xf32, #tpu.memory_space<vmem>>, vector<1x1x128xf32>
      %16 = vector.shape_cast %15 : vector<1x1x128xf32> to vector<1x128xf32>
      %17 = vector.broadcast %16 : vector<1x128xf32> to vector<8x128xf32>
      %18 = arith.addf %14, %17 : vector<8x128xf32>
      %c0_17 = arith.constant 0 : index
      %c0_18 = arith.constant 0 : index
      %c0_19 = arith.constant 0 : index
      %19 = vector.load %arg7[%c0_17, %c0_18, %c0_19] : memref<1x8x128xf32, #tpu.memory_space<vmem>>, vector<1x8x128xf32>
      %20 = vector.shape_cast %19 : vector<1x8x128xf32> to vector<8x128xf32>
      %21 = vector.shape_cast %18 : vector<8x128xf32> to vector<1x8x128xf32>
      tpu.vector_store %arg7[%c0_17, %c0_18, %c0_19], %21 {strides = array<i32>} : memref<1x8x128xf32, #tpu.memory_space<vmem>>, vector<1x8x128xf32>,
    } else {
    }
    return
  }
  func.func @transform_0(%arg0: i32, %arg1: i32, %arg2: i32, %arg3: i32) -> (i32, i32, i32) {
    %c0_i32 = arith.constant 0 : i32
    return %arg0, %arg1, %arg3 : i32, i32, i32
  }
  func.func @transform_1(%arg0: i32, %arg1: i32, %arg2: i32, %arg3: i32) -> (i32, i32, i32) {
    %c0_i32 = arith.constant 0 : i32
    return %arg0, %arg3, %arg2 : i32, i32, i32
  }
  func.func @transform_2(%arg0: i32, %arg1: i32, %arg2: i32, %arg3: i32) -> (i32, i32, i32) {
    %c0_i32 = arith.constant 0 : i32
    %c0_i32_0 = arith.constant 0 : i32
    return %arg0, %c0_i32, %arg2 : i32, i32, i32
  }
  func.func @transform_3(%arg0: i32, %arg1: i32, %arg2: i32, %arg3: i32) -> (i32, i32, i32) {
    %c0_i32 = arith.constant 0 : i32
    return %arg0, %arg1, %arg2 : i32, i32, i32
  }
}

module attributes {stable_mosaic.version = 11 : i64} {
  func.func @_matmul_bias_kernel(%arg0: i32, %arg1: i32, %arg2: i32, %arg3: i32, %arg4: memref<1x8x512xf32, #tpu.memory_space<vmem>>, %arg5: memref<1x512x128xf32, #tpu.memory_space<vmem>>, %arg6: memref<1x1x128xf32, #tpu.memory_space<vmem>>, %arg7: memref<1x8x128xf32, #tpu.memory_space<vmem>>, %arg8: memref<8x128xf32, #tpu.memory_space<vmem>>) attributes {dimension_semantics = [#tpu.dimension_semantics<parallel>, #tpu.dimension_semantics<parallel>, #tpu.dimension_semantics<parallel>, #tpu.dimension_semantics<arbitrary>], iteration_bounds = array<i64: 1, 1, 1, 2>, scalar_prefetch = 0 : i64, scratch_operands = 1 : i64, tpu.core_type = #tpu.core_type<tc>, window_params = [{transform_indices = @transform_0, window_bounds = array<i64: 1, 8, 512>}, {transform_indices = @transform_1, window_bounds = array<i64: 1, 512, 128>}, {transform_indices = @transform_2, window_bounds = array<i64: 1, 1, 128>}, {transform_indices = @transform_3, window_bounds = array<i64: 1, 8, 128>}]} {
    %c0_i32 = arith.constant 0 : i32
    %0 = arith.cmpi eq, %arg3, %c0_i32 : i32
    %1 = arith.extui %0 : i1 to i32
    %c0_i32_0 = arith.constant 0 : i32
    %2 = arith.cmpi ne, %1, %c0_i32_0 : i32
    scf.if %2 {
      %cst_11 = arith.constant 0.000000e+00 : f32
      %14 = vector.broadcast %cst_11 : f32 to vector<8x128xf32>
      %c0_12 = arith.constant 0 : index
      %c0_13 = arith.constant 0 : index
      %15 = vector.load %arg8[%c0_12, %c0_13] : memref<8x128xf32, #tpu.memory_space<vmem>>, vector<8x128xf32>
      tpu.vector_store %arg8[%c0_12, %c0_13], %14 {strides = array<i32>} : memref<8x128xf32, #tpu.memory_space<vmem>>, vector<8x128xf32>,
    } else {
    }
    %c0 = arith.constant 0 : index
    %c0_1 = arith.constant 0 : index
    %3 = vector.load %arg8[%c0, %c0_1] : memref<8x128xf32, #tpu.memory_space<vmem>>, vector<8x128xf32>
    %c0_2 = arith.constant 0 : index
    %c0_3 = arith.constant 0 : index
    %c0_4 = arith.constant 0 : index
    %4 = vector.load %arg4[%c0_2, %c0_3, %c0_4] : memref<1x8x512xf32, #tpu.memory_space<vmem>>, vector<1x8x512xf32>
    %5 = vector.shape_cast %4 : vector<1x8x512xf32> to vector<8x512xf32>
    %c0_5 = arith.constant 0 : index
    %c0_6 = arith.constant 0 : index
    %c0_7 = arith.constant 0 : index
    %6 = vector.load %arg5[%c0_5, %c0_6, %c0_7] : memref<1x512x128xf32, #tpu.memory_space<vmem>>, vector<1x512x128xf32>
    %7 = vector.shape_cast %6 : vector<1x512x128xf32> to vector<512x128xf32>
    %cst = arith.constant dense<0.000000e+00> : vector<8x128xf32>
    %8 = tpu.matmul %5, %7, %cst {dimension_numbers = #tpu.dot_dimension_numbers<[1], [0], [0], [1], [0, 0, 1, 1], [], []>} : vector<8x512xf32>, vector<512x128xf32>, vector<8x128xf32> -> vector<8x128xf32>
    %9 = arith.addf %3, %8 : vector<8x128xf32>
    %c0_8 = arith.constant 0 : index
    %c0_9 = arith.constant 0 : index
    %10 = vector.load %arg8[%c0_8, %c0_9] : memref<8x128xf32, #tpu.memory_space<vmem>>, vector<8x128xf32>
    tpu.vector_store %arg8[%c0_8, %c0_9], %9 {strides = array<i32>} : memref<8x128xf32, #tpu.memory_space<vmem>>, vector<8x128xf32>,
    %c1_i32 = arith.constant 1 : i32
    %11 = arith.cmpi eq, %arg3, %c1_i32 : i32
    %12 = arith.extui %11 : i1 to i32
    %c0_i32_10 = arith.constant 0 : i32
    %13 = arith.cmpi ne, %12, %c0_i32_10 : i32
    scf.if %13 {
      %c0_11 = arith.constant 0 : index
      %c0_12 = arith.constant 0 : index
      %14 = vector.load %arg8[%c0_11, %c0_12] : memref<8x128xf32, #tpu.memory_space<vmem>>, vector<8x128xf32>
      %c0_13 = arith.constant 0 : index
      %c0_14 = arith.constant 0 : index
      %c0_15 = arith.constant 0 : index
      %15 = vector.load %arg6[%c0_13, %c0_14, %c0_15] : memref<1x1x128xf32, #tpu.memory_space<vmem>>, vector<1x1x128xf32>
      %16 = vector.shape_cast %15 : vector<1x1x128xf32> to vector<1x128xf32>
      %17 = vector.broadcast %16 : vector<1x128xf32> to vector<8x128xf32>
      %18 = arith.addf %14, %17 : vector<8x128xf32>
      %c0_16 = arith.constant 0 : index
      %c0_17 = arith.constant 0 : index
      %c0_18 = arith.constant 0 : index
      %19 = vector.load %arg7[%c0_16, %c0_17, %c0_18] : memref<1x8x128xf32, #tpu.memory_space<vmem>>, vector<1x8x128xf32>
      %20 = vector.shape_cast %19 : vector<1x8x128xf32> to vector<8x128xf32>
      %21 = vector.shape_cast %18 : vector<8x128xf32> to vector<1x8x128xf32>
      tpu.vector_store %arg7[%c0_16, %c0_17, %c0_18], %21 {strides = array<i32>} : memref<1x8x128xf32, #tpu.memory_space<vmem>>, vector<1x8x128xf32>,
    } else {
    }
    return
  }
  func.func @transform_0(%arg0: i32, %arg1: i32, %arg2: i32, %arg3: i32) -> (i32, i32, i32) {
    %c0_i32 = arith.constant 0 : i32
    return %arg0, %arg1, %arg3 : i32, i32, i32
  }
  func.func @transform_1(%arg0: i32, %arg1: i32, %arg2: i32, %arg3: i32) -> (i32, i32, i32) {
    %c0_i32 = arith.constant 0 : i32
    return %arg0, %arg3, %arg2 : i32, i32, i32
  }
  func.func @transform_2(%arg0: i32, %arg1: i32, %arg2: i32, %arg3: i32) -> (i32, i32, i32) {
    %c0_i32 = arith.constant 0 : i32
    %c0_i32_0 = arith.constant 0 : i32
    return %arg0, %c0_i32, %arg2 : i32, i32, i32
  }
  func.func @transform_3(%arg0: i32, %arg1: i32, %arg2: i32, %arg3: i32) -> (i32, i32, i32) {
    %c0_i32 = arith.constant 0 : i32
    return %arg0, %arg1, %arg2 : i32, i32, i32
  }
}

module attributes {stable_mosaic.version = 11 : i64} {
  func.func @_matmul_bias_kernel(%arg0: i32, %arg1: i32, %arg2: i32, %arg3: i32, %arg4: memref<1x8x256xf32, #tpu.memory_space<vmem>>, %arg5: memref<1x256x128xf32, #tpu.memory_space<vmem>>, %arg6: memref<1x1x128xf32, #tpu.memory_space<vmem>>, %arg7: memref<1x8x128xf32, #tpu.memory_space<vmem>>, %arg8: memref<8x128xf32, #tpu.memory_space<vmem>>) attributes {dimension_semantics = [#tpu.dimension_semantics<parallel>, #tpu.dimension_semantics<parallel>, #tpu.dimension_semantics<parallel>, #tpu.dimension_semantics<arbitrary>], iteration_bounds = array<i64: 4, 1, 1, 1>, scalar_prefetch = 0 : i64, scratch_operands = 1 : i64, tpu.core_type = #tpu.core_type<tc>, window_params = [{transform_indices = @transform_0, window_bounds = array<i64: 1, 8, 256>}, {transform_indices = @transform_1, window_bounds = array<i64: 1, 256, 128>}, {transform_indices = @transform_2, window_bounds = array<i64: 1, 1, 128>}, {transform_indices = @transform_3, window_bounds = array<i64: 1, 8, 128>}]} {
    %c0_i32 = arith.constant 0 : i32
    %0 = arith.cmpi eq, %arg3, %c0_i32 : i32
    %1 = arith.extui %0 : i1 to i32
    %c0_i32_0 = arith.constant 0 : i32
    %2 = arith.cmpi ne, %1, %c0_i32_0 : i32
    scf.if %2 {
      %cst_12 = arith.constant 0.000000e+00 : f32
      %14 = vector.broadcast %cst_12 : f32 to vector<8x128xf32>
      %c0_13 = arith.constant 0 : index
      %c0_14 = arith.constant 0 : index
      %15 = vector.load %arg8[%c0_13, %c0_14] : memref<8x128xf32, #tpu.memory_space<vmem>>, vector<8x128xf32>
      tpu.vector_store %arg8[%c0_13, %c0_14], %14 {strides = array<i32>} : memref<8x128xf32, #tpu.memory_space<vmem>>, vector<8x128xf32>,
    } else {
    }
    %c0 = arith.constant 0 : index
    %c0_1 = arith.constant 0 : index
    %3 = vector.load %arg8[%c0, %c0_1] : memref<8x128xf32, #tpu.memory_space<vmem>>, vector<8x128xf32>
    %c0_2 = arith.constant 0 : index
    %c0_3 = arith.constant 0 : index
    %c0_4 = arith.constant 0 : index
    %4 = vector.load %arg4[%c0_2, %c0_3, %c0_4] : memref<1x8x256xf32, #tpu.memory_space<vmem>>, vector<1x8x256xf32>
    %5 = vector.shape_cast %4 : vector<1x8x256xf32> to vector<8x256xf32>
    %c0_5 = arith.constant 0 : index
    %c0_6 = arith.constant 0 : index
    %c0_7 = arith.constant 0 : index
    %6 = vector.load %arg5[%c0_5, %c0_6, %c0_7] : memref<1x256x128xf32, #tpu.memory_space<vmem>>, vector<1x256x128xf32>
    %7 = vector.shape_cast %6 : vector<1x256x128xf32> to vector<256x128xf32>
    %cst = arith.constant dense<0.000000e+00> : vector<8x128xf32>
    %8 = tpu.matmul %5, %7, %cst {dimension_numbers = #tpu.dot_dimension_numbers<[1], [0], [0], [1], [0, 0, 1, 1], [], []>} : vector<8x256xf32>, vector<256x128xf32>, vector<8x128xf32> -> vector<8x128xf32>
    %9 = arith.addf %3, %8 : vector<8x128xf32>
    %c0_8 = arith.constant 0 : index
    %c0_9 = arith.constant 0 : index
    %10 = vector.load %arg8[%c0_8, %c0_9] : memref<8x128xf32, #tpu.memory_space<vmem>>, vector<8x128xf32>
    tpu.vector_store %arg8[%c0_8, %c0_9], %9 {strides = array<i32>} : memref<8x128xf32, #tpu.memory_space<vmem>>, vector<8x128xf32>,
    %c0_i32_10 = arith.constant 0 : i32
    %11 = arith.cmpi eq, %arg3, %c0_i32_10 : i32
    %12 = arith.extui %11 : i1 to i32
    %c0_i32_11 = arith.constant 0 : i32
    %13 = arith.cmpi ne, %12, %c0_i32_11 : i32
    scf.if %13 {
      %c0_12 = arith.constant 0 : index
      %c0_13 = arith.constant 0 : index
      %14 = vector.load %arg8[%c0_12, %c0_13] : memref<8x128xf32, #tpu.memory_space<vmem>>, vector<8x128xf32>
      %c0_14 = arith.constant 0 : index
      %c0_15 = arith.constant 0 : index
      %c0_16 = arith.constant 0 : index
      %15 = vector.load %arg6[%c0_14, %c0_15, %c0_16] : memref<1x1x128xf32, #tpu.memory_space<vmem>>, vector<1x1x128xf32>
      %16 = vector.shape_cast %15 : vector<1x1x128xf32> to vector<1x128xf32>
      %17 = vector.broadcast %16 : vector<1x128xf32> to vector<8x128xf32>
      %18 = arith.addf %14, %17 : vector<8x128xf32>
      %c0_17 = arith.constant 0 : index
      %c0_18 = arith.constant 0 : index
      %c0_19 = arith.constant 0 : index
      %19 = vector.load %arg7[%c0_17, %c0_18, %c0_19] : memref<1x8x128xf32, #tpu.memory_space<vmem>>, vector<1x8x128xf32>
      %20 = vector.shape_cast %19 : vector<1x8x128xf32> to vector<8x128xf32>
      %21 = vector.shape_cast %18 : vector<8x128xf32> to vector<1x8x128xf32>
      tpu.vector_store %arg7[%c0_17, %c0_18, %c0_19], %21 {strides = array<i32>} : memref<1x8x128xf32, #tpu.memory_space<vmem>>, vector<1x8x128xf32>,
    } else {
    }
    return
  }
  func.func @transform_0(%arg0: i32, %arg1: i32, %arg2: i32, %arg3: i32) -> (i32, i32, i32) {
    %c0_i32 = arith.constant 0 : i32
    return %arg0, %arg1, %arg3 : i32, i32, i32
  }
  func.func @transform_1(%arg0: i32, %arg1: i32, %arg2: i32, %arg3: i32) -> (i32, i32, i32) {
    %c0_i32 = arith.constant 0 : i32
    return %arg0, %arg3, %arg2 : i32, i32, i32
  }
  func.func @transform_2(%arg0: i32, %arg1: i32, %arg2: i32, %arg3: i32) -> (i32, i32, i32) {
    %c0_i32 = arith.constant 0 : i32
    %c0_i32_0 = arith.constant 0 : i32
    return %arg0, %c0_i32, %arg2 : i32, i32, i32
  }
  func.func @transform_3(%arg0: i32, %arg1: i32, %arg2: i32, %arg3: i32) -> (i32, i32, i32) {
    %c0_i32 = arith.constant 0 : i32
    return %arg0, %arg1, %arg2 : i32, i32, i32
  }
}

module attributes {stable_mosaic.version = 11 : i64} {
  func.func @_matmul_bias_kernel(%arg0: i32, %arg1: i32, %arg2: i32, %arg3: i32, %arg4: memref<1x8x512xf32, #tpu.memory_space<vmem>>, %arg5: memref<1x512x128xf32, #tpu.memory_space<vmem>>, %arg6: memref<1x1x128xf32, #tpu.memory_space<vmem>>, %arg7: memref<1x8x128xf32, #tpu.memory_space<vmem>>, %arg8: memref<8x128xf32, #tpu.memory_space<vmem>>) attributes {dimension_semantics = [#tpu.dimension_semantics<parallel>, #tpu.dimension_semantics<parallel>, #tpu.dimension_semantics<parallel>, #tpu.dimension_semantics<arbitrary>], iteration_bounds = array<i64: 4, 1, 1, 1>, scalar_prefetch = 0 : i64, scratch_operands = 1 : i64, tpu.core_type = #tpu.core_type<tc>, window_params = [{transform_indices = @transform_0, window_bounds = array<i64: 1, 8, 512>}, {transform_indices = @transform_1, window_bounds = array<i64: 1, 512, 128>}, {transform_indices = @transform_2, window_bounds = array<i64: 1, 1, 128>}, {transform_indices = @transform_3, window_bounds = array<i64: 1, 8, 128>}]} {
    %c0_i32 = arith.constant 0 : i32
    %0 = arith.cmpi eq, %arg3, %c0_i32 : i32
    %1 = arith.extui %0 : i1 to i32
    %c0_i32_0 = arith.constant 0 : i32
    %2 = arith.cmpi ne, %1, %c0_i32_0 : i32
    scf.if %2 {
      %cst_12 = arith.constant 0.000000e+00 : f32
      %14 = vector.broadcast %cst_12 : f32 to vector<8x128xf32>
      %c0_13 = arith.constant 0 : index
      %c0_14 = arith.constant 0 : index
      %15 = vector.load %arg8[%c0_13, %c0_14] : memref<8x128xf32, #tpu.memory_space<vmem>>, vector<8x128xf32>
      tpu.vector_store %arg8[%c0_13, %c0_14], %14 {strides = array<i32>} : memref<8x128xf32, #tpu.memory_space<vmem>>, vector<8x128xf32>,
    } else {
    }
    %c0 = arith.constant 0 : index
    %c0_1 = arith.constant 0 : index
    %3 = vector.load %arg8[%c0, %c0_1] : memref<8x128xf32, #tpu.memory_space<vmem>>, vector<8x128xf32>
    %c0_2 = arith.constant 0 : index
    %c0_3 = arith.constant 0 : index
    %c0_4 = arith.constant 0 : index
    %4 = vector.load %arg4[%c0_2, %c0_3, %c0_4] : memref<1x8x512xf32, #tpu.memory_space<vmem>>, vector<1x8x512xf32>
    %5 = vector.shape_cast %4 : vector<1x8x512xf32> to vector<8x512xf32>
    %c0_5 = arith.constant 0 : index
    %c0_6 = arith.constant 0 : index
    %c0_7 = arith.constant 0 : index
    %6 = vector.load %arg5[%c0_5, %c0_6, %c0_7] : memref<1x512x128xf32, #tpu.memory_space<vmem>>, vector<1x512x128xf32>
    %7 = vector.shape_cast %6 : vector<1x512x128xf32> to vector<512x128xf32>
    %cst = arith.constant dense<0.000000e+00> : vector<8x128xf32>
    %8 = tpu.matmul %5, %7, %cst {dimension_numbers = #tpu.dot_dimension_numbers<[1], [0], [0], [1], [0, 0, 1, 1], [], []>} : vector<8x512xf32>, vector<512x128xf32>, vector<8x128xf32> -> vector<8x128xf32>
    %9 = arith.addf %3, %8 : vector<8x128xf32>
    %c0_8 = arith.constant 0 : index
    %c0_9 = arith.constant 0 : index
    %10 = vector.load %arg8[%c0_8, %c0_9] : memref<8x128xf32, #tpu.memory_space<vmem>>, vector<8x128xf32>
    tpu.vector_store %arg8[%c0_8, %c0_9], %9 {strides = array<i32>} : memref<8x128xf32, #tpu.memory_space<vmem>>, vector<8x128xf32>,
    %c0_i32_10 = arith.constant 0 : i32
    %11 = arith.cmpi eq, %arg3, %c0_i32_10 : i32
    %12 = arith.extui %11 : i1 to i32
    %c0_i32_11 = arith.constant 0 : i32
    %13 = arith.cmpi ne, %12, %c0_i32_11 : i32
    scf.if %13 {
      %c0_12 = arith.constant 0 : index
      %c0_13 = arith.constant 0 : index
      %14 = vector.load %arg8[%c0_12, %c0_13] : memref<8x128xf32, #tpu.memory_space<vmem>>, vector<8x128xf32>
      %c0_14 = arith.constant 0 : index
      %c0_15 = arith.constant 0 : index
      %c0_16 = arith.constant 0 : index
      %15 = vector.load %arg6[%c0_14, %c0_15, %c0_16] : memref<1x1x128xf32, #tpu.memory_space<vmem>>, vector<1x1x128xf32>
      %16 = vector.shape_cast %15 : vector<1x1x128xf32> to vector<1x128xf32>
      %17 = vector.broadcast %16 : vector<1x128xf32> to vector<8x128xf32>
      %18 = arith.addf %14, %17 : vector<8x128xf32>
      %c0_17 = arith.constant 0 : index
      %c0_18 = arith.constant 0 : index
      %c0_19 = arith.constant 0 : index
      %19 = vector.load %arg7[%c0_17, %c0_18, %c0_19] : memref<1x8x128xf32, #tpu.memory_space<vmem>>, vector<1x8x128xf32>
      %20 = vector.shape_cast %19 : vector<1x8x128xf32> to vector<8x128xf32>
      %21 = vector.shape_cast %18 : vector<8x128xf32> to vector<1x8x128xf32>
      tpu.vector_store %arg7[%c0_17, %c0_18, %c0_19], %21 {strides = array<i32>} : memref<1x8x128xf32, #tpu.memory_space<vmem>>, vector<1x8x128xf32>,
    } else {
    }
    return
  }
  func.func @transform_0(%arg0: i32, %arg1: i32, %arg2: i32, %arg3: i32) -> (i32, i32, i32) {
    %c0_i32 = arith.constant 0 : i32
    return %arg0, %arg1, %arg3 : i32, i32, i32
  }
  func.func @transform_1(%arg0: i32, %arg1: i32, %arg2: i32, %arg3: i32) -> (i32, i32, i32) {
    %c0_i32 = arith.constant 0 : i32
    return %arg0, %arg3, %arg2 : i32, i32, i32
  }
  func.func @transform_2(%arg0: i32, %arg1: i32, %arg2: i32, %arg3: i32) -> (i32, i32, i32) {
    %c0_i32 = arith.constant 0 : i32
    %c0_i32_0 = arith.constant 0 : i32
    return %arg0, %c0_i32, %arg2 : i32, i32, i32
  }
  func.func @transform_3(%arg0: i32, %arg1: i32, %arg2: i32, %arg3: i32) -> (i32, i32, i32) {
    %c0_i32 = arith.constant 0 : i32
    return %arg0, %arg1, %arg2 : i32, i32, i32
  }
}

module attributes {stable_mosaic.version = 11 : i64} {
  func.func @_matmul_bias_kernel(%arg0: i32, %arg1: i32, %arg2: i32, %arg3: i32, %arg4: memref<1x32x256xf32, #tpu.memory_space<vmem>>, %arg5: memref<1x256x128xf32, #tpu.memory_space<vmem>>, %arg6: memref<1x1x128xf32, #tpu.memory_space<vmem>>, %arg7: memref<1x32x128xf32, #tpu.memory_space<vmem>>, %arg8: memref<32x128xf32, #tpu.memory_space<vmem>>) attributes {dimension_semantics = [#tpu.dimension_semantics<parallel>, #tpu.dimension_semantics<parallel>, #tpu.dimension_semantics<parallel>, #tpu.dimension_semantics<arbitrary>], iteration_bounds = array<i64: 4, 1, 1, 1>, scalar_prefetch = 0 : i64, scratch_operands = 1 : i64, tpu.core_type = #tpu.core_type<tc>, window_params = [{transform_indices = @transform_0, window_bounds = array<i64: 1, 32, 256>}, {transform_indices = @transform_1, window_bounds = array<i64: 1, 256, 128>}, {transform_indices = @transform_2, window_bounds = array<i64: 1, 1, 128>}, {transform_indices = @transform_3, window_bounds = array<i64: 1, 32, 128>}]} {
    %c0_i32 = arith.constant 0 : i32
    %0 = arith.cmpi eq, %arg3, %c0_i32 : i32
    %1 = arith.extui %0 : i1 to i32
    %c0_i32_0 = arith.constant 0 : i32
    %2 = arith.cmpi ne, %1, %c0_i32_0 : i32
    scf.if %2 {
      %cst_12 = arith.constant 0.000000e+00 : f32
      %14 = vector.broadcast %cst_12 : f32 to vector<32x128xf32>
      %c0_13 = arith.constant 0 : index
      %c0_14 = arith.constant 0 : index
      %15 = vector.load %arg8[%c0_13, %c0_14] : memref<32x128xf32, #tpu.memory_space<vmem>>, vector<32x128xf32>
      tpu.vector_store %arg8[%c0_13, %c0_14], %14 {strides = array<i32>} : memref<32x128xf32, #tpu.memory_space<vmem>>, vector<32x128xf32>,
    } else {
    }
    %c0 = arith.constant 0 : index
    %c0_1 = arith.constant 0 : index
    %3 = vector.load %arg8[%c0, %c0_1] : memref<32x128xf32, #tpu.memory_space<vmem>>, vector<32x128xf32>
    %c0_2 = arith.constant 0 : index
    %c0_3 = arith.constant 0 : index
    %c0_4 = arith.constant 0 : index
    %4 = vector.load %arg4[%c0_2, %c0_3, %c0_4] : memref<1x32x256xf32, #tpu.memory_space<vmem>>, vector<1x32x256xf32>
    %5 = vector.shape_cast %4 : vector<1x32x256xf32> to vector<32x256xf32>
    %c0_5 = arith.constant 0 : index
    %c0_6 = arith.constant 0 : index
    %c0_7 = arith.constant 0 : index
    %6 = vector.load %arg5[%c0_5, %c0_6, %c0_7] : memref<1x256x128xf32, #tpu.memory_space<vmem>>, vector<1x256x128xf32>
    %7 = vector.shape_cast %6 : vector<1x256x128xf32> to vector<256x128xf32>
    %cst = arith.constant dense<0.000000e+00> : vector<32x128xf32>
    %8 = tpu.matmul %5, %7, %cst {dimension_numbers = #tpu.dot_dimension_numbers<[1], [0], [0], [1], [0, 0, 1, 1], [], []>} : vector<32x256xf32>, vector<256x128xf32>, vector<32x128xf32> -> vector<32x128xf32>
    %9 = arith.addf %3, %8 : vector<32x128xf32>
    %c0_8 = arith.constant 0 : index
    %c0_9 = arith.constant 0 : index
    %10 = vector.load %arg8[%c0_8, %c0_9] : memref<32x128xf32, #tpu.memory_space<vmem>>, vector<32x128xf32>
    tpu.vector_store %arg8[%c0_8, %c0_9], %9 {strides = array<i32>} : memref<32x128xf32, #tpu.memory_space<vmem>>, vector<32x128xf32>,
    %c0_i32_10 = arith.constant 0 : i32
    %11 = arith.cmpi eq, %arg3, %c0_i32_10 : i32
    %12 = arith.extui %11 : i1 to i32
    %c0_i32_11 = arith.constant 0 : i32
    %13 = arith.cmpi ne, %12, %c0_i32_11 : i32
    scf.if %13 {
      %c0_12 = arith.constant 0 : index
      %c0_13 = arith.constant 0 : index
      %14 = vector.load %arg8[%c0_12, %c0_13] : memref<32x128xf32, #tpu.memory_space<vmem>>, vector<32x128xf32>
      %c0_14 = arith.constant 0 : index
      %c0_15 = arith.constant 0 : index
      %c0_16 = arith.constant 0 : index
      %15 = vector.load %arg6[%c0_14, %c0_15, %c0_16] : memref<1x1x128xf32, #tpu.memory_space<vmem>>, vector<1x1x128xf32>
      %16 = vector.shape_cast %15 : vector<1x1x128xf32> to vector<1x128xf32>
      %17 = vector.broadcast %16 : vector<1x128xf32> to vector<32x128xf32>
      %18 = arith.addf %14, %17 : vector<32x128xf32>
      %c0_17 = arith.constant 0 : index
      %c0_18 = arith.constant 0 : index
      %c0_19 = arith.constant 0 : index
      %19 = vector.load %arg7[%c0_17, %c0_18, %c0_19] : memref<1x32x128xf32, #tpu.memory_space<vmem>>, vector<1x32x128xf32>
      %20 = vector.shape_cast %19 : vector<1x32x128xf32> to vector<32x128xf32>
      %21 = vector.shape_cast %18 : vector<32x128xf32> to vector<1x32x128xf32>
      tpu.vector_store %arg7[%c0_17, %c0_18, %c0_19], %21 {strides = array<i32>} : memref<1x32x128xf32, #tpu.memory_space<vmem>>, vector<1x32x128xf32>,
    } else {
    }
    return
  }
  func.func @transform_0(%arg0: i32, %arg1: i32, %arg2: i32, %arg3: i32) -> (i32, i32, i32) {
    %c0_i32 = arith.constant 0 : i32
    return %arg0, %arg1, %arg3 : i32, i32, i32
  }
  func.func @transform_1(%arg0: i32, %arg1: i32, %arg2: i32, %arg3: i32) -> (i32, i32, i32) {
    %c0_i32 = arith.constant 0 : i32
    return %arg0, %arg3, %arg2 : i32, i32, i32
  }
  func.func @transform_2(%arg0: i32, %arg1: i32, %arg2: i32, %arg3: i32) -> (i32, i32, i32) {
    %c0_i32 = arith.constant 0 : i32
    %c0_i32_0 = arith.constant 0 : i32
    return %arg0, %c0_i32, %arg2 : i32, i32, i32
  }
  func.func @transform_3(%arg0: i32, %arg1: i32, %arg2: i32, %arg3: i32) -> (i32, i32, i32) {
    %c0_i32 = arith.constant 0 : i32
    return %arg0, %arg1, %arg2 : i32, i32, i32
  }
}

module attributes {stable_mosaic.version = 11 : i64} {
  func.func @_matmul_bias_kernel(%arg0: i32, %arg1: i32, %arg2: i32, %arg3: i32, %arg4: memref<1x128x128xf32, #tpu.memory_space<vmem>>, %arg5: memref<1x128x128xf32, #tpu.memory_space<vmem>>, %arg6: memref<1x1x128xf32, #tpu.memory_space<vmem>>, %arg7: memref<1x128x128xf32, #tpu.memory_space<vmem>>, %arg8: memref<128x128xf32, #tpu.memory_space<vmem>>) attributes {dimension_semantics = [#tpu.dimension_semantics<parallel>, #tpu.dimension_semantics<parallel>, #tpu.dimension_semantics<parallel>, #tpu.dimension_semantics<arbitrary>], iteration_bounds = array<i64: 4, 1, 1, 1>, scalar_prefetch = 0 : i64, scratch_operands = 1 : i64, tpu.core_type = #tpu.core_type<tc>, window_params = [{transform_indices = @transform_0, window_bounds = array<i64: 1, 128, 128>}, {transform_indices = @transform_1, window_bounds = array<i64: 1, 128, 128>}, {transform_indices = @transform_2, window_bounds = array<i64: 1, 1, 128>}, {transform_indices = @transform_3, window_bounds = array<i64: 1, 128, 128>}]} {
    %c0_i32 = arith.constant 0 : i32
    %0 = arith.cmpi eq, %arg3, %c0_i32 : i32
    %1 = arith.extui %0 : i1 to i32
    %c0_i32_0 = arith.constant 0 : i32
    %2 = arith.cmpi ne, %1, %c0_i32_0 : i32
    scf.if %2 {
      %cst_12 = arith.constant 0.000000e+00 : f32
      %14 = vector.broadcast %cst_12 : f32 to vector<128x128xf32>
      %c0_13 = arith.constant 0 : index
      %c0_14 = arith.constant 0 : index
      %15 = vector.load %arg8[%c0_13, %c0_14] : memref<128x128xf32, #tpu.memory_space<vmem>>, vector<128x128xf32>
      tpu.vector_store %arg8[%c0_13, %c0_14], %14 {strides = array<i32>} : memref<128x128xf32, #tpu.memory_space<vmem>>, vector<128x128xf32>,
    } else {
    }
    %c0 = arith.constant 0 : index
    %c0_1 = arith.constant 0 : index
    %3 = vector.load %arg8[%c0, %c0_1] : memref<128x128xf32, #tpu.memory_space<vmem>>, vector<128x128xf32>
    %c0_2 = arith.constant 0 : index
    %c0_3 = arith.constant 0 : index
    %c0_4 = arith.constant 0 : index
    %4 = vector.load %arg4[%c0_2, %c0_3, %c0_4] : memref<1x128x128xf32, #tpu.memory_space<vmem>>, vector<1x128x128xf32>
    %5 = vector.shape_cast %4 : vector<1x128x128xf32> to vector<128x128xf32>
    %c0_5 = arith.constant 0 : index
    %c0_6 = arith.constant 0 : index
    %c0_7 = arith.constant 0 : index
    %6 = vector.load %arg5[%c0_5, %c0_6, %c0_7] : memref<1x128x128xf32, #tpu.memory_space<vmem>>, vector<1x128x128xf32>
    %7 = vector.shape_cast %6 : vector<1x128x128xf32> to vector<128x128xf32>
    %cst = arith.constant dense<0.000000e+00> : vector<128x128xf32>
    %8 = tpu.matmul %5, %7, %cst {dimension_numbers = #tpu.dot_dimension_numbers<[1], [0], [0], [1], [0, 0, 1, 1], [], []>} : vector<128x128xf32>, vector<128x128xf32>, vector<128x128xf32> -> vector<128x128xf32>
    %9 = arith.addf %3, %8 : vector<128x128xf32>
    %c0_8 = arith.constant 0 : index
    %c0_9 = arith.constant 0 : index
    %10 = vector.load %arg8[%c0_8, %c0_9] : memref<128x128xf32, #tpu.memory_space<vmem>>, vector<128x128xf32>
    tpu.vector_store %arg8[%c0_8, %c0_9], %9 {strides = array<i32>} : memref<128x128xf32, #tpu.memory_space<vmem>>, vector<128x128xf32>,
    %c0_i32_10 = arith.constant 0 : i32
    %11 = arith.cmpi eq, %arg3, %c0_i32_10 : i32
    %12 = arith.extui %11 : i1 to i32
    %c0_i32_11 = arith.constant 0 : i32
    %13 = arith.cmpi ne, %12, %c0_i32_11 : i32
    scf.if %13 {
      %c0_12 = arith.constant 0 : index
      %c0_13 = arith.constant 0 : index
      %14 = vector.load %arg8[%c0_12, %c0_13] : memref<128x128xf32, #tpu.memory_space<vmem>>, vector<128x128xf32>
      %c0_14 = arith.constant 0 : index
      %c0_15 = arith.constant 0 : index
      %c0_16 = arith.constant 0 : index
      %15 = vector.load %arg6[%c0_14, %c0_15, %c0_16] : memref<1x1x128xf32, #tpu.memory_space<vmem>>, vector<1x1x128xf32>
      %16 = vector.shape_cast %15 : vector<1x1x128xf32> to vector<1x128xf32>
      %17 = vector.broadcast %16 : vector<1x128xf32> to vector<128x128xf32>
      %18 = arith.addf %14, %17 : vector<128x128xf32>
      %c0_17 = arith.constant 0 : index
      %c0_18 = arith.constant 0 : index
      %c0_19 = arith.constant 0 : index
      %19 = vector.load %arg7[%c0_17, %c0_18, %c0_19] : memref<1x128x128xf32, #tpu.memory_space<vmem>>, vector<1x128x128xf32>
      %20 = vector.shape_cast %19 : vector<1x128x128xf32> to vector<128x128xf32>
      %21 = vector.shape_cast %18 : vector<128x128xf32> to vector<1x128x128xf32>
      tpu.vector_store %arg7[%c0_17, %c0_18, %c0_19], %21 {strides = array<i32>} : memref<1x128x128xf32, #tpu.memory_space<vmem>>, vector<1x128x128xf32>,
    } else {
    }
    return
  }
  func.func @transform_0(%arg0: i32, %arg1: i32, %arg2: i32, %arg3: i32) -> (i32, i32, i32) {
    %c0_i32 = arith.constant 0 : i32
    return %arg0, %arg1, %arg3 : i32, i32, i32
  }
  func.func @transform_1(%arg0: i32, %arg1: i32, %arg2: i32, %arg3: i32) -> (i32, i32, i32) {
    %c0_i32 = arith.constant 0 : i32
    return %arg0, %arg3, %arg2 : i32, i32, i32
  }
  func.func @transform_2(%arg0: i32, %arg1: i32, %arg2: i32, %arg3: i32) -> (i32, i32, i32) {
    %c0_i32 = arith.constant 0 : i32
    %c0_i32_0 = arith.constant 0 : i32
    return %arg0, %c0_i32, %arg2 : i32, i32, i32
  }
  func.func @transform_3(%arg0: i32, %arg1: i32, %arg2: i32, %arg3: i32) -> (i32, i32, i32) {
    %c0_i32 = arith.constant 0 : i32
    return %arg0, %arg1, %arg2 : i32, i32, i32
  }
}

module attributes {stable_mosaic.version = 11 : i64} {
  func.func @_instance_norm_kernel(%arg0: i32, %arg1: memref<1x256x8xf32, #tpu.memory_space<vmem>>, %arg2: memref<1x256x8xf32, #tpu.memory_space<vmem>>) attributes {dimension_semantics = [#tpu.dimension_semantics<parallel>], iteration_bounds = array<i64: 2>, scalar_prefetch = 0 : i64, scratch_operands = 0 : i64, tpu.core_type = #tpu.core_type<tc>, window_params = [{transform_indices = @transform_0, window_bounds = array<i64: 1, 256, 8>}, {transform_indices = @transform_1, window_bounds = array<i64: 1, 256, 8>}]} {
    %c0 = arith.constant 0 : index
    %c0_0 = arith.constant 0 : index
    %c0_1 = arith.constant 0 : index
    %0 = vector.load %arg1[%c0, %c0_0, %c0_1] : memref<1x256x8xf32, #tpu.memory_space<vmem>>, vector<1x256x8xf32>
    %1 = vector.shape_cast %0 : vector<1x256x8xf32> to vector<256x8xf32>
    %cst = arith.constant dense<0.000000e+00> : vector<8xf32>
    %2 = vector.multi_reduction <add>, %1, %cst [0] : vector<256x8xf32> to vector<8xf32>
    %3 = vector.shape_cast %2 : vector<8xf32> to vector<1x8xf32>
    %cst_2 = arith.constant 3.906250e-03 : f32
    %4 = vector.broadcast %cst_2 : f32 to vector<1x8xf32>
    %5 = arith.mulf %3, %4 : vector<1x8xf32>
    %6 = arith.mulf %1, %1 : vector<256x8xf32>
    %cst_3 = arith.constant dense<0.000000e+00> : vector<8xf32>
    %7 = vector.multi_reduction <add>, %6, %cst_3 [0] : vector<256x8xf32> to vector<8xf32>
    %8 = vector.shape_cast %7 : vector<8xf32> to vector<1x8xf32>
    %cst_4 = arith.constant 3.906250e-03 : f32
    %9 = vector.broadcast %cst_4 : f32 to vector<1x8xf32>
    %10 = arith.mulf %8, %9 : vector<1x8xf32>
    %11 = arith.mulf %5, %5 : vector<1x8xf32>
    %12 = arith.subf %10, %11 : vector<1x8xf32>
    %cst_5 = arith.constant 0.000000e+00 : f32
    %13 = vector.broadcast %cst_5 : f32 to vector<1x8xf32>
    %14 = arith.maximumf %12, %13 : vector<1x8xf32>
    %15 = vector.broadcast %5 : vector<1x8xf32> to vector<256x8xf32>
    %16 = arith.subf %1, %15 : vector<256x8xf32>
    %cst_6 = arith.constant 9.99999974E-6 : f32
    %17 = vector.broadcast %cst_6 : f32 to vector<1x8xf32>
    %18 = arith.addf %14, %17 : vector<1x8xf32>
    %19 = math.rsqrt %18 : vector<1x8xf32>
    %20 = vector.broadcast %19 : vector<1x8xf32> to vector<256x8xf32>
    %21 = arith.mulf %16, %20 : vector<256x8xf32>
    %c0_7 = arith.constant 0 : index
    %c0_8 = arith.constant 0 : index
    %c0_9 = arith.constant 0 : index
    %22 = vector.load %arg2[%c0_7, %c0_8, %c0_9] : memref<1x256x8xf32, #tpu.memory_space<vmem>>, vector<1x256x8xf32>
    %23 = vector.shape_cast %22 : vector<1x256x8xf32> to vector<256x8xf32>
    %24 = vector.shape_cast %21 : vector<256x8xf32> to vector<1x256x8xf32>
    tpu.vector_store %arg2[%c0_7, %c0_8, %c0_9], %24 {strides = array<i32>} : memref<1x256x8xf32, #tpu.memory_space<vmem>>, vector<1x256x8xf32>,
    return
  }
  func.func @transform_0(%arg0: i32) -> (i32, i32, i32) {
    %c0_i32 = arith.constant 0 : i32
    %c0_i32_0 = arith.constant 0 : i32
    %c0_i32_1 = arith.constant 0 : i32
    return %arg0, %c0_i32, %c0_i32_0 : i32, i32, i32
  }
  func.func @transform_1(%arg0: i32) -> (i32, i32, i32) {
    %c0_i32 = arith.constant 0 : i32
    %c0_i32_0 = arith.constant 0 : i32
    %c0_i32_1 = arith.constant 0 : i32
    return %arg0, %c0_i32, %c0_i32_0 : i32, i32, i32
  }
}

module attributes {stable_mosaic.version = 11 : i64} {
  func.func @_matmul_bias_kernel(%arg0: i32, %arg1: i32, %arg2: i32, %arg3: i32, %arg4: memref<1x256x128xf32, #tpu.memory_space<vmem>>, %arg5: memref<1x128x128xf32, #tpu.memory_space<vmem>>, %arg6: memref<1x1x128xf32, #tpu.memory_space<vmem>>, %arg7: memref<1x256x128xf32, #tpu.memory_space<vmem>>, %arg8: memref<256x128xf32, #tpu.memory_space<vmem>>) attributes {dimension_semantics = [#tpu.dimension_semantics<parallel>, #tpu.dimension_semantics<parallel>, #tpu.dimension_semantics<parallel>, #tpu.dimension_semantics<arbitrary>], iteration_bounds = array<i64: 4, 2, 1, 1>, scalar_prefetch = 0 : i64, scratch_operands = 1 : i64, tpu.core_type = #tpu.core_type<tc>, window_params = [{transform_indices = @transform_0, window_bounds = array<i64: 1, 256, 128>}, {transform_indices = @transform_1, window_bounds = array<i64: 1, 128, 128>}, {transform_indices = @transform_2, window_bounds = array<i64: 1, 1, 128>}, {transform_indices = @transform_3, window_bounds = array<i64: 1, 256, 128>}]} {
    %c0_i32 = arith.constant 0 : i32
    %0 = arith.cmpi eq, %arg3, %c0_i32 : i32
    %1 = arith.extui %0 : i1 to i32
    %c0_i32_0 = arith.constant 0 : i32
    %2 = arith.cmpi ne, %1, %c0_i32_0 : i32
    scf.if %2 {
      %cst_12 = arith.constant 0.000000e+00 : f32
      %14 = vector.broadcast %cst_12 : f32 to vector<256x128xf32>
      %c0_13 = arith.constant 0 : index
      %c0_14 = arith.constant 0 : index
      %15 = vector.load %arg8[%c0_13, %c0_14] : memref<256x128xf32, #tpu.memory_space<vmem>>, vector<256x128xf32>
      tpu.vector_store %arg8[%c0_13, %c0_14], %14 {strides = array<i32>} : memref<256x128xf32, #tpu.memory_space<vmem>>, vector<256x128xf32>,
    } else {
    }
    %c0 = arith.constant 0 : index
    %c0_1 = arith.constant 0 : index
    %3 = vector.load %arg8[%c0, %c0_1] : memref<256x128xf32, #tpu.memory_space<vmem>>, vector<256x128xf32>
    %c0_2 = arith.constant 0 : index
    %c0_3 = arith.constant 0 : index
    %c0_4 = arith.constant 0 : index
    %4 = vector.load %arg4[%c0_2, %c0_3, %c0_4] : memref<1x256x128xf32, #tpu.memory_space<vmem>>, vector<1x256x128xf32>
    %5 = vector.shape_cast %4 : vector<1x256x128xf32> to vector<256x128xf32>
    %c0_5 = arith.constant 0 : index
    %c0_6 = arith.constant 0 : index
    %c0_7 = arith.constant 0 : index
    %6 = vector.load %arg5[%c0_5, %c0_6, %c0_7] : memref<1x128x128xf32, #tpu.memory_space<vmem>>, vector<1x128x128xf32>
    %7 = vector.shape_cast %6 : vector<1x128x128xf32> to vector<128x128xf32>
    %cst = arith.constant dense<0.000000e+00> : vector<256x128xf32>
    %8 = tpu.matmul %5, %7, %cst {dimension_numbers = #tpu.dot_dimension_numbers<[1], [0], [0], [1], [0, 0, 1, 1], [], []>} : vector<256x128xf32>, vector<128x128xf32>, vector<256x128xf32> -> vector<256x128xf32>
    %9 = arith.addf %3, %8 : vector<256x128xf32>
    %c0_8 = arith.constant 0 : index
    %c0_9 = arith.constant 0 : index
    %10 = vector.load %arg8[%c0_8, %c0_9] : memref<256x128xf32, #tpu.memory_space<vmem>>, vector<256x128xf32>
    tpu.vector_store %arg8[%c0_8, %c0_9], %9 {strides = array<i32>} : memref<256x128xf32, #tpu.memory_space<vmem>>, vector<256x128xf32>,
    %c0_i32_10 = arith.constant 0 : i32
    %11 = arith.cmpi eq, %arg3, %c0_i32_10 : i32
    %12 = arith.extui %11 : i1 to i32
    %c0_i32_11 = arith.constant 0 : i32
    %13 = arith.cmpi ne, %12, %c0_i32_11 : i32
    scf.if %13 {
      %c0_12 = arith.constant 0 : index
      %c0_13 = arith.constant 0 : index
      %14 = vector.load %arg8[%c0_12, %c0_13] : memref<256x128xf32, #tpu.memory_space<vmem>>, vector<256x128xf32>
      %c0_14 = arith.constant 0 : index
      %c0_15 = arith.constant 0 : index
      %c0_16 = arith.constant 0 : index
      %15 = vector.load %arg6[%c0_14, %c0_15, %c0_16] : memref<1x1x128xf32, #tpu.memory_space<vmem>>, vector<1x1x128xf32>
      %16 = vector.shape_cast %15 : vector<1x1x128xf32> to vector<1x128xf32>
      %17 = vector.broadcast %16 : vector<1x128xf32> to vector<256x128xf32>
      %18 = arith.addf %14, %17 : vector<256x128xf32>
      %c0_17 = arith.constant 0 : index
      %c0_18 = arith.constant 0 : index
      %c0_19 = arith.constant 0 : index
      %19 = vector.load %arg7[%c0_17, %c0_18, %c0_19] : memref<1x256x128xf32, #tpu.memory_space<vmem>>, vector<1x256x128xf32>
      %20 = vector.shape_cast %19 : vector<1x256x128xf32> to vector<256x128xf32>
      %21 = vector.shape_cast %18 : vector<256x128xf32> to vector<1x256x128xf32>
      tpu.vector_store %arg7[%c0_17, %c0_18, %c0_19], %21 {strides = array<i32>} : memref<1x256x128xf32, #tpu.memory_space<vmem>>, vector<1x256x128xf32>,
    } else {
    }
    return
  }
  func.func @transform_0(%arg0: i32, %arg1: i32, %arg2: i32, %arg3: i32) -> (i32, i32, i32) {
    %c0_i32 = arith.constant 0 : i32
    return %arg0, %arg1, %arg3 : i32, i32, i32
  }
  func.func @transform_1(%arg0: i32, %arg1: i32, %arg2: i32, %arg3: i32) -> (i32, i32, i32) {
    %c0_i32 = arith.constant 0 : i32
    return %arg0, %arg3, %arg2 : i32, i32, i32
  }
  func.func @transform_2(%arg0: i32, %arg1: i32, %arg2: i32, %arg3: i32) -> (i32, i32, i32) {
    %c0_i32 = arith.constant 0 : i32
    %c0_i32_0 = arith.constant 0 : i32
    return %arg0, %c0_i32, %arg2 : i32, i32, i32
  }
  func.func @transform_3(%arg0: i32, %arg1: i32, %arg2: i32, %arg3: i32) -> (i32, i32, i32) {
    %c0_i32 = arith.constant 0 : i32
    return %arg0, %arg1, %arg2 : i32, i32, i32
  }
}

</mosaic_0001>

<llo_original>
// kernel: run.17
$region0: #{run.17}
  #allocation0 [shape = 'u32[]', space=smem, size = 0x4, offset = 0x4, fixed_abs, tag = 'smem constant byte address 0x4 - core index']
  #allocation1 [shape = 'u32[72,128]{1,0:T(1,128)}', space=vmem, size = 0x9000, scoped, tag = 'internal scratch']
  #allocation2 [shape = 'f32[256,128]{1,0:T(8,128)}', space=vmem, size = 0x20000, scoped, tag = 'scratch operand']
  %s0 = inlined_call_operand.vmem [shape: f32[1,512,128], index: 0, kind: input, shape index: {}]
  %s1 = inlined_call_operand.vmem [shape: f32[1,128,128], index: 1, kind: input, shape index: {}]
  %s2 = inlined_call_operand.vmem [shape: f32[1,1,128], index: 2, kind: input, shape index: {}]
  %s3 = inlined_call_operand.vmem [shape: f32[1,512,128], index: 3, kind: output, shape index: {}]
  %s4 = sld [smem:[#allocation0]]
  $region53: #{run.17} parent=0
    _
  %s6 = ssub.s32 1, %s4
  %s7 = scalar_select 0, %s6, %s4
  loop: start=0, step=1, limit=4
  $region2: #{run.17} parent=0 // loop_pre_header
    _
  $region3: #{run.17} parent=0 // loop_header
    %s9 = sphi 0, %s13
    %p10 = scmp.ge.s32.totalorder %s9, 4
    %s16 = sphi 0, %s42
    %s17 = sphi 0, %s38
    %s18 = sphi 0, %s34
    %s19 = sphi 0, %s30
    %s20 = sphi 0, %s16
    %s21 = sphi 0, %s17
    %s22 = sphi 0, %s18
    %s23 = sphi 0, %s19
    %s24 = sphi 0, %s20
    %s25 = sphi 0, %s21
    %s26 = sphi 0, %s22
    %s27 = sphi 0, %s23
    %s49 = sphi 0, %s51
    %s52 = sphi 0, %s49
    %s53 = sphi 0, %s52
    %s69 = sphi 0, %s53
    %s79 = sphi 0, %s81
    %s82 = sphi 0, %s79
    %s83 = sphi 0, %s82
    %s99 = sphi 0, %s83
    %s107 = sphi 0, %s109
    %s110 = sphi 0, %s107
    %s111 = sphi 0, %s110
    %s127 = sphi 0, %s111
    %s137 = sphi 0, %s139
    %s140 = sphi 0, %s137
    %s141 = sphi 0, %s140
    %s157 = sphi 0, %s141
  $region4: #{run.17} parent=0 // loop_header_branch
    %12 = sbr.rel (%p10) target = $region8
  $region5: #{run.17} parent=0 // loop_body
    %s14 = ssub.s32 %s9, 1
    %s15 = ssub.s32 %s9, 2
    %s28 = sadd.s32 1, %s19
    %p29 = scmp.ge.s32.totalorder %s28, 1
    %s30 = scalar_select %p29, 0, %s28
    %s31 = sadd.s32 1, %s18
    %s32 = scalar_select %p29, %s31, %s18
    %p33 = scmp.ge.s32.totalorder %s32, 1
    %s34 = scalar_select %p33, 0, %s32
    %s35 = sadd.s32 1, %s17
    %s36 = scalar_select %p33, %s35, %s17
    %p37 = scmp.ge.s32.totalorder %s36, 2
    %s38 = scalar_select %p37, 0, %s36
    %s39 = sadd.s32 1, %s16
    %s40 = scalar_select %p37, %s39, %s16
    %p41 = scmp.ge.s32.totalorder %s40, 1
    %s42 = scalar_select %p41, 0, %s40
    %s43 = ssub.s32 %s16, %s42
    %s44 = ssub.s32 %s17, %s38
    %s45 = sor.u32 %s43, %s44
    %s46 = ssub.s32 %s19, %s30
    %s47 = sor.u32 %s45, %s46
    %p48 = scmp.eq.s32.totalorder %s47, 0
    %s50 = sadd.s32 %s49, 1
    %s51 = scalar_select %p48, %s49, %s50
    %p54 = pneg %p48
    %p55 = scmp.eq.s32.totalorder %s9, 1
    %p56 = por %p54, %p55
    %p57 = scmp.ne.s32.totalorder %s49, %s52
    %p58 = scmp.eq.s32.totalorder %s9, 0
    %p59 = por %p57, %p58
    %p60 = scmp.ne.s32.totalorder %s49, %s52
    %p61 = scmp.eq.s32.totalorder %s14, 1
    %p62 = por %p60, %p61
    %p63 = scmp.ne.s32.totalorder %s52, %s53
    %p64 = scmp.eq.s32.totalorder %s14, 0
    %p65 = por %p63, %p64
    %p66 = scmp.ne.s32.totalorder %s52, %s53
    %p67 = scmp.eq.s32.totalorder %s15, 1
    %p68 = por %p66, %p67
    %p70 = scmp.ne.s32.totalorder %s53, %s69
    %p71 = scmp.eq.s32.totalorder %s15, 0
    %p72 = por %p70, %p71
    %s73 = ssub.s32 %s16, %s42
    %s74 = ssub.s32 %s19, %s30
    %s75 = sor.u32 %s73, %s74
    %s76 = ssub.s32 %s18, %s34
    %s77 = sor.u32 %s75, %s76
    %p78 = scmp.eq.s32.totalorder %s77, 0
    %s80 = sadd.s32 %s79, 1
    %s81 = scalar_select %p78, %s79, %s80
    %p84 = pneg %p78
    %p85 = scmp.eq.s32.totalorder %s9, 1
    %p86 = por %p84, %p85
    %p87 = scmp.ne.s32.totalorder %s79, %s82
    %p88 = scmp.eq.s32.totalorder %s9, 0
    %p89 = por %p87, %p88
    %p90 = scmp.ne.s32.totalorder %s79, %s82
    %p91 = scmp.eq.s32.totalorder %s14, 1
    %p92 = por %p90, %p91
    %p93 = scmp.ne.s32.totalorder %s82, %s83
    %p94 = scmp.eq.s32.totalorder %s14, 0
    %p95 = por %p93, %p94
    %p96 = scmp.ne.s32.totalorder %s82, %s83
    %p97 = scmp.eq.s32.totalorder %s15, 1
    %p98 = por %p96, %p97
    %p100 = scmp.ne.s32.totalorder %s83, %s99
    %p101 = scmp.eq.s32.totalorder %s15, 0
    %p102 = por %p100, %p101
    %s103 = ssub.s32 %s16, %s42
    %s104 = ssub.s32 %s18, %s34
    %s105 = sor.u32 %s103, %s104
    %p106 = scmp.eq.s32.totalorder %s105, 0
    %s108 = sadd.s32 %s107, 1
    %s109 = scalar_select %p106, %s107, %s108
    %p112 = pneg %p106
    %p113 = scmp.eq.s32.totalorder %s9, 1
    %p114 = por %p112, %p113
    %p115 = scmp.ne.s32.totalorder %s107, %s110
    %p116 = scmp.eq.s32.totalorder %s9, 0
    %p117 = por %p115, %p116
    %p118 = scmp.ne.s32.totalorder %s107, %s110
    %p119 = scmp.eq.s32.totalorder %s14, 1
    %p120 = por %p118, %p119
    %p121 = scmp.ne.s32.totalorder %s110, %s111
    %p122 = scmp.eq.s32.totalorder %s14, 0
    %p123 = por %p121, %p122
    %p124 = scmp.ne.s32.totalorder %s110, %s111
    %p125 = scmp.eq.s32.totalorder %s15, 1
    %p126 = por %p124, %p125
    %p128 = scmp.ne.s32.totalorder %s111, %s127
    %p129 = scmp.eq.s32.totalorder %s15, 0
    %p130 = por %p128, %p129
    %s131 = ssub.s32 %s16, %s42
    %s132 = ssub.s32 %s17, %s38
    %s133 = sor.u32 %s131, %s132
    %s134 = ssub.s32 %s18, %s34
    %s135 = sor.u32 %s133, %s134
    %p136 = scmp.eq.s32.totalorder %s135, 0
    %s138 = sadd.s32 %s137, 1
    %s139 = scalar_select %p136, %s137, %s138
    %p142 = pneg %p136
    %p143 = scmp.eq.s32.totalorder %s9, 1
    %p144 = por %p142, %p143
    %p145 = scmp.ne.s32.totalorder %s137, %s140
    %p146 = scmp.eq.s32.totalorder %s9, 0
    %p147 = por %p145, %p146
    %p148 = scmp.ne.s32.totalorder %s137, %s140
    %p149 = scmp.eq.s32.totalorder %s14, 1
    %p150 = por %p148, %p149
    %p151 = scmp.ne.s32.totalorder %s140, %s141
    %p152 = scmp.eq.s32.totalorder %s14, 0
    %p153 = por %p151, %p152
    %p154 = scmp.ne.s32.totalorder %s140, %s141
    %p155 = scmp.eq.s32.totalorder %s15, 1
    %p156 = por %p154, %p155
    %p158 = scmp.ne.s32.totalorder %s141, %s157
    %p159 = scmp.eq.s32.totalorder %s15, 0
    %p160 = por %p158, %p159
    %p161 = scmp.le.s32.totalorder 1, %s9
    %p162 = scmp.lt.s32.totalorder %s9, 3
    %p163 = pnand %p161, %p162
    %p164 = pneg %p163
    // Predicated region
    $region9: #{run.17} parent=5 // pred_check
      _
    $region10: #{run.17} parent=5 // pred_check_branch
      %166 = sbr.rel (%p163) target = $region12
    $region11: #{run.17} parent=5 // pred_region
      %s167 = ssub.s32 %s9, 1
      // Predicated region
      $region13: #{run.17} parent=11 // pred_check
        %p168 = pneg %p95
      $region14: #{run.17} parent=11 // pred_check_branch
        %170 = sbr.rel (%p168) target = $region16
      $region15: #{run.17} parent=11 // pred_region
        %s171 = smul.u32 16, %s23
        %p172 = scmp.lt.s32.totalorder %s20, 0
        %s173 = scalar_select %p172, %s20, 0
        %p174 = scmp.lt.s32.totalorder %s171, 15
        %s175 = scalar_select %p174, %s171, 15
        %p176 = scmp.lt.s32.totalorder %s22, 0
        %s177 = scalar_select %p176, %s22, 0
        %s178 = sadd.s32 %s177, %s175
        %s179 = smul.addr %s173, 16
        %s180 = sadd.s32 %s178, %s179
        %s181 = smul.addr %s180, 8
        %s182 = scalar_lea.vmem %s1, %s181
        %s183 = smul.u32 16, %s23
      $region16: #{run.17} parent=11 // pred_fallthru
        _
      // Predicated region
      $region17: #{run.17} parent=11 // pred_check
        %p184 = pneg %p123
      $region18: #{run.17} parent=11 // pred_check_branch
        %186 = sbr.rel (%p184) target = $region20
      $region19: #{run.17} parent=11 // pred_region
        %p187 = scmp.lt.s32.totalorder %s20, 0
        %s188 = scalar_select %p187, %s20, 0
        %p189 = scmp.lt.s32.totalorder %s22, 0
        %s190 = scalar_select %p189, %s22, 0
        %s191 = sadd.s32 %s190, %s188
        %s192 = scalar_lea.vmem %s2, %s191
      $region20: #{run.17} parent=11 // pred_fallthru
        _
    $region12: #{run.17} parent=5 // pred_fallthru
      _
    %p193 = scmp.lt.s32.totalorder %s9, 2
    // Predicated region
    $region21: #{run.17} parent=5 // pred_check
      %p194 = pneg %p193
    $region22: #{run.17} parent=5 // pred_check_branch
      %196 = sbr.rel (%p194) target = $region24
    $region23: #{run.17} parent=5 // pred_region
      // Predicated region
      $region25: #{run.17} parent=23 // pred_check
        %p197 = pneg %p59
      $region26: #{run.17} parent=23 // pred_check_branch
        %199 = sbr.rel (%p197) target = $region28
      $region27: #{run.17} parent=23 // pred_region
        %s200 = smul.u32 32, %s17
        %p201 = scmp.lt.s32.totalorder %s16, 0
        %s202 = scalar_select %p201, %s16, 0
        %p203 = scmp.lt.s32.totalorder %s200, 63
        %s204 = scalar_select %p203, %s200, 63
        %p205 = scmp.lt.s32.totalorder %s19, 0
        %s206 = scalar_select %p205, %s19, 0
        %s207 = sadd.s32 %s206, %s204
        %s208 = smul.addr %s202, 64
        %s209 = sadd.s32 %s207, %s208
        %s210 = smul.addr %s209, 8
        %s211 = scalar_lea.vmem %s0, %s210
        %s212 = smul.u32 32, %s17
      $region28: #{run.17} parent=23 // pred_fallthru
        _
    $region24: #{run.17} parent=5 // pred_fallthru
      _
    %p213 = scmp.le.s32.totalorder 1, %s9
    %p214 = scmp.lt.s32.totalorder %s9, 3
    %p215 = pnand %p213, %p214
    %p216 = pneg %p215
    // Predicated region
    $region29: #{run.17} parent=5 // pred_check
      _
    $region30: #{run.17} parent=5 // pred_check_branch
      %218 = sbr.rel (%p215) target = $region32
    $region31: #{run.17} parent=5 // pred_region
      %s219 = ssub.s32 %s9, 1
      %s220 = smul.u32 32, %s21
      %p221 = scmp.lt.s32.totalorder %s20, 0
      %s222 = scalar_select %p221, %s20, 0
      %p223 = scmp.lt.s32.totalorder %s220, 63
      %s224 = scalar_select %p223, %s220, 63
      %p225 = scmp.lt.s32.totalorder %s23, 0
      %s226 = scalar_select %p225, %s23, 0
      %s227 = sadd.s32 %s226, %s224
      %s228 = smul.addr %s222, 64
      %s229 = sadd.s32 %s227, %s228
      %s230 = smul.addr %s229, 8
      %s231 = scalar_lea.vmem %s0, %s230
      %p232 = pneg %p65
      %p233 = pneg %p62
      %s234 = smul.u32 16, %s23
      %p235 = scmp.lt.s32.totalorder %s20, 0
      %s236 = scalar_select %p235, %s20, 0
      %p237 = scmp.lt.s32.totalorder %s234, 15
      %s238 = scalar_select %p237, %s234, 15
      %p239 = scmp.lt.s32.totalorder %s22, 0
      %s240 = scalar_select %p239, %s22, 0
      %s241 = sadd.s32 %s240, %s238
      %s242 = smul.addr %s236, 16
      %s243 = sadd.s32 %s241, %s242
      %s244 = smul.addr %s243, 8
      %s245 = scalar_lea.vmem %s1, %s244
      %p246 = pneg %p95
      %p247 = pneg %p92
      %p248 = scmp.lt.s32.totalorder %s20, 0
      %s249 = scalar_select %p248, %s20, 0
      %p250 = scmp.lt.s32.totalorder %s22, 0
      %s251 = scalar_select %p250, %s22, 0
      %s252 = sadd.s32 %s251, %s249
      %s253 = scalar_lea.vmem %s2, %s252
      %p254 = pneg %p123
      %p255 = pneg %p120
      %p256 = pneg %p153
      %p257 = pneg %p150
      %s258 = smul.u32 32, %s21
      %p259 = scmp.lt.s32.totalorder %s20, 0
      %s260 = scalar_select %p259, %s20, 0
      %p261 = scmp.lt.s32.totalorder %s258, 63
      %s262 = scalar_select %p261, %s258, 63
      %p263 = scmp.lt.s32.totalorder %s22, 0
      %s264 = scalar_select %p263, %s22, 0
      %s265 = sadd.s32 %s264, %s262
      %s266 = smul.addr %s260, 64
      %s267 = sadd.s32 %s265, %s266
      %s268 = smul.addr %s267, 8
      %s269 = scalar_lea.vmem %s3, %s268
      %s270 = smul.u32 32, %s21
      %p271 = scmp.lt.s32.totalorder %s20, 0
      %s272 = scalar_select %p271, %s20, 0
      %p273 = scmp.lt.s32.totalorder %s270, 63
      %s274 = scalar_select %p273, %s270, 63
      %p275 = scmp.lt.s32.totalorder %s23, 0
      %s276 = scalar_select %p275, %s23, 0
      %s277 = sadd.s32 %s276, %s274
      %s278 = smul.addr %s272, 64
      %s279 = sadd.s32 %s277, %s278
      %s280 = smul.addr %s279, 8
      %s281 = scalar_lea.vmem %s0, %s280
      %s282 = smul.u32 32, %s21
      %s283 = smul.u32 16, %s23
      %p284 = scmp.lt.s32.totalorder %s20, 0
      %s285 = scalar_select %p284, %s20, 0
      %p286 = scmp.lt.s32.totalorder %s283, 15
      %s287 = scalar_select %p286, %s283, 15
      %p288 = scmp.lt.s32.totalorder %s22, 0
      %s289 = scalar_select %p288, %s22, 0
      %s290 = sadd.s32 %s289, %s287
      %s291 = smul.addr %s285, 16
      %s292 = sadd.s32 %s290, %s291
      %s293 = smul.addr %s292, 8
      %s294 = scalar_lea.vmem %s1, %s293
      %s295 = smul.u32 16, %s23
      %p296 = scmp.lt.s32.totalorder %s20, 0
      %s297 = scalar_select %p296, %s20, 0
      %p298 = scmp.lt.s32.totalorder %s22, 0
      %s299 = scalar_select %p298, %s22, 0
      %s300 = sadd.s32 %s299, %s297
      %s301 = scalar_lea.vmem %s2, %s300
      %s302 = smul.u32 32, %s21
      %p303 = scmp.lt.s32.totalorder %s20, 0
      %s304 = scalar_select %p303, %s20, 0
      %p305 = scmp.lt.s32.totalorder %s302, 63
      %s306 = scalar_select %p305, %s302, 63
      %p307 = scmp.lt.s32.totalorder %s22, 0
      %s308 = scalar_select %p307, %s22, 0
      %s309 = sadd.s32 %s308, %s306
      %s310 = smul.addr %s304, 64
      %s311 = sadd.s32 %s309, %s310
      %s312 = smul.addr %s311, 8
      %s313 = scalar_lea.vmem %s3, %s312
      %s314 = smul.u32 32, %s21
      %p315 = scmp.eq.s32.totalorder %s23, 0
      // Predicated region
      $region33: #{run.17} parent=31 // pred_check
        %p316 = pneg %p315
      $region34: #{run.17} parent=31 // pred_check_branch
        %318 = sbr.rel (%p316) target = $region36
      $region35: #{run.17} parent=31 // pred_region
        %319 = vst [vmem:[#allocation2] sm:$0xff] 0.0
        %320 = vst [vmem:[#allocation2 + $0x8] sm:$0xff] 0.0
        %321 = vst [vmem:[#allocation2 + $0x10] sm:$0xff] 0.0
        %322 = vst [vmem:[#allocation2 + $0x18] sm:$0xff] 0.0
        %323 = vst [vmem:[#allocation2 + $0x20] sm:$0xff] 0.0
        %324 = vst [vmem:[#allocation2 + $0x28] sm:$0xff] 0.0
        %325 = vst [vmem:[#allocation2 + $0x30] sm:$0xff] 0.0
        %326 = vst [vmem:[#allocation2 + $0x38] sm:$0xff] 0.0
        %327 = vst [vmem:[#allocation2 + $0x40] sm:$0xff] 0.0
        %328 = vst [vmem:[#allocation2 + $0x48] sm:$0xff] 0.0
        %329 = vst [vmem:[#allocation2 + $0x50] sm:$0xff] 0.0
        %330 = vst [vmem:[#allocation2 + $0x58] sm:$0xff] 0.0
        %331 = vst [vmem:[#allocation2 + $0x60] sm:$0xff] 0.0
        %332 = vst [vmem:[#allocation2 + $0x68] sm:$0xff] 0.0
        %333 = vst [vmem:[#allocation2 + $0x70] sm:$0xff] 0.0
        %334 = vst [vmem:[#allocation2 + $0x78] sm:$0xff] 0.0
        %335 = vst [vmem:[#allocation2 + $0x80] sm:$0xff] 0.0
        %336 = vst [vmem:[#allocation2 + $0x88] sm:$0xff] 0.0
        %337 = vst [vmem:[#allocation2 + $0x90] sm:$0xff] 0.0
        %338 = vst [vmem:[#allocation2 + $0x98] sm:$0xff] 0.0
        %339 = vst [vmem:[#allocation2 + $0xa0] sm:$0xff] 0.0
        %340 = vst [vmem:[#allocation2 + $0xa8] sm:$0xff] 0.0
        %341 = vst [vmem:[#allocation2 + $0xb0] sm:$0xff] 0.0
        %342 = vst [vmem:[#allocation2 + $0xb8] sm:$0xff] 0.0
        %343 = vst [vmem:[#allocation2 + $0xc0] sm:$0xff] 0.0
        %344 = vst [vmem:[#allocation2 + $0xc8] sm:$0xff] 0.0
        %345 = vst [vmem:[#allocation2 + $0xd0] sm:$0xff] 0.0
        %346 = vst [vmem:[#allocation2 + $0xd8] sm:$0xff] 0.0
        %347 = vst [vmem:[#allocation2 + $0xe0] sm:$0xff] 0.0
        %348 = vst [vmem:[#allocation2 + $0xe8] sm:$0xff] 0.0
        %349 = vst [vmem:[#allocation2 + $0xf0] sm:$0xff] 0.0
        %350 = vst [vmem:[#allocation2 + $0xf8] sm:$0xff] 0.0
      $region36: #{run.17} parent=31 // pred_fallthru
        _
      %v351 = vld [vmem:[#allocation2] sm:$0xff]
      %v352 = vld [vmem:[#allocation2 + $0x8] sm:$0xff]
      %v353 = vld [vmem:[#allocation2 + $0x10] sm:$0xff]
      %v354 = vld [vmem:[#allocation2 + $0x18] sm:$0xff]
      %v355 = vld [vmem:[#allocation2 + $0x20] sm:$0xff]
      %v356 = vld [vmem:[#allocation2 + $0x28] sm:$0xff]
      %v357 = vld [vmem:[#allocation2 + $0x30] sm:$0xff]
      %v358 = vld [vmem:[#allocation2 + $0x38] sm:$0xff]
      %v359 = vld [vmem:[#allocation2 + $0x40] sm:$0xff]
      %v360 = vld [vmem:[#allocation2 + $0x48] sm:$0xff]
      %v361 = vld [vmem:[#allocation2 + $0x50] sm:$0xff]
      %v362 = vld [vmem:[#allocation2 + $0x58] sm:$0xff]
      %v363 = vld [vmem:[#allocation2 + $0x60] sm:$0xff]
      %v364 = vld [vmem:[#allocation2 + $0x68] sm:$0xff]
      %v365 = vld [vmem:[#allocation2 + $0x70] sm:$0xff]
      %v366 = vld [vmem:[#allocation2 + $0x78] sm:$0xff]
      %v367 = vld [vmem:[#allocation2 + $0x80] sm:$0xff]
      %v368 = vld [vmem:[#allocation2 + $0x88] sm:$0xff]
      %v369 = vld [vmem:[#allocation2 + $0x90] sm:$0xff]
      %v370 = vld [vmem:[#allocation2 + $0x98] sm:$0xff]
      %v371 = vld [vmem:[#allocation2 + $0xa0] sm:$0xff]
      %v372 = vld [vmem:[#allocation2 + $0xa8] sm:$0xff]
      %v373 = vld [vmem:[#allocation2 + $0xb0] sm:$0xff]
      %v374 = vld [vmem:[#allocation2 + $0xb8] sm:$0xff]
      %v375 = vld [vmem:[#allocation2 + $0xc0] sm:$0xff]
      %v376 = vld [vmem:[#allocation2 + $0xc8] sm:$0xff]
      %v377 = vld [vmem:[#allocation2 + $0xd0] sm:$0xff]
      %v378 = vld [vmem:[#allocation2 + $0xd8] sm:$0xff]
      %v379 = vld [vmem:[#allocation2 + $0xe0] sm:$0xff]
      %v380 = vld [vmem:[#allocation2 + $0xe8] sm:$0xff]
      %v381 = vld [vmem:[#allocation2 + $0xf0] sm:$0xff]
      %v382 = vld [vmem:[#allocation2 + $0xf8] sm:$0xff]
      %v383 = vld [vmem:[%s281] sm:$0xff]
      %v384 = vld [vmem:[%s281 + $0x8] sm:$0xff]
      %v385 = vld [vmem:[%s281 + $0x10] sm:$0xff]
      %v386 = vld [vmem:[%s281 + $0x18] sm:$0xff]
      %v387 = vld [vmem:[%s281 + $0x20] sm:$0xff]
      %v388 = vld [vmem:[%s281 + $0x28] sm:$0xff]
      %v389 = vld [vmem:[%s281 + $0x30] sm:$0xff]
      %v390 = vld [vmem:[%s281 + $0x38] sm:$0xff]
      %v391 = vld [vmem:[%s281 + $0x40] sm:$0xff]
      %v392 = vld [vmem:[%s281 + $0x48] sm:$0xff]
      %v393 = vld [vmem:[%s281 + $0x50] sm:$0xff]
      %v394 = vld [vmem:[%s281 + $0x58] sm:$0xff]
      %v395 = vld [vmem:[%s281 + $0x60] sm:$0xff]
      %v396 = vld [vmem:[%s281 + $0x68] sm:$0xff]
      %v397 = vld [vmem:[%s281 + $0x70] sm:$0xff]
      %v398 = vld [vmem:[%s281 + $0x78] sm:$0xff]
      %v399 = vld [vmem:[%s281 + $0x80] sm:$0xff]
      %v400 = vld [vmem:[%s281 + $0x88] sm:$0xff]
      %v401 = vld [vmem:[%s281 + $0x90] sm:$0xff]
      %v402 = vld [vmem:[%s281 + $0x98] sm:$0xff]
      %v403 = vld [vmem:[%s281 + $0xa0] sm:$0xff]
      %v404 = vld [vmem:[%s281 + $0xa8] sm:$0xff]
      %v405 = vld [vmem:[%s281 + $0xb0] sm:$0xff]
      %v406 = vld [vmem:[%s281 + $0xb8] sm:$0xff]
      %v407 = vld [vmem:[%s281 + $0xc0] sm:$0xff]
      %v408 = vld [vmem:[%s281 + $0xc8] sm:$0xff]
      %v409 = vld [vmem:[%s281 + $0xd0] sm:$0xff]
      %v410 = vld [vmem:[%s281 + $0xd8] sm:$0xff]
      %v411 = vld [vmem:[%s281 + $0xe0] sm:$0xff]
      %v412 = vld [vmem:[%s281 + $0xe8] sm:$0xff]
      %v413 = vld [vmem:[%s281 + $0xf0] sm:$0xff]
      %v414 = vld [vmem:[%s281 + $0xf8] sm:$0xff]
      %v415 = vld [vmem:[%s294] sm:$0xff]
      %v416 = vld [vmem:[%s294 + $0x8] sm:$0xff]
      %v417 = vld [vmem:[%s294 + $0x10] sm:$0xff]
      %v418 = vld [vmem:[%s294 + $0x18] sm:$0xff]
      %v419 = vld [vmem:[%s294 + $0x20] sm:$0xff]
      %v420 = vld [vmem:[%s294 + $0x28] sm:$0xff]
      %v421 = vld [vmem:[%s294 + $0x30] sm:$0xff]
      %v422 = vld [vmem:[%s294 + $0x38] sm:$0xff]
      %v423 = vld [vmem:[%s294 + $0x40] sm:$0xff]
      %v424 = vld [vmem:[%s294 + $0x48] sm:$0xff]
      %v425 = vld [vmem:[%s294 + $0x50] sm:$0xff]
      %v426 = vld [vmem:[%s294 + $0x58] sm:$0xff]
      %v427 = vld [vmem:[%s294 + $0x60] sm:$0xff]
      %v428 = vld [vmem:[%s294 + $0x68] sm:$0xff]
      %v429 = vld [vmem:[%s294 + $0x70] sm:$0xff]
      %v430 = vld [vmem:[%s294 + $0x78] sm:$0xff]
      %431 = vmatpush.msra.mxu0 %v430
      %432 = vmatpush.msra.mxu0 %v429
      %433 = vmatpush.msra.mxu0 %v428
      %434 = vmatpush.msra.mxu0 %v427
      %435 = vmatpush.msra.mxu0 %v426
      %436 = vmatpush.msra.mxu0 %v425
      %437 = vmatpush.msra.mxu0 %v424
      %438 = vmatpush.msra.mxu0 %v423
      %439 = vmatpush.msra.mxu0 %v422
      %440 = vmatpush.msra.mxu0 %v421
      %441 = vmatpush.msra.mxu0 %v420
      %442 = vmatpush.msra.mxu0 %v419
      %443 = vmatpush.msra.mxu0 %v418
      %444 = vmatpush.msra.mxu0 %v417
      %445 = vmatpush.msra.mxu0 %v416
      %446 = vmatpush.msra.mxu0 %v415
      %447 = vmatmul.f32.gmra.mxu0 %v383
      %v448 = vpop.f32.mrf.mxu0
      %v449 = vadd.f32 0.0, %v448
      %450 = vmatmul.f32.gmra.mxu0 %v384
      %v451 = vpop.f32.mrf.mxu0
      %v452 = vadd.f32 0.0, %v451
      %453 = vmatmul.f32.gmra.mxu0 %v385
      %v454 = vpop.f32.mrf.mxu0
      %v455 = vadd.f32 0.0, %v454
      %456 = vmatmul.f32.gmra.mxu0 %v386
      %v457 = vpop.f32.mrf.mxu0
      %v458 = vadd.f32 0.0, %v457
      %459 = vmatmul.f32.gmra.mxu0 %v387
      %v460 = vpop.f32.mrf.mxu0
      %v461 = vadd.f32 0.0, %v460
      %462 = vmatmul.f32.gmra.mxu0 %v388
      %v463 = vpop.f32.mrf.mxu0
      %v464 = vadd.f32 0.0, %v463
      %465 = vmatmul.f32.gmra.mxu0 %v389
      %v466 = vpop.f32.mrf.mxu0
      %v467 = vadd.f32 0.0, %v466
      %468 = vmatmul.f32.gmra.mxu0 %v390
      %v469 = vpop.f32.mrf.mxu0
      %v470 = vadd.f32 0.0, %v469
      %471 = vmatmul.f32.gmra.mxu0 %v391
      %v472 = vpop.f32.mrf.mxu0
      %v473 = vadd.f32 0.0, %v472
      %474 = vmatmul.f32.gmra.mxu0 %v392
      %v475 = vpop.f32.mrf.mxu0
      %v476 = vadd.f32 0.0, %v475
      %477 = vmatmul.f32.gmra.mxu0 %v393
      %v478 = vpop.f32.mrf.mxu0
      %v479 = vadd.f32 0.0, %v478
      %480 = vmatmul.f32.gmra.mxu0 %v394
      %v481 = vpop.f32.mrf.mxu0
      %v482 = vadd.f32 0.0, %v481
      %483 = vmatmul.f32.gmra.mxu0 %v395
      %v484 = vpop.f32.mrf.mxu0
      %v485 = vadd.f32 0.0, %v484
      %486 = vmatmul.f32.gmra.mxu0 %v396
      %v487 = vpop.f32.mrf.mxu0
      %v488 = vadd.f32 0.0, %v487
      %489 = vmatmul.f32.gmra.mxu0 %v397
      %v490 = vpop.f32.mrf.mxu0
      %v491 = vadd.f32 0.0, %v490
      %492 = vmatmul.f32.gmra.mxu0 %v398
      %v493 = vpop.f32.mrf.mxu0
      %v494 = vadd.f32 0.0, %v493
      %495 = vmatmul.f32.gmra.mxu0 %v399
      %v496 = vpop.f32.mrf.mxu0
      %v497 = vadd.f32 0.0, %v496
      %498 = vmatmul.f32.gmra.mxu0 %v400
      %v499 = vpop.f32.mrf.mxu0
      %v500 = vadd.f32 0.0, %v499
      %501 = vmatmul.f32.gmra.mxu0 %v401
      %v502 = vpop.f32.mrf.mxu0
      %v503 = vadd.f32 0.0, %v502
      %504 = vmatmul.f32.gmra.mxu0 %v402
      %v505 = vpop.f32.mrf.mxu0
      %v506 = vadd.f32 0.0, %v505
      %507 = vmatmul.f32.gmra.mxu0 %v403
      %v508 = vpop.f32.mrf.mxu0
      %v509 = vadd.f32 0.0, %v508
      %510 = vmatmul.f32.gmra.mxu0 %v404
      %v511 = vpop.f32.mrf.mxu0
      %v512 = vadd.f32 0.0, %v511
      %513 = vmatmul.f32.gmra.mxu0 %v405
      %v514 = vpop.f32.mrf.mxu0
      %v515 = vadd.f32 0.0, %v514
      %516 = vmatmul.f32.gmra.mxu0 %v406
      %v517 = vpop.f32.mrf.mxu0
      %v518 = vadd.f32 0.0, %v517
      %519 = vmatmul.f32.gmra.mxu0 %v407
      %v520 = vpop.f32.mrf.mxu0
      %v521 = vadd.f32 0.0, %v520
      %522 = vmatmul.f32.gmra.mxu0 %v408
      %v523 = vpop.f32.mrf.mxu0
      %v524 = vadd.f32 0.0, %v523
      %525 = vmatmul.f32.gmra.mxu0 %v409
      %v526 = vpop.f32.mrf.mxu0
      %v527 = vadd.f32 0.0, %v526
      %528 = vmatmul.f32.gmra.mxu0 %v410
      %v529 = vpop.f32.mrf.mxu0
      %v530 = vadd.f32 0.0, %v529
      %531 = vmatmul.f32.gmra.mxu0 %v411
      %v532 = vpop.f32.mrf.mxu0
      %v533 = vadd.f32 0.0, %v532
      %534 = vmatmul.f32.gmra.mxu0 %v412
      %v535 = vpop.f32.mrf.mxu0
      %v536 = vadd.f32 0.0, %v535
      %537 = vmatmul.f32.gmra.mxu0 %v413
      %v538 = vpop.f32.mrf.mxu0
      %v539 = vadd.f32 0.0, %v538
      %540 = vmatmul.f32.gmra.mxu0 %v414
      %v541 = vpop.f32.mrf.mxu0
      %v542 = vadd.f32 0.0, %v541
      %543 = vdwg.mxu0
      %v544 = vadd.f32 %v351, %v449
      %v545 = vadd.f32 %v352, %v452
      %v546 = vadd.f32 %v353, %v455
      %v547 = vadd.f32 %v354, %v458
      %v548 = vadd.f32 %v355, %v461
      %v549 = vadd.f32 %v356, %v464
      %v550 = vadd.f32 %v357, %v467
      %v551 = vadd.f32 %v358, %v470
      %v552 = vadd.f32 %v359, %v473
      %v553 = vadd.f32 %v360, %v476
      %v554 = vadd.f32 %v361, %v479
      %v555 = vadd.f32 %v362, %v482
      %v556 = vadd.f32 %v363, %v485
      %v557 = vadd.f32 %v364, %v488
      %v558 = vadd.f32 %v365, %v491
      %v559 = vadd.f32 %v366, %v494
      %v560 = vadd.f32 %v367, %v497
      %v561 = vadd.f32 %v368, %v500
      %v562 = vadd.f32 %v369, %v503
      %v563 = vadd.f32 %v370, %v506
      %v564 = vadd.f32 %v371, %v509
      %v565 = vadd.f32 %v372, %v512
      %v566 = vadd.f32 %v373, %v515
      %v567 = vadd.f32 %v374, %v518
      %v568 = vadd.f32 %v375, %v521
      %v569 = vadd.f32 %v376, %v524
      %v570 = vadd.f32 %v377, %v527
      %v571 = vadd.f32 %v378, %v530
      %v572 = vadd.f32 %v379, %v533
      %v573 = vadd.f32 %v380, %v536
      %v574 = vadd.f32 %v381, %v539
      %v575 = vadd.f32 %v382, %v542
      %576 = vst [vmem:[#allocation2] sm:$0xff] %v544
      %577 = vst [vmem:[#allocation2 + $0x8] sm:$0xff] %v545
      %578 = vst [vmem:[#allocation2 + $0x10] sm:$0xff] %v546
      %579 = vst [vmem:[#allocation2 + $0x18] sm:$0xff] %v547
      %580 = vst [vmem:[#allocation2 + $0x20] sm:$0xff] %v548
      %581 = vst [vmem:[#allocation2 + $0x28] sm:$0xff] %v549
      %582 = vst [vmem:[#allocation2 + $0x30] sm:$0xff] %v550
      %583 = vst [vmem:[#allocation2 + $0x38] sm:$0xff] %v551
      %584 = vst [vmem:[#allocation2 + $0x40] sm:$0xff] %v552
      %585 = vst [vmem:[#allocation2 + $0x48] sm:$0xff] %v553
      %586 = vst [vmem:[#allocation2 + $0x50] sm:$0xff] %v554
      %587 = vst [vmem:[#allocation2 + $0x58] sm:$0xff] %v555
      %588 = vst [vmem:[#allocation2 + $0x60] sm:$0xff] %v556
      %589 = vst [vmem:[#allocation2 + $0x68] sm:$0xff] %v557
      %590 = vst [vmem:[#allocation2 + $0x70] sm:$0xff] %v558
      %591 = vst [vmem:[#allocation2 + $0x78] sm:$0xff] %v559
      %592 = vst [vmem:[#allocation2 + $0x80] sm:$0xff] %v560
      %593 = vst [vmem:[#allocation2 + $0x88] sm:$0xff] %v561
      %594 = vst [vmem:[#allocation2 + $0x90] sm:$0xff] %v562
      %595 = vst [vmem:[#allocation2 + $0x98] sm:$0xff] %v563
      %596 = vst [vmem:[#allocation2 + $0xa0] sm:$0xff] %v564
      %597 = vst [vmem:[#allocation2 + $0xa8] sm:$0xff] %v565
      %598 = vst [vmem:[#allocation2 + $0xb0] sm:$0xff] %v566
      %599 = vst [vmem:[#allocation2 + $0xb8] sm:$0xff] %v567
      %600 = vst [vmem:[#allocation2 + $0xc0] sm:$0xff] %v568
      %601 = vst [vmem:[#allocation2 + $0xc8] sm:$0xff] %v569
      %602 = vst [vmem:[#allocation2 + $0xd0] sm:$0xff] %v570
      %603 = vst [vmem:[#allocation2 + $0xd8] sm:$0xff] %v571
      %604 = vst [vmem:[#allocation2 + $0xe0] sm:$0xff] %v572
      %605 = vst [vmem:[#allocation2 + $0xe8] sm:$0xff] %v573
      %606 = vst [vmem:[#allocation2 + $0xf0] sm:$0xff] %v574
      %607 = vst [vmem:[#allocation2 + $0xf8] sm:$0xff] %v575
      // Predicated region
      $region37: #{run.17} parent=31 // pred_check
        %p608 = pneg %p315
      $region38: #{run.17} parent=31 // pred_check_branch
        %610 = sbr.rel (%p608) target = $region40
      $region39: #{run.17} parent=31 // pred_region
        %v611 = vld [vmem:[#allocation2] sm:$0xff]
        %v612 = vld [vmem:[#allocation2 + $0x8] sm:$0xff]
        %v613 = vld [vmem:[#allocation2 + $0x10] sm:$0xff]
        %v614 = vld [vmem:[#allocation2 + $0x18] sm:$0xff]
        %v615 = vld [vmem:[#allocation2 + $0x20] sm:$0xff]
        %v616 = vld [vmem:[#allocation2 + $0x28] sm:$0xff]
        %v617 = vld [vmem:[#allocation2 + $0x30] sm:$0xff]
        %v618 = vld [vmem:[#allocation2 + $0x38] sm:$0xff]
        %v619 = vld [vmem:[#allocation2 + $0x40] sm:$0xff]
        %v620 = vld [vmem:[#allocation2 + $0x48] sm:$0xff]
        %v621 = vld [vmem:[#allocation2 + $0x50] sm:$0xff]
        %v622 = vld [vmem:[#allocation2 + $0x58] sm:$0xff]
        %v623 = vld [vmem:[#allocation2 + $0x60] sm:$0xff]
        %v624 = vld [vmem:[#allocation2 + $0x68] sm:$0xff]
        %v625 = vld [vmem:[#allocation2 + $0x70] sm:$0xff]
        %v626 = vld [vmem:[#allocation2 + $0x78] sm:$0xff]
        %v627 = vld [vmem:[#allocation2 + $0x80] sm:$0xff]
        %v628 = vld [vmem:[#allocation2 + $0x88] sm:$0xff]
        %v629 = vld [vmem:[#allocation2 + $0x90] sm:$0xff]
        %v630 = vld [vmem:[#allocation2 + $0x98] sm:$0xff]
        %v631 = vld [vmem:[#allocation2 + $0xa0] sm:$0xff]
        %v632 = vld [vmem:[#allocation2 + $0xa8] sm:$0xff]
        %v633 = vld [vmem:[#allocation2 + $0xb0] sm:$0xff]
        %v634 = vld [vmem:[#allocation2 + $0xb8] sm:$0xff]
        %v635 = vld [vmem:[#allocation2 + $0xc0] sm:$0xff]
        %v636 = vld [vmem:[#allocation2 + $0xc8] sm:$0xff]
        %v637 = vld [vmem:[#allocation2 + $0xd0] sm:$0xff]
        %v638 = vld [vmem:[#allocation2 + $0xd8] sm:$0xff]
        %v639 = vld [vmem:[#allocation2 + $0xe0] sm:$0xff]
        %v640 = vld [vmem:[#allocation2 + $0xe8] sm:$0xff]
        %v641 = vld [vmem:[#allocation2 + $0xf0] sm:$0xff]
        %v642 = vld [vmem:[#allocation2 + $0xf8] sm:$0xff]
        %v643 = vld [vmem:[%s301] sm:$0x1]
        %v645 = vperm.slane %v643, 0
        %v647 = vadd.f32 %v611, %v645
        %v648 = vadd.f32 %v612, %v645
        %v649 = vadd.f32 %v613, %v645
        %v650 = vadd.f32 %v614, %v645
        %v651 = vadd.f32 %v615, %v645
        %v652 = vadd.f32 %v616, %v645
        %v653 = vadd.f32 %v617, %v645
        %v654 = vadd.f32 %v618, %v645
        %v655 = vadd.f32 %v619, %v645
        %v656 = vadd.f32 %v620, %v645
        %v657 = vadd.f32 %v621, %v645
        %v658 = vadd.f32 %v622, %v645
        %v659 = vadd.f32 %v623, %v645
        %v660 = vadd.f32 %v624, %v645
        %v661 = vadd.f32 %v625, %v645
        %v662 = vadd.f32 %v626, %v645
        %v663 = vadd.f32 %v627, %v645
        %v664 = vadd.f32 %v628, %v645
        %v665 = vadd.f32 %v629, %v645
        %v666 = vadd.f32 %v630, %v645
        %v667 = vadd.f32 %v631, %v645
        %v668 = vadd.f32 %v632, %v645
        %v669 = vadd.f32 %v633, %v645
        %v670 = vadd.f32 %v634, %v645
        %v671 = vadd.f32 %v635, %v645
        %v672 = vadd.f32 %v636, %v645
        %v673 = vadd.f32 %v637, %v645
        %v674 = vadd.f32 %v638, %v645
        %v675 = vadd.f32 %v639, %v645
        %v676 = vadd.f32 %v640, %v645
        %v677 = vadd.f32 %v641, %v645
        %v678 = vadd.f32 %v642, %v645
        %679 = vst [vmem:[%s313] sm:$0xff] %v647
        %680 = vst [vmem:[%s313 + $0x8] sm:$0xff] %v648
        %681 = vst [vmem:[%s313 + $0x10] sm:$0xff] %v649
        %682 = vst [vmem:[%s313 + $0x18] sm:$0xff] %v650
        %683 = vst [vmem:[%s313 + $0x20] sm:$0xff] %v651
        %684 = vst [vmem:[%s313 + $0x28] sm:$0xff] %v652
        %685 = vst [vmem:[%s313 + $0x30] sm:$0xff] %v653
        %686 = vst [vmem:[%s313 + $0x38] sm:$0xff] %v654
        %687 = vst [vmem:[%s313 + $0x40] sm:$0xff] %v655
        %688 = vst [vmem:[%s313 + $0x48] sm:$0xff] %v656
        %689 = vst [vmem:[%s313 + $0x50] sm:$0xff] %v657
        %690 = vst [vmem:[%s313 + $0x58] sm:$0xff] %v658
        %691 = vst [vmem:[%s313 + $0x60] sm:$0xff] %v659
        %692 = vst [vmem:[%s313 + $0x68] sm:$0xff] %v660
        %693 = vst [vmem:[%s313 + $0x70] sm:$0xff] %v661
        %694 = vst [vmem:[%s313 + $0x78] sm:$0xff] %v662
        %695 = vst [vmem:[%s313 + $0x80] sm:$0xff] %v663
        %696 = vst [vmem:[%s313 + $0x88] sm:$0xff] %v664
        %697 = vst [vmem:[%s313 + $0x90] sm:$0xff] %v665
        %698 = vst [vmem:[%s313 + $0x98] sm:$0xff] %v666
        %699 = vst [vmem:[%s313 + $0xa0] sm:$0xff] %v667
        %700 = vst [vmem:[%s313 + $0xa8] sm:$0xff] %v668
        %701 = vst [vmem:[%s313 + $0xb0] sm:$0xff] %v669
        %702 = vst [vmem:[%s313 + $0xb8] sm:$0xff] %v670
        %703 = vst [vmem:[%s313 + $0xc0] sm:$0xff] %v671
        %704 = vst [vmem:[%s313 + $0xc8] sm:$0xff] %v672
        %705 = vst [vmem:[%s313 + $0xd0] sm:$0xff] %v673
        %706 = vst [vmem:[%s313 + $0xd8] sm:$0xff] %v674
        %707 = vst [vmem:[%s313 + $0xe0] sm:$0xff] %v675
        %708 = vst [vmem:[%s313 + $0xe8] sm:$0xff] %v676
        %709 = vst [vmem:[%s313 + $0xf0] sm:$0xff] %v677
        %710 = vst [vmem:[%s313 + $0xf8] sm:$0xff] %v678
      $region40: #{run.17} parent=31 // pred_fallthru
        _
      %s711 = smul.u32 32, %s21
      %p712 = scmp.lt.s32.totalorder %s20, 0
      %s713 = scalar_select %p712, %s20, 0
      %p714 = scmp.lt.s32.totalorder %s711, 63
      %s715 = scalar_select %p714, %s711, 63
      %p716 = scmp.lt.s32.totalorder %s22, 0
      %s717 = scalar_select %p716, %s22, 0
      %s718 = sadd.s32 %s717, %s715
      %s719 = smul.addr %s713, 64
      %s720 = sadd.s32 %s718, %s719
      %s721 = smul.addr %s720, 8
      %s722 = scalar_lea.vmem %s3, %s721
      // Predicated region
      $region41: #{run.17} parent=31 // pred_check
        %p723 = pneg %p150
      $region42: #{run.17} parent=31 // pred_check_branch
        %725 = sbr.rel (%p723) target = $region44
      $region43: #{run.17} parent=31 // pred_region
        %s726 = smul.u32 32, %s21
      $region44: #{run.17} parent=31 // pred_fallthru
        _
    $region32: #{run.17} parent=5 // pred_fallthru
      _
    %p727 = scmp.le.s32.totalorder 2, %s9
    // Predicated region
    $region45: #{run.17} parent=5 // pred_check
      %p728 = pneg %p727
    $region46: #{run.17} parent=5 // pred_check_branch
      %730 = sbr.rel (%p728) target = $region48
    $region47: #{run.17} parent=5 // pred_region
      %s731 = ssub.s32 %s9, 2
      // Predicated region
      $region49: #{run.17} parent=47 // pred_check
        %p732 = pneg %p156
      $region50: #{run.17} parent=47 // pred_check_branch
        %734 = sbr.rel (%p732) target = $region52
      $region51: #{run.17} parent=47 // pred_region
        %s735 = smul.u32 32, %s25
        %p736 = scmp.lt.s32.totalorder %s24, 0
        %s737 = scalar_select %p736, %s24, 0
        %p738 = scmp.lt.s32.totalorder %s735, 63
        %s739 = scalar_select %p738, %s735, 63
        %p740 = scmp.lt.s32.totalorder %s26, 0
        %s741 = scalar_select %p740, %s26, 0
        %s742 = sadd.s32 %s741, %s739
        %s743 = smul.addr %s737, 64
        %s744 = sadd.s32 %s742, %s743
        %s745 = smul.addr %s744, 8
        %s746 = scalar_lea.vmem %s3, %s745
      $region52: #{run.17} parent=47 // pred_fallthru
        _
    $region48: #{run.17} parent=5 // pred_fallthru
      _
  $region6: #{run.17} parent=0 // loop_footer
    %s13 = sadd.s32 1, %s9
  $region7: #{run.17} parent=0 // loop_footer_branch
    %8 = sbr.rel target = $region3
  $region8: #{run.17} parent=0 // loop_exit
    _

// kernel: run.18
$region0: #{run.18}
  #allocation0 [shape = 'u32[]', space=smem, size = 0x4, offset = 0x4, fixed_abs, tag = 'smem constant byte address 0x4 - core index']
  #allocation1 [shape = 'u32[72,128]{1,0:T(1,128)}', space=vmem, size = 0x9000, scoped, tag = 'internal scratch']
  #allocation2 [shape = 'f32[128,128]{1,0:T(8,128)}', space=vmem, size = 0x10000, scoped, tag = 'scratch operand']
  %s0 = inlined_call_operand.vmem [shape: f32[1,128,128], index: 0, kind: input, shape index: {}]
  %s1 = inlined_call_operand.vmem [shape: f32[1,128,128], index: 1, kind: input, shape index: {}]
  %s2 = inlined_call_operand.vmem [shape: f32[1,1,128], index: 2, kind: input, shape index: {}]
  %s3 = inlined_call_operand.vmem [shape: f32[1,128,128], index: 3, kind: output, shape index: {}]
  %s4 = sld [smem:[#allocation0]]
  $region30: #{run.18} parent=0
    _
  %s6 = ssub.s32 1, %s4
  %s7 = scalar_select 0, %s6, %s4
  // Predicated region
  $region2: #{run.18} parent=0 // pred_check
    _
  $region3: #{run.18} parent=0 // pred_check_branch
    %9 = sbr.rel (0) target = $region5
  $region4: #{run.18} parent=0 // pred_region
    _
  $region5: #{run.18} parent=0 // pred_fallthru
    _
  // Predicated region
  $region6: #{run.18} parent=0 // pred_check
    _
  $region7: #{run.18} parent=0 // pred_check_branch
    %11 = sbr.rel (0) target = $region9
  $region8: #{run.18} parent=0 // pred_region
    _
  $region9: #{run.18} parent=0 // pred_fallthru
    _
  // Predicated region
  $region10: #{run.18} parent=0 // pred_check
    _
  $region11: #{run.18} parent=0 // pred_check_branch
    %13 = sbr.rel (0) target = $region13
  $region12: #{run.18} parent=0 // pred_region
    _
  $region13: #{run.18} parent=0 // pred_fallthru
    _
  %p14 = scmp.eq.s32.totalorder 0, 0
  // Predicated region
  $region14: #{run.18} parent=0 // pred_check
    %p15 = pneg %p14
  $region15: #{run.18} parent=0 // pred_check_branch
    %17 = sbr.rel (%p15) target = $region17
  $region16: #{run.18} parent=0 // pred_region
    %18 = vst [vmem:[#allocation2] sm:$0xff] 0.0
    %19 = vst [vmem:[#allocation2 + $0x8] sm:$0xff] 0.0
    %20 = vst [vmem:[#allocation2 + $0x10] sm:$0xff] 0.0
    %21 = vst [vmem:[#allocation2 + $0x18] sm:$0xff] 0.0
    %22 = vst [vmem:[#allocation2 + $0x20] sm:$0xff] 0.0
    %23 = vst [vmem:[#allocation2 + $0x28] sm:$0xff] 0.0
    %24 = vst [vmem:[#allocation2 + $0x30] sm:$0xff] 0.0
    %25 = vst [vmem:[#allocation2 + $0x38] sm:$0xff] 0.0
    %26 = vst [vmem:[#allocation2 + $0x40] sm:$0xff] 0.0
    %27 = vst [vmem:[#allocation2 + $0x48] sm:$0xff] 0.0
    %28 = vst [vmem:[#allocation2 + $0x50] sm:$0xff] 0.0
    %29 = vst [vmem:[#allocation2 + $0x58] sm:$0xff] 0.0
    %30 = vst [vmem:[#allocation2 + $0x60] sm:$0xff] 0.0
    %31 = vst [vmem:[#allocation2 + $0x68] sm:$0xff] 0.0
    %32 = vst [vmem:[#allocation2 + $0x70] sm:$0xff] 0.0
    %33 = vst [vmem:[#allocation2 + $0x78] sm:$0xff] 0.0
  $region17: #{run.18} parent=0 // pred_fallthru
    _
  %v34 = vld [vmem:[#allocation2] sm:$0xff]
  %v35 = vld [vmem:[#allocation2 + $0x8] sm:$0xff]
  %v36 = vld [vmem:[#allocation2 + $0x10] sm:$0xff]
  %v37 = vld [vmem:[#allocation2 + $0x18] sm:$0xff]
  %v38 = vld [vmem:[#allocation2 + $0x20] sm:$0xff]
  %v39 = vld [vmem:[#allocation2 + $0x28] sm:$0xff]
  %v40 = vld [vmem:[#allocation2 + $0x30] sm:$0xff]
  %v41 = vld [vmem:[#allocation2 + $0x38] sm:$0xff]
  %v42 = vld [vmem:[#allocation2 + $0x40] sm:$0xff]
  %v43 = vld [vmem:[#allocation2 + $0x48] sm:$0xff]
  %v44 = vld [vmem:[#allocation2 + $0x50] sm:$0xff]
  %v45 = vld [vmem:[#allocation2 + $0x58] sm:$0xff]
  %v46 = vld [vmem:[#allocation2 + $0x60] sm:$0xff]
  %v47 = vld [vmem:[#allocation2 + $0x68] sm:$0xff]
  %v48 = vld [vmem:[#allocation2 + $0x70] sm:$0xff]
  %v49 = vld [vmem:[#allocation2 + $0x78] sm:$0xff]
  %v50 = vld [vmem:[%s0] sm:$0xff]
  %v51 = vld [vmem:[%s0 + $0x8] sm:$0xff]
  %v52 = vld [vmem:[%s0 + $0x10] sm:$0xff]
  %v53 = vld [vmem:[%s0 + $0x18] sm:$0xff]
  %v54 = vld [vmem:[%s0 + $0x20] sm:$0xff]
  %v55 = vld [vmem:[%s0 + $0x28] sm:$0xff]
  %v56 = vld [vmem:[%s0 + $0x30] sm:$0xff]
  %v57 = vld [vmem:[%s0 + $0x38] sm:$0xff]
  %v58 = vld [vmem:[%s0 + $0x40] sm:$0xff]
  %v59 = vld [vmem:[%s0 + $0x48] sm:$0xff]
  %v60 = vld [vmem:[%s0 + $0x50] sm:$0xff]
  %v61 = vld [vmem:[%s0 + $0x58] sm:$0xff]
  %v62 = vld [vmem:[%s0 + $0x60] sm:$0xff]
  %v63 = vld [vmem:[%s0 + $0x68] sm:$0xff]
  %v64 = vld [vmem:[%s0 + $0x70] sm:$0xff]
  %v65 = vld [vmem:[%s0 + $0x78] sm:$0xff]
  %v66 = vld [vmem:[%s1] sm:$0xff]
  %v67 = vld [vmem:[%s1 + $0x8] sm:$0xff]
  %v68 = vld [vmem:[%s1 + $0x10] sm:$0xff]
  %v69 = vld [vmem:[%s1 + $0x18] sm:$0xff]
  %v70 = vld [vmem:[%s1 + $0x20] sm:$0xff]
  %v71 = vld [vmem:[%s1 + $0x28] sm:$0xff]
  %v72 = vld [vmem:[%s1 + $0x30] sm:$0xff]
  %v73 = vld [vmem:[%s1 + $0x38] sm:$0xff]
  %v74 = vld [vmem:[%s1 + $0x40] sm:$0xff]
  %v75 = vld [vmem:[%s1 + $0x48] sm:$0xff]
  %v76 = vld [vmem:[%s1 + $0x50] sm:$0xff]
  %v77 = vld [vmem:[%s1 + $0x58] sm:$0xff]
  %v78 = vld [vmem:[%s1 + $0x60] sm:$0xff]
  %v79 = vld [vmem:[%s1 + $0x68] sm:$0xff]
  %v80 = vld [vmem:[%s1 + $0x70] sm:$0xff]
  %v81 = vld [vmem:[%s1 + $0x78] sm:$0xff]
  %82 = vmatpush.msra.mxu0 %v81
  %83 = vmatpush.msra.mxu0 %v80
  %84 = vmatpush.msra.mxu0 %v79
  %85 = vmatpush.msra.mxu0 %v78
  %86 = vmatpush.msra.mxu0 %v77
  %87 = vmatpush.msra.mxu0 %v76
  %88 = vmatpush.msra.mxu0 %v75
  %89 = vmatpush.msra.mxu0 %v74
  %90 = vmatpush.msra.mxu0 %v73
  %91 = vmatpush.msra.mxu0 %v72
  %92 = vmatpush.msra.mxu0 %v71
  %93 = vmatpush.msra.mxu0 %v70
  %94 = vmatpush.msra.mxu0 %v69
  %95 = vmatpush.msra.mxu0 %v68
  %96 = vmatpush.msra.mxu0 %v67
  %97 = vmatpush.msra.mxu0 %v66
  %98 = vmatmul.f32.gmra.mxu0 %v50
  %v99 = vpop.f32.mrf.mxu0
  %v100 = vadd.f32 0.0, %v99
  %101 = vmatmul.f32.gmra.mxu0 %v51
  %v102 = vpop.f32.mrf.mxu0
  %v103 = vadd.f32 0.0, %v102
  %104 = vmatmul.f32.gmra.mxu0 %v52
  %v105 = vpop.f32.mrf.mxu0
  %v106 = vadd.f32 0.0, %v105
  %107 = vmatmul.f32.gmra.mxu0 %v53
  %v108 = vpop.f32.mrf.mxu0
  %v109 = vadd.f32 0.0, %v108
  %110 = vmatmul.f32.gmra.mxu0 %v54
  %v111 = vpop.f32.mrf.mxu0
  %v112 = vadd.f32 0.0, %v111
  %113 = vmatmul.f32.gmra.mxu0 %v55
  %v114 = vpop.f32.mrf.mxu0
  %v115 = vadd.f32 0.0, %v114
  %116 = vmatmul.f32.gmra.mxu0 %v56
  %v117 = vpop.f32.mrf.mxu0
  %v118 = vadd.f32 0.0, %v117
  %119 = vmatmul.f32.gmra.mxu0 %v57
  %v120 = vpop.f32.mrf.mxu0
  %v121 = vadd.f32 0.0, %v120
  %122 = vmatmul.f32.gmra.mxu0 %v58
  %v123 = vpop.f32.mrf.mxu0
  %v124 = vadd.f32 0.0, %v123
  %125 = vmatmul.f32.gmra.mxu0 %v59
  %v126 = vpop.f32.mrf.mxu0
  %v127 = vadd.f32 0.0, %v126
  %128 = vmatmul.f32.gmra.mxu0 %v60
  %v129 = vpop.f32.mrf.mxu0
  %v130 = vadd.f32 0.0, %v129
  %131 = vmatmul.f32.gmra.mxu0 %v61
  %v132 = vpop.f32.mrf.mxu0
  %v133 = vadd.f32 0.0, %v132
  %134 = vmatmul.f32.gmra.mxu0 %v62
  %v135 = vpop.f32.mrf.mxu0
  %v136 = vadd.f32 0.0, %v135
  %137 = vmatmul.f32.gmra.mxu0 %v63
  %v138 = vpop.f32.mrf.mxu0
  %v139 = vadd.f32 0.0, %v138
  %140 = vmatmul.f32.gmra.mxu0 %v64
  %v141 = vpop.f32.mrf.mxu0
  %v142 = vadd.f32 0.0, %v141
  %143 = vmatmul.f32.gmra.mxu0 %v65
  %v144 = vpop.f32.mrf.mxu0
  %v145 = vadd.f32 0.0, %v144
  %146 = vdwg.mxu0
  %v147 = vadd.f32 %v34, %v100
  %v148 = vadd.f32 %v35, %v103
  %v149 = vadd.f32 %v36, %v106
  %v150 = vadd.f32 %v37, %v109
  %v151 = vadd.f32 %v38, %v112
  %v152 = vadd.f32 %v39, %v115
  %v153 = vadd.f32 %v40, %v118
  %v154 = vadd.f32 %v41, %v121
  %v155 = vadd.f32 %v42, %v124
  %v156 = vadd.f32 %v43, %v127
  %v157 = vadd.f32 %v44, %v130
  %v158 = vadd.f32 %v45, %v133
  %v159 = vadd.f32 %v46, %v136
  %v160 = vadd.f32 %v47, %v139
  %v161 = vadd.f32 %v48, %v142
  %v162 = vadd.f32 %v49, %v145
  %163 = vst [vmem:[#allocation2] sm:$0xff] %v147
  %164 = vst [vmem:[#allocation2 + $0x8] sm:$0xff] %v148
  %165 = vst [vmem:[#allocation2 + $0x10] sm:$0xff] %v149
  %166 = vst [vmem:[#allocation2 + $0x18] sm:$0xff] %v150
  %167 = vst [vmem:[#allocation2 + $0x20] sm:$0xff] %v151
  %168 = vst [vmem:[#allocation2 + $0x28] sm:$0xff] %v152
  %169 = vst [vmem:[#allocation2 + $0x30] sm:$0xff] %v153
  %170 = vst [vmem:[#allocation2 + $0x38] sm:$0xff] %v154
  %171 = vst [vmem:[#allocation2 + $0x40] sm:$0xff] %v155
  %172 = vst [vmem:[#allocation2 + $0x48] sm:$0xff] %v156
  %173 = vst [vmem:[#allocation2 + $0x50] sm:$0xff] %v157
  %174 = vst [vmem:[#allocation2 + $0x58] sm:$0xff] %v158
  %175 = vst [vmem:[#allocation2 + $0x60] sm:$0xff] %v159
  %176 = vst [vmem:[#allocation2 + $0x68] sm:$0xff] %v160
  %177 = vst [vmem:[#allocation2 + $0x70] sm:$0xff] %v161
  %178 = vst [vmem:[#allocation2 + $0x78] sm:$0xff] %v162
  // Predicated region
  $region18: #{run.18} parent=0 // pred_check
    %p179 = pneg %p14
  $region19: #{run.18} parent=0 // pred_check_branch
    %181 = sbr.rel (%p179) target = $region21
  $region20: #{run.18} parent=0 // pred_region
    %v182 = vld [vmem:[#allocation2] sm:$0xff]
    %v183 = vld [vmem:[#allocation2 + $0x8] sm:$0xff]
    %v184 = vld [vmem:[#allocation2 + $0x10] sm:$0xff]
    %v185 = vld [vmem:[#allocation2 + $0x18] sm:$0xff]
    %v186 = vld [vmem:[#allocation2 + $0x20] sm:$0xff]
    %v187 = vld [vmem:[#allocation2 + $0x28] sm:$0xff]
    %v188 = vld [vmem:[#allocation2 + $0x30] sm:$0xff]
    %v189 = vld [vmem:[#allocation2 + $0x38] sm:$0xff]
    %v190 = vld [vmem:[#allocation2 + $0x40] sm:$0xff]
    %v191 = vld [vmem:[#allocation2 + $0x48] sm:$0xff]
    %v192 = vld [vmem:[#allocation2 + $0x50] sm:$0xff]
    %v193 = vld [vmem:[#allocation2 + $0x58] sm:$0xff]
    %v194 = vld [vmem:[#allocation2 + $0x60] sm:$0xff]
    %v195 = vld [vmem:[#allocation2 + $0x68] sm:$0xff]
    %v196 = vld [vmem:[#allocation2 + $0x70] sm:$0xff]
    %v197 = vld [vmem:[#allocation2 + $0x78] sm:$0xff]
    %v198 = vld [vmem:[%s2] sm:$0x1]
    %v200 = vperm.slane %v198, 0
    %v202 = vadd.f32 %v182, %v200
    %v203 = vadd.f32 %v183, %v200
    %v204 = vadd.f32 %v184, %v200
    %v205 = vadd.f32 %v185, %v200
    %v206 = vadd.f32 %v186, %v200
    %v207 = vadd.f32 %v187, %v200
    %v208 = vadd.f32 %v188, %v200
    %v209 = vadd.f32 %v189, %v200
    %v210 = vadd.f32 %v190, %v200
    %v211 = vadd.f32 %v191, %v200
    %v212 = vadd.f32 %v192, %v200
    %v213 = vadd.f32 %v193, %v200
    %v214 = vadd.f32 %v194, %v200
    %v215 = vadd.f32 %v195, %v200
    %v216 = vadd.f32 %v196, %v200
    %v217 = vadd.f32 %v197, %v200
    %218 = vst [vmem:[%s3] sm:$0xff] %v202
    %219 = vst [vmem:[%s3 + $0x8] sm:$0xff] %v203
    %220 = vst [vmem:[%s3 + $0x10] sm:$0xff] %v204
    %221 = vst [vmem:[%s3 + $0x18] sm:$0xff] %v205
    %222 = vst [vmem:[%s3 + $0x20] sm:$0xff] %v206
    %223 = vst [vmem:[%s3 + $0x28] sm:$0xff] %v207
    %224 = vst [vmem:[%s3 + $0x30] sm:$0xff] %v208
    %225 = vst [vmem:[%s3 + $0x38] sm:$0xff] %v209
    %226 = vst [vmem:[%s3 + $0x40] sm:$0xff] %v210
    %227 = vst [vmem:[%s3 + $0x48] sm:$0xff] %v211
    %228 = vst [vmem:[%s3 + $0x50] sm:$0xff] %v212
    %229 = vst [vmem:[%s3 + $0x58] sm:$0xff] %v213
    %230 = vst [vmem:[%s3 + $0x60] sm:$0xff] %v214
    %231 = vst [vmem:[%s3 + $0x68] sm:$0xff] %v215
    %232 = vst [vmem:[%s3 + $0x70] sm:$0xff] %v216
    %233 = vst [vmem:[%s3 + $0x78] sm:$0xff] %v217
  $region21: #{run.18} parent=0 // pred_fallthru
    _
  // Predicated region
  $region22: #{run.18} parent=0 // pred_check
    _
  $region23: #{run.18} parent=0 // pred_check_branch
    %235 = sbr.rel (0) target = $region25
  $region24: #{run.18} parent=0 // pred_region
    _
  $region25: #{run.18} parent=0 // pred_fallthru
    _
  // Predicated region
  $region26: #{run.18} parent=0 // pred_check
    _
  $region27: #{run.18} parent=0 // pred_check_branch
    %237 = sbr.rel (0) target = $region29
  $region28: #{run.18} parent=0 // pred_region
    _
  $region29: #{run.18} parent=0 // pred_fallthru
    _

// kernel: run.19
$region0: #{run.19}
  #allocation0 [shape = 'u32[]', space=smem, size = 0x4, offset = 0x4, fixed_abs, tag = 'smem constant byte address 0x4 - core index']
  #allocation1 [shape = 'u32[72,128]{1,0:T(1,128)}', space=vmem, size = 0x9000, scoped, tag = 'internal scratch']
  %s0 = inlined_call_operand.vmem [shape: f32[2,64,16], index: 0, kind: input, shape index: {}]
  %s1 = inlined_call_operand.vmem [shape: f32[2,64,16], index: 1, kind: output, shape index: {}]
  %s2 = sld [smem:[#allocation0]]
  $region37: #{run.19} parent=0
    _
  %s4 = ssub.s32 1, %s2
  %s5 = scalar_select 0, %s4, %s2
  loop: start=0, step=1, limit=4
  $region2: #{run.19} parent=0 // loop_pre_header
    _
  $region3: #{run.19} parent=0 // loop_header
    %s7 = sphi 0, %s11
    %p8 = scmp.ge.s32.totalorder %s7, 4
    %s17 = sphi 0, %s19
    %s20 = sphi 0, %s17
    %s21 = sphi 0, %s20
    %s37 = sphi 0, %s21
    %s43 = sphi 0, %s45
    %s46 = sphi 0, %s43
    %s47 = sphi 0, %s46
    %s63 = sphi 0, %s47
  $region4: #{run.19} parent=0 // loop_header_branch
    %10 = sbr.rel (%p8) target = $region8
  $region5: #{run.19} parent=0 // loop_body
    %s12 = ssub.s32 %s7, 1
    %s13 = ssub.s32 %s7, 2
    %s14 = sadd.s32 %s7, 1
    %s15 = ssub.s32 %s7, %s14
    %p16 = scmp.eq.s32.totalorder %s15, 0
    %s18 = sadd.s32 %s17, 1
    %s19 = scalar_select %p16, %s17, %s18
    %p22 = pneg %p16
    %p23 = scmp.eq.s32.totalorder %s7, 1
    %p24 = por %p22, %p23
    %p25 = scmp.ne.s32.totalorder %s17, %s20
    %p26 = scmp.eq.s32.totalorder %s7, 0
    %p27 = por %p25, %p26
    %p28 = scmp.ne.s32.totalorder %s17, %s20
    %p29 = scmp.eq.s32.totalorder %s12, 1
    %p30 = por %p28, %p29
    %p31 = scmp.ne.s32.totalorder %s20, %s21
    %p32 = scmp.eq.s32.totalorder %s12, 0
    %p33 = por %p31, %p32
    %p34 = scmp.ne.s32.totalorder %s20, %s21
    %p35 = scmp.eq.s32.totalorder %s13, 1
    %p36 = por %p34, %p35
    %p38 = scmp.ne.s32.totalorder %s21, %s37
    %p39 = scmp.eq.s32.totalorder %s13, 0
    %p40 = por %p38, %p39
    %s41 = ssub.s32 %s7, %s14
    %p42 = scmp.eq.s32.totalorder %s41, 0
    %s44 = sadd.s32 %s43, 1
    %s45 = scalar_select %p42, %s43, %s44
    %p48 = pneg %p42
    %p49 = scmp.eq.s32.totalorder %s7, 1
    %p50 = por %p48, %p49
    %p51 = scmp.ne.s32.totalorder %s43, %s46
    %p52 = scmp.eq.s32.totalorder %s7, 0
    %p53 = por %p51, %p52
    %p54 = scmp.ne.s32.totalorder %s43, %s46
    %p55 = scmp.eq.s32.totalorder %s12, 1
    %p56 = por %p54, %p55
    %p57 = scmp.ne.s32.totalorder %s46, %s47
    %p58 = scmp.eq.s32.totalorder %s12, 0
    %p59 = por %p57, %p58
    %p60 = scmp.ne.s32.totalorder %s46, %s47
    %p61 = scmp.eq.s32.totalorder %s13, 1
    %p62 = por %p60, %p61
    %p64 = scmp.ne.s32.totalorder %s47, %s63
    %p65 = scmp.eq.s32.totalorder %s13, 0
    %p66 = por %p64, %p65
    %p67 = scmp.le.s32.totalorder 1, %s7
    %p68 = scmp.lt.s32.totalorder %s7, 3
    %p69 = pnand %p67, %p68
    %p70 = pneg %p69
    // Predicated region
    $region9: #{run.19} parent=5 // pred_check
      _
    $region10: #{run.19} parent=5 // pred_check_branch
      %72 = sbr.rel (%p69) target = $region12
    $region11: #{run.19} parent=5 // pred_region
      %s73 = ssub.s32 %s7, 1
    $region12: #{run.19} parent=5 // pred_fallthru
      _
    %p74 = scmp.lt.s32.totalorder %s7, 2
    // Predicated region
    $region13: #{run.19} parent=5 // pred_check
      %p75 = pneg %p74
    $region14: #{run.19} parent=5 // pred_check_branch
      %77 = sbr.rel (%p75) target = $region16
    $region15: #{run.19} parent=5 // pred_region
      // Predicated region
      $region17: #{run.19} parent=15 // pred_check
        %p78 = pneg %p27
      $region18: #{run.19} parent=15 // pred_check_branch
        %80 = sbr.rel (%p78) target = $region20
      $region19: #{run.19} parent=15 // pred_region
        %p81 = scmp.lt.s32.totalorder %s7, 1
        %s82 = scalar_select %p81, %s7, 1
        %s83 = smul.addr %s82, 8
        %s84 = smul.addr %s83, 8
        %s85 = scalar_lea.vmem %s0, %s84
      $region20: #{run.19} parent=15 // pred_fallthru
        _
    $region16: #{run.19} parent=5 // pred_fallthru
      _
    %p86 = scmp.le.s32.totalorder 1, %s7
    %p87 = scmp.lt.s32.totalorder %s7, 3
    %p88 = pnand %p86, %p87
    %p89 = pneg %p88
    // Predicated region
    $region21: #{run.19} parent=5 // pred_check
      _
    $region22: #{run.19} parent=5 // pred_check_branch
      %91 = sbr.rel (%p88) target = $region24
    $region23: #{run.19} parent=5 // pred_region
      %s92 = ssub.s32 %s7, 1
      %p93 = scmp.lt.s32.totalorder %s12, 1
      %s94 = scalar_select %p93, %s12, 1
      %s95 = smul.addr %s94, 8
      %s96 = smul.addr %s95, 8
      %s97 = scalar_lea.vmem %s0, %s96
      %p98 = pneg %p33
      %p99 = pneg %p30
      %p100 = pneg %p59
      %p101 = pneg %p56
      %p102 = scmp.lt.s32.totalorder %s12, 1
      %s103 = scalar_select %p102, %s12, 1
      %s104 = smul.addr %s103, 8
      %s105 = smul.addr %s104, 8
      %s106 = scalar_lea.vmem %s1, %s105
      %p107 = scmp.lt.s32.totalorder %s12, 1
      %s108 = scalar_select %p107, %s12, 1
      %s109 = smul.addr %s108, 8
      %s110 = smul.addr %s109, 8
      %s111 = scalar_lea.vmem %s0, %s110
      %p112 = scmp.lt.s32.totalorder %s12, 1
      %s113 = scalar_select %p112, %s12, 1
      %s114 = smul.addr %s113, 8
      %s115 = smul.addr %s114, 8
      %s116 = scalar_lea.vmem %s1, %s115
      %v117 = vld [vmem:[%s111] sm:$0xff]
      %v118 = vld [vmem:[%s111 + $0x8] sm:$0xff]
      %v119 = vld [vmem:[%s111 + $0x10] sm:$0xff]
      %v120 = vld [vmem:[%s111 + $0x18] sm:$0xff]
      %v121 = vld [vmem:[%s111 + $0x20] sm:$0xff]
      %v122 = vld [vmem:[%s111 + $0x28] sm:$0xff]
      %v123 = vld [vmem:[%s111 + $0x30] sm:$0xff]
      %v124 = vld [vmem:[%s111 + $0x38] sm:$0xff]
      %vm125 = vcmask 130048
      %v126 = vsel %vm125, %v117, 0.0
      %v127 = vsel %vm125, %v118, 0.0
      %v128 = vadd.f32 %v126, %v127
      %v129 = vsel %vm125, %v119, 0.0
      %v130 = vadd.f32 %v128, %v129
      %v131 = vsel %vm125, %v120, 0.0
      %v132 = vadd.f32 %v130, %v131
      %v133 = vsel %vm125, %v121, 0.0
      %v134 = vadd.f32 %v132, %v133
      %v135 = vsel %vm125, %v122, 0.0
      %v136 = vadd.f32 %v134, %v135
      %v137 = vsel %vm125, %v123, 0.0
      %v138 = vadd.f32 %v136, %v137
      %v139 = vsel %vm125, %v124, 0.0
      %v140 = vadd.f32 %v138, %v139
      %v141 = vrot.slane %v140, 4
      %v142 = vadd.f32 %v140, %v141
      %v143 = vrot.slane %v142, 2
      %v144 = vadd.f32 %v142, %v143
      %v145 = vrot.slane %v144, 1
      %v146 = vadd.f32 %v144, %v145
      %v147 = vmul.f32 %v146, 0.015625
      %v148 = vmul.f32 %v117, %v117
      %v149 = vmul.f32 %v118, %v118
      %v150 = vmul.f32 %v119, %v119
      %v151 = vmul.f32 %v120, %v120
      %v152 = vmul.f32 %v121, %v121
      %v153 = vmul.f32 %v122, %v122
      %v154 = vmul.f32 %v123, %v123
      %v155 = vmul.f32 %v124, %v124
      %v156 = vsel %vm125, %v148, 0.0
      %v157 = vsel %vm125, %v149, 0.0
      %v158 = vadd.f32 %v156, %v157
      %v159 = vsel %vm125, %v150, 0.0
      %v160 = vadd.f32 %v158, %v159
      %v161 = vsel %vm125, %v151, 0.0
      %v162 = vadd.f32 %v160, %v161
      %v163 = vsel %vm125, %v152, 0.0
      %v164 = vadd.f32 %v162, %v163
      %v165 = vsel %vm125, %v153, 0.0
      %v166 = vadd.f32 %v164, %v165
      %v167 = vsel %vm125, %v154, 0.0
      %v168 = vadd.f32 %v166, %v167
      %v169 = vsel %vm125, %v155, 0.0
      %v170 = vadd.f32 %v168, %v169
      %v171 = vrot.slane %v170, 4
      %v172 = vadd.f32 %v170, %v171
      %v173 = vrot.slane %v172, 2
      %v174 = vadd.f32 %v172, %v173
      %v175 = vrot.slane %v174, 1
      %v176 = vadd.f32 %v174, %v175
      %v177 = vmul.f32 %v176, 0.015625
      %v178 = vmul.f32 %v147, %v147
      %v179 = vsub.f32 %v177, %v178
      %v180 = vmax.f32 %v179, 0.0
      %v181 = vsub.f32 %v117, %v147
      %v182 = vsub.f32 %v118, %v147
      %v183 = vsub.f32 %v119, %v147
      %v184 = vsub.f32 %v120, %v147
      %v185 = vsub.f32 %v121, %v147
      %v186 = vsub.f32 %v122, %v147
      %v187 = vsub.f32 %v123, %v147
      %v188 = vsub.f32 %v124, %v147
      %v189 = vadd.f32 %v180, 1e-05
      %v190 = vrsqrt.pop %v189
      %v191 = vmul.f32 %v190, %v189
      %v192 = vmul.f32 %v191, %v190
      %v193 = vmul.f32 0.5, %v192
      %v194 = vsub.f32 1.5, %v193
      %v195 = vmul.f32 %v190, %v194
      %vm196 = vweird.f32 %v189
      %vm197 = vweird.f32 %v190
      %vm198 = vmor %vm196, %vm197
      %v199 = vsel %vm198, %v190, %v195
      %v200 = vmul.f32 %v181, %v199
      %v201 = vmul.f32 %v182, %v199
      %v202 = vmul.f32 %v183, %v199
      %v203 = vmul.f32 %v184, %v199
      %v204 = vmul.f32 %v185, %v199
      %v205 = vmul.f32 %v186, %v199
      %v206 = vmul.f32 %v187, %v199
      %v207 = vmul.f32 %v188, %v199
      %208 = vst.msk [vmem:[%s116] sm:$0xff] %vm125, %v200
      %209 = vst.msk [vmem:[%s116 + $0x8] sm:$0xff] %vm125, %v201
      %210 = vst.msk [vmem:[%s116 + $0x10] sm:$0xff] %vm125, %v202
      %211 = vst.msk [vmem:[%s116 + $0x18] sm:$0xff] %vm125, %v203
      %212 = vst.msk [vmem:[%s116 + $0x20] sm:$0xff] %vm125, %v204
      %213 = vst.msk [vmem:[%s116 + $0x28] sm:$0xff] %vm125, %v205
      %214 = vst.msk [vmem:[%s116 + $0x30] sm:$0xff] %vm125, %v206
      %215 = vst.msk [vmem:[%s116 + $0x38] sm:$0xff] %vm125, %v207
      %p216 = scmp.lt.s32.totalorder %s12, 1
      %s217 = scalar_select %p216, %s12, 1
      %s218 = smul.addr %s217, 8
      %s219 = smul.addr %s218, 8
      %s220 = scalar_lea.vmem %s1, %s219
      // Predicated region
      $region25: #{run.19} parent=23 // pred_check
        %p221 = pneg %p56
      $region26: #{run.19} parent=23 // pred_check_branch
        %223 = sbr.rel (%p221) target = $region28
      $region27: #{run.19} parent=23 // pred_region
        _
      $region28: #{run.19} parent=23 // pred_fallthru
        _
    $region24: #{run.19} parent=5 // pred_fallthru
      _
    %p224 = scmp.le.s32.totalorder 2, %s7
    // Predicated region
    $region29: #{run.19} parent=5 // pred_check
      %p225 = pneg %p224
    $region30: #{run.19} parent=5 // pred_check_branch
      %227 = sbr.rel (%p225) target = $region32
    $region31: #{run.19} parent=5 // pred_region
      %s228 = ssub.s32 %s7, 2
      // Predicated region
      $region33: #{run.19} parent=31 // pred_check
        %p229 = pneg %p62
      $region34: #{run.19} parent=31 // pred_check_branch
        %231 = sbr.rel (%p229) target = $region36
      $region35: #{run.19} parent=31 // pred_region
        %p232 = scmp.lt.s32.totalorder %s13, 1
        %s233 = scalar_select %p232, %s13, 1
        %s234 = smul.addr %s233, 8
        %s235 = smul.addr %s234, 8
        %s236 = scalar_lea.vmem %s1, %s235
      $region36: #{run.19} parent=31 // pred_fallthru
        _
    $region32: #{run.19} parent=5 // pred_fallthru
      _
  $region6: #{run.19} parent=0 // loop_footer
    %s11 = sadd.s32 1, %s7
  $region7: #{run.19} parent=0 // loop_footer_branch
    %6 = sbr.rel target = $region3
  $region8: #{run.19} parent=0 // loop_exit
    _

// kernel: run.20
$region0: #{run.20}
  #allocation0 [shape = 'u32[]', space=smem, size = 0x4, offset = 0x4, fixed_abs, tag = 'smem constant byte address 0x4 - core index']
  #allocation1 [shape = 'u32[72,128]{1,0:T(1,128)}', space=vmem, size = 0x9000, scoped, tag = 'internal scratch']
  #allocation2 [shape = 'f32[32,128]{1,0:T(8,128)}', space=vmem, size = 0x4000, scoped, tag = 'scratch operand']
  %s0 = inlined_call_operand.vmem [shape: f32[1,32,256], index: 0, kind: input, shape index: {}]
  %s1 = inlined_call_operand.vmem [shape: f32[1,256,128], index: 1, kind: input, shape index: {}]
  %s2 = inlined_call_operand.vmem [shape: f32[1,1,128], index: 2, kind: input, shape index: {}]
  %s3 = inlined_call_operand.vmem [shape: f32[1,32,128], index: 3, kind: output, shape index: {}]
  %s4 = sld [smem:[#allocation0]]
  $region30: #{run.20} parent=0
    _
  %s6 = ssub.s32 1, %s4
  %s7 = scalar_select 0, %s6, %s4
  // Predicated region
  $region2: #{run.20} parent=0 // pred_check
    _
  $region3: #{run.20} parent=0 // pred_check_branch
    %9 = sbr.rel (0) target = $region5
  $region4: #{run.20} parent=0 // pred_region
    _
  $region5: #{run.20} parent=0 // pred_fallthru
    _
  // Predicated region
  $region6: #{run.20} parent=0 // pred_check
    _
  $region7: #{run.20} parent=0 // pred_check_branch
    %11 = sbr.rel (0) target = $region9
  $region8: #{run.20} parent=0 // pred_region
    _
  $region9: #{run.20} parent=0 // pred_fallthru
    _
  // Predicated region
  $region10: #{run.20} parent=0 // pred_check
    _
  $region11: #{run.20} parent=0 // pred_check_branch
    %13 = sbr.rel (0) target = $region13
  $region12: #{run.20} parent=0 // pred_region
    _
  $region13: #{run.20} parent=0 // pred_fallthru
    _
  %p14 = scmp.eq.s32.totalorder 0, 0
  // Predicated region
  $region14: #{run.20} parent=0 // pred_check
    %p15 = pneg %p14
  $region15: #{run.20} parent=0 // pred_check_branch
    %17 = sbr.rel (%p15) target = $region17
  $region16: #{run.20} parent=0 // pred_region
    %18 = vst [vmem:[#allocation2] sm:$0xff] 0.0
    %19 = vst [vmem:[#allocation2 + $0x8] sm:$0xff] 0.0
    %20 = vst [vmem:[#allocation2 + $0x10] sm:$0xff] 0.0
    %21 = vst [vmem:[#allocation2 + $0x18] sm:$0xff] 0.0
  $region17: #{run.20} parent=0 // pred_fallthru
    _
  %v22 = vld [vmem:[#allocation2] sm:$0xff]
  %v23 = vld [vmem:[#allocation2 + $0x8] sm:$0xff]
  %v24 = vld [vmem:[#allocation2 + $0x10] sm:$0xff]
  %v25 = vld [vmem:[#allocation2 + $0x18] sm:$0xff]
  %v26 = vld [vmem:[%s0] sm:$0xff]
  %v27 = vld [vmem:[%s0 + $0x8] sm:$0xff]
  %v28 = vld [vmem:[%s0 + $0x10] sm:$0xff]
  %v29 = vld [vmem:[%s0 + $0x18] sm:$0xff]
  %v30 = vld [vmem:[%s0 + $0x20] sm:$0xff]
  %v31 = vld [vmem:[%s0 + $0x28] sm:$0xff]
  %v32 = vld [vmem:[%s0 + $0x30] sm:$0xff]
  %v33 = vld [vmem:[%s0 + $0x38] sm:$0xff]
  %v34 = vld [vmem:[%s1] sm:$0xff]
  %v35 = vld [vmem:[%s1 + $0x8] sm:$0xff]
  %v36 = vld [vmem:[%s1 + $0x10] sm:$0xff]
  %v37 = vld [vmem:[%s1 + $0x18] sm:$0xff]
  %v38 = vld [vmem:[%s1 + $0x20] sm:$0xff]
  %v39 = vld [vmem:[%s1 + $0x28] sm:$0xff]
  %v40 = vld [vmem:[%s1 + $0x30] sm:$0xff]
  %v41 = vld [vmem:[%s1 + $0x38] sm:$0xff]
  %v42 = vld [vmem:[%s1 + $0x40] sm:$0xff]
  %v43 = vld [vmem:[%s1 + $0x48] sm:$0xff]
  %v44 = vld [vmem:[%s1 + $0x50] sm:$0xff]
  %v45 = vld [vmem:[%s1 + $0x58] sm:$0xff]
  %v46 = vld [vmem:[%s1 + $0x60] sm:$0xff]
  %v47 = vld [vmem:[%s1 + $0x68] sm:$0xff]
  %v48 = vld [vmem:[%s1 + $0x70] sm:$0xff]
  %v49 = vld [vmem:[%s1 + $0x78] sm:$0xff]
  %v50 = vld [vmem:[%s1 + $0x80] sm:$0xff]
  %v51 = vld [vmem:[%s1 + $0x88] sm:$0xff]
  %v52 = vld [vmem:[%s1 + $0x90] sm:$0xff]
  %v53 = vld [vmem:[%s1 + $0x98] sm:$0xff]
  %v54 = vld [vmem:[%s1 + $0xa0] sm:$0xff]
  %v55 = vld [vmem:[%s1 + $0xa8] sm:$0xff]
  %v56 = vld [vmem:[%s1 + $0xb0] sm:$0xff]
  %v57 = vld [vmem:[%s1 + $0xb8] sm:$0xff]
  %v58 = vld [vmem:[%s1 + $0xc0] sm:$0xff]
  %v59 = vld [vmem:[%s1 + $0xc8] sm:$0xff]
  %v60 = vld [vmem:[%s1 + $0xd0] sm:$0xff]
  %v61 = vld [vmem:[%s1 + $0xd8] sm:$0xff]
  %v62 = vld [vmem:[%s1 + $0xe0] sm:$0xff]
  %v63 = vld [vmem:[%s1 + $0xe8] sm:$0xff]
  %v64 = vld [vmem:[%s1 + $0xf0] sm:$0xff]
  %v65 = vld [vmem:[%s1 + $0xf8] sm:$0xff]
  %66 = vmatpush.msra.mxu0 %v49
  %67 = vmatpush.msra.mxu0 %v48
  %68 = vmatpush.msra.mxu0 %v47
  %69 = vmatpush.msra.mxu0 %v46
  %70 = vmatpush.msra.mxu0 %v45
  %71 = vmatpush.msra.mxu0 %v44
  %72 = vmatpush.msra.mxu0 %v43
  %73 = vmatpush.msra.mxu0 %v42
  %74 = vmatpush.msra.mxu0 %v41
  %75 = vmatpush.msra.mxu0 %v40
  %76 = vmatpush.msra.mxu0 %v39
  %77 = vmatpush.msra.mxu0 %v38
  %78 = vmatpush.msra.mxu0 %v37
  %79 = vmatpush.msra.mxu0 %v36
  %80 = vmatpush.msra.mxu0 %v35
  %81 = vmatpush.msra.mxu0 %v34
  %82 = vmatmul.f32.gmra.mxu0 %v26
  %v83 = vpop.f32.mrf.mxu0
  %v84 = vadd.f32 0.0, %v83
  %85 = vmatmul.f32.gmra.mxu0 %v28
  %v86 = vpop.f32.mrf.mxu0
  %v87 = vadd.f32 0.0, %v86
  %88 = vmatmul.f32.gmra.mxu0 %v30
  %v89 = vpop.f32.mrf.mxu0
  %v90 = vadd.f32 0.0, %v89
  %91 = vmatmul.f32.gmra.mxu0 %v32
  %v92 = vpop.f32.mrf.mxu0
  %v93 = vadd.f32 0.0, %v92
  %94 = vdwg.mxu0
  %95 = vmatpush.msra.mxu0 %v65
  %96 = vmatpush.msra.mxu0 %v64
  %97 = vmatpush.msra.mxu0 %v63
  %98 = vmatpush.msra.mxu0 %v62
  %99 = vmatpush.msra.mxu0 %v61
  %100 = vmatpush.msra.mxu0 %v60
  %101 = vmatpush.msra.mxu0 %v59
  %102 = vmatpush.msra.mxu0 %v58
  %103 = vmatpush.msra.mxu0 %v57
  %104 = vmatpush.msra.mxu0 %v56
  %105 = vmatpush.msra.mxu0 %v55
  %106 = vmatpush.msra.mxu0 %v54
  %107 = vmatpush.msra.mxu0 %v53
  %108 = vmatpush.msra.mxu0 %v52
  %109 = vmatpush.msra.mxu0 %v51
  %110 = vmatpush.msra.mxu0 %v50
  %111 = vmatmul.f32.gmra.mxu0 %v27
  %v112 = vpop.f32.mrf.mxu0
  %v113 = vadd.f32 %v84, %v112
  %114 = vmatmul.f32.gmra.mxu0 %v29
  %v115 = vpop.f32.mrf.mxu0
  %v116 = vadd.f32 %v87, %v115
  %117 = vmatmul.f32.gmra.mxu0 %v31
  %v118 = vpop.f32.mrf.mxu0
  %v119 = vadd.f32 %v90, %v118
  %120 = vmatmul.f32.gmra.mxu0 %v33
  %v121 = vpop.f32.mrf.mxu0
  %v122 = vadd.f32 %v93, %v121
  %123 = vdwg.mxu0
  %v124 = vadd.f32 %v22, %v113
  %v125 = vadd.f32 %v23, %v116
  %v126 = vadd.f32 %v24, %v119
  %v127 = vadd.f32 %v25, %v122
  %128 = vst [vmem:[#allocation2] sm:$0xff] %v124
  %129 = vst [vmem:[#allocation2 + $0x8] sm:$0xff] %v125
  %130 = vst [vmem:[#allocation2 + $0x10] sm:$0xff] %v126
  %131 = vst [vmem:[#allocation2 + $0x18] sm:$0xff] %v127
  // Predicated region
  $region18: #{run.20} parent=0 // pred_check
    %p132 = pneg %p14
  $region19: #{run.20} parent=0 // pred_check_branch
    %134 = sbr.rel (%p132) target = $region21
  $region20: #{run.20} parent=0 // pred_region
    %v135 = vld [vmem:[#allocation2] sm:$0xff]
    %v136 = vld [vmem:[#allocation2 + $0x8] sm:$0xff]
    %v137 = vld [vmem:[#allocation2 + $0x10] sm:$0xff]
    %v138 = vld [vmem:[#allocation2 + $0x18] sm:$0xff]
    %v139 = vld [vmem:[%s2] sm:$0x1]
    %v141 = vperm.slane %v139, 0
    %v143 = vadd.f32 %v135, %v141
    %v144 = vadd.f32 %v136, %v141
    %v145 = vadd.f32 %v137, %v141
    %v146 = vadd.f32 %v138, %v141
    %147 = vst [vmem:[%s3] sm:$0xff] %v143
    %148 = vst [vmem:[%s3 + $0x8] sm:$0xff] %v144
    %149 = vst [vmem:[%s3 + $0x10] sm:$0xff] %v145
    %150 = vst [vmem:[%s3 + $0x18] sm:$0xff] %v146
  $region21: #{run.20} parent=0 // pred_fallthru
    _
  // Predicated region
  $region22: #{run.20} parent=0 // pred_check
    _
  $region23: #{run.20} parent=0 // pred_check_branch
    %152 = sbr.rel (0) target = $region25
  $region24: #{run.20} parent=0 // pred_region
    _
  $region25: #{run.20} parent=0 // pred_fallthru
    _
  // Predicated region
  $region26: #{run.20} parent=0 // pred_check
    _
  $region27: #{run.20} parent=0 // pred_check_branch
    %154 = sbr.rel (0) target = $region29
  $region28: #{run.20} parent=0 // pred_region
    _
  $region29: #{run.20} parent=0 // pred_fallthru
    _

// kernel: run.21
$region0: #{run.21}
  #allocation0 [shape = 'u32[]', space=smem, size = 0x4, offset = 0x4, fixed_abs, tag = 'smem constant byte address 0x4 - core index']
  #allocation1 [shape = 'u32[72,128]{1,0:T(1,128)}', space=vmem, size = 0x9000, scoped, tag = 'internal scratch']
  %s0 = inlined_call_operand.vmem [shape: f32[2,16,32], index: 0, kind: input, shape index: {}]
  %s1 = inlined_call_operand.vmem [shape: f32[2,16,32], index: 1, kind: output, shape index: {}]
  %s2 = sld [smem:[#allocation0]]
  $region37: #{run.21} parent=0
    _
  %s4 = ssub.s32 1, %s2
  %s5 = scalar_select 0, %s4, %s2
  loop: start=0, step=1, limit=4
  $region2: #{run.21} parent=0 // loop_pre_header
    _
  $region3: #{run.21} parent=0 // loop_header
    %s7 = sphi 0, %s11
    %p8 = scmp.ge.s32.totalorder %s7, 4
    %s17 = sphi 0, %s19
    %s20 = sphi 0, %s17
    %s21 = sphi 0, %s20
    %s37 = sphi 0, %s21
    %s43 = sphi 0, %s45
    %s46 = sphi 0, %s43
    %s47 = sphi 0, %s46
    %s63 = sphi 0, %s47
  $region4: #{run.21} parent=0 // loop_header_branch
    %10 = sbr.rel (%p8) target = $region8
  $region5: #{run.21} parent=0 // loop_body
    %s12 = ssub.s32 %s7, 1
    %s13 = ssub.s32 %s7, 2
    %s14 = sadd.s32 %s7, 1
    %s15 = ssub.s32 %s7, %s14
    %p16 = scmp.eq.s32.totalorder %s15, 0
    %s18 = sadd.s32 %s17, 1
    %s19 = scalar_select %p16, %s17, %s18
    %p22 = pneg %p16
    %p23 = scmp.eq.s32.totalorder %s7, 1
    %p24 = por %p22, %p23
    %p25 = scmp.ne.s32.totalorder %s17, %s20
    %p26 = scmp.eq.s32.totalorder %s7, 0
    %p27 = por %p25, %p26
    %p28 = scmp.ne.s32.totalorder %s17, %s20
    %p29 = scmp.eq.s32.totalorder %s12, 1
    %p30 = por %p28, %p29
    %p31 = scmp.ne.s32.totalorder %s20, %s21
    %p32 = scmp.eq.s32.totalorder %s12, 0
    %p33 = por %p31, %p32
    %p34 = scmp.ne.s32.totalorder %s20, %s21
    %p35 = scmp.eq.s32.totalorder %s13, 1
    %p36 = por %p34, %p35
    %p38 = scmp.ne.s32.totalorder %s21, %s37
    %p39 = scmp.eq.s32.totalorder %s13, 0
    %p40 = por %p38, %p39
    %s41 = ssub.s32 %s7, %s14
    %p42 = scmp.eq.s32.totalorder %s41, 0
    %s44 = sadd.s32 %s43, 1
    %s45 = scalar_select %p42, %s43, %s44
    %p48 = pneg %p42
    %p49 = scmp.eq.s32.totalorder %s7, 1
    %p50 = por %p48, %p49
    %p51 = scmp.ne.s32.totalorder %s43, %s46
    %p52 = scmp.eq.s32.totalorder %s7, 0
    %p53 = por %p51, %p52
    %p54 = scmp.ne.s32.totalorder %s43, %s46
    %p55 = scmp.eq.s32.totalorder %s12, 1
    %p56 = por %p54, %p55
    %p57 = scmp.ne.s32.totalorder %s46, %s47
    %p58 = scmp.eq.s32.totalorder %s12, 0
    %p59 = por %p57, %p58
    %p60 = scmp.ne.s32.totalorder %s46, %s47
    %p61 = scmp.eq.s32.totalorder %s13, 1
    %p62 = por %p60, %p61
    %p64 = scmp.ne.s32.totalorder %s47, %s63
    %p65 = scmp.eq.s32.totalorder %s13, 0
    %p66 = por %p64, %p65
    %p67 = scmp.le.s32.totalorder 1, %s7
    %p68 = scmp.lt.s32.totalorder %s7, 3
    %p69 = pnand %p67, %p68
    %p70 = pneg %p69
    // Predicated region
    $region9: #{run.21} parent=5 // pred_check
      _
    $region10: #{run.21} parent=5 // pred_check_branch
      %72 = sbr.rel (%p69) target = $region12
    $region11: #{run.21} parent=5 // pred_region
      %s73 = ssub.s32 %s7, 1
    $region12: #{run.21} parent=5 // pred_fallthru
      _
    %p74 = scmp.lt.s32.totalorder %s7, 2
    // Predicated region
    $region13: #{run.21} parent=5 // pred_check
      %p75 = pneg %p74
    $region14: #{run.21} parent=5 // pred_check_branch
      %77 = sbr.rel (%p75) target = $region16
    $region15: #{run.21} parent=5 // pred_region
      // Predicated region
      $region17: #{run.21} parent=15 // pred_check
        %p78 = pneg %p27
      $region18: #{run.21} parent=15 // pred_check_branch
        %80 = sbr.rel (%p78) target = $region20
      $region19: #{run.21} parent=15 // pred_region
        %p81 = scmp.lt.s32.totalorder %s7, 1
        %s82 = scalar_select %p81, %s7, 1
        %s83 = smul.addr %s82, 2
        %s84 = smul.addr %s83, 8
        %s85 = scalar_lea.vmem %s0, %s84
      $region20: #{run.21} parent=15 // pred_fallthru
        _
    $region16: #{run.21} parent=5 // pred_fallthru
      _
    %p86 = scmp.le.s32.totalorder 1, %s7
    %p87 = scmp.lt.s32.totalorder %s7, 3
    %p88 = pnand %p86, %p87
    %p89 = pneg %p88
    // Predicated region
    $region21: #{run.21} parent=5 // pred_check
      _
    $region22: #{run.21} parent=5 // pred_check_branch
      %91 = sbr.rel (%p88) target = $region24
    $region23: #{run.21} parent=5 // pred_region
      %s92 = ssub.s32 %s7, 1
      %p93 = scmp.lt.s32.totalorder %s12, 1
      %s94 = scalar_select %p93, %s12, 1
      %s95 = smul.addr %s94, 2
      %s96 = smul.addr %s95, 8
      %s97 = scalar_lea.vmem %s0, %s96
      %p98 = pneg %p33
      %p99 = pneg %p30
      %p100 = pneg %p59
      %p101 = pneg %p56
      %p102 = scmp.lt.s32.totalorder %s12, 1
      %s103 = scalar_select %p102, %s12, 1
      %s104 = smul.addr %s103, 2
      %s105 = smul.addr %s104, 8
      %s106 = scalar_lea.vmem %s1, %s105
      %p107 = scmp.lt.s32.totalorder %s12, 1
      %s108 = scalar_select %p107, %s12, 1
      %s109 = smul.addr %s108, 2
      %s110 = smul.addr %s109, 8
      %s111 = scalar_lea.vmem %s0, %s110
      %p112 = scmp.lt.s32.totalorder %s12, 1
      %s113 = scalar_select %p112, %s12, 1
      %s114 = smul.addr %s113, 2
      %s115 = smul.addr %s114, 8
      %s116 = scalar_lea.vmem %s1, %s115
      %v117 = vld [vmem:[%s111] sm:$0xff]
      %v118 = vld [vmem:[%s111 + $0x8] sm:$0xff]
      %vm119 = vcmask 261120
      %v120 = vsel %vm119, %v117, 0.0
      %v121 = vsel %vm119, %v118, 0.0
      %v122 = vadd.f32 %v120, %v121
      %v123 = vrot.slane %v122, 4
      %v124 = vadd.f32 %v122, %v123
      %v125 = vrot.slane %v124, 2
      %v126 = vadd.f32 %v124, %v125
      %v127 = vrot.slane %v126, 1
      %v128 = vadd.f32 %v126, %v127
      %v129 = vmul.f32 %v128, 0.0625
      %v130 = vmul.f32 %v117, %v117
      %v131 = vmul.f32 %v118, %v118
      %v132 = vsel %vm119, %v130, 0.0
      %v133 = vsel %vm119, %v131, 0.0
      %v134 = vadd.f32 %v132, %v133
      %v135 = vrot.slane %v134, 4
      %v136 = vadd.f32 %v134, %v135
      %v137 = vrot.slane %v136, 2
      %v138 = vadd.f32 %v136, %v137
      %v139 = vrot.slane %v138, 1
      %v140 = vadd.f32 %v138, %v139
      %v141 = vmul.f32 %v140, 0.0625
      %v142 = vmul.f32 %v129, %v129
      %v143 = vsub.f32 %v141, %v142
      %v144 = vmax.f32 %v143, 0.0
      %v145 = vsub.f32 %v117, %v129
      %v146 = vsub.f32 %v118, %v129
      %v147 = vadd.f32 %v144, 1e-05
      %v148 = vrsqrt.pop %v147
      %v149 = vmul.f32 %v148, %v147
      %v150 = vmul.f32 %v149, %v148
      %v151 = vmul.f32 0.5, %v150
      %v152 = vsub.f32 1.5, %v151
      %v153 = vmul.f32 %v148, %v152
      %vm154 = vweird.f32 %v147
      %vm155 = vweird.f32 %v148
      %vm156 = vmor %vm154, %vm155
      %v157 = vsel %vm156, %v148, %v153
      %v158 = vmul.f32 %v145, %v157
      %v159 = vmul.f32 %v146, %v157
      %160 = vst.msk [vmem:[%s116] sm:$0xff] %vm119, %v158
      %161 = vst.msk [vmem:[%s116 + $0x8] sm:$0xff] %vm119, %v159
      %p162 = scmp.lt.s32.totalorder %s12, 1
      %s163 = scalar_select %p162, %s12, 1
      %s164 = smul.addr %s163, 2
      %s165 = smul.addr %s164, 8
      %s166 = scalar_lea.vmem %s1, %s165
      // Predicated region
      $region25: #{run.21} parent=23 // pred_check
        %p167 = pneg %p56
      $region26: #{run.21} parent=23 // pred_check_branch
        %169 = sbr.rel (%p167) target = $region28
      $region27: #{run.21} parent=23 // pred_region
        _
      $region28: #{run.21} parent=23 // pred_fallthru
        _
    $region24: #{run.21} parent=5 // pred_fallthru
      _
    %p170 = scmp.le.s32.totalorder 2, %s7
    // Predicated region
    $region29: #{run.21} parent=5 // pred_check
      %p171 = pneg %p170
    $region30: #{run.21} parent=5 // pred_check_branch
      %173 = sbr.rel (%p171) target = $region32
    $region31: #{run.21} parent=5 // pred_region
      %s174 = ssub.s32 %s7, 2
      // Predicated region
      $region33: #{run.21} parent=31 // pred_check
        %p175 = pneg %p62
      $region34: #{run.21} parent=31 // pred_check_branch
        %177 = sbr.rel (%p175) target = $region36
      $region35: #{run.21} parent=31 // pred_region
        %p178 = scmp.lt.s32.totalorder %s13, 1
        %s179 = scalar_select %p178, %s13, 1
        %s180 = smul.addr %s179, 2
        %s181 = smul.addr %s180, 8
        %s182 = scalar_lea.vmem %s1, %s181
      $region36: #{run.21} parent=31 // pred_fallthru
        _
    $region32: #{run.21} parent=5 // pred_fallthru
      _
  $region6: #{run.21} parent=0 // loop_footer
    %s11 = sadd.s32 1, %s7
  $region7: #{run.21} parent=0 // loop_footer_branch
    %6 = sbr.rel target = $region3
  $region8: #{run.21} parent=0 // loop_exit
    _

// kernel: run.23
$region0: #{run.23}
  #allocation0 [shape = 'u32[]', space=smem, size = 0x4, offset = 0x4, fixed_abs, tag = 'smem constant byte address 0x4 - core index']
  #allocation1 [shape = 'u32[72,128]{1,0:T(1,128)}', space=vmem, size = 0x9000, scoped, tag = 'internal scratch']
  %s0 = inlined_call_operand.vmem [shape: f32[2,4,64], index: 0, kind: input, shape index: {}]
  %s1 = inlined_call_operand.vmem [shape: f32[2,4,64], index: 1, kind: output, shape index: {}]
  %s2 = sld [smem:[#allocation0]]
  $region37: #{run.23} parent=0
    _
  %s4 = ssub.s32 1, %s2
  %s5 = scalar_select 0, %s4, %s2
  loop: start=0, step=1, limit=4
  $region2: #{run.23} parent=0 // loop_pre_header
    _
  $region3: #{run.23} parent=0 // loop_header
    %s7 = sphi 0, %s11
    %p8 = scmp.ge.s32.totalorder %s7, 4
    %s17 = sphi 0, %s19
    %s20 = sphi 0, %s17
    %s21 = sphi 0, %s20
    %s37 = sphi 0, %s21
    %s43 = sphi 0, %s45
    %s46 = sphi 0, %s43
    %s47 = sphi 0, %s46
    %s63 = sphi 0, %s47
  $region4: #{run.23} parent=0 // loop_header_branch
    %10 = sbr.rel (%p8) target = $region8
  $region5: #{run.23} parent=0 // loop_body
    %s12 = ssub.s32 %s7, 1
    %s13 = ssub.s32 %s7, 2
    %s14 = sadd.s32 %s7, 1
    %s15 = ssub.s32 %s7, %s14
    %p16 = scmp.eq.s32.totalorder %s15, 0
    %s18 = sadd.s32 %s17, 1
    %s19 = scalar_select %p16, %s17, %s18
    %p22 = pneg %p16
    %p23 = scmp.eq.s32.totalorder %s7, 1
    %p24 = por %p22, %p23
    %p25 = scmp.ne.s32.totalorder %s17, %s20
    %p26 = scmp.eq.s32.totalorder %s7, 0
    %p27 = por %p25, %p26
    %p28 = scmp.ne.s32.totalorder %s17, %s20
    %p29 = scmp.eq.s32.totalorder %s12, 1
    %p30 = por %p28, %p29
    %p31 = scmp.ne.s32.totalorder %s20, %s21
    %p32 = scmp.eq.s32.totalorder %s12, 0
    %p33 = por %p31, %p32
    %p34 = scmp.ne.s32.totalorder %s20, %s21
    %p35 = scmp.eq.s32.totalorder %s13, 1
    %p36 = por %p34, %p35
    %p38 = scmp.ne.s32.totalorder %s21, %s37
    %p39 = scmp.eq.s32.totalorder %s13, 0
    %p40 = por %p38, %p39
    %s41 = ssub.s32 %s7, %s14
    %p42 = scmp.eq.s32.totalorder %s41, 0
    %s44 = sadd.s32 %s43, 1
    %s45 = scalar_select %p42, %s43, %s44
    %p48 = pneg %p42
    %p49 = scmp.eq.s32.totalorder %s7, 1
    %p50 = por %p48, %p49
    %p51 = scmp.ne.s32.totalorder %s43, %s46
    %p52 = scmp.eq.s32.totalorder %s7, 0
    %p53 = por %p51, %p52
    %p54 = scmp.ne.s32.totalorder %s43, %s46
    %p55 = scmp.eq.s32.totalorder %s12, 1
    %p56 = por %p54, %p55
    %p57 = scmp.ne.s32.totalorder %s46, %s47
    %p58 = scmp.eq.s32.totalorder %s12, 0
    %p59 = por %p57, %p58
    %p60 = scmp.ne.s32.totalorder %s46, %s47
    %p61 = scmp.eq.s32.totalorder %s13, 1
    %p62 = por %p60, %p61
    %p64 = scmp.ne.s32.totalorder %s47, %s63
    %p65 = scmp.eq.s32.totalorder %s13, 0
    %p66 = por %p64, %p65
    %p67 = scmp.le.s32.totalorder 1, %s7
    %p68 = scmp.lt.s32.totalorder %s7, 3
    %p69 = pnand %p67, %p68
    %p70 = pneg %p69
    // Predicated region
    $region9: #{run.23} parent=5 // pred_check
      _
    $region10: #{run.23} parent=5 // pred_check_branch
      %72 = sbr.rel (%p69) target = $region12
    $region11: #{run.23} parent=5 // pred_region
      %s73 = ssub.s32 %s7, 1
    $region12: #{run.23} parent=5 // pred_fallthru
      _
    %p74 = scmp.lt.s32.totalorder %s7, 2
    // Predicated region
    $region13: #{run.23} parent=5 // pred_check
      %p75 = pneg %p74
    $region14: #{run.23} parent=5 // pred_check_branch
      %77 = sbr.rel (%p75) target = $region16
    $region15: #{run.23} parent=5 // pred_region
      // Predicated region
      $region17: #{run.23} parent=15 // pred_check
        %p78 = pneg %p27
      $region18: #{run.23} parent=15 // pred_check_branch
        %80 = sbr.rel (%p78) target = $region20
      $region19: #{run.23} parent=15 // pred_region
        %p81 = scmp.lt.s32.totalorder %s7, 1
        %s82 = scalar_select %p81, %s7, 1
        %s83 = smul.addr %s82, 4
        %s84 = scalar_lea.vmem %s0, %s83
      $region20: #{run.23} parent=15 // pred_fallthru
        _
    $region16: #{run.23} parent=5 // pred_fallthru
      _
    %p85 = scmp.le.s32.totalorder 1, %s7
    %p86 = scmp.lt.s32.totalorder %s7, 3
    %p87 = pnand %p85, %p86
    %p88 = pneg %p87
    // Predicated region
    $region21: #{run.23} parent=5 // pred_check
      _
    $region22: #{run.23} parent=5 // pred_check_branch
      %90 = sbr.rel (%p87) target = $region24
    $region23: #{run.23} parent=5 // pred_region
      %s91 = ssub.s32 %s7, 1
      %p92 = scmp.lt.s32.totalorder %s12, 1
      %s93 = scalar_select %p92, %s12, 1
      %s94 = smul.addr %s93, 4
      %s95 = scalar_lea.vmem %s0, %s94
      %p96 = pneg %p33
      %p97 = pneg %p30
      %p98 = pneg %p59
      %p99 = pneg %p56
      %p100 = scmp.lt.s32.totalorder %s12, 1
      %s101 = scalar_select %p100, %s12, 1
      %s102 = smul.addr %s101, 4
      %s103 = scalar_lea.vmem %s1, %s102
      %p104 = scmp.lt.s32.totalorder %s12, 1
      %s105 = scalar_select %p104, %s12, 1
      %s106 = smul.addr %s105, 4
      %s107 = scalar_lea.vmem %s0, %s106
      %p108 = scmp.lt.s32.totalorder %s12, 1
      %s109 = scalar_select %p108, %s12, 1
      %s110 = smul.addr %s109, 4
      %s111 = scalar_lea.vmem %s1, %s110
      %v112 = vld [vmem:[%s107] sm:$0xf]
      %vm113 = vcmask 519168
      %v114 = vsel %vm113, %v112, 0.0
      %v115 = vrot.slane %v114, 4
      %v116 = vadd.f32 %v114, %v115
      %v117 = vrot.slane %v116, 2
      %v118 = vadd.f32 %v116, %v117
      %v119 = vrot.slane %v118, 1
      %v120 = vadd.f32 %v118, %v119
      %v121 = vmul.f32 %v120, 0.25
      %v122 = vmul.f32 %v112, %v112
      %v123 = vsel %vm113, %v122, 0.0
      %v124 = vrot.slane %v123, 4
      %v125 = vadd.f32 %v123, %v124
      %v126 = vrot.slane %v125, 2
      %v127 = vadd.f32 %v125, %v126
      %v128 = vrot.slane %v127, 1
      %v129 = vadd.f32 %v127, %v128
      %v130 = vmul.f32 %v129, 0.25
      %v131 = vmul.f32 %v121, %v121
      %v132 = vsub.f32 %v130, %v131
      %v133 = vmax.f32 %v132, 0.0
      %v134 = vsub.f32 %v112, %v121
      %v135 = vadd.f32 %v133, 1e-05
      %v136 = vrsqrt.pop %v135
      %v137 = vmul.f32 %v136, %v135
      %v138 = vmul.f32 %v137, %v136
      %v139 = vmul.f32 0.5, %v138
      %v140 = vsub.f32 1.5, %v139
      %v141 = vmul.f32 %v136, %v140
      %vm142 = vweird.f32 %v135
      %vm143 = vweird.f32 %v136
      %vm144 = vmor %vm142, %vm143
      %v145 = vsel %vm144, %v136, %v141
      %v146 = vmul.f32 %v134, %v145
      %147 = vst.msk [vmem:[%s111] sm:$0xf] %vm113, %v146
      %p148 = scmp.lt.s32.totalorder %s12, 1
      %s149 = scalar_select %p148, %s12, 1
      %s150 = smul.addr %s149, 4
      %s151 = scalar_lea.vmem %s1, %s150
      // Predicated region
      $region25: #{run.23} parent=23 // pred_check
        %p152 = pneg %p56
      $region26: #{run.23} parent=23 // pred_check_branch
        %154 = sbr.rel (%p152) target = $region28
      $region27: #{run.23} parent=23 // pred_region
        _
      $region28: #{run.23} parent=23 // pred_fallthru
        _
    $region24: #{run.23} parent=5 // pred_fallthru
      _
    %p155 = scmp.le.s32.totalorder 2, %s7
    // Predicated region
    $region29: #{run.23} parent=5 // pred_check
      %p156 = pneg %p155
    $region30: #{run.23} parent=5 // pred_check_branch
      %158 = sbr.rel (%p156) target = $region32
    $region31: #{run.23} parent=5 // pred_region
      %s159 = ssub.s32 %s7, 2
      // Predicated region
      $region33: #{run.23} parent=31 // pred_check
        %p160 = pneg %p62
      $region34: #{run.23} parent=31 // pred_check_branch
        %162 = sbr.rel (%p160) target = $region36
      $region35: #{run.23} parent=31 // pred_region
        %p163 = scmp.lt.s32.totalorder %s13, 1
        %s164 = scalar_select %p163, %s13, 1
        %s165 = smul.addr %s164, 4
        %s166 = scalar_lea.vmem %s1, %s165
      $region36: #{run.23} parent=31 // pred_fallthru
        _
    $region32: #{run.23} parent=5 // pred_fallthru
      _
  $region6: #{run.23} parent=0 // loop_footer
    %s11 = sadd.s32 1, %s7
  $region7: #{run.23} parent=0 // loop_footer_branch
    %6 = sbr.rel target = $region3
  $region8: #{run.23} parent=0 // loop_exit
    _

// kernel: run.22
$region0: #{run.22}
  #allocation0 [shape = 'u32[]', space=smem, size = 0x4, offset = 0x4, fixed_abs, tag = 'smem constant byte address 0x4 - core index']
  #allocation1 [shape = 'u32[72,128]{1,0:T(1,128)}', space=vmem, size = 0x9000, scoped, tag = 'internal scratch']
  #allocation2 [shape = 'f32[8,128]{1,0:T(8,128)}', space=vmem, size = 0x1000, scoped, tag = 'scratch operand']
  %s0 = inlined_call_operand.vmem [shape: f32[1,8,512], index: 0, kind: input, shape index: {}]
  %s1 = inlined_call_operand.vmem [shape: f32[1,512,128], index: 1, kind: input, shape index: {}]
  %s2 = inlined_call_operand.vmem [shape: f32[1,1,128], index: 2, kind: input, shape index: {}]
  %s3 = inlined_call_operand.vmem [shape: f32[1,8,128], index: 3, kind: output, shape index: {}]
  %s4 = sld [smem:[#allocation0]]
  $region30: #{run.22} parent=0
    _
  %s6 = ssub.s32 1, %s4
  %s7 = scalar_select 0, %s6, %s4
  // Predicated region
  $region2: #{run.22} parent=0 // pred_check
    _
  $region3: #{run.22} parent=0 // pred_check_branch
    %9 = sbr.rel (0) target = $region5
  $region4: #{run.22} parent=0 // pred_region
    _
  $region5: #{run.22} parent=0 // pred_fallthru
    _
  // Predicated region
  $region6: #{run.22} parent=0 // pred_check
    _
  $region7: #{run.22} parent=0 // pred_check_branch
    %11 = sbr.rel (0) target = $region9
  $region8: #{run.22} parent=0 // pred_region
    _
  $region9: #{run.22} parent=0 // pred_fallthru
    _
  // Predicated region
  $region10: #{run.22} parent=0 // pred_check
    _
  $region11: #{run.22} parent=0 // pred_check_branch
    %13 = sbr.rel (0) target = $region13
  $region12: #{run.22} parent=0 // pred_region
    _
  $region13: #{run.22} parent=0 // pred_fallthru
    _
  %p14 = scmp.eq.s32.totalorder 0, 0
  // Predicated region
  $region14: #{run.22} parent=0 // pred_check
    %p15 = pneg %p14
  $region15: #{run.22} parent=0 // pred_check_branch
    %17 = sbr.rel (%p15) target = $region17
  $region16: #{run.22} parent=0 // pred_region
    %18 = vst [vmem:[#allocation2] sm:$0xff] 0.0
  $region17: #{run.22} parent=0 // pred_fallthru
    _
  %v19 = vld [vmem:[#allocation2] sm:$0xff]
  %v20 = vld [vmem:[%s0] sm:$0xff]
  %v21 = vld [vmem:[%s0 + $0x8] sm:$0xff]
  %v22 = vld [vmem:[%s0 + $0x10] sm:$0xff]
  %v23 = vld [vmem:[%s0 + $0x18] sm:$0xff]
  %v24 = vld [vmem:[%s1] sm:$0xff]
  %v25 = vld [vmem:[%s1 + $0x8] sm:$0xff]
  %v26 = vld [vmem:[%s1 + $0x10] sm:$0xff]
  %v27 = vld [vmem:[%s1 + $0x18] sm:$0xff]
  %v28 = vld [vmem:[%s1 + $0x20] sm:$0xff]
  %v29 = vld [vmem:[%s1 + $0x28] sm:$0xff]
  %v30 = vld [vmem:[%s1 + $0x30] sm:$0xff]
  %v31 = vld [vmem:[%s1 + $0x38] sm:$0xff]
  %v32 = vld [vmem:[%s1 + $0x40] sm:$0xff]
  %v33 = vld [vmem:[%s1 + $0x48] sm:$0xff]
  %v34 = vld [vmem:[%s1 + $0x50] sm:$0xff]
  %v35 = vld [vmem:[%s1 + $0x58] sm:$0xff]
  %v36 = vld [vmem:[%s1 + $0x60] sm:$0xff]
  %v37 = vld [vmem:[%s1 + $0x68] sm:$0xff]
  %v38 = vld [vmem:[%s1 + $0x70] sm:$0xff]
  %v39 = vld [vmem:[%s1 + $0x78] sm:$0xff]
  %v40 = vld [vmem:[%s1 + $0x80] sm:$0xff]
  %v41 = vld [vmem:[%s1 + $0x88] sm:$0xff]
  %v42 = vld [vmem:[%s1 + $0x90] sm:$0xff]
  %v43 = vld [vmem:[%s1 + $0x98] sm:$0xff]
  %v44 = vld [vmem:[%s1 + $0xa0] sm:$0xff]
  %v45 = vld [vmem:[%s1 + $0xa8] sm:$0xff]
  %v46 = vld [vmem:[%s1 + $0xb0] sm:$0xff]
  %v47 = vld [vmem:[%s1 + $0xb8] sm:$0xff]
  %v48 = vld [vmem:[%s1 + $0xc0] sm:$0xff]
  %v49 = vld [vmem:[%s1 + $0xc8] sm:$0xff]
  %v50 = vld [vmem:[%s1 + $0xd0] sm:$0xff]
  %v51 = vld [vmem:[%s1 + $0xd8] sm:$0xff]
  %v52 = vld [vmem:[%s1 + $0xe0] sm:$0xff]
  %v53 = vld [vmem:[%s1 + $0xe8] sm:$0xff]
  %v54 = vld [vmem:[%s1 + $0xf0] sm:$0xff]
  %v55 = vld [vmem:[%s1 + $0xf8] sm:$0xff]
  %v56 = vld [vmem:[%s1 + $0x100] sm:$0xff]
  %v57 = vld [vmem:[%s1 + $0x108] sm:$0xff]
  %v58 = vld [vmem:[%s1 + $0x110] sm:$0xff]
  %v59 = vld [vmem:[%s1 + $0x118] sm:$0xff]
  %v60 = vld [vmem:[%s1 + $0x120] sm:$0xff]
  %v61 = vld [vmem:[%s1 + $0x128] sm:$0xff]
  %v62 = vld [vmem:[%s1 + $0x130] sm:$0xff]
  %v63 = vld [vmem:[%s1 + $0x138] sm:$0xff]
  %v64 = vld [vmem:[%s1 + $0x140] sm:$0xff]
  %v65 = vld [vmem:[%s1 + $0x148] sm:$0xff]
  %v66 = vld [vmem:[%s1 + $0x150] sm:$0xff]
  %v67 = vld [vmem:[%s1 + $0x158] sm:$0xff]
  %v68 = vld [vmem:[%s1 + $0x160] sm:$0xff]
  %v69 = vld [vmem:[%s1 + $0x168] sm:$0xff]
  %v70 = vld [vmem:[%s1 + $0x170] sm:$0xff]
  %v71 = vld [vmem:[%s1 + $0x178] sm:$0xff]
  %v72 = vld [vmem:[%s1 + $0x180] sm:$0xff]
  %v73 = vld [vmem:[%s1 + $0x188] sm:$0xff]
  %v74 = vld [vmem:[%s1 + $0x190] sm:$0xff]
  %v75 = vld [vmem:[%s1 + $0x198] sm:$0xff]
  %v76 = vld [vmem:[%s1 + $0x1a0] sm:$0xff]
  %v77 = vld [vmem:[%s1 + $0x1a8] sm:$0xff]
  %v78 = vld [vmem:[%s1 + $0x1b0] sm:$0xff]
  %v79 = vld [vmem:[%s1 + $0x1b8] sm:$0xff]
  %v80 = vld [vmem:[%s1 + $0x1c0] sm:$0xff]
  %v81 = vld [vmem:[%s1 + $0x1c8] sm:$0xff]
  %v82 = vld [vmem:[%s1 + $0x1d0] sm:$0xff]
  %v83 = vld [vmem:[%s1 + $0x1d8] sm:$0xff]
  %v84 = vld [vmem:[%s1 + $0x1e0] sm:$0xff]
  %v85 = vld [vmem:[%s1 + $0x1e8] sm:$0xff]
  %v86 = vld [vmem:[%s1 + $0x1f0] sm:$0xff]
  %v87 = vld [vmem:[%s1 + $0x1f8] sm:$0xff]
  %88 = vmatpush.msra.mxu0 %v39
  %89 = vmatpush.msra.mxu0 %v38
  %90 = vmatpush.msra.mxu0 %v37
  %91 = vmatpush.msra.mxu0 %v36
  %92 = vmatpush.msra.mxu0 %v35
  %93 = vmatpush.msra.mxu0 %v34
  %94 = vmatpush.msra.mxu0 %v33
  %95 = vmatpush.msra.mxu0 %v32
  %96 = vmatpush.msra.mxu0 %v31
  %97 = vmatpush.msra.mxu0 %v30
  %98 = vmatpush.msra.mxu0 %v29
  %99 = vmatpush.msra.mxu0 %v28
  %100 = vmatpush.msra.mxu0 %v27
  %101 = vmatpush.msra.mxu0 %v26
  %102 = vmatpush.msra.mxu0 %v25
  %103 = vmatpush.msra.mxu0 %v24
  %104 = vmatmul.f32.gmra.mxu0 %v20
  %v105 = vpop.f32.mrf.mxu0
  %v106 = vadd.f32 0.0, %v105
  %107 = vdwg.mxu0
  %108 = vmatpush.msra.mxu0 %v55
  %109 = vmatpush.msra.mxu0 %v54
  %110 = vmatpush.msra.mxu0 %v53
  %111 = vmatpush.msra.mxu0 %v52
  %112 = vmatpush.msra.mxu0 %v51
  %113 = vmatpush.msra.mxu0 %v50
  %114 = vmatpush.msra.mxu0 %v49
  %115 = vmatpush.msra.mxu0 %v48
  %116 = vmatpush.msra.mxu0 %v47
  %117 = vmatpush.msra.mxu0 %v46
  %118 = vmatpush.msra.mxu0 %v45
  %119 = vmatpush.msra.mxu0 %v44
  %120 = vmatpush.msra.mxu0 %v43
  %121 = vmatpush.msra.mxu0 %v42
  %122 = vmatpush.msra.mxu0 %v41
  %123 = vmatpush.msra.mxu0 %v40
  %124 = vmatmul.f32.gmra.mxu0 %v21
  %v125 = vpop.f32.mrf.mxu0
  %v126 = vadd.f32 %v106, %v125
  %127 = vdwg.mxu0
  %128 = vmatpush.msra.mxu0 %v71
  %129 = vmatpush.msra.mxu0 %v70
  %130 = vmatpush.msra.mxu0 %v69
  %131 = vmatpush.msra.mxu0 %v68
  %132 = vmatpush.msra.mxu0 %v67
  %133 = vmatpush.msra.mxu0 %v66
  %134 = vmatpush.msra.mxu0 %v65
  %135 = vmatpush.msra.mxu0 %v64
  %136 = vmatpush.msra.mxu0 %v63
  %137 = vmatpush.msra.mxu0 %v62
  %138 = vmatpush.msra.mxu0 %v61
  %139 = vmatpush.msra.mxu0 %v60
  %140 = vmatpush.msra.mxu0 %v59
  %141 = vmatpush.msra.mxu0 %v58
  %142 = vmatpush.msra.mxu0 %v57
  %143 = vmatpush.msra.mxu0 %v56
  %144 = vmatmul.f32.gmra.mxu0 %v22
  %v145 = vpop.f32.mrf.mxu0
  %v146 = vadd.f32 %v126, %v145
  %147 = vdwg.mxu0
  %148 = vmatpush.msra.mxu0 %v87
  %149 = vmatpush.msra.mxu0 %v86
  %150 = vmatpush.msra.mxu0 %v85
  %151 = vmatpush.msra.mxu0 %v84
  %152 = vmatpush.msra.mxu0 %v83
  %153 = vmatpush.msra.mxu0 %v82
  %154 = vmatpush.msra.mxu0 %v81
  %155 = vmatpush.msra.mxu0 %v80
  %156 = vmatpush.msra.mxu0 %v79
  %157 = vmatpush.msra.mxu0 %v78
  %158 = vmatpush.msra.mxu0 %v77
  %159 = vmatpush.msra.mxu0 %v76
  %160 = vmatpush.msra.mxu0 %v75
  %161 = vmatpush.msra.mxu0 %v74
  %162 = vmatpush.msra.mxu0 %v73
  %163 = vmatpush.msra.mxu0 %v72
  %164 = vmatmul.f32.gmra.mxu0 %v23
  %v165 = vpop.f32.mrf.mxu0
  %v166 = vadd.f32 %v146, %v165
  %167 = vdwg.mxu0
  %v168 = vadd.f32 %v19, %v166
  %169 = vst [vmem:[#allocation2] sm:$0xff] %v168
  // Predicated region
  $region18: #{run.22} parent=0 // pred_check
    %p170 = pneg %p14
  $region19: #{run.22} parent=0 // pred_check_branch
    %172 = sbr.rel (%p170) target = $region21
  $region20: #{run.22} parent=0 // pred_region
    %v173 = vld [vmem:[#allocation2] sm:$0xff]
    %v174 = vld [vmem:[%s2] sm:$0x1]
    %v176 = vperm.slane %v174, 0
    %v178 = vadd.f32 %v173, %v176
    %179 = vst [vmem:[%s3] sm:$0xff] %v178
  $region21: #{run.22} parent=0 // pred_fallthru
    _
  // Predicated region
  $region22: #{run.22} parent=0 // pred_check
    _
  $region23: #{run.22} parent=0 // pred_check_branch
    %181 = sbr.rel (0) target = $region25
  $region24: #{run.22} parent=0 // pred_region
    _
  $region25: #{run.22} parent=0 // pred_fallthru
    _
  // Predicated region
  $region26: #{run.22} parent=0 // pred_check
    _
  $region27: #{run.22} parent=0 // pred_check_branch
    %183 = sbr.rel (0) target = $region29
  $region28: #{run.22} parent=0 // pred_region
    _
  $region29: #{run.22} parent=0 // pred_fallthru
    _

// kernel: run.24
$region0: #{run.24}
  #allocation0 [shape = 'u32[]', space=smem, size = 0x4, offset = 0x4, fixed_abs, tag = 'smem constant byte address 0x4 - core index']
  #allocation1 [shape = 'u32[72,128]{1,0:T(1,128)}', space=vmem, size = 0x9000, scoped, tag = 'internal scratch']
  #allocation2 [shape = 'f32[8,128]{1,0:T(8,128)}', space=vmem, size = 0x1000, scoped, tag = 'scratch operand']
  %s0 = inlined_call_operand.vmem [shape: f32[1,8,1024], index: 0, kind: input, shape index: {}]
  %s1 = inlined_call_operand.vmem [shape: f32[1,1024,128], index: 1, kind: input, shape index: {}]
  %s2 = inlined_call_operand.vmem [shape: f32[1,1,128], index: 2, kind: input, shape index: {}]
  %s3 = inlined_call_operand.vmem [shape: f32[1,8,128], index: 3, kind: output, shape index: {}]
  %s4 = sld [smem:[#allocation0]]
  $region53: #{run.24} parent=0
    _
  %s6 = ssub.s32 1, %s4
  %s7 = scalar_select 0, %s6, %s4
  loop: start=0, step=1, limit=4
  $region2: #{run.24} parent=0 // loop_pre_header
    _
  $region3: #{run.24} parent=0 // loop_header
    %s9 = sphi 0, %s13
    %p10 = scmp.ge.s32.totalorder %s9, 4
    %s16 = sphi 0, %s42
    %s17 = sphi 0, %s38
    %s18 = sphi 0, %s34
    %s19 = sphi 0, %s30
    %s20 = sphi 0, %s16
    %s21 = sphi 0, %s17
    %s22 = sphi 0, %s18
    %s23 = sphi 0, %s19
    %s24 = sphi 0, %s20
    %s25 = sphi 0, %s21
    %s26 = sphi 0, %s22
    %s27 = sphi 0, %s23
    %s49 = sphi 0, %s51
    %s52 = sphi 0, %s49
    %s53 = sphi 0, %s52
    %s69 = sphi 0, %s53
    %s79 = sphi 0, %s81
    %s82 = sphi 0, %s79
    %s83 = sphi 0, %s82
    %s99 = sphi 0, %s83
    %s107 = sphi 0, %s109
    %s110 = sphi 0, %s107
    %s111 = sphi 0, %s110
    %s127 = sphi 0, %s111
    %s137 = sphi 0, %s139
    %s140 = sphi 0, %s137
    %s141 = sphi 0, %s140
    %s157 = sphi 0, %s141
  $region4: #{run.24} parent=0 // loop_header_branch
    %12 = sbr.rel (%p10) target = $region8
  $region5: #{run.24} parent=0 // loop_body
    %s14 = ssub.s32 %s9, 1
    %s15 = ssub.s32 %s9, 2
    %s28 = sadd.s32 1, %s19
    %p29 = scmp.ge.s32.totalorder %s28, 2
    %s30 = scalar_select %p29, 0, %s28
    %s31 = sadd.s32 1, %s18
    %s32 = scalar_select %p29, %s31, %s18
    %p33 = scmp.ge.s32.totalorder %s32, 1
    %s34 = scalar_select %p33, 0, %s32
    %s35 = sadd.s32 1, %s17
    %s36 = scalar_select %p33, %s35, %s17
    %p37 = scmp.ge.s32.totalorder %s36, 1
    %s38 = scalar_select %p37, 0, %s36
    %s39 = sadd.s32 1, %s16
    %s40 = scalar_select %p37, %s39, %s16
    %p41 = scmp.ge.s32.totalorder %s40, 1
    %s42 = scalar_select %p41, 0, %s40
    %s43 = ssub.s32 %s16, %s42
    %s44 = ssub.s32 %s17, %s38
    %s45 = sor.u32 %s43, %s44
    %s46 = ssub.s32 %s19, %s30
    %s47 = sor.u32 %s45, %s46
    %p48 = scmp.eq.s32.totalorder %s47, 0
    %s50 = sadd.s32 %s49, 1
    %s51 = scalar_select %p48, %s49, %s50
    %p54 = pneg %p48
    %p55 = scmp.eq.s32.totalorder %s9, 1
    %p56 = por %p54, %p55
    %p57 = scmp.ne.s32.totalorder %s49, %s52
    %p58 = scmp.eq.s32.totalorder %s9, 0
    %p59 = por %p57, %p58
    %p60 = scmp.ne.s32.totalorder %s49, %s52
    %p61 = scmp.eq.s32.totalorder %s14, 1
    %p62 = por %p60, %p61
    %p63 = scmp.ne.s32.totalorder %s52, %s53
    %p64 = scmp.eq.s32.totalorder %s14, 0
    %p65 = por %p63, %p64
    %p66 = scmp.ne.s32.totalorder %s52, %s53
    %p67 = scmp.eq.s32.totalorder %s15, 1
    %p68 = por %p66, %p67
    %p70 = scmp.ne.s32.totalorder %s53, %s69
    %p71 = scmp.eq.s32.totalorder %s15, 0
    %p72 = por %p70, %p71
    %s73 = ssub.s32 %s16, %s42
    %s74 = ssub.s32 %s19, %s30
    %s75 = sor.u32 %s73, %s74
    %s76 = ssub.s32 %s18, %s34
    %s77 = sor.u32 %s75, %s76
    %p78 = scmp.eq.s32.totalorder %s77, 0
    %s80 = sadd.s32 %s79, 1
    %s81 = scalar_select %p78, %s79, %s80
    %p84 = pneg %p78
    %p85 = scmp.eq.s32.totalorder %s9, 1
    %p86 = por %p84, %p85
    %p87 = scmp.ne.s32.totalorder %s79, %s82
    %p88 = scmp.eq.s32.totalorder %s9, 0
    %p89 = por %p87, %p88
    %p90 = scmp.ne.s32.totalorder %s79, %s82
    %p91 = scmp.eq.s32.totalorder %s14, 1
    %p92 = por %p90, %p91
    %p93 = scmp.ne.s32.totalorder %s82, %s83
    %p94 = scmp.eq.s32.totalorder %s14, 0
    %p95 = por %p93, %p94
    %p96 = scmp.ne.s32.totalorder %s82, %s83
    %p97 = scmp.eq.s32.totalorder %s15, 1
    %p98 = por %p96, %p97
    %p100 = scmp.ne.s32.totalorder %s83, %s99
    %p101 = scmp.eq.s32.totalorder %s15, 0
    %p102 = por %p100, %p101
    %s103 = ssub.s32 %s16, %s42
    %s104 = ssub.s32 %s18, %s34
    %s105 = sor.u32 %s103, %s104
    %p106 = scmp.eq.s32.totalorder %s105, 0
    %s108 = sadd.s32 %s107, 1
    %s109 = scalar_select %p106, %s107, %s108
    %p112 = pneg %p106
    %p113 = scmp.eq.s32.totalorder %s9, 1
    %p114 = por %p112, %p113
    %p115 = scmp.ne.s32.totalorder %s107, %s110
    %p116 = scmp.eq.s32.totalorder %s9, 0
    %p117 = por %p115, %p116
    %p118 = scmp.ne.s32.totalorder %s107, %s110
    %p119 = scmp.eq.s32.totalorder %s14, 1
    %p120 = por %p118, %p119
    %p121 = scmp.ne.s32.totalorder %s110, %s111
    %p122 = scmp.eq.s32.totalorder %s14, 0
    %p123 = por %p121, %p122
    %p124 = scmp.ne.s32.totalorder %s110, %s111
    %p125 = scmp.eq.s32.totalorder %s15, 1
    %p126 = por %p124, %p125
    %p128 = scmp.ne.s32.totalorder %s111, %s127
    %p129 = scmp.eq.s32.totalorder %s15, 0
    %p130 = por %p128, %p129
    %s131 = ssub.s32 %s16, %s42
    %s132 = ssub.s32 %s17, %s38
    %s133 = sor.u32 %s131, %s132
    %s134 = ssub.s32 %s18, %s34
    %s135 = sor.u32 %s133, %s134
    %p136 = scmp.eq.s32.totalorder %s135, 0
    %s138 = sadd.s32 %s137, 1
    %s139 = scalar_select %p136, %s137, %s138
    %p142 = pneg %p136
    %p143 = scmp.eq.s32.totalorder %s9, 1
    %p144 = por %p142, %p143
    %p145 = scmp.ne.s32.totalorder %s137, %s140
    %p146 = scmp.eq.s32.totalorder %s9, 0
    %p147 = por %p145, %p146
    %p148 = scmp.ne.s32.totalorder %s137, %s140
    %p149 = scmp.eq.s32.totalorder %s14, 1
    %p150 = por %p148, %p149
    %p151 = scmp.ne.s32.totalorder %s140, %s141
    %p152 = scmp.eq.s32.totalorder %s14, 0
    %p153 = por %p151, %p152
    %p154 = scmp.ne.s32.totalorder %s140, %s141
    %p155 = scmp.eq.s32.totalorder %s15, 1
    %p156 = por %p154, %p155
    %p158 = scmp.ne.s32.totalorder %s141, %s157
    %p159 = scmp.eq.s32.totalorder %s15, 0
    %p160 = por %p158, %p159
    %p161 = scmp.le.s32.totalorder 1, %s9
    %p162 = scmp.lt.s32.totalorder %s9, 3
    %p163 = pnand %p161, %p162
    %p164 = pneg %p163
    // Predicated region
    $region9: #{run.24} parent=5 // pred_check
      _
    $region10: #{run.24} parent=5 // pred_check_branch
      %166 = sbr.rel (%p163) target = $region12
    $region11: #{run.24} parent=5 // pred_region
      %s167 = ssub.s32 %s9, 1
      // Predicated region
      $region13: #{run.24} parent=11 // pred_check
        %p168 = pneg %p123
      $region14: #{run.24} parent=11 // pred_check_branch
        %170 = sbr.rel (%p168) target = $region16
      $region15: #{run.24} parent=11 // pred_region
        %p171 = scmp.lt.s32.totalorder %s20, 0
        %s172 = scalar_select %p171, %s20, 0
        %p173 = scmp.lt.s32.totalorder %s22, 0
        %s174 = scalar_select %p173, %s22, 0
        %s175 = sadd.s32 %s174, %s172
        %s176 = scalar_lea.vmem %s2, %s175
      $region16: #{run.24} parent=11 // pred_fallthru
        _
    $region12: #{run.24} parent=5 // pred_fallthru
      _
    %p177 = scmp.lt.s32.totalorder %s9, 2
    // Predicated region
    $region17: #{run.24} parent=5 // pred_check
      %p178 = pneg %p177
    $region18: #{run.24} parent=5 // pred_check_branch
      %180 = sbr.rel (%p178) target = $region20
    $region19: #{run.24} parent=5 // pred_region
      // Predicated region
      $region21: #{run.24} parent=19 // pred_check
        %p181 = pneg %p59
      $region22: #{run.24} parent=19 // pred_check_branch
        %183 = sbr.rel (%p181) target = $region24
      $region23: #{run.24} parent=19 // pred_region
        %s184 = smul.u32 4, %s19
        %p185 = scmp.lt.s32.totalorder %s16, 0
        %s186 = scalar_select %p185, %s16, 0
        %p187 = scmp.lt.s32.totalorder %s17, 0
        %s188 = scalar_select %p187, %s17, 0
        %p189 = scmp.lt.s32.totalorder %s184, 7
        %s190 = scalar_select %p189, %s184, 7
        %s191 = smul.addr %s188, 8
        %s192 = sadd.s32 %s190, %s191
        %s193 = smul.addr %s186, 8
        %s194 = sadd.s32 %s192, %s193
        %s195 = smul.addr %s194, 8
        %s196 = scalar_lea.vmem %s0, %s195
        %s197 = smul.u32 4, %s19
      $region24: #{run.24} parent=19 // pred_fallthru
        _
      // Predicated region
      $region25: #{run.24} parent=19 // pred_check
        %p198 = pneg %p89
      $region26: #{run.24} parent=19 // pred_check_branch
        %200 = sbr.rel (%p198) target = $region28
      $region27: #{run.24} parent=19 // pred_region
        %s201 = smul.u32 64, %s19
        %p202 = scmp.lt.s32.totalorder %s16, 0
        %s203 = scalar_select %p202, %s16, 0
        %p204 = scmp.lt.s32.totalorder %s201, 127
        %s205 = scalar_select %p204, %s201, 127
        %p206 = scmp.lt.s32.totalorder %s18, 0
        %s207 = scalar_select %p206, %s18, 0
        %s208 = sadd.s32 %s207, %s205
        %s209 = smul.addr %s203, 128
        %s210 = sadd.s32 %s208, %s209
        %s211 = smul.addr %s210, 8
        %s212 = scalar_lea.vmem %s1, %s211
        %s213 = smul.u32 64, %s19
      $region28: #{run.24} parent=19 // pred_fallthru
        _
    $region20: #{run.24} parent=5 // pred_fallthru
      _
    %p214 = scmp.le.s32.totalorder 1, %s9
    %p215 = scmp.lt.s32.totalorder %s9, 3
    %p216 = pnand %p214, %p215
    %p217 = pneg %p216
    // Predicated region
    $region29: #{run.24} parent=5 // pred_check
      _
    $region30: #{run.24} parent=5 // pred_check_branch
      %219 = sbr.rel (%p216) target = $region32
    $region31: #{run.24} parent=5 // pred_region
      %s220 = ssub.s32 %s9, 1
      %s221 = smul.u32 4, %s23
      %p222 = scmp.lt.s32.totalorder %s20, 0
      %s223 = scalar_select %p222, %s20, 0
      %p224 = scmp.lt.s32.totalorder %s21, 0
      %s225 = scalar_select %p224, %s21, 0
      %p226 = scmp.lt.s32.totalorder %s221, 7
      %s227 = scalar_select %p226, %s221, 7
      %s228 = smul.addr %s225, 8
      %s229 = sadd.s32 %s227, %s228
      %s230 = smul.addr %s223, 8
      %s231 = sadd.s32 %s229, %s230
      %s232 = smul.addr %s231, 8
      %s233 = scalar_lea.vmem %s0, %s232
      %p234 = pneg %p65
      %p235 = pneg %p62
      %s236 = smul.u32 64, %s23
      %p237 = scmp.lt.s32.totalorder %s20, 0
      %s238 = scalar_select %p237, %s20, 0
      %p239 = scmp.lt.s32.totalorder %s236, 127
      %s240 = scalar_select %p239, %s236, 127
      %p241 = scmp.lt.s32.totalorder %s22, 0
      %s242 = scalar_select %p241, %s22, 0
      %s243 = sadd.s32 %s242, %s240
      %s244 = smul.addr %s238, 128
      %s245 = sadd.s32 %s243, %s244
      %s246 = smul.addr %s245, 8
      %s247 = scalar_lea.vmem %s1, %s246
      %p248 = pneg %p95
      %p249 = pneg %p92
      %p250 = scmp.lt.s32.totalorder %s20, 0
      %s251 = scalar_select %p250, %s20, 0
      %p252 = scmp.lt.s32.totalorder %s22, 0
      %s253 = scalar_select %p252, %s22, 0
      %s254 = sadd.s32 %s253, %s251
      %s255 = scalar_lea.vmem %s2, %s254
      %p256 = pneg %p123
      %p257 = pneg %p120
      %p258 = pneg %p153
      %p259 = pneg %p150
      %p260 = scmp.lt.s32.totalorder %s20, 0
      %s261 = scalar_select %p260, %s20, 0
      %p262 = scmp.lt.s32.totalorder %s21, 0
      %s263 = scalar_select %p262, %s21, 0
      %p264 = scmp.lt.s32.totalorder %s22, 0
      %s265 = scalar_select %p264, %s22, 0
      %s266 = sadd.s32 %s265, %s263
      %s267 = sadd.s32 %s266, %s261
      %s268 = smul.addr %s267, 8
      %s269 = scalar_lea.vmem %s3, %s268
      %s270 = smul.u32 4, %s23
      %p271 = scmp.lt.s32.totalorder %s20, 0
      %s272 = scalar_select %p271, %s20, 0
      %p273 = scmp.lt.s32.totalorder %s21, 0
      %s274 = scalar_select %p273, %s21, 0
      %p275 = scmp.lt.s32.totalorder %s270, 7
      %s276 = scalar_select %p275, %s270, 7
      %s277 = smul.addr %s274, 8
      %s278 = sadd.s32 %s276, %s277
      %s279 = smul.addr %s272, 8
      %s280 = sadd.s32 %s278, %s279
      %s281 = smul.addr %s280, 8
      %s282 = scalar_lea.vmem %s0, %s281
      %s283 = smul.u32 4, %s23
      %s284 = smul.u32 64, %s23
      %p285 = scmp.lt.s32.totalorder %s20, 0
      %s286 = scalar_select %p285, %s20, 0
      %p287 = scmp.lt.s32.totalorder %s284, 127
      %s288 = scalar_select %p287, %s284, 127
      %p289 = scmp.lt.s32.totalorder %s22, 0
      %s290 = scalar_select %p289, %s22, 0
      %s291 = sadd.s32 %s290, %s288
      %s292 = smul.addr %s286, 128
      %s293 = sadd.s32 %s291, %s292
      %s294 = smul.addr %s293, 8
      %s295 = scalar_lea.vmem %s1, %s294
      %s296 = smul.u32 64, %s23
      %p297 = scmp.lt.s32.totalorder %s20, 0
      %s298 = scalar_select %p297, %s20, 0
      %p299 = scmp.lt.s32.totalorder %s22, 0
      %s300 = scalar_select %p299, %s22, 0
      %s301 = sadd.s32 %s300, %s298
      %s302 = scalar_lea.vmem %s2, %s301
      %p303 = scmp.lt.s32.totalorder %s20, 0
      %s304 = scalar_select %p303, %s20, 0
      %p305 = scmp.lt.s32.totalorder %s21, 0
      %s306 = scalar_select %p305, %s21, 0
      %p307 = scmp.lt.s32.totalorder %s22, 0
      %s308 = scalar_select %p307, %s22, 0
      %s309 = sadd.s32 %s308, %s306
      %s310 = sadd.s32 %s309, %s304
      %s311 = smul.addr %s310, 8
      %s312 = scalar_lea.vmem %s3, %s311
      %p313 = scmp.eq.s32.totalorder %s23, 0
      // Predicated region
      $region33: #{run.24} parent=31 // pred_check
        %p314 = pneg %p313
      $region34: #{run.24} parent=31 // pred_check_branch
        %316 = sbr.rel (%p314) target = $region36
      $region35: #{run.24} parent=31 // pred_region
        %317 = vst [vmem:[#allocation2] sm:$0xff] 0.0
      $region36: #{run.24} parent=31 // pred_fallthru
        _
      %v318 = vld [vmem:[#allocation2] sm:$0xff]
      %v319 = vld [vmem:[%s282] sm:$0xff]
      %v320 = vld [vmem:[%s282 + $0x8] sm:$0xff]
      %v321 = vld [vmem:[%s282 + $0x10] sm:$0xff]
      %v322 = vld [vmem:[%s282 + $0x18] sm:$0xff]
      %v323 = vld [vmem:[%s295] sm:$0xff]
      %v324 = vld [vmem:[%s295 + $0x8] sm:$0xff]
      %v325 = vld [vmem:[%s295 + $0x10] sm:$0xff]
      %v326 = vld [vmem:[%s295 + $0x18] sm:$0xff]
      %v327 = vld [vmem:[%s295 + $0x20] sm:$0xff]
      %v328 = vld [vmem:[%s295 + $0x28] sm:$0xff]
      %v329 = vld [vmem:[%s295 + $0x30] sm:$0xff]
      %v330 = vld [vmem:[%s295 + $0x38] sm:$0xff]
      %v331 = vld [vmem:[%s295 + $0x40] sm:$0xff]
      %v332 = vld [vmem:[%s295 + $0x48] sm:$0xff]
      %v333 = vld [vmem:[%s295 + $0x50] sm:$0xff]
      %v334 = vld [vmem:[%s295 + $0x58] sm:$0xff]
      %v335 = vld [vmem:[%s295 + $0x60] sm:$0xff]
      %v336 = vld [vmem:[%s295 + $0x68] sm:$0xff]
      %v337 = vld [vmem:[%s295 + $0x70] sm:$0xff]
      %v338 = vld [vmem:[%s295 + $0x78] sm:$0xff]
      %v339 = vld [vmem:[%s295 + $0x80] sm:$0xff]
      %v340 = vld [vmem:[%s295 + $0x88] sm:$0xff]
      %v341 = vld [vmem:[%s295 + $0x90] sm:$0xff]
      %v342 = vld [vmem:[%s295 + $0x98] sm:$0xff]
      %v343 = vld [vmem:[%s295 + $0xa0] sm:$0xff]
      %v344 = vld [vmem:[%s295 + $0xa8] sm:$0xff]
      %v345 = vld [vmem:[%s295 + $0xb0] sm:$0xff]
      %v346 = vld [vmem:[%s295 + $0xb8] sm:$0xff]
      %v347 = vld [vmem:[%s295 + $0xc0] sm:$0xff]
      %v348 = vld [vmem:[%s295 + $0xc8] sm:$0xff]
      %v349 = vld [vmem:[%s295 + $0xd0] sm:$0xff]
      %v350 = vld [vmem:[%s295 + $0xd8] sm:$0xff]
      %v351 = vld [vmem:[%s295 + $0xe0] sm:$0xff]
      %v352 = vld [vmem:[%s295 + $0xe8] sm:$0xff]
      %v353 = vld [vmem:[%s295 + $0xf0] sm:$0xff]
      %v354 = vld [vmem:[%s295 + $0xf8] sm:$0xff]
      %v355 = vld [vmem:[%s295 + $0x100] sm:$0xff]
      %v356 = vld [vmem:[%s295 + $0x108] sm:$0xff]
      %v357 = vld [vmem:[%s295 + $0x110] sm:$0xff]
      %v358 = vld [vmem:[%s295 + $0x118] sm:$0xff]
      %v359 = vld [vmem:[%s295 + $0x120] sm:$0xff]
      %v360 = vld [vmem:[%s295 + $0x128] sm:$0xff]
      %v361 = vld [vmem:[%s295 + $0x130] sm:$0xff]
      %v362 = vld [vmem:[%s295 + $0x138] sm:$0xff]
      %v363 = vld [vmem:[%s295 + $0x140] sm:$0xff]
      %v364 = vld [vmem:[%s295 + $0x148] sm:$0xff]
      %v365 = vld [vmem:[%s295 + $0x150] sm:$0xff]
      %v366 = vld [vmem:[%s295 + $0x158] sm:$0xff]
      %v367 = vld [vmem:[%s295 + $0x160] sm:$0xff]
      %v368 = vld [vmem:[%s295 + $0x168] sm:$0xff]
      %v369 = vld [vmem:[%s295 + $0x170] sm:$0xff]
      %v370 = vld [vmem:[%s295 + $0x178] sm:$0xff]
      %v371 = vld [vmem:[%s295 + $0x180] sm:$0xff]
      %v372 = vld [vmem:[%s295 + $0x188] sm:$0xff]
      %v373 = vld [vmem:[%s295 + $0x190] sm:$0xff]
      %v374 = vld [vmem:[%s295 + $0x198] sm:$0xff]
      %v375 = vld [vmem:[%s295 + $0x1a0] sm:$0xff]
      %v376 = vld [vmem:[%s295 + $0x1a8] sm:$0xff]
      %v377 = vld [vmem:[%s295 + $0x1b0] sm:$0xff]
      %v378 = vld [vmem:[%s295 + $0x1b8] sm:$0xff]
      %v379 = vld [vmem:[%s295 + $0x1c0] sm:$0xff]
      %v380 = vld [vmem:[%s295 + $0x1c8] sm:$0xff]
      %v381 = vld [vmem:[%s295 + $0x1d0] sm:$0xff]
      %v382 = vld [vmem:[%s295 + $0x1d8] sm:$0xff]
      %v383 = vld [vmem:[%s295 + $0x1e0] sm:$0xff]
      %v384 = vld [vmem:[%s295 + $0x1e8] sm:$0xff]
      %v385 = vld [vmem:[%s295 + $0x1f0] sm:$0xff]
      %v386 = vld [vmem:[%s295 + $0x1f8] sm:$0xff]
      %387 = vmatpush.msra.mxu0 %v338
      %388 = vmatpush.msra.mxu0 %v337
      %389 = vmatpush.msra.mxu0 %v336
      %390 = vmatpush.msra.mxu0 %v335
      %391 = vmatpush.msra.mxu0 %v334
      %392 = vmatpush.msra.mxu0 %v333
      %393 = vmatpush.msra.mxu0 %v332
      %394 = vmatpush.msra.mxu0 %v331
      %395 = vmatpush.msra.mxu0 %v330
      %396 = vmatpush.msra.mxu0 %v329
      %397 = vmatpush.msra.mxu0 %v328
      %398 = vmatpush.msra.mxu0 %v327
      %399 = vmatpush.msra.mxu0 %v326
      %400 = vmatpush.msra.mxu0 %v325
      %401 = vmatpush.msra.mxu0 %v324
      %402 = vmatpush.msra.mxu0 %v323
      %403 = vmatmul.f32.gmra.mxu0 %v319
      %v404 = vpop.f32.mrf.mxu0
      %v405 = vadd.f32 0.0, %v404
      %406 = vdwg.mxu0
      %407 = vmatpush.msra.mxu0 %v354
      %408 = vmatpush.msra.mxu0 %v353
      %409 = vmatpush.msra.mxu0 %v352
      %410 = vmatpush.msra.mxu0 %v351
      %411 = vmatpush.msra.mxu0 %v350
      %412 = vmatpush.msra.mxu0 %v349
      %413 = vmatpush.msra.mxu0 %v348
      %414 = vmatpush.msra.mxu0 %v347
      %415 = vmatpush.msra.mxu0 %v346
      %416 = vmatpush.msra.mxu0 %v345
      %417 = vmatpush.msra.mxu0 %v344
      %418 = vmatpush.msra.mxu0 %v343
      %419 = vmatpush.msra.mxu0 %v342
      %420 = vmatpush.msra.mxu0 %v341
      %421 = vmatpush.msra.mxu0 %v340
      %422 = vmatpush.msra.mxu0 %v339
      %423 = vmatmul.f32.gmra.mxu0 %v320
      %v424 = vpop.f32.mrf.mxu0
      %v425 = vadd.f32 %v405, %v424
      %426 = vdwg.mxu0
      %427 = vmatpush.msra.mxu0 %v370
      %428 = vmatpush.msra.mxu0 %v369
      %429 = vmatpush.msra.mxu0 %v368
      %430 = vmatpush.msra.mxu0 %v367
      %431 = vmatpush.msra.mxu0 %v366
      %432 = vmatpush.msra.mxu0 %v365
      %433 = vmatpush.msra.mxu0 %v364
      %434 = vmatpush.msra.mxu0 %v363
      %435 = vmatpush.msra.mxu0 %v362
      %436 = vmatpush.msra.mxu0 %v361
      %437 = vmatpush.msra.mxu0 %v360
      %438 = vmatpush.msra.mxu0 %v359
      %439 = vmatpush.msra.mxu0 %v358
      %440 = vmatpush.msra.mxu0 %v357
      %441 = vmatpush.msra.mxu0 %v356
      %442 = vmatpush.msra.mxu0 %v355
      %443 = vmatmul.f32.gmra.mxu0 %v321
      %v444 = vpop.f32.mrf.mxu0
      %v445 = vadd.f32 %v425, %v444
      %446 = vdwg.mxu0
      %447 = vmatpush.msra.mxu0 %v386
      %448 = vmatpush.msra.mxu0 %v385
      %449 = vmatpush.msra.mxu0 %v384
      %450 = vmatpush.msra.mxu0 %v383
      %451 = vmatpush.msra.mxu0 %v382
      %452 = vmatpush.msra.mxu0 %v381
      %453 = vmatpush.msra.mxu0 %v380
      %454 = vmatpush.msra.mxu0 %v379
      %455 = vmatpush.msra.mxu0 %v378
      %456 = vmatpush.msra.mxu0 %v377
      %457 = vmatpush.msra.mxu0 %v376
      %458 = vmatpush.msra.mxu0 %v375
      %459 = vmatpush.msra.mxu0 %v374
      %460 = vmatpush.msra.mxu0 %v373
      %461 = vmatpush.msra.mxu0 %v372
      %462 = vmatpush.msra.mxu0 %v371
      %463 = vmatmul.f32.gmra.mxu0 %v322
      %v464 = vpop.f32.mrf.mxu0
      %v465 = vadd.f32 %v445, %v464
      %466 = vdwg.mxu0
      %v467 = vadd.f32 %v318, %v465
      %468 = vst [vmem:[#allocation2] sm:$0xff] %v467
      %p469 = scmp.eq.s32.totalorder %s23, 1
      // Predicated region
      $region37: #{run.24} parent=31 // pred_check
        %p470 = pneg %p469
      $region38: #{run.24} parent=31 // pred_check_branch
        %472 = sbr.rel (%p470) target = $region40
      $region39: #{run.24} parent=31 // pred_region
        %v473 = vld [vmem:[#allocation2] sm:$0xff]
        %v474 = vld [vmem:[%s302] sm:$0x1]
        %v476 = vperm.slane %v474, 0
        %v478 = vadd.f32 %v473, %v476
        %479 = vst [vmem:[%s312] sm:$0xff] %v478
      $region40: #{run.24} parent=31 // pred_fallthru
        _
      %p480 = scmp.lt.s32.totalorder %s20, 0
      %s481 = scalar_select %p480, %s20, 0
      %p482 = scmp.lt.s32.totalorder %s21, 0
      %s483 = scalar_select %p482, %s21, 0
      %p484 = scmp.lt.s32.totalorder %s22, 0
      %s485 = scalar_select %p484, %s22, 0
      %s486 = sadd.s32 %s485, %s483
      %s487 = sadd.s32 %s486, %s481
      %s488 = smul.addr %s487, 8
      %s489 = scalar_lea.vmem %s3, %s488
      // Predicated region
      $region41: #{run.24} parent=31 // pred_check
        %p490 = pneg %p150
      $region42: #{run.24} parent=31 // pred_check_branch
        %492 = sbr.rel (%p490) target = $region44
      $region43: #{run.24} parent=31 // pred_region
        _
      $region44: #{run.24} parent=31 // pred_fallthru
        _
      // Predicated region
      $region45: #{run.24} parent=31 // pred_check
        %p493 = pneg %p150
      $region46: #{run.24} parent=31 // pred_check_branch
        %495 = sbr.rel (%p493) target = $region48
      $region47: #{run.24} parent=31 // pred_region
        %p496 = scmp.lt.s32.totalorder %s20, 0
        %s497 = scalar_select %p496, %s20, 0
        %p498 = scmp.lt.s32.totalorder %s21, 0
        %s499 = scalar_select %p498, %s21, 0
        %p500 = scmp.lt.s32.totalorder %s22, 0
        %s501 = scalar_select %p500, %s22, 0
        %s502 = sadd.s32 %s501, %s499
        %s503 = sadd.s32 %s502, %s497
        %s504 = smul.addr %s503, 8
        %s505 = scalar_lea.vmem %s3, %s504
      $region48: #{run.24} parent=31 // pred_fallthru
        _
    $region32: #{run.24} parent=5 // pred_fallthru
      _
    %p506 = scmp.le.s32.totalorder 2, %s9
    // Predicated region
    $region49: #{run.24} parent=5 // pred_check
      %p507 = pneg %p506
    $region50: #{run.24} parent=5 // pred_check_branch
      %509 = sbr.rel (%p507) target = $region52
    $region51: #{run.24} parent=5 // pred_region
      %s510 = ssub.s32 %s9, 2
    $region52: #{run.24} parent=5 // pred_fallthru
      _
  $region6: #{run.24} parent=0 // loop_footer
    %s13 = sadd.s32 1, %s9
  $region7: #{run.24} parent=0 // loop_footer_branch
    %8 = sbr.rel target = $region3
  $region8: #{run.24} parent=0 // loop_exit
    _

// kernel: run.25
$region0: #{run.25}
  #allocation0 [shape = 'u32[]', space=smem, size = 0x4, offset = 0x4, fixed_abs, tag = 'smem constant byte address 0x4 - core index']
  #allocation1 [shape = 'u32[72,128]{1,0:T(1,128)}', space=vmem, size = 0x9000, scoped, tag = 'internal scratch']
  #allocation2 [shape = 'f32[8,128]{1,0:T(8,128)}', space=vmem, size = 0x1000, scoped, tag = 'scratch operand']
  %s0 = inlined_call_operand.vmem [shape: f32[4,8,256], index: 0, kind: input, shape index: {}]
  %s1 = inlined_call_operand.vmem [shape: f32[4,256,128], index: 1, kind: input, shape index: {}]
  %s2 = inlined_call_operand.vmem [shape: f32[4,1,128], index: 2, kind: input, shape index: {}]
  %s3 = inlined_call_operand.vmem [shape: f32[4,8,128], index: 3, kind: output, shape index: {}]
  %s4 = sld [smem:[#allocation0]]
  $region53: #{run.25} parent=0
    _
  %s6 = ssub.s32 1, %s4
  %s7 = scalar_select 0, %s6, %s4
  loop: start=0, step=1, limit=6
  $region2: #{run.25} parent=0 // loop_pre_header
    _
  $region3: #{run.25} parent=0 // loop_header
    %s9 = sphi 0, %s13
    %p10 = scmp.ge.s32.totalorder %s9, 6
    %s16 = sphi 0, %s42
    %s17 = sphi 0, %s38
    %s18 = sphi 0, %s34
    %s19 = sphi 0, %s30
    %s20 = sphi 0, %s16
    %s21 = sphi 0, %s17
    %s22 = sphi 0, %s18
    %s23 = sphi 0, %s19
    %s24 = sphi 0, %s20
    %s25 = sphi 0, %s21
    %s26 = sphi 0, %s22
    %s27 = sphi 0, %s23
    %s49 = sphi 0, %s51
    %s52 = sphi 0, %s49
    %s53 = sphi 0, %s52
    %s69 = sphi 0, %s53
    %s79 = sphi 0, %s81
    %s82 = sphi 0, %s79
    %s83 = sphi 0, %s82
    %s99 = sphi 0, %s83
    %s107 = sphi 0, %s109
    %s110 = sphi 0, %s107
    %s111 = sphi 0, %s110
    %s127 = sphi 0, %s111
    %s137 = sphi 0, %s139
    %s140 = sphi 0, %s137
    %s141 = sphi 0, %s140
    %s157 = sphi 0, %s141
  $region4: #{run.25} parent=0 // loop_header_branch
    %12 = sbr.rel (%p10) target = $region8
  $region5: #{run.25} parent=0 // loop_body
    %s14 = ssub.s32 %s9, 1
    %s15 = ssub.s32 %s9, 2
    %s28 = sadd.s32 1, %s19
    %p29 = scmp.ge.s32.totalorder %s28, 1
    %s30 = scalar_select %p29, 0, %s28
    %s31 = sadd.s32 1, %s18
    %s32 = scalar_select %p29, %s31, %s18
    %p33 = scmp.ge.s32.totalorder %s32, 1
    %s34 = scalar_select %p33, 0, %s32
    %s35 = sadd.s32 1, %s17
    %s36 = scalar_select %p33, %s35, %s17
    %p37 = scmp.ge.s32.totalorder %s36, 1
    %s38 = scalar_select %p37, 0, %s36
    %s39 = sadd.s32 1, %s16
    %s40 = scalar_select %p37, %s39, %s16
    %p41 = scmp.ge.s32.totalorder %s40, 4
    %s42 = scalar_select %p41, 0, %s40
    %s43 = ssub.s32 %s16, %s42
    %s44 = ssub.s32 %s17, %s38
    %s45 = sor.u32 %s43, %s44
    %s46 = ssub.s32 %s19, %s30
    %s47 = sor.u32 %s45, %s46
    %p48 = scmp.eq.s32.totalorder %s47, 0
    %s50 = sadd.s32 %s49, 1
    %s51 = scalar_select %p48, %s49, %s50
    %p54 = pneg %p48
    %p55 = scmp.eq.s32.totalorder %s9, 3
    %p56 = por %p54, %p55
    %p57 = scmp.ne.s32.totalorder %s49, %s52
    %p58 = scmp.eq.s32.totalorder %s9, 0
    %p59 = por %p57, %p58
    %p60 = scmp.ne.s32.totalorder %s49, %s52
    %p61 = scmp.eq.s32.totalorder %s14, 3
    %p62 = por %p60, %p61
    %p63 = scmp.ne.s32.totalorder %s52, %s53
    %p64 = scmp.eq.s32.totalorder %s14, 0
    %p65 = por %p63, %p64
    %p66 = scmp.ne.s32.totalorder %s52, %s53
    %p67 = scmp.eq.s32.totalorder %s15, 3
    %p68 = por %p66, %p67
    %p70 = scmp.ne.s32.totalorder %s53, %s69
    %p71 = scmp.eq.s32.totalorder %s15, 0
    %p72 = por %p70, %p71
    %s73 = ssub.s32 %s16, %s42
    %s74 = ssub.s32 %s19, %s30
    %s75 = sor.u32 %s73, %s74
    %s76 = ssub.s32 %s18, %s34
    %s77 = sor.u32 %s75, %s76
    %p78 = scmp.eq.s32.totalorder %s77, 0
    %s80 = sadd.s32 %s79, 1
    %s81 = scalar_select %p78, %s79, %s80
    %p84 = pneg %p78
    %p85 = scmp.eq.s32.totalorder %s9, 3
    %p86 = por %p84, %p85
    %p87 = scmp.ne.s32.totalorder %s79, %s82
    %p88 = scmp.eq.s32.totalorder %s9, 0
    %p89 = por %p87, %p88
    %p90 = scmp.ne.s32.totalorder %s79, %s82
    %p91 = scmp.eq.s32.totalorder %s14, 3
    %p92 = por %p90, %p91
    %p93 = scmp.ne.s32.totalorder %s82, %s83
    %p94 = scmp.eq.s32.totalorder %s14, 0
    %p95 = por %p93, %p94
    %p96 = scmp.ne.s32.totalorder %s82, %s83
    %p97 = scmp.eq.s32.totalorder %s15, 3
    %p98 = por %p96, %p97
    %p100 = scmp.ne.s32.totalorder %s83, %s99
    %p101 = scmp.eq.s32.totalorder %s15, 0
    %p102 = por %p100, %p101
    %s103 = ssub.s32 %s16, %s42
    %s104 = ssub.s32 %s18, %s34
    %s105 = sor.u32 %s103, %s104
    %p106 = scmp.eq.s32.totalorder %s105, 0
    %s108 = sadd.s32 %s107, 1
    %s109 = scalar_select %p106, %s107, %s108
    %p112 = pneg %p106
    %p113 = scmp.eq.s32.totalorder %s9, 3
    %p114 = por %p112, %p113
    %p115 = scmp.ne.s32.totalorder %s107, %s110
    %p116 = scmp.eq.s32.totalorder %s9, 0
    %p117 = por %p115, %p116
    %p118 = scmp.ne.s32.totalorder %s107, %s110
    %p119 = scmp.eq.s32.totalorder %s14, 3
    %p120 = por %p118, %p119
    %p121 = scmp.ne.s32.totalorder %s110, %s111
    %p122 = scmp.eq.s32.totalorder %s14, 0
    %p123 = por %p121, %p122
    %p124 = scmp.ne.s32.totalorder %s110, %s111
    %p125 = scmp.eq.s32.totalorder %s15, 3
    %p126 = por %p124, %p125
    %p128 = scmp.ne.s32.totalorder %s111, %s127
    %p129 = scmp.eq.s32.totalorder %s15, 0
    %p130 = por %p128, %p129
    %s131 = ssub.s32 %s16, %s42
    %s132 = ssub.s32 %s17, %s38
    %s133 = sor.u32 %s131, %s132
    %s134 = ssub.s32 %s18, %s34
    %s135 = sor.u32 %s133, %s134
    %p136 = scmp.eq.s32.totalorder %s135, 0
    %s138 = sadd.s32 %s137, 1
    %s139 = scalar_select %p136, %s137, %s138
    %p142 = pneg %p136
    %p143 = scmp.eq.s32.totalorder %s9, 3
    %p144 = por %p142, %p143
    %p145 = scmp.ne.s32.totalorder %s137, %s140
    %p146 = scmp.eq.s32.totalorder %s9, 0
    %p147 = por %p145, %p146
    %p148 = scmp.ne.s32.totalorder %s137, %s140
    %p149 = scmp.eq.s32.totalorder %s14, 3
    %p150 = por %p148, %p149
    %p151 = scmp.ne.s32.totalorder %s140, %s141
    %p152 = scmp.eq.s32.totalorder %s14, 0
    %p153 = por %p151, %p152
    %p154 = scmp.ne.s32.totalorder %s140, %s141
    %p155 = scmp.eq.s32.totalorder %s15, 3
    %p156 = por %p154, %p155
    %p158 = scmp.ne.s32.totalorder %s141, %s157
    %p159 = scmp.eq.s32.totalorder %s15, 0
    %p160 = por %p158, %p159
    %p161 = scmp.le.s32.totalorder 1, %s9
    %p162 = scmp.lt.s32.totalorder %s9, 5
    %p163 = pnand %p161, %p162
    %p164 = pneg %p163
    // Predicated region
    $region9: #{run.25} parent=5 // pred_check
      _
    $region10: #{run.25} parent=5 // pred_check_branch
      %166 = sbr.rel (%p163) target = $region12
    $region11: #{run.25} parent=5 // pred_region
      %s167 = ssub.s32 %s9, 1
    $region12: #{run.25} parent=5 // pred_fallthru
      _
    %p168 = scmp.lt.s32.totalorder %s9, 4
    // Predicated region
    $region13: #{run.25} parent=5 // pred_check
      %p169 = pneg %p168
    $region14: #{run.25} parent=5 // pred_check_branch
      %171 = sbr.rel (%p169) target = $region16
    $region15: #{run.25} parent=5 // pred_region
      // Predicated region
      $region17: #{run.25} parent=15 // pred_check
        %p172 = pneg %p59
      $region18: #{run.25} parent=15 // pred_check_branch
        %174 = sbr.rel (%p172) target = $region20
      $region19: #{run.25} parent=15 // pred_region
        %s175 = smul.u32 2, %s19
        %p176 = scmp.lt.s32.totalorder %s16, 3
        %s177 = scalar_select %p176, %s16, 3
        %p178 = scmp.lt.s32.totalorder %s17, 0
        %s179 = scalar_select %p178, %s17, 0
        %p180 = scmp.lt.s32.totalorder %s175, 1
        %s181 = scalar_select %p180, %s175, 1
        %s182 = smul.addr %s179, 2
        %s183 = sadd.s32 %s181, %s182
        %s184 = smul.addr %s177, 2
        %s185 = sadd.s32 %s183, %s184
        %s186 = smul.addr %s185, 8
        %s187 = scalar_lea.vmem %s0, %s186
        %s188 = smul.u32 2, %s19
      $region20: #{run.25} parent=15 // pred_fallthru
        _
      // Predicated region
      $region21: #{run.25} parent=15 // pred_check
        %p189 = pneg %p89
      $region22: #{run.25} parent=15 // pred_check_branch
        %191 = sbr.rel (%p189) target = $region24
      $region23: #{run.25} parent=15 // pred_region
        %s192 = smul.u32 32, %s19
        %p193 = scmp.lt.s32.totalorder %s16, 3
        %s194 = scalar_select %p193, %s16, 3
        %p195 = scmp.lt.s32.totalorder %s192, 31
        %s196 = scalar_select %p195, %s192, 31
        %p197 = scmp.lt.s32.totalorder %s18, 0
        %s198 = scalar_select %p197, %s18, 0
        %s199 = sadd.s32 %s198, %s196
        %s200 = smul.addr %s194, 32
        %s201 = sadd.s32 %s199, %s200
        %s202 = smul.addr %s201, 8
        %s203 = scalar_lea.vmem %s1, %s202
        %s204 = smul.u32 32, %s19
      $region24: #{run.25} parent=15 // pred_fallthru
        _
      // Predicated region
      $region25: #{run.25} parent=15 // pred_check
        %p205 = pneg %p117
      $region26: #{run.25} parent=15 // pred_check_branch
        %207 = sbr.rel (%p205) target = $region28
      $region27: #{run.25} parent=15 // pred_region
        %p208 = scmp.lt.s32.totalorder %s16, 3
        %s209 = scalar_select %p208, %s16, 3
        %p210 = scmp.lt.s32.totalorder %s18, 0
        %s211 = scalar_select %p210, %s18, 0
        %s212 = sadd.s32 %s211, %s209
        %s213 = scalar_lea.vmem %s2, %s212
      $region28: #{run.25} parent=15 // pred_fallthru
        _
    $region16: #{run.25} parent=5 // pred_fallthru
      _
    %p214 = scmp.le.s32.totalorder 1, %s9
    %p215 = scmp.lt.s32.totalorder %s9, 5
    %p216 = pnand %p214, %p215
    %p217 = pneg %p216
    // Predicated region
    $region29: #{run.25} parent=5 // pred_check
      _
    $region30: #{run.25} parent=5 // pred_check_branch
      %219 = sbr.rel (%p216) target = $region32
    $region31: #{run.25} parent=5 // pred_region
      %s220 = ssub.s32 %s9, 1
      %s221 = smul.u32 2, %s23
      %p222 = scmp.lt.s32.totalorder %s20, 3
      %s223 = scalar_select %p222, %s20, 3
      %p224 = scmp.lt.s32.totalorder %s21, 0
      %s225 = scalar_select %p224, %s21, 0
      %p226 = scmp.lt.s32.totalorder %s221, 1
      %s227 = scalar_select %p226, %s221, 1
      %s228 = smul.addr %s225, 2
      %s229 = sadd.s32 %s227, %s228
      %s230 = smul.addr %s223, 2
      %s231 = sadd.s32 %s229, %s230
      %s232 = smul.addr %s231, 8
      %s233 = scalar_lea.vmem %s0, %s232
      %p234 = pneg %p65
      %p235 = pneg %p62
      %s236 = smul.u32 32, %s23
      %p237 = scmp.lt.s32.totalorder %s20, 3
      %s238 = scalar_select %p237, %s20, 3
      %p239 = scmp.lt.s32.totalorder %s236, 31
      %s240 = scalar_select %p239, %s236, 31
      %p241 = scmp.lt.s32.totalorder %s22, 0
      %s242 = scalar_select %p241, %s22, 0
      %s243 = sadd.s32 %s242, %s240
      %s244 = smul.addr %s238, 32
      %s245 = sadd.s32 %s243, %s244
      %s246 = smul.addr %s245, 8
      %s247 = scalar_lea.vmem %s1, %s246
      %p248 = pneg %p95
      %p249 = pneg %p92
      %p250 = scmp.lt.s32.totalorder %s20, 3
      %s251 = scalar_select %p250, %s20, 3
      %p252 = scmp.lt.s32.totalorder %s22, 0
      %s253 = scalar_select %p252, %s22, 0
      %s254 = sadd.s32 %s253, %s251
      %s255 = scalar_lea.vmem %s2, %s254
      %p256 = pneg %p123
      %p257 = pneg %p120
      %p258 = pneg %p153
      %p259 = pneg %p150
      %p260 = scmp.lt.s32.totalorder %s20, 3
      %s261 = scalar_select %p260, %s20, 3
      %p262 = scmp.lt.s32.totalorder %s21, 0
      %s263 = scalar_select %p262, %s21, 0
      %p264 = scmp.lt.s32.totalorder %s22, 0
      %s265 = scalar_select %p264, %s22, 0
      %s266 = sadd.s32 %s265, %s263
      %s267 = sadd.s32 %s266, %s261
      %s268 = smul.addr %s267, 8
      %s269 = scalar_lea.vmem %s3, %s268
      %s270 = smul.u32 2, %s23
      %p271 = scmp.lt.s32.totalorder %s20, 3
      %s272 = scalar_select %p271, %s20, 3
      %p273 = scmp.lt.s32.totalorder %s21, 0
      %s274 = scalar_select %p273, %s21, 0
      %p275 = scmp.lt.s32.totalorder %s270, 1
      %s276 = scalar_select %p275, %s270, 1
      %s277 = smul.addr %s274, 2
      %s278 = sadd.s32 %s276, %s277
      %s279 = smul.addr %s272, 2
      %s280 = sadd.s32 %s278, %s279
      %s281 = smul.addr %s280, 8
      %s282 = scalar_lea.vmem %s0, %s281
      %s283 = smul.u32 2, %s23
      %s284 = smul.u32 32, %s23
      %p285 = scmp.lt.s32.totalorder %s20, 3
      %s286 = scalar_select %p285, %s20, 3
      %p287 = scmp.lt.s32.totalorder %s284, 31
      %s288 = scalar_select %p287, %s284, 31
      %p289 = scmp.lt.s32.totalorder %s22, 0
      %s290 = scalar_select %p289, %s22, 0
      %s291 = sadd.s32 %s290, %s288
      %s292 = smul.addr %s286, 32
      %s293 = sadd.s32 %s291, %s292
      %s294 = smul.addr %s293, 8
      %s295 = scalar_lea.vmem %s1, %s294
      %s296 = smul.u32 32, %s23
      %p297 = scmp.lt.s32.totalorder %s20, 3
      %s298 = scalar_select %p297, %s20, 3
      %p299 = scmp.lt.s32.totalorder %s22, 0
      %s300 = scalar_select %p299, %s22, 0
      %s301 = sadd.s32 %s300, %s298
      %s302 = scalar_lea.vmem %s2, %s301
      %p303 = scmp.lt.s32.totalorder %s20, 3
      %s304 = scalar_select %p303, %s20, 3
      %p305 = scmp.lt.s32.totalorder %s21, 0
      %s306 = scalar_select %p305, %s21, 0
      %p307 = scmp.lt.s32.totalorder %s22, 0
      %s308 = scalar_select %p307, %s22, 0
      %s309 = sadd.s32 %s308, %s306
      %s310 = sadd.s32 %s309, %s304
      %s311 = smul.addr %s310, 8
      %s312 = scalar_lea.vmem %s3, %s311
      %p313 = scmp.eq.s32.totalorder %s23, 0
      // Predicated region
      $region33: #{run.25} parent=31 // pred_check
        %p314 = pneg %p313
      $region34: #{run.25} parent=31 // pred_check_branch
        %316 = sbr.rel (%p314) target = $region36
      $region35: #{run.25} parent=31 // pred_region
        %317 = vst [vmem:[#allocation2] sm:$0xff] 0.0
      $region36: #{run.25} parent=31 // pred_fallthru
        _
      %v318 = vld [vmem:[#allocation2] sm:$0xff]
      %v319 = vld [vmem:[%s282] sm:$0xff]
      %v320 = vld [vmem:[%s282 + $0x8] sm:$0xff]
      %v321 = vld [vmem:[%s295] sm:$0xff]
      %v322 = vld [vmem:[%s295 + $0x8] sm:$0xff]
      %v323 = vld [vmem:[%s295 + $0x10] sm:$0xff]
      %v324 = vld [vmem:[%s295 + $0x18] sm:$0xff]
      %v325 = vld [vmem:[%s295 + $0x20] sm:$0xff]
      %v326 = vld [vmem:[%s295 + $0x28] sm:$0xff]
      %v327 = vld [vmem:[%s295 + $0x30] sm:$0xff]
      %v328 = vld [vmem:[%s295 + $0x38] sm:$0xff]
      %v329 = vld [vmem:[%s295 + $0x40] sm:$0xff]
      %v330 = vld [vmem:[%s295 + $0x48] sm:$0xff]
      %v331 = vld [vmem:[%s295 + $0x50] sm:$0xff]
      %v332 = vld [vmem:[%s295 + $0x58] sm:$0xff]
      %v333 = vld [vmem:[%s295 + $0x60] sm:$0xff]
      %v334 = vld [vmem:[%s295 + $0x68] sm:$0xff]
      %v335 = vld [vmem:[%s295 + $0x70] sm:$0xff]
      %v336 = vld [vmem:[%s295 + $0x78] sm:$0xff]
      %v337 = vld [vmem:[%s295 + $0x80] sm:$0xff]
      %v338 = vld [vmem:[%s295 + $0x88] sm:$0xff]
      %v339 = vld [vmem:[%s295 + $0x90] sm:$0xff]
      %v340 = vld [vmem:[%s295 + $0x98] sm:$0xff]
      %v341 = vld [vmem:[%s295 + $0xa0] sm:$0xff]
      %v342 = vld [vmem:[%s295 + $0xa8] sm:$0xff]
      %v343 = vld [vmem:[%s295 + $0xb0] sm:$0xff]
      %v344 = vld [vmem:[%s295 + $0xb8] sm:$0xff]
      %v345 = vld [vmem:[%s295 + $0xc0] sm:$0xff]
      %v346 = vld [vmem:[%s295 + $0xc8] sm:$0xff]
      %v347 = vld [vmem:[%s295 + $0xd0] sm:$0xff]
      %v348 = vld [vmem:[%s295 + $0xd8] sm:$0xff]
      %v349 = vld [vmem:[%s295 + $0xe0] sm:$0xff]
      %v350 = vld [vmem:[%s295 + $0xe8] sm:$0xff]
      %v351 = vld [vmem:[%s295 + $0xf0] sm:$0xff]
      %v352 = vld [vmem:[%s295 + $0xf8] sm:$0xff]
      %353 = vmatpush.msra.mxu0 %v336
      %354 = vmatpush.msra.mxu0 %v335
      %355 = vmatpush.msra.mxu0 %v334
      %356 = vmatpush.msra.mxu0 %v333
      %357 = vmatpush.msra.mxu0 %v332
      %358 = vmatpush.msra.mxu0 %v331
      %359 = vmatpush.msra.mxu0 %v330
      %360 = vmatpush.msra.mxu0 %v329
      %361 = vmatpush.msra.mxu0 %v328
      %362 = vmatpush.msra.mxu0 %v327
      %363 = vmatpush.msra.mxu0 %v326
      %364 = vmatpush.msra.mxu0 %v325
      %365 = vmatpush.msra.mxu0 %v324
      %366 = vmatpush.msra.mxu0 %v323
      %367 = vmatpush.msra.mxu0 %v322
      %368 = vmatpush.msra.mxu0 %v321
      %369 = vmatmul.f32.gmra.mxu0 %v319
      %v370 = vpop.f32.mrf.mxu0
      %v371 = vadd.f32 0.0, %v370
      %372 = vdwg.mxu0
      %373 = vmatpush.msra.mxu0 %v352
      %374 = vmatpush.msra.mxu0 %v351
      %375 = vmatpush.msra.mxu0 %v350
      %376 = vmatpush.msra.mxu0 %v349
      %377 = vmatpush.msra.mxu0 %v348
      %378 = vmatpush.msra.mxu0 %v347
      %379 = vmatpush.msra.mxu0 %v346
      %380 = vmatpush.msra.mxu0 %v345
      %381 = vmatpush.msra.mxu0 %v344
      %382 = vmatpush.msra.mxu0 %v343
      %383 = vmatpush.msra.mxu0 %v342
      %384 = vmatpush.msra.mxu0 %v341
      %385 = vmatpush.msra.mxu0 %v340
      %386 = vmatpush.msra.mxu0 %v339
      %387 = vmatpush.msra.mxu0 %v338
      %388 = vmatpush.msra.mxu0 %v337
      %389 = vmatmul.f32.gmra.mxu0 %v320
      %v390 = vpop.f32.mrf.mxu0
      %v391 = vadd.f32 %v371, %v390
      %392 = vdwg.mxu0
      %v393 = vadd.f32 %v318, %v391
      %394 = vst [vmem:[#allocation2] sm:$0xff] %v393
      // Predicated region
      $region37: #{run.25} parent=31 // pred_check
        %p395 = pneg %p313
      $region38: #{run.25} parent=31 // pred_check_branch
        %397 = sbr.rel (%p395) target = $region40
      $region39: #{run.25} parent=31 // pred_region
        %v398 = vld [vmem:[#allocation2] sm:$0xff]
        %v399 = vld [vmem:[%s302] sm:$0x1]
        %v401 = vperm.slane %v399, 0
        %v403 = vadd.f32 %v398, %v401
        %404 = vst [vmem:[%s312] sm:$0xff] %v403
      $region40: #{run.25} parent=31 // pred_fallthru
        _
      %p405 = scmp.lt.s32.totalorder %s20, 3
      %s406 = scalar_select %p405, %s20, 3
      %p407 = scmp.lt.s32.totalorder %s21, 0
      %s408 = scalar_select %p407, %s21, 0
      %p409 = scmp.lt.s32.totalorder %s22, 0
      %s410 = scalar_select %p409, %s22, 0
      %s411 = sadd.s32 %s410, %s408
      %s412 = sadd.s32 %s411, %s406
      %s413 = smul.addr %s412, 8
      %s414 = scalar_lea.vmem %s3, %s413
      // Predicated region
      $region41: #{run.25} parent=31 // pred_check
        %p415 = pneg %p150
      $region42: #{run.25} parent=31 // pred_check_branch
        %417 = sbr.rel (%p415) target = $region44
      $region43: #{run.25} parent=31 // pred_region
        _
      $region44: #{run.25} parent=31 // pred_fallthru
        _
    $region32: #{run.25} parent=5 // pred_fallthru
      _
    %p418 = scmp.le.s32.totalorder 2, %s9
    // Predicated region
    $region45: #{run.25} parent=5 // pred_check
      %p419 = pneg %p418
    $region46: #{run.25} parent=5 // pred_check_branch
      %421 = sbr.rel (%p419) target = $region48
    $region47: #{run.25} parent=5 // pred_region
      %s422 = ssub.s32 %s9, 2
      // Predicated region
      $region49: #{run.25} parent=47 // pred_check
        %p423 = pneg %p156
      $region50: #{run.25} parent=47 // pred_check_branch
        %425 = sbr.rel (%p423) target = $region52
      $region51: #{run.25} parent=47 // pred_region
        %p426 = scmp.lt.s32.totalorder %s24, 3
        %s427 = scalar_select %p426, %s24, 3
        %p428 = scmp.lt.s32.totalorder %s25, 0
        %s429 = scalar_select %p428, %s25, 0
        %p430 = scmp.lt.s32.totalorder %s26, 0
        %s431 = scalar_select %p430, %s26, 0
        %s432 = sadd.s32 %s431, %s429
        %s433 = sadd.s32 %s432, %s427
        %s434 = smul.addr %s433, 8
        %s435 = scalar_lea.vmem %s3, %s434
      $region52: #{run.25} parent=47 // pred_fallthru
        _
    $region48: #{run.25} parent=5 // pred_fallthru
      _
  $region6: #{run.25} parent=0 // loop_footer
    %s13 = sadd.s32 1, %s9
  $region7: #{run.25} parent=0 // loop_footer_branch
    %8 = sbr.rel target = $region3
  $region8: #{run.25} parent=0 // loop_exit
    _

// kernel: run.27
$region0: #{run.27}
  #allocation0 [shape = 'u32[]', space=smem, size = 0x4, offset = 0x4, fixed_abs, tag = 'smem constant byte address 0x4 - core index']
  #allocation1 [shape = 'u32[72,128]{1,0:T(1,128)}', space=vmem, size = 0x9000, scoped, tag = 'internal scratch']
  #allocation2 [shape = 'f32[8,128]{1,0:T(8,128)}', space=vmem, size = 0x1000, scoped, tag = 'scratch operand']
  %s0 = inlined_call_operand.vmem [shape: f32[4,8,512], index: 0, kind: input, shape index: {}]
  %s1 = inlined_call_operand.vmem [shape: f32[4,512,128], index: 1, kind: input, shape index: {}]
  %s2 = inlined_call_operand.vmem [shape: f32[4,1,128], index: 2, kind: input, shape index: {}]
  %s3 = inlined_call_operand.vmem [shape: f32[4,8,128], index: 3, kind: output, shape index: {}]
  %s4 = sld [smem:[#allocation0]]
  $region53: #{run.27} parent=0
    _
  %s6 = ssub.s32 1, %s4
  %s7 = scalar_select 0, %s6, %s4
  loop: start=0, step=1, limit=6
  $region2: #{run.27} parent=0 // loop_pre_header
    _
  $region3: #{run.27} parent=0 // loop_header
    %s9 = sphi 0, %s13
    %p10 = scmp.ge.s32.totalorder %s9, 6
    %s16 = sphi 0, %s42
    %s17 = sphi 0, %s38
    %s18 = sphi 0, %s34
    %s19 = sphi 0, %s30
    %s20 = sphi 0, %s16
    %s21 = sphi 0, %s17
    %s22 = sphi 0, %s18
    %s23 = sphi 0, %s19
    %s24 = sphi 0, %s20
    %s25 = sphi 0, %s21
    %s26 = sphi 0, %s22
    %s27 = sphi 0, %s23
    %s49 = sphi 0, %s51
    %s52 = sphi 0, %s49
    %s53 = sphi 0, %s52
    %s69 = sphi 0, %s53
    %s79 = sphi 0, %s81
    %s82 = sphi 0, %s79
    %s83 = sphi 0, %s82
    %s99 = sphi 0, %s83
    %s107 = sphi 0, %s109
    %s110 = sphi 0, %s107
    %s111 = sphi 0, %s110
    %s127 = sphi 0, %s111
    %s137 = sphi 0, %s139
    %s140 = sphi 0, %s137
    %s141 = sphi 0, %s140
    %s157 = sphi 0, %s141
  $region4: #{run.27} parent=0 // loop_header_branch
    %12 = sbr.rel (%p10) target = $region8
  $region5: #{run.27} parent=0 // loop_body
    %s14 = ssub.s32 %s9, 1
    %s15 = ssub.s32 %s9, 2
    %s28 = sadd.s32 1, %s19
    %p29 = scmp.ge.s32.totalorder %s28, 1
    %s30 = scalar_select %p29, 0, %s28
    %s31 = sadd.s32 1, %s18
    %s32 = scalar_select %p29, %s31, %s18
    %p33 = scmp.ge.s32.totalorder %s32, 1
    %s34 = scalar_select %p33, 0, %s32
    %s35 = sadd.s32 1, %s17
    %s36 = scalar_select %p33, %s35, %s17
    %p37 = scmp.ge.s32.totalorder %s36, 1
    %s38 = scalar_select %p37, 0, %s36
    %s39 = sadd.s32 1, %s16
    %s40 = scalar_select %p37, %s39, %s16
    %p41 = scmp.ge.s32.totalorder %s40, 4
    %s42 = scalar_select %p41, 0, %s40
    %s43 = ssub.s32 %s16, %s42
    %s44 = ssub.s32 %s17, %s38
    %s45 = sor.u32 %s43, %s44
    %s46 = ssub.s32 %s19, %s30
    %s47 = sor.u32 %s45, %s46
    %p48 = scmp.eq.s32.totalorder %s47, 0
    %s50 = sadd.s32 %s49, 1
    %s51 = scalar_select %p48, %s49, %s50
    %p54 = pneg %p48
    %p55 = scmp.eq.s32.totalorder %s9, 3
    %p56 = por %p54, %p55
    %p57 = scmp.ne.s32.totalorder %s49, %s52
    %p58 = scmp.eq.s32.totalorder %s9, 0
    %p59 = por %p57, %p58
    %p60 = scmp.ne.s32.totalorder %s49, %s52
    %p61 = scmp.eq.s32.totalorder %s14, 3
    %p62 = por %p60, %p61
    %p63 = scmp.ne.s32.totalorder %s52, %s53
    %p64 = scmp.eq.s32.totalorder %s14, 0
    %p65 = por %p63, %p64
    %p66 = scmp.ne.s32.totalorder %s52, %s53
    %p67 = scmp.eq.s32.totalorder %s15, 3
    %p68 = por %p66, %p67
    %p70 = scmp.ne.s32.totalorder %s53, %s69
    %p71 = scmp.eq.s32.totalorder %s15, 0
    %p72 = por %p70, %p71
    %s73 = ssub.s32 %s16, %s42
    %s74 = ssub.s32 %s19, %s30
    %s75 = sor.u32 %s73, %s74
    %s76 = ssub.s32 %s18, %s34
    %s77 = sor.u32 %s75, %s76
    %p78 = scmp.eq.s32.totalorder %s77, 0
    %s80 = sadd.s32 %s79, 1
    %s81 = scalar_select %p78, %s79, %s80
    %p84 = pneg %p78
    %p85 = scmp.eq.s32.totalorder %s9, 3
    %p86 = por %p84, %p85
    %p87 = scmp.ne.s32.totalorder %s79, %s82
    %p88 = scmp.eq.s32.totalorder %s9, 0
    %p89 = por %p87, %p88
    %p90 = scmp.ne.s32.totalorder %s79, %s82
    %p91 = scmp.eq.s32.totalorder %s14, 3
    %p92 = por %p90, %p91
    %p93 = scmp.ne.s32.totalorder %s82, %s83
    %p94 = scmp.eq.s32.totalorder %s14, 0
    %p95 = por %p93, %p94
    %p96 = scmp.ne.s32.totalorder %s82, %s83
    %p97 = scmp.eq.s32.totalorder %s15, 3
    %p98 = por %p96, %p97
    %p100 = scmp.ne.s32.totalorder %s83, %s99
    %p101 = scmp.eq.s32.totalorder %s15, 0
    %p102 = por %p100, %p101
    %s103 = ssub.s32 %s16, %s42
    %s104 = ssub.s32 %s18, %s34
    %s105 = sor.u32 %s103, %s104
    %p106 = scmp.eq.s32.totalorder %s105, 0
    %s108 = sadd.s32 %s107, 1
    %s109 = scalar_select %p106, %s107, %s108
    %p112 = pneg %p106
    %p113 = scmp.eq.s32.totalorder %s9, 3
    %p114 = por %p112, %p113
    %p115 = scmp.ne.s32.totalorder %s107, %s110
    %p116 = scmp.eq.s32.totalorder %s9, 0
    %p117 = por %p115, %p116
    %p118 = scmp.ne.s32.totalorder %s107, %s110
    %p119 = scmp.eq.s32.totalorder %s14, 3
    %p120 = por %p118, %p119
    %p121 = scmp.ne.s32.totalorder %s110, %s111
    %p122 = scmp.eq.s32.totalorder %s14, 0
    %p123 = por %p121, %p122
    %p124 = scmp.ne.s32.totalorder %s110, %s111
    %p125 = scmp.eq.s32.totalorder %s15, 3
    %p126 = por %p124, %p125
    %p128 = scmp.ne.s32.totalorder %s111, %s127
    %p129 = scmp.eq.s32.totalorder %s15, 0
    %p130 = por %p128, %p129
    %s131 = ssub.s32 %s16, %s42
    %s132 = ssub.s32 %s17, %s38
    %s133 = sor.u32 %s131, %s132
    %s134 = ssub.s32 %s18, %s34
    %s135 = sor.u32 %s133, %s134
    %p136 = scmp.eq.s32.totalorder %s135, 0
    %s138 = sadd.s32 %s137, 1
    %s139 = scalar_select %p136, %s137, %s138
    %p142 = pneg %p136
    %p143 = scmp.eq.s32.totalorder %s9, 3
    %p144 = por %p142, %p143
    %p145 = scmp.ne.s32.totalorder %s137, %s140
    %p146 = scmp.eq.s32.totalorder %s9, 0
    %p147 = por %p145, %p146
    %p148 = scmp.ne.s32.totalorder %s137, %s140
    %p149 = scmp.eq.s32.totalorder %s14, 3
    %p150 = por %p148, %p149
    %p151 = scmp.ne.s32.totalorder %s140, %s141
    %p152 = scmp.eq.s32.totalorder %s14, 0
    %p153 = por %p151, %p152
    %p154 = scmp.ne.s32.totalorder %s140, %s141
    %p155 = scmp.eq.s32.totalorder %s15, 3
    %p156 = por %p154, %p155
    %p158 = scmp.ne.s32.totalorder %s141, %s157
    %p159 = scmp.eq.s32.totalorder %s15, 0
    %p160 = por %p158, %p159
    %p161 = scmp.le.s32.totalorder 1, %s9
    %p162 = scmp.lt.s32.totalorder %s9, 5
    %p163 = pnand %p161, %p162
    %p164 = pneg %p163
    // Predicated region
    $region9: #{run.27} parent=5 // pred_check
      _
    $region10: #{run.27} parent=5 // pred_check_branch
      %166 = sbr.rel (%p163) target = $region12
    $region11: #{run.27} parent=5 // pred_region
      %s167 = ssub.s32 %s9, 1
    $region12: #{run.27} parent=5 // pred_fallthru
      _
    %p168 = scmp.lt.s32.totalorder %s9, 4
    // Predicated region
    $region13: #{run.27} parent=5 // pred_check
      %p169 = pneg %p168
    $region14: #{run.27} parent=5 // pred_check_branch
      %171 = sbr.rel (%p169) target = $region16
    $region15: #{run.27} parent=5 // pred_region
      // Predicated region
      $region17: #{run.27} parent=15 // pred_check
        %p172 = pneg %p59
      $region18: #{run.27} parent=15 // pred_check_branch
        %174 = sbr.rel (%p172) target = $region20
      $region19: #{run.27} parent=15 // pred_region
        %s175 = smul.u32 4, %s19
        %p176 = scmp.lt.s32.totalorder %s16, 3
        %s177 = scalar_select %p176, %s16, 3
        %p178 = scmp.lt.s32.totalorder %s17, 0
        %s179 = scalar_select %p178, %s17, 0
        %p180 = scmp.lt.s32.totalorder %s175, 3
        %s181 = scalar_select %p180, %s175, 3
        %s182 = smul.addr %s179, 4
        %s183 = sadd.s32 %s181, %s182
        %s184 = smul.addr %s177, 4
        %s185 = sadd.s32 %s183, %s184
        %s186 = smul.addr %s185, 8
        %s187 = scalar_lea.vmem %s0, %s186
        %s188 = smul.u32 4, %s19
      $region20: #{run.27} parent=15 // pred_fallthru
        _
      // Predicated region
      $region21: #{run.27} parent=15 // pred_check
        %p189 = pneg %p89
      $region22: #{run.27} parent=15 // pred_check_branch
        %191 = sbr.rel (%p189) target = $region24
      $region23: #{run.27} parent=15 // pred_region
        %s192 = smul.u32 64, %s19
        %p193 = scmp.lt.s32.totalorder %s16, 3
        %s194 = scalar_select %p193, %s16, 3
        %p195 = scmp.lt.s32.totalorder %s192, 63
        %s196 = scalar_select %p195, %s192, 63
        %p197 = scmp.lt.s32.totalorder %s18, 0
        %s198 = scalar_select %p197, %s18, 0
        %s199 = sadd.s32 %s198, %s196
        %s200 = smul.addr %s194, 64
        %s201 = sadd.s32 %s199, %s200
        %s202 = smul.addr %s201, 8
        %s203 = scalar_lea.vmem %s1, %s202
        %s204 = smul.u32 64, %s19
      $region24: #{run.27} parent=15 // pred_fallthru
        _
      // Predicated region
      $region25: #{run.27} parent=15 // pred_check
        %p205 = pneg %p117
      $region26: #{run.27} parent=15 // pred_check_branch
        %207 = sbr.rel (%p205) target = $region28
      $region27: #{run.27} parent=15 // pred_region
        %p208 = scmp.lt.s32.totalorder %s16, 3
        %s209 = scalar_select %p208, %s16, 3
        %p210 = scmp.lt.s32.totalorder %s18, 0
        %s211 = scalar_select %p210, %s18, 0
        %s212 = sadd.s32 %s211, %s209
        %s213 = scalar_lea.vmem %s2, %s212
      $region28: #{run.27} parent=15 // pred_fallthru
        _
    $region16: #{run.27} parent=5 // pred_fallthru
      _
    %p214 = scmp.le.s32.totalorder 1, %s9
    %p215 = scmp.lt.s32.totalorder %s9, 5
    %p216 = pnand %p214, %p215
    %p217 = pneg %p216
    // Predicated region
    $region29: #{run.27} parent=5 // pred_check
      _
    $region30: #{run.27} parent=5 // pred_check_branch
      %219 = sbr.rel (%p216) target = $region32
    $region31: #{run.27} parent=5 // pred_region
      %s220 = ssub.s32 %s9, 1
      %s221 = smul.u32 4, %s23
      %p222 = scmp.lt.s32.totalorder %s20, 3
      %s223 = scalar_select %p222, %s20, 3
      %p224 = scmp.lt.s32.totalorder %s21, 0
      %s225 = scalar_select %p224, %s21, 0
      %p226 = scmp.lt.s32.totalorder %s221, 3
      %s227 = scalar_select %p226, %s221, 3
      %s228 = smul.addr %s225, 4
      %s229 = sadd.s32 %s227, %s228
      %s230 = smul.addr %s223, 4
      %s231 = sadd.s32 %s229, %s230
      %s232 = smul.addr %s231, 8
      %s233 = scalar_lea.vmem %s0, %s232
      %p234 = pneg %p65
      %p235 = pneg %p62
      %s236 = smul.u32 64, %s23
      %p237 = scmp.lt.s32.totalorder %s20, 3
      %s238 = scalar_select %p237, %s20, 3
      %p239 = scmp.lt.s32.totalorder %s236, 63
      %s240 = scalar_select %p239, %s236, 63
      %p241 = scmp.lt.s32.totalorder %s22, 0
      %s242 = scalar_select %p241, %s22, 0
      %s243 = sadd.s32 %s242, %s240
      %s244 = smul.addr %s238, 64
      %s245 = sadd.s32 %s243, %s244
      %s246 = smul.addr %s245, 8
      %s247 = scalar_lea.vmem %s1, %s246
      %p248 = pneg %p95
      %p249 = pneg %p92
      %p250 = scmp.lt.s32.totalorder %s20, 3
      %s251 = scalar_select %p250, %s20, 3
      %p252 = scmp.lt.s32.totalorder %s22, 0
      %s253 = scalar_select %p252, %s22, 0
      %s254 = sadd.s32 %s253, %s251
      %s255 = scalar_lea.vmem %s2, %s254
      %p256 = pneg %p123
      %p257 = pneg %p120
      %p258 = pneg %p153
      %p259 = pneg %p150
      %p260 = scmp.lt.s32.totalorder %s20, 3
      %s261 = scalar_select %p260, %s20, 3
      %p262 = scmp.lt.s32.totalorder %s21, 0
      %s263 = scalar_select %p262, %s21, 0
      %p264 = scmp.lt.s32.totalorder %s22, 0
      %s265 = scalar_select %p264, %s22, 0
      %s266 = sadd.s32 %s265, %s263
      %s267 = sadd.s32 %s266, %s261
      %s268 = smul.addr %s267, 8
      %s269 = scalar_lea.vmem %s3, %s268
      %s270 = smul.u32 4, %s23
      %p271 = scmp.lt.s32.totalorder %s20, 3
      %s272 = scalar_select %p271, %s20, 3
      %p273 = scmp.lt.s32.totalorder %s21, 0
      %s274 = scalar_select %p273, %s21, 0
      %p275 = scmp.lt.s32.totalorder %s270, 3
      %s276 = scalar_select %p275, %s270, 3
      %s277 = smul.addr %s274, 4
      %s278 = sadd.s32 %s276, %s277
      %s279 = smul.addr %s272, 4
      %s280 = sadd.s32 %s278, %s279
      %s281 = smul.addr %s280, 8
      %s282 = scalar_lea.vmem %s0, %s281
      %s283 = smul.u32 4, %s23
      %s284 = smul.u32 64, %s23
      %p285 = scmp.lt.s32.totalorder %s20, 3
      %s286 = scalar_select %p285, %s20, 3
      %p287 = scmp.lt.s32.totalorder %s284, 63
      %s288 = scalar_select %p287, %s284, 63
      %p289 = scmp.lt.s32.totalorder %s22, 0
      %s290 = scalar_select %p289, %s22, 0
      %s291 = sadd.s32 %s290, %s288
      %s292 = smul.addr %s286, 64
      %s293 = sadd.s32 %s291, %s292
      %s294 = smul.addr %s293, 8
      %s295 = scalar_lea.vmem %s1, %s294
      %s296 = smul.u32 64, %s23
      %p297 = scmp.lt.s32.totalorder %s20, 3
      %s298 = scalar_select %p297, %s20, 3
      %p299 = scmp.lt.s32.totalorder %s22, 0
      %s300 = scalar_select %p299, %s22, 0
      %s301 = sadd.s32 %s300, %s298
      %s302 = scalar_lea.vmem %s2, %s301
      %p303 = scmp.lt.s32.totalorder %s20, 3
      %s304 = scalar_select %p303, %s20, 3
      %p305 = scmp.lt.s32.totalorder %s21, 0
      %s306 = scalar_select %p305, %s21, 0
      %p307 = scmp.lt.s32.totalorder %s22, 0
      %s308 = scalar_select %p307, %s22, 0
      %s309 = sadd.s32 %s308, %s306
      %s310 = sadd.s32 %s309, %s304
      %s311 = smul.addr %s310, 8
      %s312 = scalar_lea.vmem %s3, %s311
      %p313 = scmp.eq.s32.totalorder %s23, 0
      // Predicated region
      $region33: #{run.27} parent=31 // pred_check
        %p314 = pneg %p313
      $region34: #{run.27} parent=31 // pred_check_branch
        %316 = sbr.rel (%p314) target = $region36
      $region35: #{run.27} parent=31 // pred_region
        %317 = vst [vmem:[#allocation2] sm:$0xff] 0.0
      $region36: #{run.27} parent=31 // pred_fallthru
        _
      %v318 = vld [vmem:[#allocation2] sm:$0xff]
      %v319 = vld [vmem:[%s282] sm:$0xff]
      %v320 = vld [vmem:[%s282 + $0x8] sm:$0xff]
      %v321 = vld [vmem:[%s282 + $0x10] sm:$0xff]
      %v322 = vld [vmem:[%s282 + $0x18] sm:$0xff]
      %v323 = vld [vmem:[%s295] sm:$0xff]
      %v324 = vld [vmem:[%s295 + $0x8] sm:$0xff]
      %v325 = vld [vmem:[%s295 + $0x10] sm:$0xff]
      %v326 = vld [vmem:[%s295 + $0x18] sm:$0xff]
      %v327 = vld [vmem:[%s295 + $0x20] sm:$0xff]
      %v328 = vld [vmem:[%s295 + $0x28] sm:$0xff]
      %v329 = vld [vmem:[%s295 + $0x30] sm:$0xff]
      %v330 = vld [vmem:[%s295 + $0x38] sm:$0xff]
      %v331 = vld [vmem:[%s295 + $0x40] sm:$0xff]
      %v332 = vld [vmem:[%s295 + $0x48] sm:$0xff]
      %v333 = vld [vmem:[%s295 + $0x50] sm:$0xff]
      %v334 = vld [vmem:[%s295 + $0x58] sm:$0xff]
      %v335 = vld [vmem:[%s295 + $0x60] sm:$0xff]
      %v336 = vld [vmem:[%s295 + $0x68] sm:$0xff]
      %v337 = vld [vmem:[%s295 + $0x70] sm:$0xff]
      %v338 = vld [vmem:[%s295 + $0x78] sm:$0xff]
      %v339 = vld [vmem:[%s295 + $0x80] sm:$0xff]
      %v340 = vld [vmem:[%s295 + $0x88] sm:$0xff]
      %v341 = vld [vmem:[%s295 + $0x90] sm:$0xff]
      %v342 = vld [vmem:[%s295 + $0x98] sm:$0xff]
      %v343 = vld [vmem:[%s295 + $0xa0] sm:$0xff]
      %v344 = vld [vmem:[%s295 + $0xa8] sm:$0xff]
      %v345 = vld [vmem:[%s295 + $0xb0] sm:$0xff]
      %v346 = vld [vmem:[%s295 + $0xb8] sm:$0xff]
      %v347 = vld [vmem:[%s295 + $0xc0] sm:$0xff]
      %v348 = vld [vmem:[%s295 + $0xc8] sm:$0xff]
      %v349 = vld [vmem:[%s295 + $0xd0] sm:$0xff]
      %v350 = vld [vmem:[%s295 + $0xd8] sm:$0xff]
      %v351 = vld [vmem:[%s295 + $0xe0] sm:$0xff]
      %v352 = vld [vmem:[%s295 + $0xe8] sm:$0xff]
      %v353 = vld [vmem:[%s295 + $0xf0] sm:$0xff]
      %v354 = vld [vmem:[%s295 + $0xf8] sm:$0xff]
      %v355 = vld [vmem:[%s295 + $0x100] sm:$0xff]
      %v356 = vld [vmem:[%s295 + $0x108] sm:$0xff]
      %v357 = vld [vmem:[%s295 + $0x110] sm:$0xff]
      %v358 = vld [vmem:[%s295 + $0x118] sm:$0xff]
      %v359 = vld [vmem:[%s295 + $0x120] sm:$0xff]
      %v360 = vld [vmem:[%s295 + $0x128] sm:$0xff]
      %v361 = vld [vmem:[%s295 + $0x130] sm:$0xff]
      %v362 = vld [vmem:[%s295 + $0x138] sm:$0xff]
      %v363 = vld [vmem:[%s295 + $0x140] sm:$0xff]
      %v364 = vld [vmem:[%s295 + $0x148] sm:$0xff]
      %v365 = vld [vmem:[%s295 + $0x150] sm:$0xff]
      %v366 = vld [vmem:[%s295 + $0x158] sm:$0xff]
      %v367 = vld [vmem:[%s295 + $0x160] sm:$0xff]
      %v368 = vld [vmem:[%s295 + $0x168] sm:$0xff]
      %v369 = vld [vmem:[%s295 + $0x170] sm:$0xff]
      %v370 = vld [vmem:[%s295 + $0x178] sm:$0xff]
      %v371 = vld [vmem:[%s295 + $0x180] sm:$0xff]
      %v372 = vld [vmem:[%s295 + $0x188] sm:$0xff]
      %v373 = vld [vmem:[%s295 + $0x190] sm:$0xff]
      %v374 = vld [vmem:[%s295 + $0x198] sm:$0xff]
      %v375 = vld [vmem:[%s295 + $0x1a0] sm:$0xff]
      %v376 = vld [vmem:[%s295 + $0x1a8] sm:$0xff]
      %v377 = vld [vmem:[%s295 + $0x1b0] sm:$0xff]
      %v378 = vld [vmem:[%s295 + $0x1b8] sm:$0xff]
      %v379 = vld [vmem:[%s295 + $0x1c0] sm:$0xff]
      %v380 = vld [vmem:[%s295 + $0x1c8] sm:$0xff]
      %v381 = vld [vmem:[%s295 + $0x1d0] sm:$0xff]
      %v382 = vld [vmem:[%s295 + $0x1d8] sm:$0xff]
      %v383 = vld [vmem:[%s295 + $0x1e0] sm:$0xff]
      %v384 = vld [vmem:[%s295 + $0x1e8] sm:$0xff]
      %v385 = vld [vmem:[%s295 + $0x1f0] sm:$0xff]
      %v386 = vld [vmem:[%s295 + $0x1f8] sm:$0xff]
      %387 = vmatpush.msra.mxu0 %v338
      %388 = vmatpush.msra.mxu0 %v337
      %389 = vmatpush.msra.mxu0 %v336
      %390 = vmatpush.msra.mxu0 %v335
      %391 = vmatpush.msra.mxu0 %v334
      %392 = vmatpush.msra.mxu0 %v333
      %393 = vmatpush.msra.mxu0 %v332
      %394 = vmatpush.msra.mxu0 %v331
      %395 = vmatpush.msra.mxu0 %v330
      %396 = vmatpush.msra.mxu0 %v329
      %397 = vmatpush.msra.mxu0 %v328
      %398 = vmatpush.msra.mxu0 %v327
      %399 = vmatpush.msra.mxu0 %v326
      %400 = vmatpush.msra.mxu0 %v325
      %401 = vmatpush.msra.mxu0 %v324
      %402 = vmatpush.msra.mxu0 %v323
      %403 = vmatmul.f32.gmra.mxu0 %v319
      %v404 = vpop.f32.mrf.mxu0
      %v405 = vadd.f32 0.0, %v404
      %406 = vdwg.mxu0
      %407 = vmatpush.msra.mxu0 %v354
      %408 = vmatpush.msra.mxu0 %v353
      %409 = vmatpush.msra.mxu0 %v352
      %410 = vmatpush.msra.mxu0 %v351
      %411 = vmatpush.msra.mxu0 %v350
      %412 = vmatpush.msra.mxu0 %v349
      %413 = vmatpush.msra.mxu0 %v348
      %414 = vmatpush.msra.mxu0 %v347
      %415 = vmatpush.msra.mxu0 %v346
      %416 = vmatpush.msra.mxu0 %v345
      %417 = vmatpush.msra.mxu0 %v344
      %418 = vmatpush.msra.mxu0 %v343
      %419 = vmatpush.msra.mxu0 %v342
      %420 = vmatpush.msra.mxu0 %v341
      %421 = vmatpush.msra.mxu0 %v340
      %422 = vmatpush.msra.mxu0 %v339
      %423 = vmatmul.f32.gmra.mxu0 %v320
      %v424 = vpop.f32.mrf.mxu0
      %v425 = vadd.f32 %v405, %v424
      %426 = vdwg.mxu0
      %427 = vmatpush.msra.mxu0 %v370
      %428 = vmatpush.msra.mxu0 %v369
      %429 = vmatpush.msra.mxu0 %v368
      %430 = vmatpush.msra.mxu0 %v367
      %431 = vmatpush.msra.mxu0 %v366
      %432 = vmatpush.msra.mxu0 %v365
      %433 = vmatpush.msra.mxu0 %v364
      %434 = vmatpush.msra.mxu0 %v363
      %435 = vmatpush.msra.mxu0 %v362
      %436 = vmatpush.msra.mxu0 %v361
      %437 = vmatpush.msra.mxu0 %v360
      %438 = vmatpush.msra.mxu0 %v359
      %439 = vmatpush.msra.mxu0 %v358
      %440 = vmatpush.msra.mxu0 %v357
      %441 = vmatpush.msra.mxu0 %v356
      %442 = vmatpush.msra.mxu0 %v355
      %443 = vmatmul.f32.gmra.mxu0 %v321
      %v444 = vpop.f32.mrf.mxu0
      %v445 = vadd.f32 %v425, %v444
      %446 = vdwg.mxu0
      %447 = vmatpush.msra.mxu0 %v386
      %448 = vmatpush.msra.mxu0 %v385
      %449 = vmatpush.msra.mxu0 %v384
      %450 = vmatpush.msra.mxu0 %v383
      %451 = vmatpush.msra.mxu0 %v382
      %452 = vmatpush.msra.mxu0 %v381
      %453 = vmatpush.msra.mxu0 %v380
      %454 = vmatpush.msra.mxu0 %v379
      %455 = vmatpush.msra.mxu0 %v378
      %456 = vmatpush.msra.mxu0 %v377
      %457 = vmatpush.msra.mxu0 %v376
      %458 = vmatpush.msra.mxu0 %v375
      %459 = vmatpush.msra.mxu0 %v374
      %460 = vmatpush.msra.mxu0 %v373
      %461 = vmatpush.msra.mxu0 %v372
      %462 = vmatpush.msra.mxu0 %v371
      %463 = vmatmul.f32.gmra.mxu0 %v322
      %v464 = vpop.f32.mrf.mxu0
      %v465 = vadd.f32 %v445, %v464
      %466 = vdwg.mxu0
      %v467 = vadd.f32 %v318, %v465
      %468 = vst [vmem:[#allocation2] sm:$0xff] %v467
      // Predicated region
      $region37: #{run.27} parent=31 // pred_check
        %p469 = pneg %p313
      $region38: #{run.27} parent=31 // pred_check_branch
        %471 = sbr.rel (%p469) target = $region40
      $region39: #{run.27} parent=31 // pred_region
        %v472 = vld [vmem:[#allocation2] sm:$0xff]
        %v473 = vld [vmem:[%s302] sm:$0x1]
        %v475 = vperm.slane %v473, 0
        %v477 = vadd.f32 %v472, %v475
        %478 = vst [vmem:[%s312] sm:$0xff] %v477
      $region40: #{run.27} parent=31 // pred_fallthru
        _
      %p479 = scmp.lt.s32.totalorder %s20, 3
      %s480 = scalar_select %p479, %s20, 3
      %p481 = scmp.lt.s32.totalorder %s21, 0
      %s482 = scalar_select %p481, %s21, 0
      %p483 = scmp.lt.s32.totalorder %s22, 0
      %s484 = scalar_select %p483, %s22, 0
      %s485 = sadd.s32 %s484, %s482
      %s486 = sadd.s32 %s485, %s480
      %s487 = smul.addr %s486, 8
      %s488 = scalar_lea.vmem %s3, %s487
      // Predicated region
      $region41: #{run.27} parent=31 // pred_check
        %p489 = pneg %p150
      $region42: #{run.27} parent=31 // pred_check_branch
        %491 = sbr.rel (%p489) target = $region44
      $region43: #{run.27} parent=31 // pred_region
        _
      $region44: #{run.27} parent=31 // pred_fallthru
        _
    $region32: #{run.27} parent=5 // pred_fallthru
      _
    %p492 = scmp.le.s32.totalorder 2, %s9
    // Predicated region
    $region45: #{run.27} parent=5 // pred_check
      %p493 = pneg %p492
    $region46: #{run.27} parent=5 // pred_check_branch
      %495 = sbr.rel (%p493) target = $region48
    $region47: #{run.27} parent=5 // pred_region
      %s496 = ssub.s32 %s9, 2
      // Predicated region
      $region49: #{run.27} parent=47 // pred_check
        %p497 = pneg %p156
      $region50: #{run.27} parent=47 // pred_check_branch
        %499 = sbr.rel (%p497) target = $region52
      $region51: #{run.27} parent=47 // pred_region
        %p500 = scmp.lt.s32.totalorder %s24, 3
        %s501 = scalar_select %p500, %s24, 3
        %p502 = scmp.lt.s32.totalorder %s25, 0
        %s503 = scalar_select %p502, %s25, 0
        %p504 = scmp.lt.s32.totalorder %s26, 0
        %s505 = scalar_select %p504, %s26, 0
        %s506 = sadd.s32 %s505, %s503
        %s507 = sadd.s32 %s506, %s501
        %s508 = smul.addr %s507, 8
        %s509 = scalar_lea.vmem %s3, %s508
      $region52: #{run.27} parent=47 // pred_fallthru
        _
    $region48: #{run.27} parent=5 // pred_fallthru
      _
  $region6: #{run.27} parent=0 // loop_footer
    %s13 = sadd.s32 1, %s9
  $region7: #{run.27} parent=0 // loop_footer_branch
    %8 = sbr.rel target = $region3
  $region8: #{run.27} parent=0 // loop_exit
    _

// kernel: run.29
$region0: #{run.29}
  #allocation0 [shape = 'u32[]', space=smem, size = 0x4, offset = 0x4, fixed_abs, tag = 'smem constant byte address 0x4 - core index']
  #allocation1 [shape = 'u32[72,128]{1,0:T(1,128)}', space=vmem, size = 0x9000, scoped, tag = 'internal scratch']
  #allocation2 [shape = 'f32[32,128]{1,0:T(8,128)}', space=vmem, size = 0x4000, scoped, tag = 'scratch operand']
  %s0 = inlined_call_operand.vmem [shape: f32[4,32,256], index: 0, kind: input, shape index: {}]
  %s1 = inlined_call_operand.vmem [shape: f32[4,256,128], index: 1, kind: input, shape index: {}]
  %s2 = inlined_call_operand.vmem [shape: f32[4,1,128], index: 2, kind: input, shape index: {}]
  %s3 = inlined_call_operand.vmem [shape: f32[4,32,128], index: 3, kind: output, shape index: {}]
  %s4 = sld [smem:[#allocation0]]
  $region53: #{run.29} parent=0
    _
  %s6 = ssub.s32 1, %s4
  %s7 = scalar_select 0, %s6, %s4
  loop: start=0, step=1, limit=6
  $region2: #{run.29} parent=0 // loop_pre_header
    _
  $region3: #{run.29} parent=0 // loop_header
    %s9 = sphi 0, %s13
    %p10 = scmp.ge.s32.totalorder %s9, 6
    %s16 = sphi 0, %s42
    %s17 = sphi 0, %s38
    %s18 = sphi 0, %s34
    %s19 = sphi 0, %s30
    %s20 = sphi 0, %s16
    %s21 = sphi 0, %s17
    %s22 = sphi 0, %s18
    %s23 = sphi 0, %s19
    %s24 = sphi 0, %s20
    %s25 = sphi 0, %s21
    %s26 = sphi 0, %s22
    %s27 = sphi 0, %s23
    %s49 = sphi 0, %s51
    %s52 = sphi 0, %s49
    %s53 = sphi 0, %s52
    %s69 = sphi 0, %s53
    %s79 = sphi 0, %s81
    %s82 = sphi 0, %s79
    %s83 = sphi 0, %s82
    %s99 = sphi 0, %s83
    %s107 = sphi 0, %s109
    %s110 = sphi 0, %s107
    %s111 = sphi 0, %s110
    %s127 = sphi 0, %s111
    %s137 = sphi 0, %s139
    %s140 = sphi 0, %s137
    %s141 = sphi 0, %s140
    %s157 = sphi 0, %s141
  $region4: #{run.29} parent=0 // loop_header_branch
    %12 = sbr.rel (%p10) target = $region8
  $region5: #{run.29} parent=0 // loop_body
    %s14 = ssub.s32 %s9, 1
    %s15 = ssub.s32 %s9, 2
    %s28 = sadd.s32 1, %s19
    %p29 = scmp.ge.s32.totalorder %s28, 1
    %s30 = scalar_select %p29, 0, %s28
    %s31 = sadd.s32 1, %s18
    %s32 = scalar_select %p29, %s31, %s18
    %p33 = scmp.ge.s32.totalorder %s32, 1
    %s34 = scalar_select %p33, 0, %s32
    %s35 = sadd.s32 1, %s17
    %s36 = scalar_select %p33, %s35, %s17
    %p37 = scmp.ge.s32.totalorder %s36, 1
    %s38 = scalar_select %p37, 0, %s36
    %s39 = sadd.s32 1, %s16
    %s40 = scalar_select %p37, %s39, %s16
    %p41 = scmp.ge.s32.totalorder %s40, 4
    %s42 = scalar_select %p41, 0, %s40
    %s43 = ssub.s32 %s16, %s42
    %s44 = ssub.s32 %s17, %s38
    %s45 = sor.u32 %s43, %s44
    %s46 = ssub.s32 %s19, %s30
    %s47 = sor.u32 %s45, %s46
    %p48 = scmp.eq.s32.totalorder %s47, 0
    %s50 = sadd.s32 %s49, 1
    %s51 = scalar_select %p48, %s49, %s50
    %p54 = pneg %p48
    %p55 = scmp.eq.s32.totalorder %s9, 3
    %p56 = por %p54, %p55
    %p57 = scmp.ne.s32.totalorder %s49, %s52
    %p58 = scmp.eq.s32.totalorder %s9, 0
    %p59 = por %p57, %p58
    %p60 = scmp.ne.s32.totalorder %s49, %s52
    %p61 = scmp.eq.s32.totalorder %s14, 3
    %p62 = por %p60, %p61
    %p63 = scmp.ne.s32.totalorder %s52, %s53
    %p64 = scmp.eq.s32.totalorder %s14, 0
    %p65 = por %p63, %p64
    %p66 = scmp.ne.s32.totalorder %s52, %s53
    %p67 = scmp.eq.s32.totalorder %s15, 3
    %p68 = por %p66, %p67
    %p70 = scmp.ne.s32.totalorder %s53, %s69
    %p71 = scmp.eq.s32.totalorder %s15, 0
    %p72 = por %p70, %p71
    %s73 = ssub.s32 %s16, %s42
    %s74 = ssub.s32 %s19, %s30
    %s75 = sor.u32 %s73, %s74
    %s76 = ssub.s32 %s18, %s34
    %s77 = sor.u32 %s75, %s76
    %p78 = scmp.eq.s32.totalorder %s77, 0
    %s80 = sadd.s32 %s79, 1
    %s81 = scalar_select %p78, %s79, %s80
    %p84 = pneg %p78
    %p85 = scmp.eq.s32.totalorder %s9, 3
    %p86 = por %p84, %p85
    %p87 = scmp.ne.s32.totalorder %s79, %s82
    %p88 = scmp.eq.s32.totalorder %s9, 0
    %p89 = por %p87, %p88
    %p90 = scmp.ne.s32.totalorder %s79, %s82
    %p91 = scmp.eq.s32.totalorder %s14, 3
    %p92 = por %p90, %p91
    %p93 = scmp.ne.s32.totalorder %s82, %s83
    %p94 = scmp.eq.s32.totalorder %s14, 0
    %p95 = por %p93, %p94
    %p96 = scmp.ne.s32.totalorder %s82, %s83
    %p97 = scmp.eq.s32.totalorder %s15, 3
    %p98 = por %p96, %p97
    %p100 = scmp.ne.s32.totalorder %s83, %s99
    %p101 = scmp.eq.s32.totalorder %s15, 0
    %p102 = por %p100, %p101
    %s103 = ssub.s32 %s16, %s42
    %s104 = ssub.s32 %s18, %s34
    %s105 = sor.u32 %s103, %s104
    %p106 = scmp.eq.s32.totalorder %s105, 0
    %s108 = sadd.s32 %s107, 1
    %s109 = scalar_select %p106, %s107, %s108
    %p112 = pneg %p106
    %p113 = scmp.eq.s32.totalorder %s9, 3
    %p114 = por %p112, %p113
    %p115 = scmp.ne.s32.totalorder %s107, %s110
    %p116 = scmp.eq.s32.totalorder %s9, 0
    %p117 = por %p115, %p116
    %p118 = scmp.ne.s32.totalorder %s107, %s110
    %p119 = scmp.eq.s32.totalorder %s14, 3
    %p120 = por %p118, %p119
    %p121 = scmp.ne.s32.totalorder %s110, %s111
    %p122 = scmp.eq.s32.totalorder %s14, 0
    %p123 = por %p121, %p122
    %p124 = scmp.ne.s32.totalorder %s110, %s111
    %p125 = scmp.eq.s32.totalorder %s15, 3
    %p126 = por %p124, %p125
    %p128 = scmp.ne.s32.totalorder %s111, %s127
    %p129 = scmp.eq.s32.totalorder %s15, 0
    %p130 = por %p128, %p129
    %s131 = ssub.s32 %s16, %s42
    %s132 = ssub.s32 %s17, %s38
    %s133 = sor.u32 %s131, %s132
    %s134 = ssub.s32 %s18, %s34
    %s135 = sor.u32 %s133, %s134
    %p136 = scmp.eq.s32.totalorder %s135, 0
    %s138 = sadd.s32 %s137, 1
    %s139 = scalar_select %p136, %s137, %s138
    %p142 = pneg %p136
    %p143 = scmp.eq.s32.totalorder %s9, 3
    %p144 = por %p142, %p143
    %p145 = scmp.ne.s32.totalorder %s137, %s140
    %p146 = scmp.eq.s32.totalorder %s9, 0
    %p147 = por %p145, %p146
    %p148 = scmp.ne.s32.totalorder %s137, %s140
    %p149 = scmp.eq.s32.totalorder %s14, 3
    %p150 = por %p148, %p149
    %p151 = scmp.ne.s32.totalorder %s140, %s141
    %p152 = scmp.eq.s32.totalorder %s14, 0
    %p153 = por %p151, %p152
    %p154 = scmp.ne.s32.totalorder %s140, %s141
    %p155 = scmp.eq.s32.totalorder %s15, 3
    %p156 = por %p154, %p155
    %p158 = scmp.ne.s32.totalorder %s141, %s157
    %p159 = scmp.eq.s32.totalorder %s15, 0
    %p160 = por %p158, %p159
    %p161 = scmp.le.s32.totalorder 1, %s9
    %p162 = scmp.lt.s32.totalorder %s9, 5
    %p163 = pnand %p161, %p162
    %p164 = pneg %p163
    // Predicated region
    $region9: #{run.29} parent=5 // pred_check
      _
    $region10: #{run.29} parent=5 // pred_check_branch
      %166 = sbr.rel (%p163) target = $region12
    $region11: #{run.29} parent=5 // pred_region
      %s167 = ssub.s32 %s9, 1
    $region12: #{run.29} parent=5 // pred_fallthru
      _
    %p168 = scmp.lt.s32.totalorder %s9, 4
    // Predicated region
    $region13: #{run.29} parent=5 // pred_check
      %p169 = pneg %p168
    $region14: #{run.29} parent=5 // pred_check_branch
      %171 = sbr.rel (%p169) target = $region16
    $region15: #{run.29} parent=5 // pred_region
      // Predicated region
      $region17: #{run.29} parent=15 // pred_check
        %p172 = pneg %p59
      $region18: #{run.29} parent=15 // pred_check_branch
        %174 = sbr.rel (%p172) target = $region20
      $region19: #{run.29} parent=15 // pred_region
        %s175 = smul.u32 4, %s17
        %s176 = smul.u32 2, %s19
        %p177 = scmp.lt.s32.totalorder %s16, 3
        %s178 = scalar_select %p177, %s16, 3
        %p179 = scmp.lt.s32.totalorder %s175, 3
        %s180 = scalar_select %p179, %s175, 3
        %p181 = scmp.lt.s32.totalorder %s176, 1
        %s182 = scalar_select %p181, %s176, 1
        %s183 = smul.addr %s180, 2
        %s184 = sadd.s32 %s182, %s183
        %s185 = smul.addr %s178, 8
        %s186 = sadd.s32 %s184, %s185
        %s187 = smul.addr %s186, 8
        %s188 = scalar_lea.vmem %s0, %s187
        %s189 = smul.u32 4, %s17
        %s190 = smul.u32 2, %s19
      $region20: #{run.29} parent=15 // pred_fallthru
        _
      // Predicated region
      $region21: #{run.29} parent=15 // pred_check
        %p191 = pneg %p89
      $region22: #{run.29} parent=15 // pred_check_branch
        %193 = sbr.rel (%p191) target = $region24
      $region23: #{run.29} parent=15 // pred_region
        %s194 = smul.u32 32, %s19
        %p195 = scmp.lt.s32.totalorder %s16, 3
        %s196 = scalar_select %p195, %s16, 3
        %p197 = scmp.lt.s32.totalorder %s194, 31
        %s198 = scalar_select %p197, %s194, 31
        %p199 = scmp.lt.s32.totalorder %s18, 0
        %s200 = scalar_select %p199, %s18, 0
        %s201 = sadd.s32 %s200, %s198
        %s202 = smul.addr %s196, 32
        %s203 = sadd.s32 %s201, %s202
        %s204 = smul.addr %s203, 8
        %s205 = scalar_lea.vmem %s1, %s204
        %s206 = smul.u32 32, %s19
      $region24: #{run.29} parent=15 // pred_fallthru
        _
      // Predicated region
      $region25: #{run.29} parent=15 // pred_check
        %p207 = pneg %p117
      $region26: #{run.29} parent=15 // pred_check_branch
        %209 = sbr.rel (%p207) target = $region28
      $region27: #{run.29} parent=15 // pred_region
        %p210 = scmp.lt.s32.totalorder %s16, 3
        %s211 = scalar_select %p210, %s16, 3
        %p212 = scmp.lt.s32.totalorder %s18, 0
        %s213 = scalar_select %p212, %s18, 0
        %s214 = sadd.s32 %s213, %s211
        %s215 = scalar_lea.vmem %s2, %s214
      $region28: #{run.29} parent=15 // pred_fallthru
        _
    $region16: #{run.29} parent=5 // pred_fallthru
      _
    %p216 = scmp.le.s32.totalorder 1, %s9
    %p217 = scmp.lt.s32.totalorder %s9, 5
    %p218 = pnand %p216, %p217
    %p219 = pneg %p218
    // Predicated region
    $region29: #{run.29} parent=5 // pred_check
      _
    $region30: #{run.29} parent=5 // pred_check_branch
      %221 = sbr.rel (%p218) target = $region32
    $region31: #{run.29} parent=5 // pred_region
      %s222 = ssub.s32 %s9, 1
      %s223 = smul.u32 4, %s21
      %s224 = smul.u32 2, %s23
      %p225 = scmp.lt.s32.totalorder %s20, 3
      %s226 = scalar_select %p225, %s20, 3
      %p227 = scmp.lt.s32.totalorder %s223, 3
      %s228 = scalar_select %p227, %s223, 3
      %p229 = scmp.lt.s32.totalorder %s224, 1
      %s230 = scalar_select %p229, %s224, 1
      %s231 = smul.addr %s228, 2
      %s232 = sadd.s32 %s230, %s231
      %s233 = smul.addr %s226, 8
      %s234 = sadd.s32 %s232, %s233
      %s235 = smul.addr %s234, 8
      %s236 = scalar_lea.vmem %s0, %s235
      %p237 = pneg %p65
      %p238 = pneg %p62
      %s239 = smul.u32 32, %s23
      %p240 = scmp.lt.s32.totalorder %s20, 3
      %s241 = scalar_select %p240, %s20, 3
      %p242 = scmp.lt.s32.totalorder %s239, 31
      %s243 = scalar_select %p242, %s239, 31
      %p244 = scmp.lt.s32.totalorder %s22, 0
      %s245 = scalar_select %p244, %s22, 0
      %s246 = sadd.s32 %s245, %s243
      %s247 = smul.addr %s241, 32
      %s248 = sadd.s32 %s246, %s247
      %s249 = smul.addr %s248, 8
      %s250 = scalar_lea.vmem %s1, %s249
      %p251 = pneg %p95
      %p252 = pneg %p92
      %p253 = scmp.lt.s32.totalorder %s20, 3
      %s254 = scalar_select %p253, %s20, 3
      %p255 = scmp.lt.s32.totalorder %s22, 0
      %s256 = scalar_select %p255, %s22, 0
      %s257 = sadd.s32 %s256, %s254
      %s258 = scalar_lea.vmem %s2, %s257
      %p259 = pneg %p123
      %p260 = pneg %p120
      %p261 = pneg %p153
      %p262 = pneg %p150
      %s263 = smul.u32 4, %s21
      %p264 = scmp.lt.s32.totalorder %s20, 3
      %s265 = scalar_select %p264, %s20, 3
      %p266 = scmp.lt.s32.totalorder %s263, 3
      %s267 = scalar_select %p266, %s263, 3
      %p268 = scmp.lt.s32.totalorder %s22, 0
      %s269 = scalar_select %p268, %s22, 0
      %s270 = sadd.s32 %s269, %s267
      %s271 = smul.addr %s265, 4
      %s272 = sadd.s32 %s270, %s271
      %s273 = smul.addr %s272, 8
      %s274 = scalar_lea.vmem %s3, %s273
      %s275 = smul.u32 4, %s21
      %s276 = smul.u32 2, %s23
      %p277 = scmp.lt.s32.totalorder %s20, 3
      %s278 = scalar_select %p277, %s20, 3
      %p279 = scmp.lt.s32.totalorder %s275, 3
      %s280 = scalar_select %p279, %s275, 3
      %p281 = scmp.lt.s32.totalorder %s276, 1
      %s282 = scalar_select %p281, %s276, 1
      %s283 = smul.addr %s280, 2
      %s284 = sadd.s32 %s282, %s283
      %s285 = smul.addr %s278, 8
      %s286 = sadd.s32 %s284, %s285
      %s287 = smul.addr %s286, 8
      %s288 = scalar_lea.vmem %s0, %s287
      %s289 = smul.u32 4, %s21
      %s290 = smul.u32 2, %s23
      %s291 = smul.u32 32, %s23
      %p292 = scmp.lt.s32.totalorder %s20, 3
      %s293 = scalar_select %p292, %s20, 3
      %p294 = scmp.lt.s32.totalorder %s291, 31
      %s295 = scalar_select %p294, %s291, 31
      %p296 = scmp.lt.s32.totalorder %s22, 0
      %s297 = scalar_select %p296, %s22, 0
      %s298 = sadd.s32 %s297, %s295
      %s299 = smul.addr %s293, 32
      %s300 = sadd.s32 %s298, %s299
      %s301 = smul.addr %s300, 8
      %s302 = scalar_lea.vmem %s1, %s301
      %s303 = smul.u32 32, %s23
      %p304 = scmp.lt.s32.totalorder %s20, 3
      %s305 = scalar_select %p304, %s20, 3
      %p306 = scmp.lt.s32.totalorder %s22, 0
      %s307 = scalar_select %p306, %s22, 0
      %s308 = sadd.s32 %s307, %s305
      %s309 = scalar_lea.vmem %s2, %s308
      %s310 = smul.u32 4, %s21
      %p311 = scmp.lt.s32.totalorder %s20, 3
      %s312 = scalar_select %p311, %s20, 3
      %p313 = scmp.lt.s32.totalorder %s310, 3
      %s314 = scalar_select %p313, %s310, 3
      %p315 = scmp.lt.s32.totalorder %s22, 0
      %s316 = scalar_select %p315, %s22, 0
      %s317 = sadd.s32 %s316, %s314
      %s318 = smul.addr %s312, 4
      %s319 = sadd.s32 %s317, %s318
      %s320 = smul.addr %s319, 8
      %s321 = scalar_lea.vmem %s3, %s320
      %s322 = smul.u32 4, %s21
      %p323 = scmp.eq.s32.totalorder %s23, 0
      // Predicated region
      $region33: #{run.29} parent=31 // pred_check
        %p324 = pneg %p323
      $region34: #{run.29} parent=31 // pred_check_branch
        %326 = sbr.rel (%p324) target = $region36
      $region35: #{run.29} parent=31 // pred_region
        %327 = vst [vmem:[#allocation2] sm:$0xff] 0.0
        %328 = vst [vmem:[#allocation2 + $0x8] sm:$0xff] 0.0
        %329 = vst [vmem:[#allocation2 + $0x10] sm:$0xff] 0.0
        %330 = vst [vmem:[#allocation2 + $0x18] sm:$0xff] 0.0
      $region36: #{run.29} parent=31 // pred_fallthru
        _
      %v331 = vld [vmem:[#allocation2] sm:$0xff]
      %v332 = vld [vmem:[#allocation2 + $0x8] sm:$0xff]
      %v333 = vld [vmem:[#allocation2 + $0x10] sm:$0xff]
      %v334 = vld [vmem:[#allocation2 + $0x18] sm:$0xff]
      %v335 = vld [vmem:[%s288] sm:$0xff]
      %v336 = vld [vmem:[%s288 + $0x8] sm:$0xff]
      %v337 = vld [vmem:[%s288 + $0x10] sm:$0xff]
      %v338 = vld [vmem:[%s288 + $0x18] sm:$0xff]
      %v339 = vld [vmem:[%s288 + $0x20] sm:$0xff]
      %v340 = vld [vmem:[%s288 + $0x28] sm:$0xff]
      %v341 = vld [vmem:[%s288 + $0x30] sm:$0xff]
      %v342 = vld [vmem:[%s288 + $0x38] sm:$0xff]
      %v343 = vld [vmem:[%s302] sm:$0xff]
      %v344 = vld [vmem:[%s302 + $0x8] sm:$0xff]
      %v345 = vld [vmem:[%s302 + $0x10] sm:$0xff]
      %v346 = vld [vmem:[%s302 + $0x18] sm:$0xff]
      %v347 = vld [vmem:[%s302 + $0x20] sm:$0xff]
      %v348 = vld [vmem:[%s302 + $0x28] sm:$0xff]
      %v349 = vld [vmem:[%s302 + $0x30] sm:$0xff]
      %v350 = vld [vmem:[%s302 + $0x38] sm:$0xff]
      %v351 = vld [vmem:[%s302 + $0x40] sm:$0xff]
      %v352 = vld [vmem:[%s302 + $0x48] sm:$0xff]
      %v353 = vld [vmem:[%s302 + $0x50] sm:$0xff]
      %v354 = vld [vmem:[%s302 + $0x58] sm:$0xff]
      %v355 = vld [vmem:[%s302 + $0x60] sm:$0xff]
      %v356 = vld [vmem:[%s302 + $0x68] sm:$0xff]
      %v357 = vld [vmem:[%s302 + $0x70] sm:$0xff]
      %v358 = vld [vmem:[%s302 + $0x78] sm:$0xff]
      %v359 = vld [vmem:[%s302 + $0x80] sm:$0xff]
      %v360 = vld [vmem:[%s302 + $0x88] sm:$0xff]
      %v361 = vld [vmem:[%s302 + $0x90] sm:$0xff]
      %v362 = vld [vmem:[%s302 + $0x98] sm:$0xff]
      %v363 = vld [vmem:[%s302 + $0xa0] sm:$0xff]
      %v364 = vld [vmem:[%s302 + $0xa8] sm:$0xff]
      %v365 = vld [vmem:[%s302 + $0xb0] sm:$0xff]
      %v366 = vld [vmem:[%s302 + $0xb8] sm:$0xff]
      %v367 = vld [vmem:[%s302 + $0xc0] sm:$0xff]
      %v368 = vld [vmem:[%s302 + $0xc8] sm:$0xff]
      %v369 = vld [vmem:[%s302 + $0xd0] sm:$0xff]
      %v370 = vld [vmem:[%s302 + $0xd8] sm:$0xff]
      %v371 = vld [vmem:[%s302 + $0xe0] sm:$0xff]
      %v372 = vld [vmem:[%s302 + $0xe8] sm:$0xff]
      %v373 = vld [vmem:[%s302 + $0xf0] sm:$0xff]
      %v374 = vld [vmem:[%s302 + $0xf8] sm:$0xff]
      %375 = vmatpush.msra.mxu0 %v358
      %376 = vmatpush.msra.mxu0 %v357
      %377 = vmatpush.msra.mxu0 %v356
      %378 = vmatpush.msra.mxu0 %v355
      %379 = vmatpush.msra.mxu0 %v354
      %380 = vmatpush.msra.mxu0 %v353
      %381 = vmatpush.msra.mxu0 %v352
      %382 = vmatpush.msra.mxu0 %v351
      %383 = vmatpush.msra.mxu0 %v350
      %384 = vmatpush.msra.mxu0 %v349
      %385 = vmatpush.msra.mxu0 %v348
      %386 = vmatpush.msra.mxu0 %v347
      %387 = vmatpush.msra.mxu0 %v346
      %388 = vmatpush.msra.mxu0 %v345
      %389 = vmatpush.msra.mxu0 %v344
      %390 = vmatpush.msra.mxu0 %v343
      %391 = vmatmul.f32.gmra.mxu0 %v335
      %v392 = vpop.f32.mrf.mxu0
      %v393 = vadd.f32 0.0, %v392
      %394 = vmatmul.f32.gmra.mxu0 %v337
      %v395 = vpop.f32.mrf.mxu0
      %v396 = vadd.f32 0.0, %v395
      %397 = vmatmul.f32.gmra.mxu0 %v339
      %v398 = vpop.f32.mrf.mxu0
      %v399 = vadd.f32 0.0, %v398
      %400 = vmatmul.f32.gmra.mxu0 %v341
      %v401 = vpop.f32.mrf.mxu0
      %v402 = vadd.f32 0.0, %v401
      %403 = vdwg.mxu0
      %404 = vmatpush.msra.mxu0 %v374
      %405 = vmatpush.msra.mxu0 %v373
      %406 = vmatpush.msra.mxu0 %v372
      %407 = vmatpush.msra.mxu0 %v371
      %408 = vmatpush.msra.mxu0 %v370
      %409 = vmatpush.msra.mxu0 %v369
      %410 = vmatpush.msra.mxu0 %v368
      %411 = vmatpush.msra.mxu0 %v367
      %412 = vmatpush.msra.mxu0 %v366
      %413 = vmatpush.msra.mxu0 %v365
      %414 = vmatpush.msra.mxu0 %v364
      %415 = vmatpush.msra.mxu0 %v363
      %416 = vmatpush.msra.mxu0 %v362
      %417 = vmatpush.msra.mxu0 %v361
      %418 = vmatpush.msra.mxu0 %v360
      %419 = vmatpush.msra.mxu0 %v359
      %420 = vmatmul.f32.gmra.mxu0 %v336
      %v421 = vpop.f32.mrf.mxu0
      %v422 = vadd.f32 %v393, %v421
      %423 = vmatmul.f32.gmra.mxu0 %v338
      %v424 = vpop.f32.mrf.mxu0
      %v425 = vadd.f32 %v396, %v424
      %426 = vmatmul.f32.gmra.mxu0 %v340
      %v427 = vpop.f32.mrf.mxu0
      %v428 = vadd.f32 %v399, %v427
      %429 = vmatmul.f32.gmra.mxu0 %v342
      %v430 = vpop.f32.mrf.mxu0
      %v431 = vadd.f32 %v402, %v430
      %432 = vdwg.mxu0
      %v433 = vadd.f32 %v331, %v422
      %v434 = vadd.f32 %v332, %v425
      %v435 = vadd.f32 %v333, %v428
      %v436 = vadd.f32 %v334, %v431
      %437 = vst [vmem:[#allocation2] sm:$0xff] %v433
      %438 = vst [vmem:[#allocation2 + $0x8] sm:$0xff] %v434
      %439 = vst [vmem:[#allocation2 + $0x10] sm:$0xff] %v435
      %440 = vst [vmem:[#allocation2 + $0x18] sm:$0xff] %v436
      // Predicated region
      $region37: #{run.29} parent=31 // pred_check
        %p441 = pneg %p323
      $region38: #{run.29} parent=31 // pred_check_branch
        %443 = sbr.rel (%p441) target = $region40
      $region39: #{run.29} parent=31 // pred_region
        %v444 = vld [vmem:[#allocation2] sm:$0xff]
        %v445 = vld [vmem:[#allocation2 + $0x8] sm:$0xff]
        %v446 = vld [vmem:[#allocation2 + $0x10] sm:$0xff]
        %v447 = vld [vmem:[#allocation2 + $0x18] sm:$0xff]
        %v448 = vld [vmem:[%s309] sm:$0x1]
        %v450 = vperm.slane %v448, 0
        %v452 = vadd.f32 %v444, %v450
        %v453 = vadd.f32 %v445, %v450
        %v454 = vadd.f32 %v446, %v450
        %v455 = vadd.f32 %v447, %v450
        %456 = vst [vmem:[%s321] sm:$0xff] %v452
        %457 = vst [vmem:[%s321 + $0x8] sm:$0xff] %v453
        %458 = vst [vmem:[%s321 + $0x10] sm:$0xff] %v454
        %459 = vst [vmem:[%s321 + $0x18] sm:$0xff] %v455
      $region40: #{run.29} parent=31 // pred_fallthru
        _
      %s460 = smul.u32 4, %s21
      %p461 = scmp.lt.s32.totalorder %s20, 3
      %s462 = scalar_select %p461, %s20, 3
      %p463 = scmp.lt.s32.totalorder %s460, 3
      %s464 = scalar_select %p463, %s460, 3
      %p465 = scmp.lt.s32.totalorder %s22, 0
      %s466 = scalar_select %p465, %s22, 0
      %s467 = sadd.s32 %s466, %s464
      %s468 = smul.addr %s462, 4
      %s469 = sadd.s32 %s467, %s468
      %s470 = smul.addr %s469, 8
      %s471 = scalar_lea.vmem %s3, %s470
      // Predicated region
      $region41: #{run.29} parent=31 // pred_check
        %p472 = pneg %p150
      $region42: #{run.29} parent=31 // pred_check_branch
        %474 = sbr.rel (%p472) target = $region44
      $region43: #{run.29} parent=31 // pred_region
        %s475 = smul.u32 4, %s21
      $region44: #{run.29} parent=31 // pred_fallthru
        _
    $region32: #{run.29} parent=5 // pred_fallthru
      _
    %p476 = scmp.le.s32.totalorder 2, %s9
    // Predicated region
    $region45: #{run.29} parent=5 // pred_check
      %p477 = pneg %p476
    $region46: #{run.29} parent=5 // pred_check_branch
      %479 = sbr.rel (%p477) target = $region48
    $region47: #{run.29} parent=5 // pred_region
      %s480 = ssub.s32 %s9, 2
      // Predicated region
      $region49: #{run.29} parent=47 // pred_check
        %p481 = pneg %p156
      $region50: #{run.29} parent=47 // pred_check_branch
        %483 = sbr.rel (%p481) target = $region52
      $region51: #{run.29} parent=47 // pred_region
        %s484 = smul.u32 4, %s25
        %p485 = scmp.lt.s32.totalorder %s24, 3
        %s486 = scalar_select %p485, %s24, 3
        %p487 = scmp.lt.s32.totalorder %s484, 3
        %s488 = scalar_select %p487, %s484, 3
        %p489 = scmp.lt.s32.totalorder %s26, 0
        %s490 = scalar_select %p489, %s26, 0
        %s491 = sadd.s32 %s490, %s488
        %s492 = smul.addr %s486, 4
        %s493 = sadd.s32 %s491, %s492
        %s494 = smul.addr %s493, 8
        %s495 = scalar_lea.vmem %s3, %s494
      $region52: #{run.29} parent=47 // pred_fallthru
        _
    $region48: #{run.29} parent=5 // pred_fallthru
      _
  $region6: #{run.29} parent=0 // loop_footer
    %s13 = sadd.s32 1, %s9
  $region7: #{run.29} parent=0 // loop_footer_branch
    %8 = sbr.rel target = $region3
  $region8: #{run.29} parent=0 // loop_exit
    _

// kernel: run.31
$region0: #{run.31}
  #allocation0 [shape = 'u32[]', space=smem, size = 0x4, offset = 0x4, fixed_abs, tag = 'smem constant byte address 0x4 - core index']
  #allocation1 [shape = 'u32[72,128]{1,0:T(1,128)}', space=vmem, size = 0x9000, scoped, tag = 'internal scratch']
  #allocation2 [shape = 'f32[128,128]{1,0:T(8,128)}', space=vmem, size = 0x10000, scoped, tag = 'scratch operand']
  %s0 = inlined_call_operand.vmem [shape: f32[4,128,128], index: 0, kind: input, shape index: {}]
  %s1 = inlined_call_operand.vmem [shape: f32[4,128,128], index: 1, kind: input, shape index: {}]
  %s2 = inlined_call_operand.vmem [shape: f32[4,1,128], index: 2, kind: input, shape index: {}]
  %s3 = inlined_call_operand.vmem [shape: f32[4,128,128], index: 3, kind: output, shape index: {}]
  %s4 = sld [smem:[#allocation0]]
  $region53: #{run.31} parent=0
    _
  %s6 = ssub.s32 1, %s4
  %s7 = scalar_select 0, %s6, %s4
  loop: start=0, step=1, limit=6
  $region2: #{run.31} parent=0 // loop_pre_header
    _
  $region3: #{run.31} parent=0 // loop_header
    %s9 = sphi 0, %s13
    %p10 = scmp.ge.s32.totalorder %s9, 6
    %s16 = sphi 0, %s42
    %s17 = sphi 0, %s38
    %s18 = sphi 0, %s34
    %s19 = sphi 0, %s30
    %s20 = sphi 0, %s16
    %s21 = sphi 0, %s17
    %s22 = sphi 0, %s18
    %s23 = sphi 0, %s19
    %s24 = sphi 0, %s20
    %s25 = sphi 0, %s21
    %s26 = sphi 0, %s22
    %s27 = sphi 0, %s23
    %s49 = sphi 0, %s51
    %s52 = sphi 0, %s49
    %s53 = sphi 0, %s52
    %s69 = sphi 0, %s53
    %s79 = sphi 0, %s81
    %s82 = sphi 0, %s79
    %s83 = sphi 0, %s82
    %s99 = sphi 0, %s83
    %s107 = sphi 0, %s109
    %s110 = sphi 0, %s107
    %s111 = sphi 0, %s110
    %s127 = sphi 0, %s111
    %s137 = sphi 0, %s139
    %s140 = sphi 0, %s137
    %s141 = sphi 0, %s140
    %s157 = sphi 0, %s141
  $region4: #{run.31} parent=0 // loop_header_branch
    %12 = sbr.rel (%p10) target = $region8
  $region5: #{run.31} parent=0 // loop_body
    %s14 = ssub.s32 %s9, 1
    %s15 = ssub.s32 %s9, 2
    %s28 = sadd.s32 1, %s19
    %p29 = scmp.ge.s32.totalorder %s28, 1
    %s30 = scalar_select %p29, 0, %s28
    %s31 = sadd.s32 1, %s18
    %s32 = scalar_select %p29, %s31, %s18
    %p33 = scmp.ge.s32.totalorder %s32, 1
    %s34 = scalar_select %p33, 0, %s32
    %s35 = sadd.s32 1, %s17
    %s36 = scalar_select %p33, %s35, %s17
    %p37 = scmp.ge.s32.totalorder %s36, 1
    %s38 = scalar_select %p37, 0, %s36
    %s39 = sadd.s32 1, %s16
    %s40 = scalar_select %p37, %s39, %s16
    %p41 = scmp.ge.s32.totalorder %s40, 4
    %s42 = scalar_select %p41, 0, %s40
    %s43 = ssub.s32 %s16, %s42
    %s44 = ssub.s32 %s17, %s38
    %s45 = sor.u32 %s43, %s44
    %s46 = ssub.s32 %s19, %s30
    %s47 = sor.u32 %s45, %s46
    %p48 = scmp.eq.s32.totalorder %s47, 0
    %s50 = sadd.s32 %s49, 1
    %s51 = scalar_select %p48, %s49, %s50
    %p54 = pneg %p48
    %p55 = scmp.eq.s32.totalorder %s9, 3
    %p56 = por %p54, %p55
    %p57 = scmp.ne.s32.totalorder %s49, %s52
    %p58 = scmp.eq.s32.totalorder %s9, 0
    %p59 = por %p57, %p58
    %p60 = scmp.ne.s32.totalorder %s49, %s52
    %p61 = scmp.eq.s32.totalorder %s14, 3
    %p62 = por %p60, %p61
    %p63 = scmp.ne.s32.totalorder %s52, %s53
    %p64 = scmp.eq.s32.totalorder %s14, 0
    %p65 = por %p63, %p64
    %p66 = scmp.ne.s32.totalorder %s52, %s53
    %p67 = scmp.eq.s32.totalorder %s15, 3
    %p68 = por %p66, %p67
    %p70 = scmp.ne.s32.totalorder %s53, %s69
    %p71 = scmp.eq.s32.totalorder %s15, 0
    %p72 = por %p70, %p71
    %s73 = ssub.s32 %s16, %s42
    %s74 = ssub.s32 %s19, %s30
    %s75 = sor.u32 %s73, %s74
    %s76 = ssub.s32 %s18, %s34
    %s77 = sor.u32 %s75, %s76
    %p78 = scmp.eq.s32.totalorder %s77, 0
    %s80 = sadd.s32 %s79, 1
    %s81 = scalar_select %p78, %s79, %s80
    %p84 = pneg %p78
    %p85 = scmp.eq.s32.totalorder %s9, 3
    %p86 = por %p84, %p85
    %p87 = scmp.ne.s32.totalorder %s79, %s82
    %p88 = scmp.eq.s32.totalorder %s9, 0
    %p89 = por %p87, %p88
    %p90 = scmp.ne.s32.totalorder %s79, %s82
    %p91 = scmp.eq.s32.totalorder %s14, 3
    %p92 = por %p90, %p91
    %p93 = scmp.ne.s32.totalorder %s82, %s83
    %p94 = scmp.eq.s32.totalorder %s14, 0
    %p95 = por %p93, %p94
    %p96 = scmp.ne.s32.totalorder %s82, %s83
    %p97 = scmp.eq.s32.totalorder %s15, 3
    %p98 = por %p96, %p97
    %p100 = scmp.ne.s32.totalorder %s83, %s99
    %p101 = scmp.eq.s32.totalorder %s15, 0
    %p102 = por %p100, %p101
    %s103 = ssub.s32 %s16, %s42
    %s104 = ssub.s32 %s18, %s34
    %s105 = sor.u32 %s103, %s104
    %p106 = scmp.eq.s32.totalorder %s105, 0
    %s108 = sadd.s32 %s107, 1
    %s109 = scalar_select %p106, %s107, %s108
    %p112 = pneg %p106
    %p113 = scmp.eq.s32.totalorder %s9, 3
    %p114 = por %p112, %p113
    %p115 = scmp.ne.s32.totalorder %s107, %s110
    %p116 = scmp.eq.s32.totalorder %s9, 0
    %p117 = por %p115, %p116
    %p118 = scmp.ne.s32.totalorder %s107, %s110
    %p119 = scmp.eq.s32.totalorder %s14, 3
    %p120 = por %p118, %p119
    %p121 = scmp.ne.s32.totalorder %s110, %s111
    %p122 = scmp.eq.s32.totalorder %s14, 0
    %p123 = por %p121, %p122
    %p124 = scmp.ne.s32.totalorder %s110, %s111
    %p125 = scmp.eq.s32.totalorder %s15, 3
    %p126 = por %p124, %p125
    %p128 = scmp.ne.s32.totalorder %s111, %s127
    %p129 = scmp.eq.s32.totalorder %s15, 0
    %p130 = por %p128, %p129
    %s131 = ssub.s32 %s16, %s42
    %s132 = ssub.s32 %s17, %s38
    %s133 = sor.u32 %s131, %s132
    %s134 = ssub.s32 %s18, %s34
    %s135 = sor.u32 %s133, %s134
    %p136 = scmp.eq.s32.totalorder %s135, 0
    %s138 = sadd.s32 %s137, 1
    %s139 = scalar_select %p136, %s137, %s138
    %p142 = pneg %p136
    %p143 = scmp.eq.s32.totalorder %s9, 3
    %p144 = por %p142, %p143
    %p145 = scmp.ne.s32.totalorder %s137, %s140
    %p146 = scmp.eq.s32.totalorder %s9, 0
    %p147 = por %p145, %p146
    %p148 = scmp.ne.s32.totalorder %s137, %s140
    %p149 = scmp.eq.s32.totalorder %s14, 3
    %p150 = por %p148, %p149
    %p151 = scmp.ne.s32.totalorder %s140, %s141
    %p152 = scmp.eq.s32.totalorder %s14, 0
    %p153 = por %p151, %p152
    %p154 = scmp.ne.s32.totalorder %s140, %s141
    %p155 = scmp.eq.s32.totalorder %s15, 3
    %p156 = por %p154, %p155
    %p158 = scmp.ne.s32.totalorder %s141, %s157
    %p159 = scmp.eq.s32.totalorder %s15, 0
    %p160 = por %p158, %p159
    %p161 = scmp.le.s32.totalorder 1, %s9
    %p162 = scmp.lt.s32.totalorder %s9, 5
    %p163 = pnand %p161, %p162
    %p164 = pneg %p163
    // Predicated region
    $region9: #{run.31} parent=5 // pred_check
      _
    $region10: #{run.31} parent=5 // pred_check_branch
      %166 = sbr.rel (%p163) target = $region12
    $region11: #{run.31} parent=5 // pred_region
      %s167 = ssub.s32 %s9, 1
    $region12: #{run.31} parent=5 // pred_fallthru
      _
    %p168 = scmp.lt.s32.totalorder %s9, 4
    // Predicated region
    $region13: #{run.31} parent=5 // pred_check
      %p169 = pneg %p168
    $region14: #{run.31} parent=5 // pred_check_branch
      %171 = sbr.rel (%p169) target = $region16
    $region15: #{run.31} parent=5 // pred_region
      // Predicated region
      $region17: #{run.31} parent=15 // pred_check
        %p172 = pneg %p59
      $region18: #{run.31} parent=15 // pred_check_branch
        %174 = sbr.rel (%p172) target = $region20
      $region19: #{run.31} parent=15 // pred_region
        %s175 = smul.u32 16, %s17
        %p176 = scmp.lt.s32.totalorder %s16, 3
        %s177 = scalar_select %p176, %s16, 3
        %p178 = scmp.lt.s32.totalorder %s175, 15
        %s179 = scalar_select %p178, %s175, 15
        %p180 = scmp.lt.s32.totalorder %s19, 0
        %s181 = scalar_select %p180, %s19, 0
        %s182 = sadd.s32 %s181, %s179
        %s183 = smul.addr %s177, 16
        %s184 = sadd.s32 %s182, %s183
        %s185 = smul.addr %s184, 8
        %s186 = scalar_lea.vmem %s0, %s185
        %s187 = smul.u32 16, %s17
      $region20: #{run.31} parent=15 // pred_fallthru
        _
      // Predicated region
      $region21: #{run.31} parent=15 // pred_check
        %p188 = pneg %p89
      $region22: #{run.31} parent=15 // pred_check_branch
        %190 = sbr.rel (%p188) target = $region24
      $region23: #{run.31} parent=15 // pred_region
        %s191 = smul.u32 16, %s19
        %p192 = scmp.lt.s32.totalorder %s16, 3
        %s193 = scalar_select %p192, %s16, 3
        %p194 = scmp.lt.s32.totalorder %s191, 15
        %s195 = scalar_select %p194, %s191, 15
        %p196 = scmp.lt.s32.totalorder %s18, 0
        %s197 = scalar_select %p196, %s18, 0
        %s198 = sadd.s32 %s197, %s195
        %s199 = smul.addr %s193, 16
        %s200 = sadd.s32 %s198, %s199
        %s201 = smul.addr %s200, 8
        %s202 = scalar_lea.vmem %s1, %s201
        %s203 = smul.u32 16, %s19
      $region24: #{run.31} parent=15 // pred_fallthru
        _
      // Predicated region
      $region25: #{run.31} parent=15 // pred_check
        %p204 = pneg %p117
      $region26: #{run.31} parent=15 // pred_check_branch
        %206 = sbr.rel (%p204) target = $region28
      $region27: #{run.31} parent=15 // pred_region
        %p207 = scmp.lt.s32.totalorder %s16, 3
        %s208 = scalar_select %p207, %s16, 3
        %p209 = scmp.lt.s32.totalorder %s18, 0
        %s210 = scalar_select %p209, %s18, 0
        %s211 = sadd.s32 %s210, %s208
        %s212 = scalar_lea.vmem %s2, %s211
      $region28: #{run.31} parent=15 // pred_fallthru
        _
    $region16: #{run.31} parent=5 // pred_fallthru
      _
    %p213 = scmp.le.s32.totalorder 1, %s9
    %p214 = scmp.lt.s32.totalorder %s9, 5
    %p215 = pnand %p213, %p214
    %p216 = pneg %p215
    // Predicated region
    $region29: #{run.31} parent=5 // pred_check
      _
    $region30: #{run.31} parent=5 // pred_check_branch
      %218 = sbr.rel (%p215) target = $region32
    $region31: #{run.31} parent=5 // pred_region
      %s219 = ssub.s32 %s9, 1
      %s220 = smul.u32 16, %s21
      %p221 = scmp.lt.s32.totalorder %s20, 3
      %s222 = scalar_select %p221, %s20, 3
      %p223 = scmp.lt.s32.totalorder %s220, 15
      %s224 = scalar_select %p223, %s220, 15
      %p225 = scmp.lt.s32.totalorder %s23, 0
      %s226 = scalar_select %p225, %s23, 0
      %s227 = sadd.s32 %s226, %s224
      %s228 = smul.addr %s222, 16
      %s229 = sadd.s32 %s227, %s228
      %s230 = smul.addr %s229, 8
      %s231 = scalar_lea.vmem %s0, %s230
      %p232 = pneg %p65
      %p233 = pneg %p62
      %s234 = smul.u32 16, %s23
      %p235 = scmp.lt.s32.totalorder %s20, 3
      %s236 = scalar_select %p235, %s20, 3
      %p237 = scmp.lt.s32.totalorder %s234, 15
      %s238 = scalar_select %p237, %s234, 15
      %p239 = scmp.lt.s32.totalorder %s22, 0
      %s240 = scalar_select %p239, %s22, 0
      %s241 = sadd.s32 %s240, %s238
      %s242 = smul.addr %s236, 16
      %s243 = sadd.s32 %s241, %s242
      %s244 = smul.addr %s243, 8
      %s245 = scalar_lea.vmem %s1, %s244
      %p246 = pneg %p95
      %p247 = pneg %p92
      %p248 = scmp.lt.s32.totalorder %s20, 3
      %s249 = scalar_select %p248, %s20, 3
      %p250 = scmp.lt.s32.totalorder %s22, 0
      %s251 = scalar_select %p250, %s22, 0
      %s252 = sadd.s32 %s251, %s249
      %s253 = scalar_lea.vmem %s2, %s252
      %p254 = pneg %p123
      %p255 = pneg %p120
      %p256 = pneg %p153
      %p257 = pneg %p150
      %s258 = smul.u32 16, %s21
      %p259 = scmp.lt.s32.totalorder %s20, 3
      %s260 = scalar_select %p259, %s20, 3
      %p261 = scmp.lt.s32.totalorder %s258, 15
      %s262 = scalar_select %p261, %s258, 15
      %p263 = scmp.lt.s32.totalorder %s22, 0
      %s264 = scalar_select %p263, %s22, 0
      %s265 = sadd.s32 %s264, %s262
      %s266 = smul.addr %s260, 16
      %s267 = sadd.s32 %s265, %s266
      %s268 = smul.addr %s267, 8
      %s269 = scalar_lea.vmem %s3, %s268
      %s270 = smul.u32 16, %s21
      %p271 = scmp.lt.s32.totalorder %s20, 3
      %s272 = scalar_select %p271, %s20, 3
      %p273 = scmp.lt.s32.totalorder %s270, 15
      %s274 = scalar_select %p273, %s270, 15
      %p275 = scmp.lt.s32.totalorder %s23, 0
      %s276 = scalar_select %p275, %s23, 0
      %s277 = sadd.s32 %s276, %s274
      %s278 = smul.addr %s272, 16
      %s279 = sadd.s32 %s277, %s278
      %s280 = smul.addr %s279, 8
      %s281 = scalar_lea.vmem %s0, %s280
      %s282 = smul.u32 16, %s21
      %s283 = smul.u32 16, %s23
      %p284 = scmp.lt.s32.totalorder %s20, 3
      %s285 = scalar_select %p284, %s20, 3
      %p286 = scmp.lt.s32.totalorder %s283, 15
      %s287 = scalar_select %p286, %s283, 15
      %p288 = scmp.lt.s32.totalorder %s22, 0
      %s289 = scalar_select %p288, %s22, 0
      %s290 = sadd.s32 %s289, %s287
      %s291 = smul.addr %s285, 16
      %s292 = sadd.s32 %s290, %s291
      %s293 = smul.addr %s292, 8
      %s294 = scalar_lea.vmem %s1, %s293
      %s295 = smul.u32 16, %s23
      %p296 = scmp.lt.s32.totalorder %s20, 3
      %s297 = scalar_select %p296, %s20, 3
      %p298 = scmp.lt.s32.totalorder %s22, 0
      %s299 = scalar_select %p298, %s22, 0
      %s300 = sadd.s32 %s299, %s297
      %s301 = scalar_lea.vmem %s2, %s300
      %s302 = smul.u32 16, %s21
      %p303 = scmp.lt.s32.totalorder %s20, 3
      %s304 = scalar_select %p303, %s20, 3
      %p305 = scmp.lt.s32.totalorder %s302, 15
      %s306 = scalar_select %p305, %s302, 15
      %p307 = scmp.lt.s32.totalorder %s22, 0
      %s308 = scalar_select %p307, %s22, 0
      %s309 = sadd.s32 %s308, %s306
      %s310 = smul.addr %s304, 16
      %s311 = sadd.s32 %s309, %s310
      %s312 = smul.addr %s311, 8
      %s313 = scalar_lea.vmem %s3, %s312
      %s314 = smul.u32 16, %s21
      %p315 = scmp.eq.s32.totalorder %s23, 0
      // Predicated region
      $region33: #{run.31} parent=31 // pred_check
        %p316 = pneg %p315
      $region34: #{run.31} parent=31 // pred_check_branch
        %318 = sbr.rel (%p316) target = $region36
      $region35: #{run.31} parent=31 // pred_region
        %319 = vst [vmem:[#allocation2] sm:$0xff] 0.0
        %320 = vst [vmem:[#allocation2 + $0x8] sm:$0xff] 0.0
        %321 = vst [vmem:[#allocation2 + $0x10] sm:$0xff] 0.0
        %322 = vst [vmem:[#allocation2 + $0x18] sm:$0xff] 0.0
        %323 = vst [vmem:[#allocation2 + $0x20] sm:$0xff] 0.0
        %324 = vst [vmem:[#allocation2 + $0x28] sm:$0xff] 0.0
        %325 = vst [vmem:[#allocation2 + $0x30] sm:$0xff] 0.0
        %326 = vst [vmem:[#allocation2 + $0x38] sm:$0xff] 0.0
        %327 = vst [vmem:[#allocation2 + $0x40] sm:$0xff] 0.0
        %328 = vst [vmem:[#allocation2 + $0x48] sm:$0xff] 0.0
        %329 = vst [vmem:[#allocation2 + $0x50] sm:$0xff] 0.0
        %330 = vst [vmem:[#allocation2 + $0x58] sm:$0xff] 0.0
        %331 = vst [vmem:[#allocation2 + $0x60] sm:$0xff] 0.0
        %332 = vst [vmem:[#allocation2 + $0x68] sm:$0xff] 0.0
        %333 = vst [vmem:[#allocation2 + $0x70] sm:$0xff] 0.0
        %334 = vst [vmem:[#allocation2 + $0x78] sm:$0xff] 0.0
      $region36: #{run.31} parent=31 // pred_fallthru
        _
      %v335 = vld [vmem:[#allocation2] sm:$0xff]
      %v336 = vld [vmem:[#allocation2 + $0x8] sm:$0xff]
      %v337 = vld [vmem:[#allocation2 + $0x10] sm:$0xff]
      %v338 = vld [vmem:[#allocation2 + $0x18] sm:$0xff]
      %v339 = vld [vmem:[#allocation2 + $0x20] sm:$0xff]
      %v340 = vld [vmem:[#allocation2 + $0x28] sm:$0xff]
      %v341 = vld [vmem:[#allocation2 + $0x30] sm:$0xff]
      %v342 = vld [vmem:[#allocation2 + $0x38] sm:$0xff]
      %v343 = vld [vmem:[#allocation2 + $0x40] sm:$0xff]
      %v344 = vld [vmem:[#allocation2 + $0x48] sm:$0xff]
      %v345 = vld [vmem:[#allocation2 + $0x50] sm:$0xff]
      %v346 = vld [vmem:[#allocation2 + $0x58] sm:$0xff]
      %v347 = vld [vmem:[#allocation2 + $0x60] sm:$0xff]
      %v348 = vld [vmem:[#allocation2 + $0x68] sm:$0xff]
      %v349 = vld [vmem:[#allocation2 + $0x70] sm:$0xff]
      %v350 = vld [vmem:[#allocation2 + $0x78] sm:$0xff]
      %v351 = vld [vmem:[%s281] sm:$0xff]
      %v352 = vld [vmem:[%s281 + $0x8] sm:$0xff]
      %v353 = vld [vmem:[%s281 + $0x10] sm:$0xff]
      %v354 = vld [vmem:[%s281 + $0x18] sm:$0xff]
      %v355 = vld [vmem:[%s281 + $0x20] sm:$0xff]
      %v356 = vld [vmem:[%s281 + $0x28] sm:$0xff]
      %v357 = vld [vmem:[%s281 + $0x30] sm:$0xff]
      %v358 = vld [vmem:[%s281 + $0x38] sm:$0xff]
      %v359 = vld [vmem:[%s281 + $0x40] sm:$0xff]
      %v360 = vld [vmem:[%s281 + $0x48] sm:$0xff]
      %v361 = vld [vmem:[%s281 + $0x50] sm:$0xff]
      %v362 = vld [vmem:[%s281 + $0x58] sm:$0xff]
      %v363 = vld [vmem:[%s281 + $0x60] sm:$0xff]
      %v364 = vld [vmem:[%s281 + $0x68] sm:$0xff]
      %v365 = vld [vmem:[%s281 + $0x70] sm:$0xff]
      %v366 = vld [vmem:[%s281 + $0x78] sm:$0xff]
      %v367 = vld [vmem:[%s294] sm:$0xff]
      %v368 = vld [vmem:[%s294 + $0x8] sm:$0xff]
      %v369 = vld [vmem:[%s294 + $0x10] sm:$0xff]
      %v370 = vld [vmem:[%s294 + $0x18] sm:$0xff]
      %v371 = vld [vmem:[%s294 + $0x20] sm:$0xff]
      %v372 = vld [vmem:[%s294 + $0x28] sm:$0xff]
      %v373 = vld [vmem:[%s294 + $0x30] sm:$0xff]
      %v374 = vld [vmem:[%s294 + $0x38] sm:$0xff]
      %v375 = vld [vmem:[%s294 + $0x40] sm:$0xff]
      %v376 = vld [vmem:[%s294 + $0x48] sm:$0xff]
      %v377 = vld [vmem:[%s294 + $0x50] sm:$0xff]
      %v378 = vld [vmem:[%s294 + $0x58] sm:$0xff]
      %v379 = vld [vmem:[%s294 + $0x60] sm:$0xff]
      %v380 = vld [vmem:[%s294 + $0x68] sm:$0xff]
      %v381 = vld [vmem:[%s294 + $0x70] sm:$0xff]
      %v382 = vld [vmem:[%s294 + $0x78] sm:$0xff]
      %383 = vmatpush.msra.mxu0 %v382
      %384 = vmatpush.msra.mxu0 %v381
      %385 = vmatpush.msra.mxu0 %v380
      %386 = vmatpush.msra.mxu0 %v379
      %387 = vmatpush.msra.mxu0 %v378
      %388 = vmatpush.msra.mxu0 %v377
      %389 = vmatpush.msra.mxu0 %v376
      %390 = vmatpush.msra.mxu0 %v375
      %391 = vmatpush.msra.mxu0 %v374
      %392 = vmatpush.msra.mxu0 %v373
      %393 = vmatpush.msra.mxu0 %v372
      %394 = vmatpush.msra.mxu0 %v371
      %395 = vmatpush.msra.mxu0 %v370
      %396 = vmatpush.msra.mxu0 %v369
      %397 = vmatpush.msra.mxu0 %v368
      %398 = vmatpush.msra.mxu0 %v367
      %399 = vmatmul.f32.gmra.mxu0 %v351
      %v400 = vpop.f32.mrf.mxu0
      %v401 = vadd.f32 0.0, %v400
      %402 = vmatmul.f32.gmra.mxu0 %v352
      %v403 = vpop.f32.mrf.mxu0
      %v404 = vadd.f32 0.0, %v403
      %405 = vmatmul.f32.gmra.mxu0 %v353
      %v406 = vpop.f32.mrf.mxu0
      %v407 = vadd.f32 0.0, %v406
      %408 = vmatmul.f32.gmra.mxu0 %v354
      %v409 = vpop.f32.mrf.mxu0
      %v410 = vadd.f32 0.0, %v409
      %411 = vmatmul.f32.gmra.mxu0 %v355
      %v412 = vpop.f32.mrf.mxu0
      %v413 = vadd.f32 0.0, %v412
      %414 = vmatmul.f32.gmra.mxu0 %v356
      %v415 = vpop.f32.mrf.mxu0
      %v416 = vadd.f32 0.0, %v415
      %417 = vmatmul.f32.gmra.mxu0 %v357
      %v418 = vpop.f32.mrf.mxu0
      %v419 = vadd.f32 0.0, %v418
      %420 = vmatmul.f32.gmra.mxu0 %v358
      %v421 = vpop.f32.mrf.mxu0
      %v422 = vadd.f32 0.0, %v421
      %423 = vmatmul.f32.gmra.mxu0 %v359
      %v424 = vpop.f32.mrf.mxu0
      %v425 = vadd.f32 0.0, %v424
      %426 = vmatmul.f32.gmra.mxu0 %v360
      %v427 = vpop.f32.mrf.mxu0
      %v428 = vadd.f32 0.0, %v427
      %429 = vmatmul.f32.gmra.mxu0 %v361
      %v430 = vpop.f32.mrf.mxu0
      %v431 = vadd.f32 0.0, %v430
      %432 = vmatmul.f32.gmra.mxu0 %v362
      %v433 = vpop.f32.mrf.mxu0
      %v434 = vadd.f32 0.0, %v433
      %435 = vmatmul.f32.gmra.mxu0 %v363
      %v436 = vpop.f32.mrf.mxu0
      %v437 = vadd.f32 0.0, %v436
      %438 = vmatmul.f32.gmra.mxu0 %v364
      %v439 = vpop.f32.mrf.mxu0
      %v440 = vadd.f32 0.0, %v439
      %441 = vmatmul.f32.gmra.mxu0 %v365
      %v442 = vpop.f32.mrf.mxu0
      %v443 = vadd.f32 0.0, %v442
      %444 = vmatmul.f32.gmra.mxu0 %v366
      %v445 = vpop.f32.mrf.mxu0
      %v446 = vadd.f32 0.0, %v445
      %447 = vdwg.mxu0
      %v448 = vadd.f32 %v335, %v401
      %v449 = vadd.f32 %v336, %v404
      %v450 = vadd.f32 %v337, %v407
      %v451 = vadd.f32 %v338, %v410
      %v452 = vadd.f32 %v339, %v413
      %v453 = vadd.f32 %v340, %v416
      %v454 = vadd.f32 %v341, %v419
      %v455 = vadd.f32 %v342, %v422
      %v456 = vadd.f32 %v343, %v425
      %v457 = vadd.f32 %v344, %v428
      %v458 = vadd.f32 %v345, %v431
      %v459 = vadd.f32 %v346, %v434
      %v460 = vadd.f32 %v347, %v437
      %v461 = vadd.f32 %v348, %v440
      %v462 = vadd.f32 %v349, %v443
      %v463 = vadd.f32 %v350, %v446
      %464 = vst [vmem:[#allocation2] sm:$0xff] %v448
      %465 = vst [vmem:[#allocation2 + $0x8] sm:$0xff] %v449
      %466 = vst [vmem:[#allocation2 + $0x10] sm:$0xff] %v450
      %467 = vst [vmem:[#allocation2 + $0x18] sm:$0xff] %v451
      %468 = vst [vmem:[#allocation2 + $0x20] sm:$0xff] %v452
      %469 = vst [vmem:[#allocation2 + $0x28] sm:$0xff] %v453
      %470 = vst [vmem:[#allocation2 + $0x30] sm:$0xff] %v454
      %471 = vst [vmem:[#allocation2 + $0x38] sm:$0xff] %v455
      %472 = vst [vmem:[#allocation2 + $0x40] sm:$0xff] %v456
      %473 = vst [vmem:[#allocation2 + $0x48] sm:$0xff] %v457
      %474 = vst [vmem:[#allocation2 + $0x50] sm:$0xff] %v458
      %475 = vst [vmem:[#allocation2 + $0x58] sm:$0xff] %v459
      %476 = vst [vmem:[#allocation2 + $0x60] sm:$0xff] %v460
      %477 = vst [vmem:[#allocation2 + $0x68] sm:$0xff] %v461
      %478 = vst [vmem:[#allocation2 + $0x70] sm:$0xff] %v462
      %479 = vst [vmem:[#allocation2 + $0x78] sm:$0xff] %v463
      // Predicated region
      $region37: #{run.31} parent=31 // pred_check
        %p480 = pneg %p315
      $region38: #{run.31} parent=31 // pred_check_branch
        %482 = sbr.rel (%p480) target = $region40
      $region39: #{run.31} parent=31 // pred_region
        %v483 = vld [vmem:[#allocation2] sm:$0xff]
        %v484 = vld [vmem:[#allocation2 + $0x8] sm:$0xff]
        %v485 = vld [vmem:[#allocation2 + $0x10] sm:$0xff]
        %v486 = vld [vmem:[#allocation2 + $0x18] sm:$0xff]
        %v487 = vld [vmem:[#allocation2 + $0x20] sm:$0xff]
        %v488 = vld [vmem:[#allocation2 + $0x28] sm:$0xff]
        %v489 = vld [vmem:[#allocation2 + $0x30] sm:$0xff]
        %v490 = vld [vmem:[#allocation2 + $0x38] sm:$0xff]
        %v491 = vld [vmem:[#allocation2 + $0x40] sm:$0xff]
        %v492 = vld [vmem:[#allocation2 + $0x48] sm:$0xff]
        %v493 = vld [vmem:[#allocation2 + $0x50] sm:$0xff]
        %v494 = vld [vmem:[#allocation2 + $0x58] sm:$0xff]
        %v495 = vld [vmem:[#allocation2 + $0x60] sm:$0xff]
        %v496 = vld [vmem:[#allocation2 + $0x68] sm:$0xff]
        %v497 = vld [vmem:[#allocation2 + $0x70] sm:$0xff]
        %v498 = vld [vmem:[#allocation2 + $0x78] sm:$0xff]
        %v499 = vld [vmem:[%s301] sm:$0x1]
        %v501 = vperm.slane %v499, 0
        %v503 = vadd.f32 %v483, %v501
        %v504 = vadd.f32 %v484, %v501
        %v505 = vadd.f32 %v485, %v501
        %v506 = vadd.f32 %v486, %v501
        %v507 = vadd.f32 %v487, %v501
        %v508 = vadd.f32 %v488, %v501
        %v509 = vadd.f32 %v489, %v501
        %v510 = vadd.f32 %v490, %v501
        %v511 = vadd.f32 %v491, %v501
        %v512 = vadd.f32 %v492, %v501
        %v513 = vadd.f32 %v493, %v501
        %v514 = vadd.f32 %v494, %v501
        %v515 = vadd.f32 %v495, %v501
        %v516 = vadd.f32 %v496, %v501
        %v517 = vadd.f32 %v497, %v501
        %v518 = vadd.f32 %v498, %v501
        %519 = vst [vmem:[%s313] sm:$0xff] %v503
        %520 = vst [vmem:[%s313 + $0x8] sm:$0xff] %v504
        %521 = vst [vmem:[%s313 + $0x10] sm:$0xff] %v505
        %522 = vst [vmem:[%s313 + $0x18] sm:$0xff] %v506
        %523 = vst [vmem:[%s313 + $0x20] sm:$0xff] %v507
        %524 = vst [vmem:[%s313 + $0x28] sm:$0xff] %v508
        %525 = vst [vmem:[%s313 + $0x30] sm:$0xff] %v509
        %526 = vst [vmem:[%s313 + $0x38] sm:$0xff] %v510
        %527 = vst [vmem:[%s313 + $0x40] sm:$0xff] %v511
        %528 = vst [vmem:[%s313 + $0x48] sm:$0xff] %v512
        %529 = vst [vmem:[%s313 + $0x50] sm:$0xff] %v513
        %530 = vst [vmem:[%s313 + $0x58] sm:$0xff] %v514
        %531 = vst [vmem:[%s313 + $0x60] sm:$0xff] %v515
        %532 = vst [vmem:[%s313 + $0x68] sm:$0xff] %v516
        %533 = vst [vmem:[%s313 + $0x70] sm:$0xff] %v517
        %534 = vst [vmem:[%s313 + $0x78] sm:$0xff] %v518
      $region40: #{run.31} parent=31 // pred_fallthru
        _
      %s535 = smul.u32 16, %s21
      %p536 = scmp.lt.s32.totalorder %s20, 3
      %s537 = scalar_select %p536, %s20, 3
      %p538 = scmp.lt.s32.totalorder %s535, 15
      %s539 = scalar_select %p538, %s535, 15
      %p540 = scmp.lt.s32.totalorder %s22, 0
      %s541 = scalar_select %p540, %s22, 0
      %s542 = sadd.s32 %s541, %s539
      %s543 = smul.addr %s537, 16
      %s544 = sadd.s32 %s542, %s543
      %s545 = smul.addr %s544, 8
      %s546 = scalar_lea.vmem %s3, %s545
      // Predicated region
      $region41: #{run.31} parent=31 // pred_check
        %p547 = pneg %p150
      $region42: #{run.31} parent=31 // pred_check_branch
        %549 = sbr.rel (%p547) target = $region44
      $region43: #{run.31} parent=31 // pred_region
        %s550 = smul.u32 16, %s21
      $region44: #{run.31} parent=31 // pred_fallthru
        _
    $region32: #{run.31} parent=5 // pred_fallthru
      _
    %p551 = scmp.le.s32.totalorder 2, %s9
    // Predicated region
    $region45: #{run.31} parent=5 // pred_check
      %p552 = pneg %p551
    $region46: #{run.31} parent=5 // pred_check_branch
      %554 = sbr.rel (%p552) target = $region48
    $region47: #{run.31} parent=5 // pred_region
      %s555 = ssub.s32 %s9, 2
      // Predicated region
      $region49: #{run.31} parent=47 // pred_check
        %p556 = pneg %p156
      $region50: #{run.31} parent=47 // pred_check_branch
        %558 = sbr.rel (%p556) target = $region52
      $region51: #{run.31} parent=47 // pred_region
        %s559 = smul.u32 16, %s25
        %p560 = scmp.lt.s32.totalorder %s24, 3
        %s561 = scalar_select %p560, %s24, 3
        %p562 = scmp.lt.s32.totalorder %s559, 15
        %s563 = scalar_select %p562, %s559, 15
        %p564 = scmp.lt.s32.totalorder %s26, 0
        %s565 = scalar_select %p564, %s26, 0
        %s566 = sadd.s32 %s565, %s563
        %s567 = smul.addr %s561, 16
        %s568 = sadd.s32 %s566, %s567
        %s569 = smul.addr %s568, 8
        %s570 = scalar_lea.vmem %s3, %s569
      $region52: #{run.31} parent=47 // pred_fallthru
        _
    $region48: #{run.31} parent=5 // pred_fallthru
      _
  $region6: #{run.31} parent=0 // loop_footer
    %s13 = sadd.s32 1, %s9
  $region7: #{run.31} parent=0 // loop_footer_branch
    %8 = sbr.rel target = $region3
  $region8: #{run.31} parent=0 // loop_exit
    _

// kernel: run.32
$region0: #{run.32}
  #allocation0 [shape = 'u32[]', space=smem, size = 0x4, offset = 0x4, fixed_abs, tag = 'smem constant byte address 0x4 - core index']
  #allocation1 [shape = 'u32[72,128]{1,0:T(1,128)}', space=vmem, size = 0x9000, scoped, tag = 'internal scratch']
  %s0 = inlined_call_operand.vmem [shape: f32[2,256,8], index: 0, kind: input, shape index: {}]
  %s1 = inlined_call_operand.vmem [shape: f32[2,256,8], index: 1, kind: output, shape index: {}]
  %s2 = sld [smem:[#allocation0]]
  $region37: #{run.32} parent=0
    _
  %s4 = ssub.s32 1, %s2
  %s5 = scalar_select 0, %s4, %s2
  loop: start=0, step=1, limit=4
  $region2: #{run.32} parent=0 // loop_pre_header
    _
  $region3: #{run.32} parent=0 // loop_header
    %s7 = sphi 0, %s11
    %p8 = scmp.ge.s32.totalorder %s7, 4
    %s17 = sphi 0, %s19
    %s20 = sphi 0, %s17
    %s21 = sphi 0, %s20
    %s37 = sphi 0, %s21
    %s43 = sphi 0, %s45
    %s46 = sphi 0, %s43
    %s47 = sphi 0, %s46
    %s63 = sphi 0, %s47
  $region4: #{run.32} parent=0 // loop_header_branch
    %10 = sbr.rel (%p8) target = $region8
  $region5: #{run.32} parent=0 // loop_body
    %s12 = ssub.s32 %s7, 1
    %s13 = ssub.s32 %s7, 2
    %s14 = sadd.s32 %s7, 1
    %s15 = ssub.s32 %s7, %s14
    %p16 = scmp.eq.s32.totalorder %s15, 0
    %s18 = sadd.s32 %s17, 1
    %s19 = scalar_select %p16, %s17, %s18
    %p22 = pneg %p16
    %p23 = scmp.eq.s32.totalorder %s7, 1
    %p24 = por %p22, %p23
    %p25 = scmp.ne.s32.totalorder %s17, %s20
    %p26 = scmp.eq.s32.totalorder %s7, 0
    %p27 = por %p25, %p26
    %p28 = scmp.ne.s32.totalorder %s17, %s20
    %p29 = scmp.eq.s32.totalorder %s12, 1
    %p30 = por %p28, %p29
    %p31 = scmp.ne.s32.totalorder %s20, %s21
    %p32 = scmp.eq.s32.totalorder %s12, 0
    %p33 = por %p31, %p32
    %p34 = scmp.ne.s32.totalorder %s20, %s21
    %p35 = scmp.eq.s32.totalorder %s13, 1
    %p36 = por %p34, %p35
    %p38 = scmp.ne.s32.totalorder %s21, %s37
    %p39 = scmp.eq.s32.totalorder %s13, 0
    %p40 = por %p38, %p39
    %s41 = ssub.s32 %s7, %s14
    %p42 = scmp.eq.s32.totalorder %s41, 0
    %s44 = sadd.s32 %s43, 1
    %s45 = scalar_select %p42, %s43, %s44
    %p48 = pneg %p42
    %p49 = scmp.eq.s32.totalorder %s7, 1
    %p50 = por %p48, %p49
    %p51 = scmp.ne.s32.totalorder %s43, %s46
    %p52 = scmp.eq.s32.totalorder %s7, 0
    %p53 = por %p51, %p52
    %p54 = scmp.ne.s32.totalorder %s43, %s46
    %p55 = scmp.eq.s32.totalorder %s12, 1
    %p56 = por %p54, %p55
    %p57 = scmp.ne.s32.totalorder %s46, %s47
    %p58 = scmp.eq.s32.totalorder %s12, 0
    %p59 = por %p57, %p58
    %p60 = scmp.ne.s32.totalorder %s46, %s47
    %p61 = scmp.eq.s32.totalorder %s13, 1
    %p62 = por %p60, %p61
    %p64 = scmp.ne.s32.totalorder %s47, %s63
    %p65 = scmp.eq.s32.totalorder %s13, 0
    %p66 = por %p64, %p65
    %p67 = scmp.le.s32.totalorder 1, %s7
    %p68 = scmp.lt.s32.totalorder %s7, 3
    %p69 = pnand %p67, %p68
    %p70 = pneg %p69
    // Predicated region
    $region9: #{run.32} parent=5 // pred_check
      _
    $region10: #{run.32} parent=5 // pred_check_branch
      %72 = sbr.rel (%p69) target = $region12
    $region11: #{run.32} parent=5 // pred_region
      %s73 = ssub.s32 %s7, 1
    $region12: #{run.32} parent=5 // pred_fallthru
      _
    %p74 = scmp.lt.s32.totalorder %s7, 2
    // Predicated region
    $region13: #{run.32} parent=5 // pred_check
      %p75 = pneg %p74
    $region14: #{run.32} parent=5 // pred_check_branch
      %77 = sbr.rel (%p75) target = $region16
    $region15: #{run.32} parent=5 // pred_region
      // Predicated region
      $region17: #{run.32} parent=15 // pred_check
        %p78 = pneg %p27
      $region18: #{run.32} parent=15 // pred_check_branch
        %80 = sbr.rel (%p78) target = $region20
      $region19: #{run.32} parent=15 // pred_region
        %p81 = scmp.lt.s32.totalorder %s7, 1
        %s82 = scalar_select %p81, %s7, 1
        %s83 = smul.addr %s82, 32
        %s84 = smul.addr %s83, 8
        %s85 = scalar_lea.vmem %s0, %s84
      $region20: #{run.32} parent=15 // pred_fallthru
        _
    $region16: #{run.32} parent=5 // pred_fallthru
      _
    %p86 = scmp.le.s32.totalorder 1, %s7
    %p87 = scmp.lt.s32.totalorder %s7, 3
    %p88 = pnand %p86, %p87
    %p89 = pneg %p88
    // Predicated region
    $region21: #{run.32} parent=5 // pred_check
      _
    $region22: #{run.32} parent=5 // pred_check_branch
      %91 = sbr.rel (%p88) target = $region24
    $region23: #{run.32} parent=5 // pred_region
      %s92 = ssub.s32 %s7, 1
      %p93 = scmp.lt.s32.totalorder %s12, 1
      %s94 = scalar_select %p93, %s12, 1
      %s95 = smul.addr %s94, 32
      %s96 = smul.addr %s95, 8
      %s97 = scalar_lea.vmem %s0, %s96
      %p98 = pneg %p33
      %p99 = pneg %p30
      %p100 = pneg %p59
      %p101 = pneg %p56
      %p102 = scmp.lt.s32.totalorder %s12, 1
      %s103 = scalar_select %p102, %s12, 1
      %s104 = smul.addr %s103, 32
      %s105 = smul.addr %s104, 8
      %s106 = scalar_lea.vmem %s1, %s105
      %p107 = scmp.lt.s32.totalorder %s12, 1
      %s108 = scalar_select %p107, %s12, 1
      %s109 = smul.addr %s108, 32
      %s110 = smul.addr %s109, 8
      %s111 = scalar_lea.vmem %s0, %s110
      %p112 = scmp.lt.s32.totalorder %s12, 1
      %s113 = scalar_select %p112, %s12, 1
      %s114 = smul.addr %s113, 32
      %s115 = smul.addr %s114, 8
      %s116 = scalar_lea.vmem %s1, %s115
      %v117 = vld [vmem:[%s111] sm:$0xff]
      %v118 = vld [vmem:[%s111 + $0x8] sm:$0xff]
      %v119 = vld [vmem:[%s111 + $0x10] sm:$0xff]
      %v120 = vld [vmem:[%s111 + $0x18] sm:$0xff]
      %v121 = vld [vmem:[%s111 + $0x20] sm:$0xff]
      %v122 = vld [vmem:[%s111 + $0x28] sm:$0xff]
      %v123 = vld [vmem:[%s111 + $0x30] sm:$0xff]
      %v124 = vld [vmem:[%s111 + $0x38] sm:$0xff]
      %v125 = vld [vmem:[%s111 + $0x40] sm:$0xff]
      %v126 = vld [vmem:[%s111 + $0x48] sm:$0xff]
      %v127 = vld [vmem:[%s111 + $0x50] sm:$0xff]
      %v128 = vld [vmem:[%s111 + $0x58] sm:$0xff]
      %v129 = vld [vmem:[%s111 + $0x60] sm:$0xff]
      %v130 = vld [vmem:[%s111 + $0x68] sm:$0xff]
      %v131 = vld [vmem:[%s111 + $0x70] sm:$0xff]
      %v132 = vld [vmem:[%s111 + $0x78] sm:$0xff]
      %v133 = vld [vmem:[%s111 + $0x80] sm:$0xff]
      %v134 = vld [vmem:[%s111 + $0x88] sm:$0xff]
      %v135 = vld [vmem:[%s111 + $0x90] sm:$0xff]
      %v136 = vld [vmem:[%s111 + $0x98] sm:$0xff]
      %v137 = vld [vmem:[%s111 + $0xa0] sm:$0xff]
      %v138 = vld [vmem:[%s111 + $0xa8] sm:$0xff]
      %v139 = vld [vmem:[%s111 + $0xb0] sm:$0xff]
      %v140 = vld [vmem:[%s111 + $0xb8] sm:$0xff]
      %v141 = vld [vmem:[%s111 + $0xc0] sm:$0xff]
      %v142 = vld [vmem:[%s111 + $0xc8] sm:$0xff]
      %v143 = vld [vmem:[%s111 + $0xd0] sm:$0xff]
      %v144 = vld [vmem:[%s111 + $0xd8] sm:$0xff]
      %v145 = vld [vmem:[%s111 + $0xe0] sm:$0xff]
      %v146 = vld [vmem:[%s111 + $0xe8] sm:$0xff]
      %v147 = vld [vmem:[%s111 + $0xf0] sm:$0xff]
      %v148 = vld [vmem:[%s111 + $0xf8] sm:$0xff]
      %vm149 = vcmask 64512
      %v150 = vsel %vm149, %v117, 0.0
      %v151 = vsel %vm149, %v118, 0.0
      %v152 = vadd.f32 %v150, %v151
      %v153 = vsel %vm149, %v119, 0.0
      %v154 = vadd.f32 %v152, %v153
      %v155 = vsel %vm149, %v120, 0.0
      %v156 = vadd.f32 %v154, %v155
      %v157 = vsel %vm149, %v121, 0.0
      %v158 = vadd.f32 %v156, %v157
      %v159 = vsel %vm149, %v122, 0.0
      %v160 = vadd.f32 %v158, %v159
      %v161 = vsel %vm149, %v123, 0.0
      %v162 = vadd.f32 %v160, %v161
      %v163 = vsel %vm149, %v124, 0.0
      %v164 = vadd.f32 %v162, %v163
      %v165 = vsel %vm149, %v125, 0.0
      %v166 = vadd.f32 %v164, %v165
      %v167 = vsel %vm149, %v126, 0.0
      %v168 = vadd.f32 %v166, %v167
      %v169 = vsel %vm149, %v127, 0.0
      %v170 = vadd.f32 %v168, %v169
      %v171 = vsel %vm149, %v128, 0.0
      %v172 = vadd.f32 %v170, %v171
      %v173 = vsel %vm149, %v129, 0.0
      %v174 = vadd.f32 %v172, %v173
      %v175 = vsel %vm149, %v130, 0.0
      %v176 = vadd.f32 %v174, %v175
      %v177 = vsel %vm149, %v131, 0.0
      %v178 = vadd.f32 %v176, %v177
      %v179 = vsel %vm149, %v132, 0.0
      %v180 = vadd.f32 %v178, %v179
      %v181 = vsel %vm149, %v133, 0.0
      %v182 = vadd.f32 %v180, %v181
      %v183 = vsel %vm149, %v134, 0.0
      %v184 = vadd.f32 %v182, %v183
      %v185 = vsel %vm149, %v135, 0.0
      %v186 = vadd.f32 %v184, %v185
      %v187 = vsel %vm149, %v136, 0.0
      %v188 = vadd.f32 %v186, %v187
      %v189 = vsel %vm149, %v137, 0.0
      %v190 = vadd.f32 %v188, %v189
      %v191 = vsel %vm149, %v138, 0.0
      %v192 = vadd.f32 %v190, %v191
      %v193 = vsel %vm149, %v139, 0.0
      %v194 = vadd.f32 %v192, %v193
      %v195 = vsel %vm149, %v140, 0.0
      %v196 = vadd.f32 %v194, %v195
      %v197 = vsel %vm149, %v141, 0.0
      %v198 = vadd.f32 %v196, %v197
      %v199 = vsel %vm149, %v142, 0.0
      %v200 = vadd.f32 %v198, %v199
      %v201 = vsel %vm149, %v143, 0.0
      %v202 = vadd.f32 %v200, %v201
      %v203 = vsel %vm149, %v144, 0.0
      %v204 = vadd.f32 %v202, %v203
      %v205 = vsel %vm149, %v145, 0.0
      %v206 = vadd.f32 %v204, %v205
      %v207 = vsel %vm149, %v146, 0.0
      %v208 = vadd.f32 %v206, %v207
      %v209 = vsel %vm149, %v147, 0.0
      %v210 = vadd.f32 %v208, %v209
      %v211 = vsel %vm149, %v148, 0.0
      %v212 = vadd.f32 %v210, %v211
      %v213 = vrot.slane %v212, 4
      %v214 = vadd.f32 %v212, %v213
      %v215 = vrot.slane %v214, 2
      %v216 = vadd.f32 %v214, %v215
      %v217 = vrot.slane %v216, 1
      %v218 = vadd.f32 %v216, %v217
      %v219 = vmul.f32 %v218, 0.00390625
      %v220 = vmul.f32 %v117, %v117
      %v221 = vmul.f32 %v118, %v118
      %v222 = vmul.f32 %v119, %v119
      %v223 = vmul.f32 %v120, %v120
      %v224 = vmul.f32 %v121, %v121
      %v225 = vmul.f32 %v122, %v122
      %v226 = vmul.f32 %v123, %v123
      %v227 = vmul.f32 %v124, %v124
      %v228 = vmul.f32 %v125, %v125
      %v229 = vmul.f32 %v126, %v126
      %v230 = vmul.f32 %v127, %v127
      %v231 = vmul.f32 %v128, %v128
      %v232 = vmul.f32 %v129, %v129
      %v233 = vmul.f32 %v130, %v130
      %v234 = vmul.f32 %v131, %v131
      %v235 = vmul.f32 %v132, %v132
      %v236 = vmul.f32 %v133, %v133
      %v237 = vmul.f32 %v134, %v134
      %v238 = vmul.f32 %v135, %v135
      %v239 = vmul.f32 %v136, %v136
      %v240 = vmul.f32 %v137, %v137
      %v241 = vmul.f32 %v138, %v138
      %v242 = vmul.f32 %v139, %v139
      %v243 = vmul.f32 %v140, %v140
      %v244 = vmul.f32 %v141, %v141
      %v245 = vmul.f32 %v142, %v142
      %v246 = vmul.f32 %v143, %v143
      %v247 = vmul.f32 %v144, %v144
      %v248 = vmul.f32 %v145, %v145
      %v249 = vmul.f32 %v146, %v146
      %v250 = vmul.f32 %v147, %v147
      %v251 = vmul.f32 %v148, %v148
      %v252 = vsel %vm149, %v220, 0.0
      %v253 = vsel %vm149, %v221, 0.0
      %v254 = vadd.f32 %v252, %v253
      %v255 = vsel %vm149, %v222, 0.0
      %v256 = vadd.f32 %v254, %v255
      %v257 = vsel %vm149, %v223, 0.0
      %v258 = vadd.f32 %v256, %v257
      %v259 = vsel %vm149, %v224, 0.0
      %v260 = vadd.f32 %v258, %v259
      %v261 = vsel %vm149, %v225, 0.0
      %v262 = vadd.f32 %v260, %v261
      %v263 = vsel %vm149, %v226, 0.0
      %v264 = vadd.f32 %v262, %v263
      %v265 = vsel %vm149, %v227, 0.0
      %v266 = vadd.f32 %v264, %v265
      %v267 = vsel %vm149, %v228, 0.0
      %v268 = vadd.f32 %v266, %v267
      %v269 = vsel %vm149, %v229, 0.0
      %v270 = vadd.f32 %v268, %v269
      %v271 = vsel %vm149, %v230, 0.0
      %v272 = vadd.f32 %v270, %v271
      %v273 = vsel %vm149, %v231, 0.0
      %v274 = vadd.f32 %v272, %v273
      %v275 = vsel %vm149, %v232, 0.0
      %v276 = vadd.f32 %v274, %v275
      %v277 = vsel %vm149, %v233, 0.0
      %v278 = vadd.f32 %v276, %v277
      %v279 = vsel %vm149, %v234, 0.0
      %v280 = vadd.f32 %v278, %v279
      %v281 = vsel %vm149, %v235, 0.0
      %v282 = vadd.f32 %v280, %v281
      %v283 = vsel %vm149, %v236, 0.0
      %v284 = vadd.f32 %v282, %v283
      %v285 = vsel %vm149, %v237, 0.0
      %v286 = vadd.f32 %v284, %v285
      %v287 = vsel %vm149, %v238, 0.0
      %v288 = vadd.f32 %v286, %v287
      %v289 = vsel %vm149, %v239, 0.0
      %v290 = vadd.f32 %v288, %v289
      %v291 = vsel %vm149, %v240, 0.0
      %v292 = vadd.f32 %v290, %v291
      %v293 = vsel %vm149, %v241, 0.0
      %v294 = vadd.f32 %v292, %v293
      %v295 = vsel %vm149, %v242, 0.0
      %v296 = vadd.f32 %v294, %v295
      %v297 = vsel %vm149, %v243, 0.0
      %v298 = vadd.f32 %v296, %v297
      %v299 = vsel %vm149, %v244, 0.0
      %v300 = vadd.f32 %v298, %v299
      %v301 = vsel %vm149, %v245, 0.0
      %v302 = vadd.f32 %v300, %v301
      %v303 = vsel %vm149, %v246, 0.0
      %v304 = vadd.f32 %v302, %v303
      %v305 = vsel %vm149, %v247, 0.0
      %v306 = vadd.f32 %v304, %v305
      %v307 = vsel %vm149, %v248, 0.0
      %v308 = vadd.f32 %v306, %v307
      %v309 = vsel %vm149, %v249, 0.0
      %v310 = vadd.f32 %v308, %v309
      %v311 = vsel %vm149, %v250, 0.0
      %v312 = vadd.f32 %v310, %v311
      %v313 = vsel %vm149, %v251, 0.0
      %v314 = vadd.f32 %v312, %v313
      %v315 = vrot.slane %v314, 4
      %v316 = vadd.f32 %v314, %v315
      %v317 = vrot.slane %v316, 2
      %v318 = vadd.f32 %v316, %v317
      %v319 = vrot.slane %v318, 1
      %v320 = vadd.f32 %v318, %v319
      %v321 = vmul.f32 %v320, 0.00390625
      %v322 = vmul.f32 %v219, %v219
      %v323 = vsub.f32 %v321, %v322
      %v324 = vmax.f32 %v323, 0.0
      %v325 = vsub.f32 %v117, %v219
      %v326 = vsub.f32 %v118, %v219
      %v327 = vsub.f32 %v119, %v219
      %v328 = vsub.f32 %v120, %v219
      %v329 = vsub.f32 %v121, %v219
      %v330 = vsub.f32 %v122, %v219
      %v331 = vsub.f32 %v123, %v219
      %v332 = vsub.f32 %v124, %v219
      %v333 = vsub.f32 %v125, %v219
      %v334 = vsub.f32 %v126, %v219
      %v335 = vsub.f32 %v127, %v219
      %v336 = vsub.f32 %v128, %v219
      %v337 = vsub.f32 %v129, %v219
      %v338 = vsub.f32 %v130, %v219
      %v339 = vsub.f32 %v131, %v219
      %v340 = vsub.f32 %v132, %v219
      %v341 = vsub.f32 %v133, %v219
      %v342 = vsub.f32 %v134, %v219
      %v343 = vsub.f32 %v135, %v219
      %v344 = vsub.f32 %v136, %v219
      %v345 = vsub.f32 %v137, %v219
      %v346 = vsub.f32 %v138, %v219
      %v347 = vsub.f32 %v139, %v219
      %v348 = vsub.f32 %v140, %v219
      %v349 = vsub.f32 %v141, %v219
      %v350 = vsub.f32 %v142, %v219
      %v351 = vsub.f32 %v143, %v219
      %v352 = vsub.f32 %v144, %v219
      %v353 = vsub.f32 %v145, %v219
      %v354 = vsub.f32 %v146, %v219
      %v355 = vsub.f32 %v147, %v219
      %v356 = vsub.f32 %v148, %v219
      %v357 = vadd.f32 %v324, 1e-05
      %v358 = vrsqrt.pop %v357
      %v359 = vmul.f32 %v358, %v357
      %v360 = vmul.f32 %v359, %v358
      %v361 = vmul.f32 0.5, %v360
      %v362 = vsub.f32 1.5, %v361
      %v363 = vmul.f32 %v358, %v362
      %vm364 = vweird.f32 %v357
      %vm365 = vweird.f32 %v358
      %vm366 = vmor %vm364, %vm365
      %v367 = vsel %vm366, %v358, %v363
      %v368 = vmul.f32 %v325, %v367
      %v369 = vmul.f32 %v326, %v367
      %v370 = vmul.f32 %v327, %v367
      %v371 = vmul.f32 %v328, %v367
      %v372 = vmul.f32 %v329, %v367
      %v373 = vmul.f32 %v330, %v367
      %v374 = vmul.f32 %v331, %v367
      %v375 = vmul.f32 %v332, %v367
      %v376 = vmul.f32 %v333, %v367
      %v377 = vmul.f32 %v334, %v367
      %v378 = vmul.f32 %v335, %v367
      %v379 = vmul.f32 %v336, %v367
      %v380 = vmul.f32 %v337, %v367
      %v381 = vmul.f32 %v338, %v367
      %v382 = vmul.f32 %v339, %v367
      %v383 = vmul.f32 %v340, %v367
      %v384 = vmul.f32 %v341, %v367
      %v385 = vmul.f32 %v342, %v367
      %v386 = vmul.f32 %v343, %v367
      %v387 = vmul.f32 %v344, %v367
      %v388 = vmul.f32 %v345, %v367
      %v389 = vmul.f32 %v346, %v367
      %v390 = vmul.f32 %v347, %v367
      %v391 = vmul.f32 %v348, %v367
      %v392 = vmul.f32 %v349, %v367
      %v393 = vmul.f32 %v350, %v367
      %v394 = vmul.f32 %v351, %v367
      %v395 = vmul.f32 %v352, %v367
      %v396 = vmul.f32 %v353, %v367
      %v397 = vmul.f32 %v354, %v367
      %v398 = vmul.f32 %v355, %v367
      %v399 = vmul.f32 %v356, %v367
      %400 = vst.msk [vmem:[%s116] sm:$0xff] %vm149, %v368
      %401 = vst.msk [vmem:[%s116 + $0x8] sm:$0xff] %vm149, %v369
      %402 = vst.msk [vmem:[%s116 + $0x10] sm:$0xff] %vm149, %v370
      %403 = vst.msk [vmem:[%s116 + $0x18] sm:$0xff] %vm149, %v371
      %404 = vst.msk [vmem:[%s116 + $0x20] sm:$0xff] %vm149, %v372
      %405 = vst.msk [vmem:[%s116 + $0x28] sm:$0xff] %vm149, %v373
      %406 = vst.msk [vmem:[%s116 + $0x30] sm:$0xff] %vm149, %v374
      %407 = vst.msk [vmem:[%s116 + $0x38] sm:$0xff] %vm149, %v375
      %408 = vst.msk [vmem:[%s116 + $0x40] sm:$0xff] %vm149, %v376
      %409 = vst.msk [vmem:[%s116 + $0x48] sm:$0xff] %vm149, %v377
      %410 = vst.msk [vmem:[%s116 + $0x50] sm:$0xff] %vm149, %v378
      %411 = vst.msk [vmem:[%s116 + $0x58] sm:$0xff] %vm149, %v379
      %412 = vst.msk [vmem:[%s116 + $0x60] sm:$0xff] %vm149, %v380
      %413 = vst.msk [vmem:[%s116 + $0x68] sm:$0xff] %vm149, %v381
      %414 = vst.msk [vmem:[%s116 + $0x70] sm:$0xff] %vm149, %v382
      %415 = vst.msk [vmem:[%s116 + $0x78] sm:$0xff] %vm149, %v383
      %416 = vst.msk [vmem:[%s116 + $0x80] sm:$0xff] %vm149, %v384
      %417 = vst.msk [vmem:[%s116 + $0x88] sm:$0xff] %vm149, %v385
      %418 = vst.msk [vmem:[%s116 + $0x90] sm:$0xff] %vm149, %v386
      %419 = vst.msk [vmem:[%s116 + $0x98] sm:$0xff] %vm149, %v387
      %420 = vst.msk [vmem:[%s116 + $0xa0] sm:$0xff] %vm149, %v388
      %421 = vst.msk [vmem:[%s116 + $0xa8] sm:$0xff] %vm149, %v389
      %422 = vst.msk [vmem:[%s116 + $0xb0] sm:$0xff] %vm149, %v390
      %423 = vst.msk [vmem:[%s116 + $0xb8] sm:$0xff] %vm149, %v391
      %424 = vst.msk [vmem:[%s116 + $0xc0] sm:$0xff] %vm149, %v392
      %425 = vst.msk [vmem:[%s116 + $0xc8] sm:$0xff] %vm149, %v393
      %426 = vst.msk [vmem:[%s116 + $0xd0] sm:$0xff] %vm149, %v394
      %427 = vst.msk [vmem:[%s116 + $0xd8] sm:$0xff] %vm149, %v395
      %428 = vst.msk [vmem:[%s116 + $0xe0] sm:$0xff] %vm149, %v396
      %429 = vst.msk [vmem:[%s116 + $0xe8] sm:$0xff] %vm149, %v397
      %430 = vst.msk [vmem:[%s116 + $0xf0] sm:$0xff] %vm149, %v398
      %431 = vst.msk [vmem:[%s116 + $0xf8] sm:$0xff] %vm149, %v399
      %p432 = scmp.lt.s32.totalorder %s12, 1
      %s433 = scalar_select %p432, %s12, 1
      %s434 = smul.addr %s433, 32
      %s435 = smul.addr %s434, 8
      %s436 = scalar_lea.vmem %s1, %s435
      // Predicated region
      $region25: #{run.32} parent=23 // pred_check
        %p437 = pneg %p56
      $region26: #{run.32} parent=23 // pred_check_branch
        %439 = sbr.rel (%p437) target = $region28
      $region27: #{run.32} parent=23 // pred_region
        _
      $region28: #{run.32} parent=23 // pred_fallthru
        _
    $region24: #{run.32} parent=5 // pred_fallthru
      _
    %p440 = scmp.le.s32.totalorder 2, %s7
    // Predicated region
    $region29: #{run.32} parent=5 // pred_check
      %p441 = pneg %p440
    $region30: #{run.32} parent=5 // pred_check_branch
      %443 = sbr.rel (%p441) target = $region32
    $region31: #{run.32} parent=5 // pred_region
      %s444 = ssub.s32 %s7, 2
      // Predicated region
      $region33: #{run.32} parent=31 // pred_check
        %p445 = pneg %p62
      $region34: #{run.32} parent=31 // pred_check_branch
        %447 = sbr.rel (%p445) target = $region36
      $region35: #{run.32} parent=31 // pred_region
        %p448 = scmp.lt.s32.totalorder %s13, 1
        %s449 = scalar_select %p448, %s13, 1
        %s450 = smul.addr %s449, 32
        %s451 = smul.addr %s450, 8
        %s452 = scalar_lea.vmem %s1, %s451
      $region36: #{run.32} parent=31 // pred_fallthru
        _
    $region32: #{run.32} parent=5 // pred_fallthru
      _
  $region6: #{run.32} parent=0 // loop_footer
    %s11 = sadd.s32 1, %s7
  $region7: #{run.32} parent=0 // loop_footer_branch
    %6 = sbr.rel target = $region3
  $region8: #{run.32} parent=0 // loop_exit
    _

// kernel: run.33
$region0: #{run.33}
  #allocation0 [shape = 'u32[]', space=smem, size = 0x4, offset = 0x4, fixed_abs, tag = 'smem constant byte address 0x4 - core index']
  #allocation1 [shape = 'u32[72,128]{1,0:T(1,128)}', space=vmem, size = 0x9000, scoped, tag = 'internal scratch']
  #allocation2 [shape = 'f32[256,128]{1,0:T(8,128)}', space=vmem, size = 0x20000, scoped, tag = 'scratch operand']
  %s0 = inlined_call_operand.vmem [shape: f32[4,512,128], index: 0, kind: input, shape index: {}]
  %s1 = inlined_call_operand.vmem [shape: f32[4,128,128], index: 1, kind: input, shape index: {}]
  %s2 = inlined_call_operand.vmem [shape: f32[4,1,128], index: 2, kind: input, shape index: {}]
  %s3 = inlined_call_operand.vmem [shape: f32[4,512,128], index: 3, kind: output, shape index: {}]
  %s4 = sld [smem:[#allocation0]]
  $region53: #{run.33} parent=0
    _
  %s6 = ssub.s32 1, %s4
  %s7 = scalar_select 0, %s6, %s4
  loop: start=0, step=1, limit=10
  $region2: #{run.33} parent=0 // loop_pre_header
    _
  $region3: #{run.33} parent=0 // loop_header
    %s9 = sphi 0, %s13
    %p10 = scmp.ge.s32.totalorder %s9, 10
    %s16 = sphi 0, %s42
    %s17 = sphi 0, %s38
    %s18 = sphi 0, %s34
    %s19 = sphi 0, %s30
    %s20 = sphi 0, %s16
    %s21 = sphi 0, %s17
    %s22 = sphi 0, %s18
    %s23 = sphi 0, %s19
    %s24 = sphi 0, %s20
    %s25 = sphi 0, %s21
    %s26 = sphi 0, %s22
    %s27 = sphi 0, %s23
    %s49 = sphi 0, %s51
    %s52 = sphi 0, %s49
    %s53 = sphi 0, %s52
    %s69 = sphi 0, %s53
    %s79 = sphi 0, %s81
    %s82 = sphi 0, %s79
    %s83 = sphi 0, %s82
    %s99 = sphi 0, %s83
    %s107 = sphi 0, %s109
    %s110 = sphi 0, %s107
    %s111 = sphi 0, %s110
    %s127 = sphi 0, %s111
    %s137 = sphi 0, %s139
    %s140 = sphi 0, %s137
    %s141 = sphi 0, %s140
    %s157 = sphi 0, %s141
  $region4: #{run.33} parent=0 // loop_header_branch
    %12 = sbr.rel (%p10) target = $region8
  $region5: #{run.33} parent=0 // loop_body
    %s14 = ssub.s32 %s9, 1
    %s15 = ssub.s32 %s9, 2
    %s28 = sadd.s32 1, %s19
    %p29 = scmp.ge.s32.totalorder %s28, 1
    %s30 = scalar_select %p29, 0, %s28
    %s31 = sadd.s32 1, %s18
    %s32 = scalar_select %p29, %s31, %s18
    %p33 = scmp.ge.s32.totalorder %s32, 1
    %s34 = scalar_select %p33, 0, %s32
    %s35 = sadd.s32 1, %s17
    %s36 = scalar_select %p33, %s35, %s17
    %p37 = scmp.ge.s32.totalorder %s36, 2
    %s38 = scalar_select %p37, 0, %s36
    %s39 = sadd.s32 1, %s16
    %s40 = scalar_select %p37, %s39, %s16
    %p41 = scmp.ge.s32.totalorder %s40, 4
    %s42 = scalar_select %p41, 0, %s40
    %s43 = ssub.s32 %s16, %s42
    %s44 = ssub.s32 %s17, %s38
    %s45 = sor.u32 %s43, %s44
    %s46 = ssub.s32 %s19, %s30
    %s47 = sor.u32 %s45, %s46
    %p48 = scmp.eq.s32.totalorder %s47, 0
    %s50 = sadd.s32 %s49, 1
    %s51 = scalar_select %p48, %s49, %s50
    %p54 = pneg %p48
    %p55 = scmp.eq.s32.totalorder %s9, 7
    %p56 = por %p54, %p55
    %p57 = scmp.ne.s32.totalorder %s49, %s52
    %p58 = scmp.eq.s32.totalorder %s9, 0
    %p59 = por %p57, %p58
    %p60 = scmp.ne.s32.totalorder %s49, %s52
    %p61 = scmp.eq.s32.totalorder %s14, 7
    %p62 = por %p60, %p61
    %p63 = scmp.ne.s32.totalorder %s52, %s53
    %p64 = scmp.eq.s32.totalorder %s14, 0
    %p65 = por %p63, %p64
    %p66 = scmp.ne.s32.totalorder %s52, %s53
    %p67 = scmp.eq.s32.totalorder %s15, 7
    %p68 = por %p66, %p67
    %p70 = scmp.ne.s32.totalorder %s53, %s69
    %p71 = scmp.eq.s32.totalorder %s15, 0
    %p72 = por %p70, %p71
    %s73 = ssub.s32 %s16, %s42
    %s74 = ssub.s32 %s19, %s30
    %s75 = sor.u32 %s73, %s74
    %s76 = ssub.s32 %s18, %s34
    %s77 = sor.u32 %s75, %s76
    %p78 = scmp.eq.s32.totalorder %s77, 0
    %s80 = sadd.s32 %s79, 1
    %s81 = scalar_select %p78, %s79, %s80
    %p84 = pneg %p78
    %p85 = scmp.eq.s32.totalorder %s9, 7
    %p86 = por %p84, %p85
    %p87 = scmp.ne.s32.totalorder %s79, %s82
    %p88 = scmp.eq.s32.totalorder %s9, 0
    %p89 = por %p87, %p88
    %p90 = scmp.ne.s32.totalorder %s79, %s82
    %p91 = scmp.eq.s32.totalorder %s14, 7
    %p92 = por %p90, %p91
    %p93 = scmp.ne.s32.totalorder %s82, %s83
    %p94 = scmp.eq.s32.totalorder %s14, 0
    %p95 = por %p93, %p94
    %p96 = scmp.ne.s32.totalorder %s82, %s83
    %p97 = scmp.eq.s32.totalorder %s15, 7
    %p98 = por %p96, %p97
    %p100 = scmp.ne.s32.totalorder %s83, %s99
    %p101 = scmp.eq.s32.totalorder %s15, 0
    %p102 = por %p100, %p101
    %s103 = ssub.s32 %s16, %s42
    %s104 = ssub.s32 %s18, %s34
    %s105 = sor.u32 %s103, %s104
    %p106 = scmp.eq.s32.totalorder %s105, 0
    %s108 = sadd.s32 %s107, 1
    %s109 = scalar_select %p106, %s107, %s108
    %p112 = pneg %p106
    %p113 = scmp.eq.s32.totalorder %s9, 7
    %p114 = por %p112, %p113
    %p115 = scmp.ne.s32.totalorder %s107, %s110
    %p116 = scmp.eq.s32.totalorder %s9, 0
    %p117 = por %p115, %p116
    %p118 = scmp.ne.s32.totalorder %s107, %s110
    %p119 = scmp.eq.s32.totalorder %s14, 7
    %p120 = por %p118, %p119
    %p121 = scmp.ne.s32.totalorder %s110, %s111
    %p122 = scmp.eq.s32.totalorder %s14, 0
    %p123 = por %p121, %p122
    %p124 = scmp.ne.s32.totalorder %s110, %s111
    %p125 = scmp.eq.s32.totalorder %s15, 7
    %p126 = por %p124, %p125
    %p128 = scmp.ne.s32.totalorder %s111, %s127
    %p129 = scmp.eq.s32.totalorder %s15, 0
    %p130 = por %p128, %p129
    %s131 = ssub.s32 %s16, %s42
    %s132 = ssub.s32 %s17, %s38
    %s133 = sor.u32 %s131, %s132
    %s134 = ssub.s32 %s18, %s34
    %s135 = sor.u32 %s133, %s134
    %p136 = scmp.eq.s32.totalorder %s135, 0
    %s138 = sadd.s32 %s137, 1
    %s139 = scalar_select %p136, %s137, %s138
    %p142 = pneg %p136
    %p143 = scmp.eq.s32.totalorder %s9, 7
    %p144 = por %p142, %p143
    %p145 = scmp.ne.s32.totalorder %s137, %s140
    %p146 = scmp.eq.s32.totalorder %s9, 0
    %p147 = por %p145, %p146
    %p148 = scmp.ne.s32.totalorder %s137, %s140
    %p149 = scmp.eq.s32.totalorder %s14, 7
    %p150 = por %p148, %p149
    %p151 = scmp.ne.s32.totalorder %s140, %s141
    %p152 = scmp.eq.s32.totalorder %s14, 0
    %p153 = por %p151, %p152
    %p154 = scmp.ne.s32.totalorder %s140, %s141
    %p155 = scmp.eq.s32.totalorder %s15, 7
    %p156 = por %p154, %p155
    %p158 = scmp.ne.s32.totalorder %s141, %s157
    %p159 = scmp.eq.s32.totalorder %s15, 0
    %p160 = por %p158, %p159
    %p161 = scmp.le.s32.totalorder 1, %s9
    %p162 = scmp.lt.s32.totalorder %s9, 9
    %p163 = pnand %p161, %p162
    %p164 = pneg %p163
    // Predicated region
    $region9: #{run.33} parent=5 // pred_check
      _
    $region10: #{run.33} parent=5 // pred_check_branch
      %166 = sbr.rel (%p163) target = $region12
    $region11: #{run.33} parent=5 // pred_region
      %s167 = ssub.s32 %s9, 1
    $region12: #{run.33} parent=5 // pred_fallthru
      _
    %p168 = scmp.lt.s32.totalorder %s9, 8
    // Predicated region
    $region13: #{run.33} parent=5 // pred_check
      %p169 = pneg %p168
    $region14: #{run.33} parent=5 // pred_check_branch
      %171 = sbr.rel (%p169) target = $region16
    $region15: #{run.33} parent=5 // pred_region
      // Predicated region
      $region17: #{run.33} parent=15 // pred_check
        %p172 = pneg %p59
      $region18: #{run.33} parent=15 // pred_check_branch
        %174 = sbr.rel (%p172) target = $region20
      $region19: #{run.33} parent=15 // pred_region
        %s175 = smul.u32 32, %s17
        %p176 = scmp.lt.s32.totalorder %s16, 3
        %s177 = scalar_select %p176, %s16, 3
        %p178 = scmp.lt.s32.totalorder %s175, 63
        %s179 = scalar_select %p178, %s175, 63
        %p180 = scmp.lt.s32.totalorder %s19, 0
        %s181 = scalar_select %p180, %s19, 0
        %s182 = sadd.s32 %s181, %s179
        %s183 = smul.addr %s177, 64
        %s184 = sadd.s32 %s182, %s183
        %s185 = smul.addr %s184, 8
        %s186 = scalar_lea.vmem %s0, %s185
        %s187 = smul.u32 32, %s17
      $region20: #{run.33} parent=15 // pred_fallthru
        _
      // Predicated region
      $region21: #{run.33} parent=15 // pred_check
        %p188 = pneg %p89
      $region22: #{run.33} parent=15 // pred_check_branch
        %190 = sbr.rel (%p188) target = $region24
      $region23: #{run.33} parent=15 // pred_region
        %s191 = smul.u32 16, %s19
        %p192 = scmp.lt.s32.totalorder %s16, 3
        %s193 = scalar_select %p192, %s16, 3
        %p194 = scmp.lt.s32.totalorder %s191, 15
        %s195 = scalar_select %p194, %s191, 15
        %p196 = scmp.lt.s32.totalorder %s18, 0
        %s197 = scalar_select %p196, %s18, 0
        %s198 = sadd.s32 %s197, %s195
        %s199 = smul.addr %s193, 16
        %s200 = sadd.s32 %s198, %s199
        %s201 = smul.addr %s200, 8
        %s202 = scalar_lea.vmem %s1, %s201
        %s203 = smul.u32 16, %s19
      $region24: #{run.33} parent=15 // pred_fallthru
        _
      // Predicated region
      $region25: #{run.33} parent=15 // pred_check
        %p204 = pneg %p117
      $region26: #{run.33} parent=15 // pred_check_branch
        %206 = sbr.rel (%p204) target = $region28
      $region27: #{run.33} parent=15 // pred_region
        %p207 = scmp.lt.s32.totalorder %s16, 3
        %s208 = scalar_select %p207, %s16, 3
        %p209 = scmp.lt.s32.totalorder %s18, 0
        %s210 = scalar_select %p209, %s18, 0
        %s211 = sadd.s32 %s210, %s208
        %s212 = scalar_lea.vmem %s2, %s211
      $region28: #{run.33} parent=15 // pred_fallthru
        _
    $region16: #{run.33} parent=5 // pred_fallthru
      _
    %p213 = scmp.le.s32.totalorder 1, %s9
    %p214 = scmp.lt.s32.totalorder %s9, 9
    %p215 = pnand %p213, %p214
    %p216 = pneg %p215
    // Predicated region
    $region29: #{run.33} parent=5 // pred_check
      _
    $region30: #{run.33} parent=5 // pred_check_branch
      %218 = sbr.rel (%p215) target = $region32
    $region31: #{run.33} parent=5 // pred_region
      %s219 = ssub.s32 %s9, 1
      %s220 = smul.u32 32, %s21
      %p221 = scmp.lt.s32.totalorder %s20, 3
      %s222 = scalar_select %p221, %s20, 3
      %p223 = scmp.lt.s32.totalorder %s220, 63
      %s224 = scalar_select %p223, %s220, 63
      %p225 = scmp.lt.s32.totalorder %s23, 0
      %s226 = scalar_select %p225, %s23, 0
      %s227 = sadd.s32 %s226, %s224
      %s228 = smul.addr %s222, 64
      %s229 = sadd.s32 %s227, %s228
      %s230 = smul.addr %s229, 8
      %s231 = scalar_lea.vmem %s0, %s230
      %p232 = pneg %p65
      %p233 = pneg %p62
      %s234 = smul.u32 16, %s23
      %p235 = scmp.lt.s32.totalorder %s20, 3
      %s236 = scalar_select %p235, %s20, 3
      %p237 = scmp.lt.s32.totalorder %s234, 15
      %s238 = scalar_select %p237, %s234, 15
      %p239 = scmp.lt.s32.totalorder %s22, 0
      %s240 = scalar_select %p239, %s22, 0
      %s241 = sadd.s32 %s240, %s238
      %s242 = smul.addr %s236, 16
      %s243 = sadd.s32 %s241, %s242
      %s244 = smul.addr %s243, 8
      %s245 = scalar_lea.vmem %s1, %s244
      %p246 = pneg %p95
      %p247 = pneg %p92
      %p248 = scmp.lt.s32.totalorder %s20, 3
      %s249 = scalar_select %p248, %s20, 3
      %p250 = scmp.lt.s32.totalorder %s22, 0
      %s251 = scalar_select %p250, %s22, 0
      %s252 = sadd.s32 %s251, %s249
      %s253 = scalar_lea.vmem %s2, %s252
      %p254 = pneg %p123
      %p255 = pneg %p120
      %p256 = pneg %p153
      %p257 = pneg %p150
      %s258 = smul.u32 32, %s21
      %p259 = scmp.lt.s32.totalorder %s20, 3
      %s260 = scalar_select %p259, %s20, 3
      %p261 = scmp.lt.s32.totalorder %s258, 63
      %s262 = scalar_select %p261, %s258, 63
      %p263 = scmp.lt.s32.totalorder %s22, 0
      %s264 = scalar_select %p263, %s22, 0
      %s265 = sadd.s32 %s264, %s262
      %s266 = smul.addr %s260, 64
      %s267 = sadd.s32 %s265, %s266
      %s268 = smul.addr %s267, 8
      %s269 = scalar_lea.vmem %s3, %s268
      %s270 = smul.u32 32, %s21
      %p271 = scmp.lt.s32.totalorder %s20, 3
      %s272 = scalar_select %p271, %s20, 3
      %p273 = scmp.lt.s32.totalorder %s270, 63
      %s274 = scalar_select %p273, %s270, 63
      %p275 = scmp.lt.s32.totalorder %s23, 0
      %s276 = scalar_select %p275, %s23, 0
      %s277 = sadd.s32 %s276, %s274
      %s278 = smul.addr %s272, 64
      %s279 = sadd.s32 %s277, %s278
      %s280 = smul.addr %s279, 8
      %s281 = scalar_lea.vmem %s0, %s280
      %s282 = smul.u32 32, %s21
      %s283 = smul.u32 16, %s23
      %p284 = scmp.lt.s32.totalorder %s20, 3
      %s285 = scalar_select %p284, %s20, 3
      %p286 = scmp.lt.s32.totalorder %s283, 15
      %s287 = scalar_select %p286, %s283, 15
      %p288 = scmp.lt.s32.totalorder %s22, 0
      %s289 = scalar_select %p288, %s22, 0
      %s290 = sadd.s32 %s289, %s287
      %s291 = smul.addr %s285, 16
      %s292 = sadd.s32 %s290, %s291
      %s293 = smul.addr %s292, 8
      %s294 = scalar_lea.vmem %s1, %s293
      %s295 = smul.u32 16, %s23
      %p296 = scmp.lt.s32.totalorder %s20, 3
      %s297 = scalar_select %p296, %s20, 3
      %p298 = scmp.lt.s32.totalorder %s22, 0
      %s299 = scalar_select %p298, %s22, 0
      %s300 = sadd.s32 %s299, %s297
      %s301 = scalar_lea.vmem %s2, %s300
      %s302 = smul.u32 32, %s21
      %p303 = scmp.lt.s32.totalorder %s20, 3
      %s304 = scalar_select %p303, %s20, 3
      %p305 = scmp.lt.s32.totalorder %s302, 63
      %s306 = scalar_select %p305, %s302, 63
      %p307 = scmp.lt.s32.totalorder %s22, 0
      %s308 = scalar_select %p307, %s22, 0
      %s309 = sadd.s32 %s308, %s306
      %s310 = smul.addr %s304, 64
      %s311 = sadd.s32 %s309, %s310
      %s312 = smul.addr %s311, 8
      %s313 = scalar_lea.vmem %s3, %s312
      %s314 = smul.u32 32, %s21
      %p315 = scmp.eq.s32.totalorder %s23, 0
      // Predicated region
      $region33: #{run.33} parent=31 // pred_check
        %p316 = pneg %p315
      $region34: #{run.33} parent=31 // pred_check_branch
        %318 = sbr.rel (%p316) target = $region36
      $region35: #{run.33} parent=31 // pred_region
        %319 = vst [vmem:[#allocation2] sm:$0xff] 0.0
        %320 = vst [vmem:[#allocation2 + $0x8] sm:$0xff] 0.0
        %321 = vst [vmem:[#allocation2 + $0x10] sm:$0xff] 0.0
        %322 = vst [vmem:[#allocation2 + $0x18] sm:$0xff] 0.0
        %323 = vst [vmem:[#allocation2 + $0x20] sm:$0xff] 0.0
        %324 = vst [vmem:[#allocation2 + $0x28] sm:$0xff] 0.0
        %325 = vst [vmem:[#allocation2 + $0x30] sm:$0xff] 0.0
        %326 = vst [vmem:[#allocation2 + $0x38] sm:$0xff] 0.0
        %327 = vst [vmem:[#allocation2 + $0x40] sm:$0xff] 0.0
        %328 = vst [vmem:[#allocation2 + $0x48] sm:$0xff] 0.0
        %329 = vst [vmem:[#allocation2 + $0x50] sm:$0xff] 0.0
        %330 = vst [vmem:[#allocation2 + $0x58] sm:$0xff] 0.0
        %331 = vst [vmem:[#allocation2 + $0x60] sm:$0xff] 0.0
        %332 = vst [vmem:[#allocation2 + $0x68] sm:$0xff] 0.0
        %333 = vst [vmem:[#allocation2 + $0x70] sm:$0xff] 0.0
        %334 = vst [vmem:[#allocation2 + $0x78] sm:$0xff] 0.0
        %335 = vst [vmem:[#allocation2 + $0x80] sm:$0xff] 0.0
        %336 = vst [vmem:[#allocation2 + $0x88] sm:$0xff] 0.0
        %337 = vst [vmem:[#allocation2 + $0x90] sm:$0xff] 0.0
        %338 = vst [vmem:[#allocation2 + $0x98] sm:$0xff] 0.0
        %339 = vst [vmem:[#allocation2 + $0xa0] sm:$0xff] 0.0
        %340 = vst [vmem:[#allocation2 + $0xa8] sm:$0xff] 0.0
        %341 = vst [vmem:[#allocation2 + $0xb0] sm:$0xff] 0.0
        %342 = vst [vmem:[#allocation2 + $0xb8] sm:$0xff] 0.0
        %343 = vst [vmem:[#allocation2 + $0xc0] sm:$0xff] 0.0
        %344 = vst [vmem:[#allocation2 + $0xc8] sm:$0xff] 0.0
        %345 = vst [vmem:[#allocation2 + $0xd0] sm:$0xff] 0.0
        %346 = vst [vmem:[#allocation2 + $0xd8] sm:$0xff] 0.0
        %347 = vst [vmem:[#allocation2 + $0xe0] sm:$0xff] 0.0
        %348 = vst [vmem:[#allocation2 + $0xe8] sm:$0xff] 0.0
        %349 = vst [vmem:[#allocation2 + $0xf0] sm:$0xff] 0.0
        %350 = vst [vmem:[#allocation2 + $0xf8] sm:$0xff] 0.0
      $region36: #{run.33} parent=31 // pred_fallthru
        _
      %v351 = vld [vmem:[#allocation2] sm:$0xff]
      %v352 = vld [vmem:[#allocation2 + $0x8] sm:$0xff]
      %v353 = vld [vmem:[#allocation2 + $0x10] sm:$0xff]
      %v354 = vld [vmem:[#allocation2 + $0x18] sm:$0xff]
      %v355 = vld [vmem:[#allocation2 + $0x20] sm:$0xff]
      %v356 = vld [vmem:[#allocation2 + $0x28] sm:$0xff]
      %v357 = vld [vmem:[#allocation2 + $0x30] sm:$0xff]
      %v358 = vld [vmem:[#allocation2 + $0x38] sm:$0xff]
      %v359 = vld [vmem:[#allocation2 + $0x40] sm:$0xff]
      %v360 = vld [vmem:[#allocation2 + $0x48] sm:$0xff]
      %v361 = vld [vmem:[#allocation2 + $0x50] sm:$0xff]
      %v362 = vld [vmem:[#allocation2 + $0x58] sm:$0xff]
      %v363 = vld [vmem:[#allocation2 + $0x60] sm:$0xff]
      %v364 = vld [vmem:[#allocation2 + $0x68] sm:$0xff]
      %v365 = vld [vmem:[#allocation2 + $0x70] sm:$0xff]
      %v366 = vld [vmem:[#allocation2 + $0x78] sm:$0xff]
      %v367 = vld [vmem:[#allocation2 + $0x80] sm:$0xff]
      %v368 = vld [vmem:[#allocation2 + $0x88] sm:$0xff]
      %v369 = vld [vmem:[#allocation2 + $0x90] sm:$0xff]
      %v370 = vld [vmem:[#allocation2 + $0x98] sm:$0xff]
      %v371 = vld [vmem:[#allocation2 + $0xa0] sm:$0xff]
      %v372 = vld [vmem:[#allocation2 + $0xa8] sm:$0xff]
      %v373 = vld [vmem:[#allocation2 + $0xb0] sm:$0xff]
      %v374 = vld [vmem:[#allocation2 + $0xb8] sm:$0xff]
      %v375 = vld [vmem:[#allocation2 + $0xc0] sm:$0xff]
      %v376 = vld [vmem:[#allocation2 + $0xc8] sm:$0xff]
      %v377 = vld [vmem:[#allocation2 + $0xd0] sm:$0xff]
      %v378 = vld [vmem:[#allocation2 + $0xd8] sm:$0xff]
      %v379 = vld [vmem:[#allocation2 + $0xe0] sm:$0xff]
      %v380 = vld [vmem:[#allocation2 + $0xe8] sm:$0xff]
      %v381 = vld [vmem:[#allocation2 + $0xf0] sm:$0xff]
      %v382 = vld [vmem:[#allocation2 + $0xf8] sm:$0xff]
      %v383 = vld [vmem:[%s281] sm:$0xff]
      %v384 = vld [vmem:[%s281 + $0x8] sm:$0xff]
      %v385 = vld [vmem:[%s281 + $0x10] sm:$0xff]
      %v386 = vld [vmem:[%s281 + $0x18] sm:$0xff]
      %v387 = vld [vmem:[%s281 + $0x20] sm:$0xff]
      %v388 = vld [vmem:[%s281 + $0x28] sm:$0xff]
      %v389 = vld [vmem:[%s281 + $0x30] sm:$0xff]
      %v390 = vld [vmem:[%s281 + $0x38] sm:$0xff]
      %v391 = vld [vmem:[%s281 + $0x40] sm:$0xff]
      %v392 = vld [vmem:[%s281 + $0x48] sm:$0xff]
      %v393 = vld [vmem:[%s281 + $0x50] sm:$0xff]
      %v394 = vld [vmem:[%s281 + $0x58] sm:$0xff]
      %v395 = vld [vmem:[%s281 + $0x60] sm:$0xff]
      %v396 = vld [vmem:[%s281 + $0x68] sm:$0xff]
      %v397 = vld [vmem:[%s281 + $0x70] sm:$0xff]
      %v398 = vld [vmem:[%s281 + $0x78] sm:$0xff]
      %v399 = vld [vmem:[%s281 + $0x80] sm:$0xff]
      %v400 = vld [vmem:[%s281 + $0x88] sm:$0xff]
      %v401 = vld [vmem:[%s281 + $0x90] sm:$0xff]
      %v402 = vld [vmem:[%s281 + $0x98] sm:$0xff]
      %v403 = vld [vmem:[%s281 + $0xa0] sm:$0xff]
      %v404 = vld [vmem:[%s281 + $0xa8] sm:$0xff]
      %v405 = vld [vmem:[%s281 + $0xb0] sm:$0xff]
      %v406 = vld [vmem:[%s281 + $0xb8] sm:$0xff]
      %v407 = vld [vmem:[%s281 + $0xc0] sm:$0xff]
      %v408 = vld [vmem:[%s281 + $0xc8] sm:$0xff]
      %v409 = vld [vmem:[%s281 + $0xd0] sm:$0xff]
      %v410 = vld [vmem:[%s281 + $0xd8] sm:$0xff]
      %v411 = vld [vmem:[%s281 + $0xe0] sm:$0xff]
      %v412 = vld [vmem:[%s281 + $0xe8] sm:$0xff]
      %v413 = vld [vmem:[%s281 + $0xf0] sm:$0xff]
      %v414 = vld [vmem:[%s281 + $0xf8] sm:$0xff]
      %v415 = vld [vmem:[%s294] sm:$0xff]
      %v416 = vld [vmem:[%s294 + $0x8] sm:$0xff]
      %v417 = vld [vmem:[%s294 + $0x10] sm:$0xff]
      %v418 = vld [vmem:[%s294 + $0x18] sm:$0xff]
      %v419 = vld [vmem:[%s294 + $0x20] sm:$0xff]
      %v420 = vld [vmem:[%s294 + $0x28] sm:$0xff]
      %v421 = vld [vmem:[%s294 + $0x30] sm:$0xff]
      %v422 = vld [vmem:[%s294 + $0x38] sm:$0xff]
      %v423 = vld [vmem:[%s294 + $0x40] sm:$0xff]
      %v424 = vld [vmem:[%s294 + $0x48] sm:$0xff]
      %v425 = vld [vmem:[%s294 + $0x50] sm:$0xff]
      %v426 = vld [vmem:[%s294 + $0x58] sm:$0xff]
      %v427 = vld [vmem:[%s294 + $0x60] sm:$0xff]
      %v428 = vld [vmem:[%s294 + $0x68] sm:$0xff]
      %v429 = vld [vmem:[%s294 + $0x70] sm:$0xff]
      %v430 = vld [vmem:[%s294 + $0x78] sm:$0xff]
      %431 = vmatpush.msra.mxu0 %v430
      %432 = vmatpush.msra.mxu0 %v429
      %433 = vmatpush.msra.mxu0 %v428
      %434 = vmatpush.msra.mxu0 %v427
      %435 = vmatpush.msra.mxu0 %v426
      %436 = vmatpush.msra.mxu0 %v425
      %437 = vmatpush.msra.mxu0 %v424
      %438 = vmatpush.msra.mxu0 %v423
      %439 = vmatpush.msra.mxu0 %v422
      %440 = vmatpush.msra.mxu0 %v421
      %441 = vmatpush.msra.mxu0 %v420
      %442 = vmatpush.msra.mxu0 %v419
      %443 = vmatpush.msra.mxu0 %v418
      %444 = vmatpush.msra.mxu0 %v417
      %445 = vmatpush.msra.mxu0 %v416
      %446 = vmatpush.msra.mxu0 %v415
      %447 = vmatmul.f32.gmra.mxu0 %v383
      %v448 = vpop.f32.mrf.mxu0
      %v449 = vadd.f32 0.0, %v448
      %450 = vmatmul.f32.gmra.mxu0 %v384
      %v451 = vpop.f32.mrf.mxu0
      %v452 = vadd.f32 0.0, %v451
      %453 = vmatmul.f32.gmra.mxu0 %v385
      %v454 = vpop.f32.mrf.mxu0
      %v455 = vadd.f32 0.0, %v454
      %456 = vmatmul.f32.gmra.mxu0 %v386
      %v457 = vpop.f32.mrf.mxu0
      %v458 = vadd.f32 0.0, %v457
      %459 = vmatmul.f32.gmra.mxu0 %v387
      %v460 = vpop.f32.mrf.mxu0
      %v461 = vadd.f32 0.0, %v460
      %462 = vmatmul.f32.gmra.mxu0 %v388
      %v463 = vpop.f32.mrf.mxu0
      %v464 = vadd.f32 0.0, %v463
      %465 = vmatmul.f32.gmra.mxu0 %v389
      %v466 = vpop.f32.mrf.mxu0
      %v467 = vadd.f32 0.0, %v466
      %468 = vmatmul.f32.gmra.mxu0 %v390
      %v469 = vpop.f32.mrf.mxu0
      %v470 = vadd.f32 0.0, %v469
      %471 = vmatmul.f32.gmra.mxu0 %v391
      %v472 = vpop.f32.mrf.mxu0
      %v473 = vadd.f32 0.0, %v472
      %474 = vmatmul.f32.gmra.mxu0 %v392
      %v475 = vpop.f32.mrf.mxu0
      %v476 = vadd.f32 0.0, %v475
      %477 = vmatmul.f32.gmra.mxu0 %v393
      %v478 = vpop.f32.mrf.mxu0
      %v479 = vadd.f32 0.0, %v478
      %480 = vmatmul.f32.gmra.mxu0 %v394
      %v481 = vpop.f32.mrf.mxu0
      %v482 = vadd.f32 0.0, %v481
      %483 = vmatmul.f32.gmra.mxu0 %v395
      %v484 = vpop.f32.mrf.mxu0
      %v485 = vadd.f32 0.0, %v484
      %486 = vmatmul.f32.gmra.mxu0 %v396
      %v487 = vpop.f32.mrf.mxu0
      %v488 = vadd.f32 0.0, %v487
      %489 = vmatmul.f32.gmra.mxu0 %v397
      %v490 = vpop.f32.mrf.mxu0
      %v491 = vadd.f32 0.0, %v490
      %492 = vmatmul.f32.gmra.mxu0 %v398
      %v493 = vpop.f32.mrf.mxu0
      %v494 = vadd.f32 0.0, %v493
      %495 = vmatmul.f32.gmra.mxu0 %v399
      %v496 = vpop.f32.mrf.mxu0
      %v497 = vadd.f32 0.0, %v496
      %498 = vmatmul.f32.gmra.mxu0 %v400
      %v499 = vpop.f32.mrf.mxu0
      %v500 = vadd.f32 0.0, %v499
      %501 = vmatmul.f32.gmra.mxu0 %v401
      %v502 = vpop.f32.mrf.mxu0
      %v503 = vadd.f32 0.0, %v502
      %504 = vmatmul.f32.gmra.mxu0 %v402
      %v505 = vpop.f32.mrf.mxu0
      %v506 = vadd.f32 0.0, %v505
      %507 = vmatmul.f32.gmra.mxu0 %v403
      %v508 = vpop.f32.mrf.mxu0
      %v509 = vadd.f32 0.0, %v508
      %510 = vmatmul.f32.gmra.mxu0 %v404
      %v511 = vpop.f32.mrf.mxu0
      %v512 = vadd.f32 0.0, %v511
      %513 = vmatmul.f32.gmra.mxu0 %v405
      %v514 = vpop.f32.mrf.mxu0
      %v515 = vadd.f32 0.0, %v514
      %516 = vmatmul.f32.gmra.mxu0 %v406
      %v517 = vpop.f32.mrf.mxu0
      %v518 = vadd.f32 0.0, %v517
      %519 = vmatmul.f32.gmra.mxu0 %v407
      %v520 = vpop.f32.mrf.mxu0
      %v521 = vadd.f32 0.0, %v520
      %522 = vmatmul.f32.gmra.mxu0 %v408
      %v523 = vpop.f32.mrf.mxu0
      %v524 = vadd.f32 0.0, %v523
      %525 = vmatmul.f32.gmra.mxu0 %v409
      %v526 = vpop.f32.mrf.mxu0
      %v527 = vadd.f32 0.0, %v526
      %528 = vmatmul.f32.gmra.mxu0 %v410
      %v529 = vpop.f32.mrf.mxu0
      %v530 = vadd.f32 0.0, %v529
      %531 = vmatmul.f32.gmra.mxu0 %v411
      %v532 = vpop.f32.mrf.mxu0
      %v533 = vadd.f32 0.0, %v532
      %534 = vmatmul.f32.gmra.mxu0 %v412
      %v535 = vpop.f32.mrf.mxu0
      %v536 = vadd.f32 0.0, %v535
      %537 = vmatmul.f32.gmra.mxu0 %v413
      %v538 = vpop.f32.mrf.mxu0
      %v539 = vadd.f32 0.0, %v538
      %540 = vmatmul.f32.gmra.mxu0 %v414
      %v541 = vpop.f32.mrf.mxu0
      %v542 = vadd.f32 0.0, %v541
      %543 = vdwg.mxu0
      %v544 = vadd.f32 %v351, %v449
      %v545 = vadd.f32 %v352, %v452
      %v546 = vadd.f32 %v353, %v455
      %v547 = vadd.f32 %v354, %v458
      %v548 = vadd.f32 %v355, %v461
      %v549 = vadd.f32 %v356, %v464
      %v550 = vadd.f32 %v357, %v467
      %v551 = vadd.f32 %v358, %v470
      %v552 = vadd.f32 %v359, %v473
      %v553 = vadd.f32 %v360, %v476
      %v554 = vadd.f32 %v361, %v479
      %v555 = vadd.f32 %v362, %v482
      %v556 = vadd.f32 %v363, %v485
      %v557 = vadd.f32 %v364, %v488
      %v558 = vadd.f32 %v365, %v491
      %v559 = vadd.f32 %v366, %v494
      %v560 = vadd.f32 %v367, %v497
      %v561 = vadd.f32 %v368, %v500
      %v562 = vadd.f32 %v369, %v503
      %v563 = vadd.f32 %v370, %v506
      %v564 = vadd.f32 %v371, %v509
      %v565 = vadd.f32 %v372, %v512
      %v566 = vadd.f32 %v373, %v515
      %v567 = vadd.f32 %v374, %v518
      %v568 = vadd.f32 %v375, %v521
      %v569 = vadd.f32 %v376, %v524
      %v570 = vadd.f32 %v377, %v527
      %v571 = vadd.f32 %v378, %v530
      %v572 = vadd.f32 %v379, %v533
      %v573 = vadd.f32 %v380, %v536
      %v574 = vadd.f32 %v381, %v539
      %v575 = vadd.f32 %v382, %v542
      %576 = vst [vmem:[#allocation2] sm:$0xff] %v544
      %577 = vst [vmem:[#allocation2 + $0x8] sm:$0xff] %v545
      %578 = vst [vmem:[#allocation2 + $0x10] sm:$0xff] %v546
      %579 = vst [vmem:[#allocation2 + $0x18] sm:$0xff] %v547
      %580 = vst [vmem:[#allocation2 + $0x20] sm:$0xff] %v548
      %581 = vst [vmem:[#allocation2 + $0x28] sm:$0xff] %v549
      %582 = vst [vmem:[#allocation2 + $0x30] sm:$0xff] %v550
      %583 = vst [vmem:[#allocation2 + $0x38] sm:$0xff] %v551
      %584 = vst [vmem:[#allocation2 + $0x40] sm:$0xff] %v552
      %585 = vst [vmem:[#allocation2 + $0x48] sm:$0xff] %v553
      %586 = vst [vmem:[#allocation2 + $0x50] sm:$0xff] %v554
      %587 = vst [vmem:[#allocation2 + $0x58] sm:$0xff] %v555
      %588 = vst [vmem:[#allocation2 + $0x60] sm:$0xff] %v556
      %589 = vst [vmem:[#allocation2 + $0x68] sm:$0xff] %v557
      %590 = vst [vmem:[#allocation2 + $0x70] sm:$0xff] %v558
      %591 = vst [vmem:[#allocation2 + $0x78] sm:$0xff] %v559
      %592 = vst [vmem:[#allocation2 + $0x80] sm:$0xff] %v560
      %593 = vst [vmem:[#allocation2 + $0x88] sm:$0xff] %v561
      %594 = vst [vmem:[#allocation2 + $0x90] sm:$0xff] %v562
      %595 = vst [vmem:[#allocation2 + $0x98] sm:$0xff] %v563
      %596 = vst [vmem:[#allocation2 + $0xa0] sm:$0xff] %v564
      %597 = vst [vmem:[#allocation2 + $0xa8] sm:$0xff] %v565
      %598 = vst [vmem:[#allocation2 + $0xb0] sm:$0xff] %v566
      %599 = vst [vmem:[#allocation2 + $0xb8] sm:$0xff] %v567
      %600 = vst [vmem:[#allocation2 + $0xc0] sm:$0xff] %v568
      %601 = vst [vmem:[#allocation2 + $0xc8] sm:$0xff] %v569
      %602 = vst [vmem:[#allocation2 + $0xd0] sm:$0xff] %v570
      %603 = vst [vmem:[#allocation2 + $0xd8] sm:$0xff] %v571
      %604 = vst [vmem:[#allocation2 + $0xe0] sm:$0xff] %v572
      %605 = vst [vmem:[#allocation2 + $0xe8] sm:$0xff] %v573
      %606 = vst [vmem:[#allocation2 + $0xf0] sm:$0xff] %v574
      %607 = vst [vmem:[#allocation2 + $0xf8] sm:$0xff] %v575
      // Predicated region
      $region37: #{run.33} parent=31 // pred_check
        %p608 = pneg %p315
      $region38: #{run.33} parent=31 // pred_check_branch
        %610 = sbr.rel (%p608) target = $region40
      $region39: #{run.33} parent=31 // pred_region
        %v611 = vld [vmem:[#allocation2] sm:$0xff]
        %v612 = vld [vmem:[#allocation2 + $0x8] sm:$0xff]
        %v613 = vld [vmem:[#allocation2 + $0x10] sm:$0xff]
        %v614 = vld [vmem:[#allocation2 + $0x18] sm:$0xff]
        %v615 = vld [vmem:[#allocation2 + $0x20] sm:$0xff]
        %v616 = vld [vmem:[#allocation2 + $0x28] sm:$0xff]
        %v617 = vld [vmem:[#allocation2 + $0x30] sm:$0xff]
        %v618 = vld [vmem:[#allocation2 + $0x38] sm:$0xff]
        %v619 = vld [vmem:[#allocation2 + $0x40] sm:$0xff]
        %v620 = vld [vmem:[#allocation2 + $0x48] sm:$0xff]
        %v621 = vld [vmem:[#allocation2 + $0x50] sm:$0xff]
        %v622 = vld [vmem:[#allocation2 + $0x58] sm:$0xff]
        %v623 = vld [vmem:[#allocation2 + $0x60] sm:$0xff]
        %v624 = vld [vmem:[#allocation2 + $0x68] sm:$0xff]
        %v625 = vld [vmem:[#allocation2 + $0x70] sm:$0xff]
        %v626 = vld [vmem:[#allocation2 + $0x78] sm:$0xff]
        %v627 = vld [vmem:[#allocation2 + $0x80] sm:$0xff]
        %v628 = vld [vmem:[#allocation2 + $0x88] sm:$0xff]
        %v629 = vld [vmem:[#allocation2 + $0x90] sm:$0xff]
        %v630 = vld [vmem:[#allocation2 + $0x98] sm:$0xff]
        %v631 = vld [vmem:[#allocation2 + $0xa0] sm:$0xff]
        %v632 = vld [vmem:[#allocation2 + $0xa8] sm:$0xff]
        %v633 = vld [vmem:[#allocation2 + $0xb0] sm:$0xff]
        %v634 = vld [vmem:[#allocation2 + $0xb8] sm:$0xff]
        %v635 = vld [vmem:[#allocation2 + $0xc0] sm:$0xff]
        %v636 = vld [vmem:[#allocation2 + $0xc8] sm:$0xff]
        %v637 = vld [vmem:[#allocation2 + $0xd0] sm:$0xff]
        %v638 = vld [vmem:[#allocation2 + $0xd8] sm:$0xff]
        %v639 = vld [vmem:[#allocation2 + $0xe0] sm:$0xff]
        %v640 = vld [vmem:[#allocation2 + $0xe8] sm:$0xff]
        %v641 = vld [vmem:[#allocation2 + $0xf0] sm:$0xff]
        %v642 = vld [vmem:[#allocation2 + $0xf8] sm:$0xff]
        %v643 = vld [vmem:[%s301] sm:$0x1]
        %v645 = vperm.slane %v643, 0
        %v647 = vadd.f32 %v611, %v645
        %v648 = vadd.f32 %v612, %v645
        %v649 = vadd.f32 %v613, %v645
        %v650 = vadd.f32 %v614, %v645
        %v651 = vadd.f32 %v615, %v645
        %v652 = vadd.f32 %v616, %v645
        %v653 = vadd.f32 %v617, %v645
        %v654 = vadd.f32 %v618, %v645
        %v655 = vadd.f32 %v619, %v645
        %v656 = vadd.f32 %v620, %v645
        %v657 = vadd.f32 %v621, %v645
        %v658 = vadd.f32 %v622, %v645
        %v659 = vadd.f32 %v623, %v645
        %v660 = vadd.f32 %v624, %v645
        %v661 = vadd.f32 %v625, %v645
        %v662 = vadd.f32 %v626, %v645
        %v663 = vadd.f32 %v627, %v645
        %v664 = vadd.f32 %v628, %v645
        %v665 = vadd.f32 %v629, %v645
        %v666 = vadd.f32 %v630, %v645
        %v667 = vadd.f32 %v631, %v645
        %v668 = vadd.f32 %v632, %v645
        %v669 = vadd.f32 %v633, %v645
        %v670 = vadd.f32 %v634, %v645
        %v671 = vadd.f32 %v635, %v645
        %v672 = vadd.f32 %v636, %v645
        %v673 = vadd.f32 %v637, %v645
        %v674 = vadd.f32 %v638, %v645
        %v675 = vadd.f32 %v639, %v645
        %v676 = vadd.f32 %v640, %v645
        %v677 = vadd.f32 %v641, %v645
        %v678 = vadd.f32 %v642, %v645
        %679 = vst [vmem:[%s313] sm:$0xff] %v647
        %680 = vst [vmem:[%s313 + $0x8] sm:$0xff] %v648
        %681 = vst [vmem:[%s313 + $0x10] sm:$0xff] %v649
        %682 = vst [vmem:[%s313 + $0x18] sm:$0xff] %v650
        %683 = vst [vmem:[%s313 + $0x20] sm:$0xff] %v651
        %684 = vst [vmem:[%s313 + $0x28] sm:$0xff] %v652
        %685 = vst [vmem:[%s313 + $0x30] sm:$0xff] %v653
        %686 = vst [vmem:[%s313 + $0x38] sm:$0xff] %v654
        %687 = vst [vmem:[%s313 + $0x40] sm:$0xff] %v655
        %688 = vst [vmem:[%s313 + $0x48] sm:$0xff] %v656
        %689 = vst [vmem:[%s313 + $0x50] sm:$0xff] %v657
        %690 = vst [vmem:[%s313 + $0x58] sm:$0xff] %v658
        %691 = vst [vmem:[%s313 + $0x60] sm:$0xff] %v659
        %692 = vst [vmem:[%s313 + $0x68] sm:$0xff] %v660
        %693 = vst [vmem:[%s313 + $0x70] sm:$0xff] %v661
        %694 = vst [vmem:[%s313 + $0x78] sm:$0xff] %v662
        %695 = vst [vmem:[%s313 + $0x80] sm:$0xff] %v663
        %696 = vst [vmem:[%s313 + $0x88] sm:$0xff] %v664
        %697 = vst [vmem:[%s313 + $0x90] sm:$0xff] %v665
        %698 = vst [vmem:[%s313 + $0x98] sm:$0xff] %v666
        %699 = vst [vmem:[%s313 + $0xa0] sm:$0xff] %v667
        %700 = vst [vmem:[%s313 + $0xa8] sm:$0xff] %v668
        %701 = vst [vmem:[%s313 + $0xb0] sm:$0xff] %v669
        %702 = vst [vmem:[%s313 + $0xb8] sm:$0xff] %v670
        %703 = vst [vmem:[%s313 + $0xc0] sm:$0xff] %v671
        %704 = vst [vmem:[%s313 + $0xc8] sm:$0xff] %v672
        %705 = vst [vmem:[%s313 + $0xd0] sm:$0xff] %v673
        %706 = vst [vmem:[%s313 + $0xd8] sm:$0xff] %v674
        %707 = vst [vmem:[%s313 + $0xe0] sm:$0xff] %v675
        %708 = vst [vmem:[%s313 + $0xe8] sm:$0xff] %v676
        %709 = vst [vmem:[%s313 + $0xf0] sm:$0xff] %v677
        %710 = vst [vmem:[%s313 + $0xf8] sm:$0xff] %v678
      $region40: #{run.33} parent=31 // pred_fallthru
        _
      %s711 = smul.u32 32, %s21
      %p712 = scmp.lt.s32.totalorder %s20, 3
      %s713 = scalar_select %p712, %s20, 3
      %p714 = scmp.lt.s32.totalorder %s711, 63
      %s715 = scalar_select %p714, %s711, 63
      %p716 = scmp.lt.s32.totalorder %s22, 0
      %s717 = scalar_select %p716, %s22, 0
      %s718 = sadd.s32 %s717, %s715
      %s719 = smul.addr %s713, 64
      %s720 = sadd.s32 %s718, %s719
      %s721 = smul.addr %s720, 8
      %s722 = scalar_lea.vmem %s3, %s721
      // Predicated region
      $region41: #{run.33} parent=31 // pred_check
        %p723 = pneg %p150
      $region42: #{run.33} parent=31 // pred_check_branch
        %725 = sbr.rel (%p723) target = $region44
      $region43: #{run.33} parent=31 // pred_region
        %s726 = smul.u32 32, %s21
      $region44: #{run.33} parent=31 // pred_fallthru
        _
    $region32: #{run.33} parent=5 // pred_fallthru
      _
    %p727 = scmp.le.s32.totalorder 2, %s9
    // Predicated region
    $region45: #{run.33} parent=5 // pred_check
      %p728 = pneg %p727
    $region46: #{run.33} parent=5 // pred_check_branch
      %730 = sbr.rel (%p728) target = $region48
    $region47: #{run.33} parent=5 // pred_region
      %s731 = ssub.s32 %s9, 2
      // Predicated region
      $region49: #{run.33} parent=47 // pred_check
        %p732 = pneg %p156
      $region50: #{run.33} parent=47 // pred_check_branch
        %734 = sbr.rel (%p732) target = $region52
      $region51: #{run.33} parent=47 // pred_region
        %s735 = smul.u32 32, %s25
        %p736 = scmp.lt.s32.totalorder %s24, 3
        %s737 = scalar_select %p736, %s24, 3
        %p738 = scmp.lt.s32.totalorder %s735, 63
        %s739 = scalar_select %p738, %s735, 63
        %p740 = scmp.lt.s32.totalorder %s26, 0
        %s741 = scalar_select %p740, %s26, 0
        %s742 = sadd.s32 %s741, %s739
        %s743 = smul.addr %s737, 64
        %s744 = sadd.s32 %s742, %s743
        %s745 = smul.addr %s744, 8
        %s746 = scalar_lea.vmem %s3, %s745
      $region52: #{run.33} parent=47 // pred_fallthru
        _
    $region48: #{run.33} parent=5 // pred_fallthru
      _
  $region6: #{run.33} parent=0 // loop_footer
    %s13 = sadd.s32 1, %s9
  $region7: #{run.33} parent=0 // loop_footer_branch
    %8 = sbr.rel target = $region3
  $region8: #{run.33} parent=0 // loop_exit
    _

</llo_original>
